<compile_context>
chip_gen: v6e
topology: v6e:2x2x1
jax: 0.10.0
libtpu: 0.0.40
codegen_flags: <defaults>
</compile_context>

<pallas_src>
import numpy as np
import jax
import jax.numpy as jnp
from jax.experimental import pallas as pl
from jax.experimental.pallas import tpu as pltpu

KH = 5   # nn.Conv2d(..., 5) kernel height
KW = 5   # nn.Conv2d(..., 5) kernel width


# ----------------------------- Pallas kernel --------------------------------

def _regrnet_kernel(x_ref,
                    w1_ref, b1_ref, w2_ref, b2_ref,
                    wf1_ref, bf1_ref, wf2_ref, bf2_ref, wf3_ref, bf3_ref,
                    sel_ref, o_ref):
    """Whole regrNet forward for a block of B batch elements (grid=(N//B,)).

    x_ref holds B elements row-packed and batch-stacked: (B*(H//4), 4*W*Cin).
    Conv+pool layers: 4 chains (one per 2x2 pooling offset) of banded matmuls,
    elementwise max over chains, then bias + ReLU once (exact: max/ReLU are
    monotone and the bias is constant per channel inside a pooling window).
    Invalid rows (crossing batch-element boundaries) carry finite garbage and
    are dropped by the final 0/1 row-selection matmul.
    """
    bf16 = jnp.bfloat16

    def mm(a, b):
        return jnp.dot(a, b, preferred_element_type=jnp.float32)

    x = x_ref[...]                                   # (B*Rp, 4*W*Cin) bf16
    R = x.shape[0]

    # ---- conv1 + 2x2 max-pool + bias + ReLU (output: 2 pooled rows packed per lane-row) ----
    t1 = w1_ref.shape[0] // 4                        # taps per chain (=2)
    L1 = R - (t1 - 1)

    def chain1(ci):
        y = mm(x[0:L1], w1_ref[ci * t1])
        for j in range(1, t1):
            y = y + mm(x[j:j + L1], w1_ref[ci * t1 + j])
        return y

    c = chain1(0)
    c = jnp.maximum(c, chain1(1))
    c = jnp.maximum(c, chain1(2))
    c = jnp.maximum(c, chain1(3))
    h1 = jnp.maximum(c + b1_ref[...], 0.0).astype(bf16)          # (L1, 2*Wp1*C1)

    # ---- conv2 + 2x2 max-pool + bias + ReLU ----
    t2 = w2_ref.shape[0] // 4                        # taps per chain (=3)
    L2 = L1 - (t2 - 1)

    def chain2(ci):
        y = mm(h1[0:L2], w2_ref[ci * t2])
        for j in range(1, t2):
            y = y + mm(h1[j:j + L2], w2_ref[ci * t2 + j])
        return y

    d = chain2(0)
    d = jnp.maximum(d, chain2(1))
    d = jnp.maximum(d, chain2(2))
    d = jnp.maximum(d, chain2(3))
    h2 = jnp.maximum(d + b2_ref[...], 0.0).astype(bf16)          # (L2, Wp2*C2)

    # ---- fc1 with the spatial flatten folded into per-row weight blocks ----
    nr = wf1_ref.shape[0]                            # Hp2 (=4)
    Lz = L2 - (nr - 1)
    z = mm(h2[0:Lz], wf1_ref[0])
    for r in range(1, nr):
        z = z + mm(h2[r:r + Lz], wf1_ref[r])         # (Lz, 120) f32

    # compact to one valid row per batch element, then the tiny fc tail
    z = mm(sel_ref[...], z)                          # (B, 120) f32
    z = jnp.maximum(z + bf1_ref[...], 0.0).astype(bf16)
    z = jnp.maximum(mm(z, wf2_ref[...]) + bf2_ref[...], 0.0).astype(bf16)
    o_ref[...] = mm(z, wf3_ref[...]) + bf3_ref[...]  # (B, numCrops*numOutputs) f32


# ----------------------------- host-side weight prep ------------------------

def prepare(params, crop_size, num_crops, batch_block):
    """One-time conversion of PyTorch-layout parameters into kernel operands."""
    (w1, b1, w2, b2, wf1, bf1, wf2, bf2, wf3, bf3) = [np.asarray(p) for p in params]
    H, W = crop_size
    cin = num_crops
    c1, c2 = w1.shape[0], w2.shape[0]
    ho1, wo1 = H - (KH - 1), W - (KW - 1)
    hp1, wp1 = ho1 // 2, wo1 // 2
    ho2, wo2 = hp1 - (KH - 1), wp1 - (KW - 1)
    hp2, wp2 = ho2 // 2, wo2 // 2
    # TODO(synk): MaxPool2d floor semantics for odd conv outputs are not handled; the row
    # packing additionally needs H % 4 == 0 and hp1 % 2 == 0 (all true for 28x28 crops).
    assert H % 4 == 0 and ho1 % 2 == 0 and wo1 % 2 == 0 and ho2 % 2 == 0 and wo2 % 2 == 0
    assert hp1 % 2 == 0

    rp = H // 4                                      # packed rows per element
    K1, N1 = 4 * W * cin, 2 * wp1 * c1               # (448, 144) for 28x28, cin=4
    K2, N2 = 2 * wp1 * c1, wp2 * c2                  # (144, 64)

    # Layer 1: 4 chains (pool offsets dr, dc) x 2 taps of banded matrices (K1, N1).
    # Columns 0:wp1*c1 hold pooled row 2q, columns wp1*c1: hold pooled row 2q+1.
    W1 = np.zeros((4, 2, K1, N1), np.float32)
    for dr in range(2):
        for dc in range(2):
            ci = dr * 2 + dc
            for j in range(2):
                for half in range(2):                 # which pooled row of the output pack
                    delta = dr + 2 * half             # conv row offset within 4q..4q+3
                    for m in range(4):                # image row within the input pack
                        ky = 4 * j + m - delta
                        if not 0 <= ky < KH:
                            continue
                        for u in range(wp1):
                            for kx in range(KW):
                                t = 2 * u + dc + kx
                                if t >= W:
                                    continue
                                r0 = (m * W + t) * cin
                                c0 = half * wp1 * c1 + u * c1
                                W1[ci, j, r0:r0 + cin, c0:c0 + c1] = w1[:, :, ky, kx].T

    # Layer 2: 4 chains x 3 taps, (K2, N2).
    W2 = np.zeros((4, 3, K2, N2), np.float32)
    for dr in range(2):
        for dc in range(2):
            ci = dr * 2 + dc
            for j in range(3):
                for m2 in range(2):                   # h1 row within the packed pair
                    ky = 2 * j + m2 - dr
                    if not 0 <= ky < KH:
                        continue
                    for u in range(wp2):
                        for kx in range(KW):
                            t = 2 * u + dc + kx
                            if t >= wp1:
                                continue
                            r0 = (m2 * wp1 + t) * c1
                            c0 = u * c2
                            W2[ci, j, r0:r0 + c1, c0:c0 + c2] = w2[:, :, ky, kx].T

    # fc1 rows: PyTorch flatten order (g, p, u) -> kernel layout (p, u*C2+g), split by row p.
    idx = (np.arange(c2)[None, None, :] * (hp2 * wp2)
           + np.arange(hp2)[:, None, None] * wp2
           + np.arange(wp2)[None, :, None])           # (hp2, wp2, c2)
    wf1r = wf1[idx.reshape(hp2, wp2 * c2), :]         # (hp2, wp2*c2, 120)

    # 0/1 row-selection picking the one valid fc1 output row per batch element.
    B = batch_block
    Lz = B * rp - (2 - 1) - (3 - 1) - (hp2 - 1)
    sel = np.zeros((B, Lz), np.float32)
    sel[np.arange(B), np.arange(B) * rp] = 1.0

    bf16 = jnp.bfloat16
    return dict(
        w1=jnp.asarray(W1.reshape(4 * 2, K1, N1), bf16),
        b1=jnp.asarray(np.tile(b1, 2 * wp1).reshape(1, N1), jnp.float32),
        w2=jnp.asarray(W2.reshape(4 * 3, K2, N2), bf16),
        b2=jnp.asarray(np.tile(b2, wp2).reshape(1, N2), jnp.float32),
        wf1=jnp.asarray(wf1r, bf16),
        bf1=jnp.asarray(bf1.reshape(1, -1), jnp.float32),
        wf2=jnp.asarray(wf2, bf16),
        bf2=jnp.asarray(bf2.reshape(1, -1), jnp.float32),
        wf3=jnp.asarray(wf3, bf16),
        bf3=jnp.asarray(bf3.reshape(1, -1), jnp.float32),
        sel=jnp.asarray(sel, jnp.float32),
        rp=rp, batch_block=B,
    )


# ----------------------------- forward wrapper -------------------------------

def make_forward(prep, num_crops, num_outputs):
    p = prep
    B = p['batch_block']
    rp = p['rp']
    weight_names = ('w1', 'b1', 'w2', 'b2', 'wf1', 'bf1',
                    'wf2', 'bf2', 'wf3', 'bf3', 'sel')

    def full(a):
        nd = a.ndim
        return pl.BlockSpec(a.shape, lambda n, _nd=nd: (0,) * _nd)

    @jax.jit
    def forward(crops, labels):
        N, cin, H, W = crops.shape
        assert N % B == 0, "batch must be a multiple of the per-step block"
        # zeroCrops mask (exact 0/1 multiply) + NCHW -> row-packed bf16 slab:
        # (N*(H//4), 4*W*Cin), channels fastest along lanes.
        x = crops * labels[:, :, None, None]
        x4 = x.transpose(0, 2, 3, 1).reshape(N * rp, 4 * W * cin).astype(jnp.bfloat16)

        out = pl.pallas_call(
            _regrnet_kernel,
            out_shape=jax.ShapeDtypeStruct((N, num_crops * num_outputs), jnp.float32),
            grid=(N // B,),
            in_specs=[pl.BlockSpec((B * rp, 4 * W * cin), lambda n: (n, 0))]
                     + [full(p[k]) for k in weight_names],
            out_specs=pl.BlockSpec((B, num_crops * num_outputs), lambda n: (n, 0)),
            compiler_params=pltpu.CompilerParams(
                dimension_semantics=("parallel",)),
        )(x4, *[p[k] for k in weight_names])
        return out.reshape(N, num_crops, num_outputs)

    return forward


# ----------------------------- reference (plain JAX) -------------------------

def reference_forward(crops, labels, params, num_crops, num_outputs):
    (w1, b1, w2, b2, wf1, bf1, wf2, bf2, wf3, bf3) = params
    N = crops.shape[0]
    x = crops * labels[:, :, None, None]

    def conv(x, w, b):
        y = jax.lax.conv_general_dilated(
            x, w, (1, 1), 'VALID', dimension_numbers=('NCHW', 'OIHW', 'NCHW'))
        return y + b[None, :, None, None]

    def pool(x):
        return jax.lax.reduce_window(x, -jnp.inf, jax.lax.max,
                                     (1, 1, 2, 2), (1, 1, 2, 2), 'VALID')

    h = pool(jax.nn.relu(conv(x, w1, b1)))
    h = pool(jax.nn.relu(conv(h, w2, b2)))
    h = h.reshape(N, -1)
    h = jax.nn.relu(h @ wf1 + bf1)
    h = jax.nn.relu(h @ wf2 + bf2)
    out = h @ wf3 + bf3
    return out.reshape(-1, num_crops, num_outputs)


# ----------------------------- params ----------------------------------------

def init_params(key, num_crops, num_outputs, crop_size):
    ks = jax.random.split(key, 10)

    def unif(k, shape, fan_in):
        bound = 1.0 / float(fan_in) ** 0.5
        return jax.random.uniform(k, shape, jnp.float32, -bound, bound)

    w1 = unif(ks[0], (6, num_crops, 5, 5), num_crops * 25)
    b1 = unif(ks[1], (6,), num_crops * 25)
    w2 = unif(ks[2], (16, 6, 5, 5), 6 * 25)
    b2 = unif(ks[3], (16,), 6 * 25)
    h = ((crop_size[0] - 4) // 2 - 4) // 2
    w = ((crop_size[1] - 4) // 2 - 4) // 2
    const = h * w * 16                                   # regrNet._const
    wf1 = unif(ks[4], (const, 120), const)
    bf1 = unif(ks[5], (120,), const)
    wf2 = unif(ks[6], (120, 84), 120)
    bf2 = unif(ks[7], (84,), 120)
    wf3 = unif(ks[8], (84, num_outputs * num_crops), 84)
    bf3 = unif(ks[9], (num_outputs * num_crops,), 84)
    return (w1, b1, w2, b2, wf1, bf1, wf2, bf2, wf3, bf3)


# ----------------------------- main -------------------------------------------

if __name__ == "__main__":
    # numCrops = 4 corresponds to e.g. IMG 150x150, window 100x100, step 50 (2x2 windows)
    NUM_CROPS = 4
    NUM_OUTPUTS = 3
    CROP = (28, 28)        # cropSize; regrNet._const = (((28-4)/2-4)/2)^2 * 16 = 256
    N = 32                 # total batch
    B = 16                 # batch elements per grid step (grid = 2 -> both v7x TCs busy)

    key = jax.random.PRNGKey(0)
    k_crop, k_lab, k_par = jax.random.split(key, 3)
    crops = jax.random.normal(k_crop, (N, NUM_CROPS, CROP[0], CROP[1]), jnp.float32)
    labels = (jax.random.uniform(k_lab, (N, NUM_CROPS)) > 0.3).astype(jnp.float32)
    params = init_params(k_par, NUM_CROPS, NUM_OUTPUTS, CROP)

    prep = prepare(params, CROP, NUM_CROPS, batch_block=B)
    forward = make_forward(prep, NUM_CROPS, NUM_OUTPUTS)

    out = jax.block_until_ready(forward(crops, labels))

    ref = reference_forward(crops, labels, params, NUM_CROPS, NUM_OUTPUTS)
    assert out.shape == (N, NUM_CROPS, NUM_OUTPUTS), out.shape
    assert bool(jnp.all(jnp.isfinite(out)))
    max_err = float(jnp.max(jnp.abs(out - ref)))
    assert bool(jnp.allclose(out, ref, rtol=2e-2, atol=2e-2)), max_err
    print("KERNEL_OK")
</pallas_src>

<mosaic_0001>
module attributes {stable_mosaic.version = 11 : i64} {
  func.func @_regrnet_kernel(%arg0: i32, %arg1: memref<112x448xbf16, #tpu.memory_space<vmem>>, %arg2: memref<8x448x144xbf16, #tpu.memory_space<vmem>>, %arg3: memref<1x144xf32, #tpu.memory_space<vmem>>, %arg4: memref<12x144x64xbf16, #tpu.memory_space<vmem>>, %arg5: memref<1x64xf32, #tpu.memory_space<vmem>>, %arg6: memref<4x64x120xbf16, #tpu.memory_space<vmem>>, %arg7: memref<1x120xf32, #tpu.memory_space<vmem>>, %arg8: memref<120x84xbf16, #tpu.memory_space<vmem>>, %arg9: memref<1x84xf32, #tpu.memory_space<vmem>>, %arg10: memref<84x12xbf16, #tpu.memory_space<vmem>>, %arg11: memref<1x12xf32, #tpu.memory_space<vmem>>, %arg12: memref<16x106xf32, #tpu.memory_space<vmem>>, %arg13: memref<16x12xf32, #tpu.memory_space<vmem>>) attributes {dimension_semantics = [#tpu.dimension_semantics<parallel>], iteration_bounds = array<i64: 2>, scalar_prefetch = 0 : i64, scratch_operands = 0 : i64, tpu.core_type = #tpu.core_type<tc>, window_params = [{transform_indices = @transform_0, window_bounds = array<i64: 112, 448>}, {pipeline_mode = #tpu.pipeline_mode<synchronous>, transform_indices = @transform_1, window_bounds = array<i64: 8, 448, 144>}, {pipeline_mode = #tpu.pipeline_mode<synchronous>, transform_indices = @transform_2, window_bounds = array<i64: 1, 144>}, {pipeline_mode = #tpu.pipeline_mode<synchronous>, transform_indices = @transform_3, window_bounds = array<i64: 12, 144, 64>}, {pipeline_mode = #tpu.pipeline_mode<synchronous>, transform_indices = @transform_4, window_bounds = array<i64: 1, 64>}, {pipeline_mode = #tpu.pipeline_mode<synchronous>, transform_indices = @transform_5, window_bounds = array<i64: 4, 64, 120>}, {pipeline_mode = #tpu.pipeline_mode<synchronous>, transform_indices = @transform_6, window_bounds = array<i64: 1, 120>}, {pipeline_mode = #tpu.pipeline_mode<synchronous>, transform_indices = @transform_7, window_bounds = array<i64: 120, 84>}, {pipeline_mode = #tpu.pipeline_mode<synchronous>, transform_indices = @transform_8, window_bounds = array<i64: 1, 84>}, {pipeline_mode = #tpu.pipeline_mode<synchronous>, transform_indices = @transform_9, window_bounds = array<i64: 84, 12>}, {pipeline_mode = #tpu.pipeline_mode<synchronous>, transform_indices = @transform_10, window_bounds = array<i64: 1, 12>}, {pipeline_mode = #tpu.pipeline_mode<synchronous>, transform_indices = @transform_11, window_bounds = array<i64: 16, 106>}, {transform_indices = @transform_12, window_bounds = array<i64: 16, 12>}]} {
    %c0 = arith.constant 0 : index
    %c0_0 = arith.constant 0 : index
    %0 = vector.load %arg1[%c0, %c0_0] : memref<112x448xbf16, #tpu.memory_space<vmem>>, vector<112x448xbf16>
    %1 = vector.extract_strided_slice %0 {offsets = [0, 0], sizes = [111, 448], strides = [1, 1]} : vector<112x448xbf16> to vector<111x448xbf16>
    %c0_1 = arith.constant 0 : index
    %c0_2 = arith.constant 0 : index
    %c0_3 = arith.constant 0 : index
    %2 = vector.load %arg2[%c0_1, %c0_2, %c0_3] : memref<8x448x144xbf16, #tpu.memory_space<vmem>>, vector<1x448x144xbf16>
    %3 = vector.shape_cast %2 : vector<1x448x144xbf16> to vector<448x144xbf16>
    %cst = arith.constant dense<0.000000e+00> : vector<111x144xf32>
    %4 = tpu.matmul %1, %3, %cst {dimension_numbers = #tpu.dot_dimension_numbers<[1], [0], [0], [1], [0, 0, 1, 1], [], []>} : vector<111x448xbf16>, vector<448x144xbf16>, vector<111x144xf32> -> vector<111x144xf32>
    %5 = vector.extract_strided_slice %0 {offsets = [1, 0], sizes = [111, 448], strides = [1, 1]} : vector<112x448xbf16> to vector<111x448xbf16>
    %c1 = arith.constant 1 : index
    %c0_4 = arith.constant 0 : index
    %c0_5 = arith.constant 0 : index
    %6 = vector.load %arg2[%c1, %c0_4, %c0_5] : memref<8x448x144xbf16, #tpu.memory_space<vmem>>, vector<1x448x144xbf16>
    %7 = vector.shape_cast %6 : vector<1x448x144xbf16> to vector<448x144xbf16>
    %cst_6 = arith.constant dense<0.000000e+00> : vector<111x144xf32>
    %8 = tpu.matmul %5, %7, %cst_6 {dimension_numbers = #tpu.dot_dimension_numbers<[1], [0], [0], [1], [0, 0, 1, 1], [], []>} : vector<111x448xbf16>, vector<448x144xbf16>, vector<111x144xf32> -> vector<111x144xf32>
    %9 = arith.addf %4, %8 : vector<111x144xf32>
    %10 = vector.extract_strided_slice %0 {offsets = [0, 0], sizes = [111, 448], strides = [1, 1]} : vector<112x448xbf16> to vector<111x448xbf16>
    %c2 = arith.constant 2 : index
    %c0_7 = arith.constant 0 : index
    %c0_8 = arith.constant 0 : index
    %11 = vector.load %arg2[%c2, %c0_7, %c0_8] : memref<8x448x144xbf16, #tpu.memory_space<vmem>>, vector<1x448x144xbf16>
    %12 = vector.shape_cast %11 : vector<1x448x144xbf16> to vector<448x144xbf16>
    %cst_9 = arith.constant dense<0.000000e+00> : vector<111x144xf32>
    %13 = tpu.matmul %10, %12, %cst_9 {dimension_numbers = #tpu.dot_dimension_numbers<[1], [0], [0], [1], [0, 0, 1, 1], [], []>} : vector<111x448xbf16>, vector<448x144xbf16>, vector<111x144xf32> -> vector<111x144xf32>
    %14 = vector.extract_strided_slice %0 {offsets = [1, 0], sizes = [111, 448], strides = [1, 1]} : vector<112x448xbf16> to vector<111x448xbf16>
    %c3 = arith.constant 3 : index
    %c0_10 = arith.constant 0 : index
    %c0_11 = arith.constant 0 : index
    %15 = vector.load %arg2[%c3, %c0_10, %c0_11] : memref<8x448x144xbf16, #tpu.memory_space<vmem>>, vector<1x448x144xbf16>
    %16 = vector.shape_cast %15 : vector<1x448x144xbf16> to vector<448x144xbf16>
    %cst_12 = arith.constant dense<0.000000e+00> : vector<111x144xf32>
    %17 = tpu.matmul %14, %16, %cst_12 {dimension_numbers = #tpu.dot_dimension_numbers<[1], [0], [0], [1], [0, 0, 1, 1], [], []>} : vector<111x448xbf16>, vector<448x144xbf16>, vector<111x144xf32> -> vector<111x144xf32>
    %18 = arith.addf %13, %17 : vector<111x144xf32>
    %19 = arith.maximumf %9, %18 : vector<111x144xf32>
    %20 = vector.extract_strided_slice %0 {offsets = [0, 0], sizes = [111, 448], strides = [1, 1]} : vector<112x448xbf16> to vector<111x448xbf16>
    %c4 = arith.constant 4 : index
    %c0_13 = arith.constant 0 : index
    %c0_14 = arith.constant 0 : index
    %21 = vector.load %arg2[%c4, %c0_13, %c0_14] : memref<8x448x144xbf16, #tpu.memory_space<vmem>>, vector<1x448x144xbf16>
    %22 = vector.shape_cast %21 : vector<1x448x144xbf16> to vector<448x144xbf16>
    %cst_15 = arith.constant dense<0.000000e+00> : vector<111x144xf32>
    %23 = tpu.matmul %20, %22, %cst_15 {dimension_numbers = #tpu.dot_dimension_numbers<[1], [0], [0], [1], [0, 0, 1, 1], [], []>} : vector<111x448xbf16>, vector<448x144xbf16>, vector<111x144xf32> -> vector<111x144xf32>
    %24 = vector.extract_strided_slice %0 {offsets = [1, 0], sizes = [111, 448], strides = [1, 1]} : vector<112x448xbf16> to vector<111x448xbf16>
    %c5 = arith.constant 5 : index
    %c0_16 = arith.constant 0 : index
    %c0_17 = arith.constant 0 : index
    %25 = vector.load %arg2[%c5, %c0_16, %c0_17] : memref<8x448x144xbf16, #tpu.memory_space<vmem>>, vector<1x448x144xbf16>
    %26 = vector.shape_cast %25 : vector<1x448x144xbf16> to vector<448x144xbf16>
    %cst_18 = arith.constant dense<0.000000e+00> : vector<111x144xf32>
    %27 = tpu.matmul %24, %26, %cst_18 {dimension_numbers = #tpu.dot_dimension_numbers<[1], [0], [0], [1], [0, 0, 1, 1], [], []>} : vector<111x448xbf16>, vector<448x144xbf16>, vector<111x144xf32> -> vector<111x144xf32>
    %28 = arith.addf %23, %27 : vector<111x144xf32>
    %29 = arith.maximumf %19, %28 : vector<111x144xf32>
    %30 = vector.extract_strided_slice %0 {offsets = [0, 0], sizes = [111, 448], strides = [1, 1]} : vector<112x448xbf16> to vector<111x448xbf16>
    %c6 = arith.constant 6 : index
    %c0_19 = arith.constant 0 : index
    %c0_20 = arith.constant 0 : index
    %31 = vector.load %arg2[%c6, %c0_19, %c0_20] : memref<8x448x144xbf16, #tpu.memory_space<vmem>>, vector<1x448x144xbf16>
    %32 = vector.shape_cast %31 : vector<1x448x144xbf16> to vector<448x144xbf16>
    %cst_21 = arith.constant dense<0.000000e+00> : vector<111x144xf32>
    %33 = tpu.matmul %30, %32, %cst_21 {dimension_numbers = #tpu.dot_dimension_numbers<[1], [0], [0], [1], [0, 0, 1, 1], [], []>} : vector<111x448xbf16>, vector<448x144xbf16>, vector<111x144xf32> -> vector<111x144xf32>
    %34 = vector.extract_strided_slice %0 {offsets = [1, 0], sizes = [111, 448], strides = [1, 1]} : vector<112x448xbf16> to vector<111x448xbf16>
    %c7 = arith.constant 7 : index
    %c0_22 = arith.constant 0 : index
    %c0_23 = arith.constant 0 : index
    %35 = vector.load %arg2[%c7, %c0_22, %c0_23] : memref<8x448x144xbf16, #tpu.memory_space<vmem>>, vector<1x448x144xbf16>
    %36 = vector.shape_cast %35 : vector<1x448x144xbf16> to vector<448x144xbf16>
    %cst_24 = arith.constant dense<0.000000e+00> : vector<111x144xf32>
    %37 = tpu.matmul %34, %36, %cst_24 {dimension_numbers = #tpu.dot_dimension_numbers<[1], [0], [0], [1], [0, 0, 1, 1], [], []>} : vector<111x448xbf16>, vector<448x144xbf16>, vector<111x144xf32> -> vector<111x144xf32>
    %38 = arith.addf %33, %37 : vector<111x144xf32>
    %39 = arith.maximumf %29, %38 : vector<111x144xf32>
    %c0_25 = arith.constant 0 : index
    %c0_26 = arith.constant 0 : index
    %40 = vector.load %arg3[%c0_25, %c0_26] : memref<1x144xf32, #tpu.memory_space<vmem>>, vector<1x144xf32>
    %41 = vector.broadcast %40 : vector<1x144xf32> to vector<111x144xf32>
    %42 = arith.addf %39, %41 : vector<111x144xf32>
    %cst_27 = arith.constant 0.000000e+00 : f32
    %43 = vector.broadcast %cst_27 : f32 to vector<111x144xf32>
    %44 = arith.maximumf %42, %43 : vector<111x144xf32>
    %45 = arith.truncf %44 : vector<111x144xf32> to vector<111x144xbf16>
    %46 = vector.extract_strided_slice %45 {offsets = [0, 0], sizes = [109, 144], strides = [1, 1]} : vector<111x144xbf16> to vector<109x144xbf16>
    %c0_28 = arith.constant 0 : index
    %c0_29 = arith.constant 0 : index
    %c0_30 = arith.constant 0 : index
    %47 = vector.load %arg4[%c0_28, %c0_29, %c0_30] : memref<12x144x64xbf16, #tpu.memory_space<vmem>>, vector<1x144x64xbf16>
    %48 = vector.shape_cast %47 : vector<1x144x64xbf16> to vector<144x64xbf16>
    %cst_31 = arith.constant dense<0.000000e+00> : vector<109x64xf32>
    %49 = tpu.matmul %46, %48, %cst_31 {dimension_numbers = #tpu.dot_dimension_numbers<[1], [0], [0], [1], [0, 0, 1, 1], [], []>} : vector<109x144xbf16>, vector<144x64xbf16>, vector<109x64xf32> -> vector<109x64xf32>
    %50 = vector.extract_strided_slice %45 {offsets = [1, 0], sizes = [109, 144], strides = [1, 1]} : vector<111x144xbf16> to vector<109x144xbf16>
    %c1_32 = arith.constant 1 : index
    %c0_33 = arith.constant 0 : index
    %c0_34 = arith.constant 0 : index
    %51 = vector.load %arg4[%c1_32, %c0_33, %c0_34] : memref<12x144x64xbf16, #tpu.memory_space<vmem>>, vector<1x144x64xbf16>
    %52 = vector.shape_cast %51 : vector<1x144x64xbf16> to vector<144x64xbf16>
    %cst_35 = arith.constant dense<0.000000e+00> : vector<109x64xf32>
    %53 = tpu.matmul %50, %52, %cst_35 {dimension_numbers = #tpu.dot_dimension_numbers<[1], [0], [0], [1], [0, 0, 1, 1], [], []>} : vector<109x144xbf16>, vector<144x64xbf16>, vector<109x64xf32> -> vector<109x64xf32>
    %54 = arith.addf %49, %53 : vector<109x64xf32>
    %55 = vector.extract_strided_slice %45 {offsets = [2, 0], sizes = [109, 144], strides = [1, 1]} : vector<111x144xbf16> to vector<109x144xbf16>
    %c2_36 = arith.constant 2 : index
    %c0_37 = arith.constant 0 : index
    %c0_38 = arith.constant 0 : index
    %56 = vector.load %arg4[%c2_36, %c0_37, %c0_38] : memref<12x144x64xbf16, #tpu.memory_space<vmem>>, vector<1x144x64xbf16>
    %57 = vector.shape_cast %56 : vector<1x144x64xbf16> to vector<144x64xbf16>
    %cst_39 = arith.constant dense<0.000000e+00> : vector<109x64xf32>
    %58 = tpu.matmul %55, %57, %cst_39 {dimension_numbers = #tpu.dot_dimension_numbers<[1], [0], [0], [1], [0, 0, 1, 1], [], []>} : vector<109x144xbf16>, vector<144x64xbf16>, vector<109x64xf32> -> vector<109x64xf32>
    %59 = arith.addf %54, %58 : vector<109x64xf32>
    %60 = vector.extract_strided_slice %45 {offsets = [0, 0], sizes = [109, 144], strides = [1, 1]} : vector<111x144xbf16> to vector<109x144xbf16>
    %c3_40 = arith.constant 3 : index
    %c0_41 = arith.constant 0 : index
    %c0_42 = arith.constant 0 : index
    %61 = vector.load %arg4[%c3_40, %c0_41, %c0_42] : memref<12x144x64xbf16, #tpu.memory_space<vmem>>, vector<1x144x64xbf16>
    %62 = vector.shape_cast %61 : vector<1x144x64xbf16> to vector<144x64xbf16>
    %cst_43 = arith.constant dense<0.000000e+00> : vector<109x64xf32>
    %63 = tpu.matmul %60, %62, %cst_43 {dimension_numbers = #tpu.dot_dimension_numbers<[1], [0], [0], [1], [0, 0, 1, 1], [], []>} : vector<109x144xbf16>, vector<144x64xbf16>, vector<109x64xf32> -> vector<109x64xf32>
    %64 = vector.extract_strided_slice %45 {offsets = [1, 0], sizes = [109, 144], strides = [1, 1]} : vector<111x144xbf16> to vector<109x144xbf16>
    %c4_44 = arith.constant 4 : index
    %c0_45 = arith.constant 0 : index
    %c0_46 = arith.constant 0 : index
    %65 = vector.load %arg4[%c4_44, %c0_45, %c0_46] : memref<12x144x64xbf16, #tpu.memory_space<vmem>>, vector<1x144x64xbf16>
    %66 = vector.shape_cast %65 : vector<1x144x64xbf16> to vector<144x64xbf16>
    %cst_47 = arith.constant dense<0.000000e+00> : vector<109x64xf32>
    %67 = tpu.matmul %64, %66, %cst_47 {dimension_numbers = #tpu.dot_dimension_numbers<[1], [0], [0], [1], [0, 0, 1, 1], [], []>} : vector<109x144xbf16>, vector<144x64xbf16>, vector<109x64xf32> -> vector<109x64xf32>
    %68 = arith.addf %63, %67 : vector<109x64xf32>
    %69 = vector.extract_strided_slice %45 {offsets = [2, 0], sizes = [109, 144], strides = [1, 1]} : vector<111x144xbf16> to vector<109x144xbf16>
    %c5_48 = arith.constant 5 : index
    %c0_49 = arith.constant 0 : index
    %c0_50 = arith.constant 0 : index
    %70 = vector.load %arg4[%c5_48, %c0_49, %c0_50] : memref<12x144x64xbf16, #tpu.memory_space<vmem>>, vector<1x144x64xbf16>
    %71 = vector.shape_cast %70 : vector<1x144x64xbf16> to vector<144x64xbf16>
    %cst_51 = arith.constant dense<0.000000e+00> : vector<109x64xf32>
    %72 = tpu.matmul %69, %71, %cst_51 {dimension_numbers = #tpu.dot_dimension_numbers<[1], [0], [0], [1], [0, 0, 1, 1], [], []>} : vector<109x144xbf16>, vector<144x64xbf16>, vector<109x64xf32> -> vector<109x64xf32>
    %73 = arith.addf %68, %72 : vector<109x64xf32>
    %74 = arith.maximumf %59, %73 : vector<109x64xf32>
    %75 = vector.extract_strided_slice %45 {offsets = [0, 0], sizes = [109, 144], strides = [1, 1]} : vector<111x144xbf16> to vector<109x144xbf16>
    %c6_52 = arith.constant 6 : index
    %c0_53 = arith.constant 0 : index
    %c0_54 = arith.constant 0 : index
    %76 = vector.load %arg4[%c6_52, %c0_53, %c0_54] : memref<12x144x64xbf16, #tpu.memory_space<vmem>>, vector<1x144x64xbf16>
    %77 = vector.shape_cast %76 : vector<1x144x64xbf16> to vector<144x64xbf16>
    %cst_55 = arith.constant dense<0.000000e+00> : vector<109x64xf32>
    %78 = tpu.matmul %75, %77, %cst_55 {dimension_numbers = #tpu.dot_dimension_numbers<[1], [0], [0], [1], [0, 0, 1, 1], [], []>} : vector<109x144xbf16>, vector<144x64xbf16>, vector<109x64xf32> -> vector<109x64xf32>
    %79 = vector.extract_strided_slice %45 {offsets = [1, 0], sizes = [109, 144], strides = [1, 1]} : vector<111x144xbf16> to vector<109x144xbf16>
    %c7_56 = arith.constant 7 : index
    %c0_57 = arith.constant 0 : index
    %c0_58 = arith.constant 0 : index
    %80 = vector.load %arg4[%c7_56, %c0_57, %c0_58] : memref<12x144x64xbf16, #tpu.memory_space<vmem>>, vector<1x144x64xbf16>
    %81 = vector.shape_cast %80 : vector<1x144x64xbf16> to vector<144x64xbf16>
    %cst_59 = arith.constant dense<0.000000e+00> : vector<109x64xf32>
    %82 = tpu.matmul %79, %81, %cst_59 {dimension_numbers = #tpu.dot_dimension_numbers<[1], [0], [0], [1], [0, 0, 1, 1], [], []>} : vector<109x144xbf16>, vector<144x64xbf16>, vector<109x64xf32> -> vector<109x64xf32>
    %83 = arith.addf %78, %82 : vector<109x64xf32>
    %84 = vector.extract_strided_slice %45 {offsets = [2, 0], sizes = [109, 144], strides = [1, 1]} : vector<111x144xbf16> to vector<109x144xbf16>
    %c8 = arith.constant 8 : index
    %c0_60 = arith.constant 0 : index
    %c0_61 = arith.constant 0 : index
    %85 = vector.load %arg4[%c8, %c0_60, %c0_61] : memref<12x144x64xbf16, #tpu.memory_space<vmem>>, vector<1x144x64xbf16>
    %86 = vector.shape_cast %85 : vector<1x144x64xbf16> to vector<144x64xbf16>
    %cst_62 = arith.constant dense<0.000000e+00> : vector<109x64xf32>
    %87 = tpu.matmul %84, %86, %cst_62 {dimension_numbers = #tpu.dot_dimension_numbers<[1], [0], [0], [1], [0, 0, 1, 1], [], []>} : vector<109x144xbf16>, vector<144x64xbf16>, vector<109x64xf32> -> vector<109x64xf32>
    %88 = arith.addf %83, %87 : vector<109x64xf32>
    %89 = arith.maximumf %74, %88 : vector<109x64xf32>
    %90 = vector.extract_strided_slice %45 {offsets = [0, 0], sizes = [109, 144], strides = [1, 1]} : vector<111x144xbf16> to vector<109x144xbf16>
    %c9 = arith.constant 9 : index
    %c0_63 = arith.constant 0 : index
    %c0_64 = arith.constant 0 : index
    %91 = vector.load %arg4[%c9, %c0_63, %c0_64] : memref<12x144x64xbf16, #tpu.memory_space<vmem>>, vector<1x144x64xbf16>
    %92 = vector.shape_cast %91 : vector<1x144x64xbf16> to vector<144x64xbf16>
    %cst_65 = arith.constant dense<0.000000e+00> : vector<109x64xf32>
    %93 = tpu.matmul %90, %92, %cst_65 {dimension_numbers = #tpu.dot_dimension_numbers<[1], [0], [0], [1], [0, 0, 1, 1], [], []>} : vector<109x144xbf16>, vector<144x64xbf16>, vector<109x64xf32> -> vector<109x64xf32>
    %94 = vector.extract_strided_slice %45 {offsets = [1, 0], sizes = [109, 144], strides = [1, 1]} : vector<111x144xbf16> to vector<109x144xbf16>
    %c10 = arith.constant 10 : index
    %c0_66 = arith.constant 0 : index
    %c0_67 = arith.constant 0 : index
    %95 = vector.load %arg4[%c10, %c0_66, %c0_67] : memref<12x144x64xbf16, #tpu.memory_space<vmem>>, vector<1x144x64xbf16>
    %96 = vector.shape_cast %95 : vector<1x144x64xbf16> to vector<144x64xbf16>
    %cst_68 = arith.constant dense<0.000000e+00> : vector<109x64xf32>
    %97 = tpu.matmul %94, %96, %cst_68 {dimension_numbers = #tpu.dot_dimension_numbers<[1], [0], [0], [1], [0, 0, 1, 1], [], []>} : vector<109x144xbf16>, vector<144x64xbf16>, vector<109x64xf32> -> vector<109x64xf32>
    %98 = arith.addf %93, %97 : vector<109x64xf32>
    %99 = vector.extract_strided_slice %45 {offsets = [2, 0], sizes = [109, 144], strides = [1, 1]} : vector<111x144xbf16> to vector<109x144xbf16>
    %c11 = arith.constant 11 : index
    %c0_69 = arith.constant 0 : index
    %c0_70 = arith.constant 0 : index
    %100 = vector.load %arg4[%c11, %c0_69, %c0_70] : memref<12x144x64xbf16, #tpu.memory_space<vmem>>, vector<1x144x64xbf16>
    %101 = vector.shape_cast %100 : vector<1x144x64xbf16> to vector<144x64xbf16>
    %cst_71 = arith.constant dense<0.000000e+00> : vector<109x64xf32>
    %102 = tpu.matmul %99, %101, %cst_71 {dimension_numbers = #tpu.dot_dimension_numbers<[1], [0], [0], [1], [0, 0, 1, 1], [], []>} : vector<109x144xbf16>, vector<144x64xbf16>, vector<109x64xf32> -> vector<109x64xf32>
    %103 = arith.addf %98, %102 : vector<109x64xf32>
    %104 = arith.maximumf %89, %103 : vector<109x64xf32>
    %c0_72 = arith.constant 0 : index
    %c0_73 = arith.constant 0 : index
    %105 = vector.load %arg5[%c0_72, %c0_73] : memref<1x64xf32, #tpu.memory_space<vmem>>, vector<1x64xf32>
    %106 = vector.broadcast %105 : vector<1x64xf32> to vector<109x64xf32>
    %107 = arith.addf %104, %106 : vector<109x64xf32>
    %cst_74 = arith.constant 0.000000e+00 : f32
    %108 = vector.broadcast %cst_74 : f32 to vector<109x64xf32>
    %109 = arith.maximumf %107, %108 : vector<109x64xf32>
    %110 = arith.truncf %109 : vector<109x64xf32> to vector<109x64xbf16>
    %111 = vector.extract_strided_slice %110 {offsets = [0, 0], sizes = [106, 64], strides = [1, 1]} : vector<109x64xbf16> to vector<106x64xbf16>
    %c0_75 = arith.constant 0 : index
    %c0_76 = arith.constant 0 : index
    %c0_77 = arith.constant 0 : index
    %112 = vector.load %arg6[%c0_75, %c0_76, %c0_77] : memref<4x64x120xbf16, #tpu.memory_space<vmem>>, vector<1x64x120xbf16>
    %113 = vector.shape_cast %112 : vector<1x64x120xbf16> to vector<64x120xbf16>
    %cst_78 = arith.constant dense<0.000000e+00> : vector<106x120xf32>
    %114 = tpu.matmul %111, %113, %cst_78 {dimension_numbers = #tpu.dot_dimension_numbers<[1], [0], [0], [1], [0, 0, 1, 1], [], []>} : vector<106x64xbf16>, vector<64x120xbf16>, vector<106x120xf32> -> vector<106x120xf32>
    %115 = vector.extract_strided_slice %110 {offsets = [1, 0], sizes = [106, 64], strides = [1, 1]} : vector<109x64xbf16> to vector<106x64xbf16>
    %c1_79 = arith.constant 1 : index
    %c0_80 = arith.constant 0 : index
    %c0_81 = arith.constant 0 : index
    %116 = vector.load %arg6[%c1_79, %c0_80, %c0_81] : memref<4x64x120xbf16, #tpu.memory_space<vmem>>, vector<1x64x120xbf16>
    %117 = vector.shape_cast %116 : vector<1x64x120xbf16> to vector<64x120xbf16>
    %cst_82 = arith.constant dense<0.000000e+00> : vector<106x120xf32>
    %118 = tpu.matmul %115, %117, %cst_82 {dimension_numbers = #tpu.dot_dimension_numbers<[1], [0], [0], [1], [0, 0, 1, 1], [], []>} : vector<106x64xbf16>, vector<64x120xbf16>, vector<106x120xf32> -> vector<106x120xf32>
    %119 = arith.addf %114, %118 : vector<106x120xf32>
    %120 = vector.extract_strided_slice %110 {offsets = [2, 0], sizes = [106, 64], strides = [1, 1]} : vector<109x64xbf16> to vector<106x64xbf16>
    %c2_83 = arith.constant 2 : index
    %c0_84 = arith.constant 0 : index
    %c0_85 = arith.constant 0 : index
    %121 = vector.load %arg6[%c2_83, %c0_84, %c0_85] : memref<4x64x120xbf16, #tpu.memory_space<vmem>>, vector<1x64x120xbf16>
    %122 = vector.shape_cast %121 : vector<1x64x120xbf16> to vector<64x120xbf16>
    %cst_86 = arith.constant dense<0.000000e+00> : vector<106x120xf32>
    %123 = tpu.matmul %120, %122, %cst_86 {dimension_numbers = #tpu.dot_dimension_numbers<[1], [0], [0], [1], [0, 0, 1, 1], [], []>} : vector<106x64xbf16>, vector<64x120xbf16>, vector<106x120xf32> -> vector<106x120xf32>
    %124 = arith.addf %119, %123 : vector<106x120xf32>
    %125 = vector.extract_strided_slice %110 {offsets = [3, 0], sizes = [106, 64], strides = [1, 1]} : vector<109x64xbf16> to vector<106x64xbf16>
    %c3_87 = arith.constant 3 : index
    %c0_88 = arith.constant 0 : index
    %c0_89 = arith.constant 0 : index
    %126 = vector.load %arg6[%c3_87, %c0_88, %c0_89] : memref<4x64x120xbf16, #tpu.memory_space<vmem>>, vector<1x64x120xbf16>
    %127 = vector.shape_cast %126 : vector<1x64x120xbf16> to vector<64x120xbf16>
    %cst_90 = arith.constant dense<0.000000e+00> : vector<106x120xf32>
    %128 = tpu.matmul %125, %127, %cst_90 {dimension_numbers = #tpu.dot_dimension_numbers<[1], [0], [0], [1], [0, 0, 1, 1], [], []>} : vector<106x64xbf16>, vector<64x120xbf16>, vector<106x120xf32> -> vector<106x120xf32>
    %129 = arith.addf %124, %128 : vector<106x120xf32>
    %c0_91 = arith.constant 0 : index
    %c0_92 = arith.constant 0 : index
    %130 = vector.load %arg12[%c0_91, %c0_92] : memref<16x106xf32, #tpu.memory_space<vmem>>, vector<16x106xf32>
    %cst_93 = arith.constant dense<0.000000e+00> : vector<16x120xf32>
    %131 = tpu.matmul %130, %129, %cst_93 {dimension_numbers = #tpu.dot_dimension_numbers<[1], [0], [0], [1], [0, 0, 1, 1], [], []>} : vector<16x106xf32>, vector<106x120xf32>, vector<16x120xf32> -> vector<16x120xf32>
    %c0_94 = arith.constant 0 : index
    %c0_95 = arith.constant 0 : index
    %132 = vector.load %arg7[%c0_94, %c0_95] : memref<1x120xf32, #tpu.memory_space<vmem>>, vector<1x120xf32>
    %133 = vector.broadcast %132 : vector<1x120xf32> to vector<16x120xf32>
    %134 = arith.addf %131, %133 : vector<16x120xf32>
    %cst_96 = arith.constant 0.000000e+00 : f32
    %135 = vector.broadcast %cst_96 : f32 to vector<16x120xf32>
    %136 = arith.maximumf %134, %135 : vector<16x120xf32>
    %137 = arith.truncf %136 : vector<16x120xf32> to vector<16x120xbf16>
    %c0_97 = arith.constant 0 : index
    %c0_98 = arith.constant 0 : index
    %138 = vector.load %arg8[%c0_97, %c0_98] : memref<120x84xbf16, #tpu.memory_space<vmem>>, vector<120x84xbf16>
    %cst_99 = arith.constant dense<0.000000e+00> : vector<16x84xf32>
    %139 = tpu.matmul %137, %138, %cst_99 {dimension_numbers = #tpu.dot_dimension_numbers<[1], [0], [0], [1], [0, 0, 1, 1], [], []>} : vector<16x120xbf16>, vector<120x84xbf16>, vector<16x84xf32> -> vector<16x84xf32>
    %c0_100 = arith.constant 0 : index
    %c0_101 = arith.constant 0 : index
    %140 = vector.load %arg9[%c0_100, %c0_101] : memref<1x84xf32, #tpu.memory_space<vmem>>, vector<1x84xf32>
    %141 = vector.broadcast %140 : vector<1x84xf32> to vector<16x84xf32>
    %142 = arith.addf %139, %141 : vector<16x84xf32>
    %cst_102 = arith.constant 0.000000e+00 : f32
    %143 = vector.broadcast %cst_102 : f32 to vector<16x84xf32>
    %144 = arith.maximumf %142, %143 : vector<16x84xf32>
    %145 = arith.truncf %144 : vector<16x84xf32> to vector<16x84xbf16>
    %c0_103 = arith.constant 0 : index
    %c0_104 = arith.constant 0 : index
    %146 = vector.load %arg10[%c0_103, %c0_104] : memref<84x12xbf16, #tpu.memory_space<vmem>>, vector<84x12xbf16>
    %cst_105 = arith.constant dense<0.000000e+00> : vector<16x12xf32>
    %147 = tpu.matmul %145, %146, %cst_105 {dimension_numbers = #tpu.dot_dimension_numbers<[1], [0], [0], [1], [0, 0, 1, 1], [], []>} : vector<16x84xbf16>, vector<84x12xbf16>, vector<16x12xf32> -> vector<16x12xf32>
    %c0_106 = arith.constant 0 : index
    %c0_107 = arith.constant 0 : index
    %148 = vector.load %arg11[%c0_106, %c0_107] : memref<1x12xf32, #tpu.memory_space<vmem>>, vector<1x12xf32>
    %149 = vector.broadcast %148 : vector<1x12xf32> to vector<16x12xf32>
    %150 = arith.addf %147, %149 : vector<16x12xf32>
    %c0_108 = arith.constant 0 : index
    %c0_109 = arith.constant 0 : index
    %151 = vector.load %arg13[%c0_108, %c0_109] : memref<16x12xf32, #tpu.memory_space<vmem>>, vector<16x12xf32>
    tpu.vector_store %arg13[%c0_108, %c0_109], %150 {strides = array<i32>} : memref<16x12xf32, #tpu.memory_space<vmem>>, vector<16x12xf32>,
    return
  }
  func.func @transform_0(%arg0: i32) -> (i32, i32) {
    %c0_i32 = arith.constant 0 : i32
    %c0_i32_0 = arith.constant 0 : i32
    return %arg0, %c0_i32 : i32, i32
  }
  func.func @transform_1(%arg0: i32) -> (i32, i32, i32) {
    %c0_i32 = arith.constant 0 : i32
    %c0_i32_0 = arith.constant 0 : i32
    %c0_i32_1 = arith.constant 0 : i32
    %c0_i32_2 = arith.constant 0 : i32
    return %c0_i32, %c0_i32_0, %c0_i32_1 : i32, i32, i32
  }
  func.func @transform_2(%arg0: i32) -> (i32, i32) {
    %c0_i32 = arith.constant 0 : i32
    %c0_i32_0 = arith.constant 0 : i32
    %c0_i32_1 = arith.constant 0 : i32
    return %c0_i32, %c0_i32_0 : i32, i32
  }
  func.func @transform_3(%arg0: i32) -> (i32, i32, i32) {
    %c0_i32 = arith.constant 0 : i32
    %c0_i32_0 = arith.constant 0 : i32
    %c0_i32_1 = arith.constant 0 : i32
    %c0_i32_2 = arith.constant 0 : i32
    return %c0_i32, %c0_i32_0, %c0_i32_1 : i32, i32, i32
  }
  func.func @transform_4(%arg0: i32) -> (i32, i32) {
    %c0_i32 = arith.constant 0 : i32
    %c0_i32_0 = arith.constant 0 : i32
    %c0_i32_1 = arith.constant 0 : i32
    return %c0_i32, %c0_i32_0 : i32, i32
  }
  func.func @transform_5(%arg0: i32) -> (i32, i32, i32) {
    %c0_i32 = arith.constant 0 : i32
    %c0_i32_0 = arith.constant 0 : i32
    %c0_i32_1 = arith.constant 0 : i32
    %c0_i32_2 = arith.constant 0 : i32
    return %c0_i32, %c0_i32_0, %c0_i32_1 : i32, i32, i32
  }
  func.func @transform_6(%arg0: i32) -> (i32, i32) {
    %c0_i32 = arith.constant 0 : i32
    %c0_i32_0 = arith.constant 0 : i32
    %c0_i32_1 = arith.constant 0 : i32
    return %c0_i32, %c0_i32_0 : i32, i32
  }
  func.func @transform_7(%arg0: i32) -> (i32, i32) {
    %c0_i32 = arith.constant 0 : i32
    %c0_i32_0 = arith.constant 0 : i32
    %c0_i32_1 = arith.constant 0 : i32
    return %c0_i32, %c0_i32_0 : i32, i32
  }
  func.func @transform_8(%arg0: i32) -> (i32, i32) {
    %c0_i32 = arith.constant 0 : i32
    %c0_i32_0 = arith.constant 0 : i32
    %c0_i32_1 = arith.constant 0 : i32
    return %c0_i32, %c0_i32_0 : i32, i32
  }
  func.func @transform_9(%arg0: i32) -> (i32, i32) {
    %c0_i32 = arith.constant 0 : i32
    %c0_i32_0 = arith.constant 0 : i32
    %c0_i32_1 = arith.constant 0 : i32
    return %c0_i32, %c0_i32_0 : i32, i32
  }
  func.func @transform_10(%arg0: i32) -> (i32, i32) {
    %c0_i32 = arith.constant 0 : i32
    %c0_i32_0 = arith.constant 0 : i32
    %c0_i32_1 = arith.constant 0 : i32
    return %c0_i32, %c0_i32_0 : i32, i32
  }
  func.func @transform_11(%arg0: i32) -> (i32, i32) {
    %c0_i32 = arith.constant 0 : i32
    %c0_i32_0 = arith.constant 0 : i32
    %c0_i32_1 = arith.constant 0 : i32
    return %c0_i32, %c0_i32_0 : i32, i32
  }
  func.func @transform_12(%arg0: i32) -> (i32, i32) {
    %c0_i32 = arith.constant 0 : i32
    %c0_i32_0 = arith.constant 0 : i32
    return %arg0, %c0_i32 : i32, i32
  }
}

</mosaic_0001>

<llo_original>
// kernel: forward.1
$region0: #{forward.1}
  #allocation0 [shape = 'u32[]', space=smem, size = 0x4, offset = 0x4, fixed_abs, tag = 'smem constant byte address 0x4 - core index']
  #allocation1 [shape = 'u32[144,128]{1,0:T(1,128)}', space=vmem, size = 0x12000, scoped, tag = 'internal scratch']
  %s0 = inlined_call_operand.vmem [shape: bf16[224,448], index: 0, kind: input, shape index: {}]
  %s1 = inlined_call_operand.vmem [shape: bf16[8,448,144], index: 1, kind: input, shape index: {}]
  %s2 = inlined_call_operand.vmem [shape: f32[1,144], index: 2, kind: input, shape index: {}]
  %s3 = inlined_call_operand.vmem [shape: bf16[12,144,64], index: 3, kind: input, shape index: {}]
  %s4 = inlined_call_operand.vmem [shape: f32[1,64], index: 4, kind: input, shape index: {}]
  %s5 = inlined_call_operand.vmem [shape: bf16[4,64,120], index: 5, kind: input, shape index: {}]
  %s6 = inlined_call_operand.vmem [shape: f32[1,120], index: 6, kind: input, shape index: {}]
  %s7 = inlined_call_operand.vmem [shape: bf16[120,84], index: 7, kind: input, shape index: {}]
  %s8 = inlined_call_operand.vmem [shape: f32[1,84], index: 8, kind: input, shape index: {}]
  %s9 = inlined_call_operand.vmem [shape: bf16[84,12], index: 9, kind: input, shape index: {}]
  %s10 = inlined_call_operand.vmem [shape: f32[1,12], index: 10, kind: input, shape index: {}]
  %s11 = inlined_call_operand.vmem [shape: f32[16,106], index: 11, kind: input, shape index: {}]
  %s12 = inlined_call_operand.vmem [shape: f32[32,12], index: 12, kind: output, shape index: {}]
  %s13 = sld [smem:[#allocation0]]
  $region81: #{forward.1} parent=0
    _
  %s15 = ssub.s32 1, %s13
  %s16 = scalar_select 0, %s15, %s13
  loop: start=0, step=1, limit=4
  $region2: #{forward.1} parent=0 // loop_pre_header
    _
  $region3: #{forward.1} parent=0 // loop_header
    %s18 = sphi 0, %s22
    %p19 = scmp.ge.s32.totalorder %s18, 4
    %s28 = sphi 0, %s30
    %s31 = sphi 0, %s28
    %s32 = sphi 0, %s31
    %s48 = sphi 0, %s32
    %s52 = sphi 0, %s52
    %s54 = sphi 0, %s52
    %s55 = sphi 0, %s54
    %s69 = sphi 0, %s55
    %s73 = sphi 0, %s73
    %s75 = sphi 0, %s73
    %s76 = sphi 0, %s75
    %s90 = sphi 0, %s76
    %s94 = sphi 0, %s94
    %s96 = sphi 0, %s94
    %s97 = sphi 0, %s96
    %s111 = sphi 0, %s97
    %s115 = sphi 0, %s115
    %s117 = sphi 0, %s115
    %s118 = sphi 0, %s117
    %s132 = sphi 0, %s118
    %s136 = sphi 0, %s136
    %s138 = sphi 0, %s136
    %s139 = sphi 0, %s138
    %s153 = sphi 0, %s139
    %s157 = sphi 0, %s157
    %s159 = sphi 0, %s157
    %s160 = sphi 0, %s159
    %s174 = sphi 0, %s160
    %s178 = sphi 0, %s178
    %s180 = sphi 0, %s178
    %s181 = sphi 0, %s180
    %s195 = sphi 0, %s181
    %s199 = sphi 0, %s199
    %s201 = sphi 0, %s199
    %s202 = sphi 0, %s201
    %s216 = sphi 0, %s202
    %s220 = sphi 0, %s220
    %s222 = sphi 0, %s220
    %s223 = sphi 0, %s222
    %s237 = sphi 0, %s223
    %s241 = sphi 0, %s241
    %s243 = sphi 0, %s241
    %s244 = sphi 0, %s243
    %s258 = sphi 0, %s244
    %s262 = sphi 0, %s262
    %s264 = sphi 0, %s262
    %s265 = sphi 0, %s264
    %s279 = sphi 0, %s265
    %s285 = sphi 0, %s287
    %s288 = sphi 0, %s285
    %s289 = sphi 0, %s288
    %s305 = sphi 0, %s289
  $region4: #{forward.1} parent=0 // loop_header_branch
    %21 = sbr.rel (%p19) target = $region8
  $region5: #{forward.1} parent=0 // loop_body
    %s23 = ssub.s32 %s18, 1
    %s24 = ssub.s32 %s18, 2
    %s25 = sadd.s32 %s18, 1
    %s26 = ssub.s32 %s18, %s25
    %p27 = scmp.eq.s32.totalorder %s26, 0
    %s29 = sadd.s32 %s28, 1
    %s30 = scalar_select %p27, %s28, %s29
    %p33 = pneg %p27
    %p34 = scmp.eq.s32.totalorder %s18, 1
    %p35 = por %p33, %p34
    %p36 = scmp.ne.s32.totalorder %s28, %s31
    %p37 = scmp.eq.s32.totalorder %s18, 0
    %p38 = por %p36, %p37
    %p39 = scmp.ne.s32.totalorder %s28, %s31
    %p40 = scmp.eq.s32.totalorder %s23, 1
    %p41 = por %p39, %p40
    %p42 = scmp.ne.s32.totalorder %s31, %s32
    %p43 = scmp.eq.s32.totalorder %s23, 0
    %p44 = por %p42, %p43
    %p45 = scmp.ne.s32.totalorder %s31, %s32
    %p46 = scmp.eq.s32.totalorder %s24, 1
    %p47 = por %p45, %p46
    %p49 = scmp.ne.s32.totalorder %s32, %s48
    %p50 = scmp.eq.s32.totalorder %s24, 0
    %p51 = por %p49, %p50
    %s53 = sadd.s32 %s52, 1
    %p56 = scmp.eq.s32.totalorder %s18, 1
    %p57 = scmp.ne.s32.totalorder %s52, %s54
    %p58 = scmp.eq.s32.totalorder %s18, 0
    %p59 = por %p57, %p58
    %p60 = scmp.ne.s32.totalorder %s52, %s54
    %p61 = scmp.eq.s32.totalorder %s23, 1
    %p62 = por %p60, %p61
    %p63 = scmp.ne.s32.totalorder %s54, %s55
    %p64 = scmp.eq.s32.totalorder %s23, 0
    %p65 = por %p63, %p64
    %p66 = scmp.ne.s32.totalorder %s54, %s55
    %p67 = scmp.eq.s32.totalorder %s24, 1
    %p68 = por %p66, %p67
    %p70 = scmp.ne.s32.totalorder %s55, %s69
    %p71 = scmp.eq.s32.totalorder %s24, 0
    %p72 = por %p70, %p71
    %s74 = sadd.s32 %s73, 1
    %p77 = scmp.eq.s32.totalorder %s18, 1
    %p78 = scmp.ne.s32.totalorder %s73, %s75
    %p79 = scmp.eq.s32.totalorder %s18, 0
    %p80 = por %p78, %p79
    %p81 = scmp.ne.s32.totalorder %s73, %s75
    %p82 = scmp.eq.s32.totalorder %s23, 1
    %p83 = por %p81, %p82
    %p84 = scmp.ne.s32.totalorder %s75, %s76
    %p85 = scmp.eq.s32.totalorder %s23, 0
    %p86 = por %p84, %p85
    %p87 = scmp.ne.s32.totalorder %s75, %s76
    %p88 = scmp.eq.s32.totalorder %s24, 1
    %p89 = por %p87, %p88
    %p91 = scmp.ne.s32.totalorder %s76, %s90
    %p92 = scmp.eq.s32.totalorder %s24, 0
    %p93 = por %p91, %p92
    %s95 = sadd.s32 %s94, 1
    %p98 = scmp.eq.s32.totalorder %s18, 1
    %p99 = scmp.ne.s32.totalorder %s94, %s96
    %p100 = scmp.eq.s32.totalorder %s18, 0
    %p101 = por %p99, %p100
    %p102 = scmp.ne.s32.totalorder %s94, %s96
    %p103 = scmp.eq.s32.totalorder %s23, 1
    %p104 = por %p102, %p103
    %p105 = scmp.ne.s32.totalorder %s96, %s97
    %p106 = scmp.eq.s32.totalorder %s23, 0
    %p107 = por %p105, %p106
    %p108 = scmp.ne.s32.totalorder %s96, %s97
    %p109 = scmp.eq.s32.totalorder %s24, 1
    %p110 = por %p108, %p109
    %p112 = scmp.ne.s32.totalorder %s97, %s111
    %p113 = scmp.eq.s32.totalorder %s24, 0
    %p114 = por %p112, %p113
    %s116 = sadd.s32 %s115, 1
    %p119 = scmp.eq.s32.totalorder %s18, 1
    %p120 = scmp.ne.s32.totalorder %s115, %s117
    %p121 = scmp.eq.s32.totalorder %s18, 0
    %p122 = por %p120, %p121
    %p123 = scmp.ne.s32.totalorder %s115, %s117
    %p124 = scmp.eq.s32.totalorder %s23, 1
    %p125 = por %p123, %p124
    %p126 = scmp.ne.s32.totalorder %s117, %s118
    %p127 = scmp.eq.s32.totalorder %s23, 0
    %p128 = por %p126, %p127
    %p129 = scmp.ne.s32.totalorder %s117, %s118
    %p130 = scmp.eq.s32.totalorder %s24, 1
    %p131 = por %p129, %p130
    %p133 = scmp.ne.s32.totalorder %s118, %s132
    %p134 = scmp.eq.s32.totalorder %s24, 0
    %p135 = por %p133, %p134
    %s137 = sadd.s32 %s136, 1
    %p140 = scmp.eq.s32.totalorder %s18, 1
    %p141 = scmp.ne.s32.totalorder %s136, %s138
    %p142 = scmp.eq.s32.totalorder %s18, 0
    %p143 = por %p141, %p142
    %p144 = scmp.ne.s32.totalorder %s136, %s138
    %p145 = scmp.eq.s32.totalorder %s23, 1
    %p146 = por %p144, %p145
    %p147 = scmp.ne.s32.totalorder %s138, %s139
    %p148 = scmp.eq.s32.totalorder %s23, 0
    %p149 = por %p147, %p148
    %p150 = scmp.ne.s32.totalorder %s138, %s139
    %p151 = scmp.eq.s32.totalorder %s24, 1
    %p152 = por %p150, %p151
    %p154 = scmp.ne.s32.totalorder %s139, %s153
    %p155 = scmp.eq.s32.totalorder %s24, 0
    %p156 = por %p154, %p155
    %s158 = sadd.s32 %s157, 1
    %p161 = scmp.eq.s32.totalorder %s18, 1
    %p162 = scmp.ne.s32.totalorder %s157, %s159
    %p163 = scmp.eq.s32.totalorder %s18, 0
    %p164 = por %p162, %p163
    %p165 = scmp.ne.s32.totalorder %s157, %s159
    %p166 = scmp.eq.s32.totalorder %s23, 1
    %p167 = por %p165, %p166
    %p168 = scmp.ne.s32.totalorder %s159, %s160
    %p169 = scmp.eq.s32.totalorder %s23, 0
    %p170 = por %p168, %p169
    %p171 = scmp.ne.s32.totalorder %s159, %s160
    %p172 = scmp.eq.s32.totalorder %s24, 1
    %p173 = por %p171, %p172
    %p175 = scmp.ne.s32.totalorder %s160, %s174
    %p176 = scmp.eq.s32.totalorder %s24, 0
    %p177 = por %p175, %p176
    %s179 = sadd.s32 %s178, 1
    %p182 = scmp.eq.s32.totalorder %s18, 1
    %p183 = scmp.ne.s32.totalorder %s178, %s180
    %p184 = scmp.eq.s32.totalorder %s18, 0
    %p185 = por %p183, %p184
    %p186 = scmp.ne.s32.totalorder %s178, %s180
    %p187 = scmp.eq.s32.totalorder %s23, 1
    %p188 = por %p186, %p187
    %p189 = scmp.ne.s32.totalorder %s180, %s181
    %p190 = scmp.eq.s32.totalorder %s23, 0
    %p191 = por %p189, %p190
    %p192 = scmp.ne.s32.totalorder %s180, %s181
    %p193 = scmp.eq.s32.totalorder %s24, 1
    %p194 = por %p192, %p193
    %p196 = scmp.ne.s32.totalorder %s181, %s195
    %p197 = scmp.eq.s32.totalorder %s24, 0
    %p198 = por %p196, %p197
    %s200 = sadd.s32 %s199, 1
    %p203 = scmp.eq.s32.totalorder %s18, 1
    %p204 = scmp.ne.s32.totalorder %s199, %s201
    %p205 = scmp.eq.s32.totalorder %s18, 0
    %p206 = por %p204, %p205
    %p207 = scmp.ne.s32.totalorder %s199, %s201
    %p208 = scmp.eq.s32.totalorder %s23, 1
    %p209 = por %p207, %p208
    %p210 = scmp.ne.s32.totalorder %s201, %s202
    %p211 = scmp.eq.s32.totalorder %s23, 0
    %p212 = por %p210, %p211
    %p213 = scmp.ne.s32.totalorder %s201, %s202
    %p214 = scmp.eq.s32.totalorder %s24, 1
    %p215 = por %p213, %p214
    %p217 = scmp.ne.s32.totalorder %s202, %s216
    %p218 = scmp.eq.s32.totalorder %s24, 0
    %p219 = por %p217, %p218
    %s221 = sadd.s32 %s220, 1
    %p224 = scmp.eq.s32.totalorder %s18, 1
    %p225 = scmp.ne.s32.totalorder %s220, %s222
    %p226 = scmp.eq.s32.totalorder %s18, 0
    %p227 = por %p225, %p226
    %p228 = scmp.ne.s32.totalorder %s220, %s222
    %p229 = scmp.eq.s32.totalorder %s23, 1
    %p230 = por %p228, %p229
    %p231 = scmp.ne.s32.totalorder %s222, %s223
    %p232 = scmp.eq.s32.totalorder %s23, 0
    %p233 = por %p231, %p232
    %p234 = scmp.ne.s32.totalorder %s222, %s223
    %p235 = scmp.eq.s32.totalorder %s24, 1
    %p236 = por %p234, %p235
    %p238 = scmp.ne.s32.totalorder %s223, %s237
    %p239 = scmp.eq.s32.totalorder %s24, 0
    %p240 = por %p238, %p239
    %s242 = sadd.s32 %s241, 1
    %p245 = scmp.eq.s32.totalorder %s18, 1
    %p246 = scmp.ne.s32.totalorder %s241, %s243
    %p247 = scmp.eq.s32.totalorder %s18, 0
    %p248 = por %p246, %p247
    %p249 = scmp.ne.s32.totalorder %s241, %s243
    %p250 = scmp.eq.s32.totalorder %s23, 1
    %p251 = por %p249, %p250
    %p252 = scmp.ne.s32.totalorder %s243, %s244
    %p253 = scmp.eq.s32.totalorder %s23, 0
    %p254 = por %p252, %p253
    %p255 = scmp.ne.s32.totalorder %s243, %s244
    %p256 = scmp.eq.s32.totalorder %s24, 1
    %p257 = por %p255, %p256
    %p259 = scmp.ne.s32.totalorder %s244, %s258
    %p260 = scmp.eq.s32.totalorder %s24, 0
    %p261 = por %p259, %p260
    %s263 = sadd.s32 %s262, 1
    %p266 = scmp.eq.s32.totalorder %s18, 1
    %p267 = scmp.ne.s32.totalorder %s262, %s264
    %p268 = scmp.eq.s32.totalorder %s18, 0
    %p269 = por %p267, %p268
    %p270 = scmp.ne.s32.totalorder %s262, %s264
    %p271 = scmp.eq.s32.totalorder %s23, 1
    %p272 = por %p270, %p271
    %p273 = scmp.ne.s32.totalorder %s264, %s265
    %p274 = scmp.eq.s32.totalorder %s23, 0
    %p275 = por %p273, %p274
    %p276 = scmp.ne.s32.totalorder %s264, %s265
    %p277 = scmp.eq.s32.totalorder %s24, 1
    %p278 = por %p276, %p277
    %p280 = scmp.ne.s32.totalorder %s265, %s279
    %p281 = scmp.eq.s32.totalorder %s24, 0
    %p282 = por %p280, %p281
    %s283 = ssub.s32 %s18, %s25
    %p284 = scmp.eq.s32.totalorder %s283, 0
    %s286 = sadd.s32 %s285, 1
    %s287 = scalar_select %p284, %s285, %s286
    %p290 = pneg %p284
    %p291 = scmp.eq.s32.totalorder %s18, 1
    %p292 = por %p290, %p291
    %p293 = scmp.ne.s32.totalorder %s285, %s288
    %p294 = scmp.eq.s32.totalorder %s18, 0
    %p295 = por %p293, %p294
    %p296 = scmp.ne.s32.totalorder %s285, %s288
    %p297 = scmp.eq.s32.totalorder %s23, 1
    %p298 = por %p296, %p297
    %p299 = scmp.ne.s32.totalorder %s288, %s289
    %p300 = scmp.eq.s32.totalorder %s23, 0
    %p301 = por %p299, %p300
    %p302 = scmp.ne.s32.totalorder %s288, %s289
    %p303 = scmp.eq.s32.totalorder %s24, 1
    %p304 = por %p302, %p303
    %p306 = scmp.ne.s32.totalorder %s289, %s305
    %p307 = scmp.eq.s32.totalorder %s24, 0
    %p308 = por %p306, %p307
    %p309 = scmp.le.s32.totalorder 1, %s18
    %p310 = scmp.lt.s32.totalorder %s18, 3
    %p311 = pnand %p309, %p310
    %p312 = pneg %p311
    // Predicated region
    $region9: #{forward.1} parent=5 // pred_check
      _
    $region10: #{forward.1} parent=5 // pred_check_branch
      %314 = sbr.rel (%p311) target = $region12
    $region11: #{forward.1} parent=5 // pred_region
      %s315 = ssub.s32 %s18, 1
      // Predicated region
      $region13: #{forward.1} parent=11 // pred_check
        %p316 = pneg %p65
      $region14: #{forward.1} parent=11 // pred_check_branch
        %318 = sbr.rel (%p316) target = $region16
      $region15: #{forward.1} parent=11 // pred_region
        _
      $region16: #{forward.1} parent=11 // pred_fallthru
        _
      // Predicated region
      $region17: #{forward.1} parent=11 // pred_check
        %p319 = pneg %p86
      $region18: #{forward.1} parent=11 // pred_check_branch
        %321 = sbr.rel (%p319) target = $region20
      $region19: #{forward.1} parent=11 // pred_region
        _
      $region20: #{forward.1} parent=11 // pred_fallthru
        _
      // Predicated region
      $region21: #{forward.1} parent=11 // pred_check
        %p322 = pneg %p107
      $region22: #{forward.1} parent=11 // pred_check_branch
        %324 = sbr.rel (%p322) target = $region24
      $region23: #{forward.1} parent=11 // pred_region
        _
      $region24: #{forward.1} parent=11 // pred_fallthru
        _
      // Predicated region
      $region25: #{forward.1} parent=11 // pred_check
        %p325 = pneg %p128
      $region26: #{forward.1} parent=11 // pred_check_branch
        %327 = sbr.rel (%p325) target = $region28
      $region27: #{forward.1} parent=11 // pred_region
        _
      $region28: #{forward.1} parent=11 // pred_fallthru
        _
      // Predicated region
      $region29: #{forward.1} parent=11 // pred_check
        %p328 = pneg %p149
      $region30: #{forward.1} parent=11 // pred_check_branch
        %330 = sbr.rel (%p328) target = $region32
      $region31: #{forward.1} parent=11 // pred_region
        _
      $region32: #{forward.1} parent=11 // pred_fallthru
        _
      // Predicated region
      $region33: #{forward.1} parent=11 // pred_check
        %p331 = pneg %p170
      $region34: #{forward.1} parent=11 // pred_check_branch
        %333 = sbr.rel (%p331) target = $region36
      $region35: #{forward.1} parent=11 // pred_region
        _
      $region36: #{forward.1} parent=11 // pred_fallthru
        _
      // Predicated region
      $region37: #{forward.1} parent=11 // pred_check
        %p334 = pneg %p191
      $region38: #{forward.1} parent=11 // pred_check_branch
        %336 = sbr.rel (%p334) target = $region40
      $region39: #{forward.1} parent=11 // pred_region
        _
      $region40: #{forward.1} parent=11 // pred_fallthru
        _
      // Predicated region
      $region41: #{forward.1} parent=11 // pred_check
        %p337 = pneg %p212
      $region42: #{forward.1} parent=11 // pred_check_branch
        %339 = sbr.rel (%p337) target = $region44
      $region43: #{forward.1} parent=11 // pred_region
        _
      $region44: #{forward.1} parent=11 // pred_fallthru
        _
      // Predicated region
      $region45: #{forward.1} parent=11 // pred_check
        %p340 = pneg %p233
      $region46: #{forward.1} parent=11 // pred_check_branch
        %342 = sbr.rel (%p340) target = $region48
      $region47: #{forward.1} parent=11 // pred_region
        _
      $region48: #{forward.1} parent=11 // pred_fallthru
        _
      // Predicated region
      $region49: #{forward.1} parent=11 // pred_check
        %p343 = pneg %p254
      $region50: #{forward.1} parent=11 // pred_check_branch
        %345 = sbr.rel (%p343) target = $region52
      $region51: #{forward.1} parent=11 // pred_region
        _
      $region52: #{forward.1} parent=11 // pred_fallthru
        _
      // Predicated region
      $region53: #{forward.1} parent=11 // pred_check
        %p346 = pneg %p275
      $region54: #{forward.1} parent=11 // pred_check_branch
        %348 = sbr.rel (%p346) target = $region56
      $region55: #{forward.1} parent=11 // pred_region
        _
      $region56: #{forward.1} parent=11 // pred_fallthru
        _
    $region12: #{forward.1} parent=5 // pred_fallthru
      _
    %p349 = scmp.lt.s32.totalorder %s18, 2
    // Predicated region
    $region57: #{forward.1} parent=5 // pred_check
      %p350 = pneg %p349
    $region58: #{forward.1} parent=5 // pred_check_branch
      %352 = sbr.rel (%p350) target = $region60
    $region59: #{forward.1} parent=5 // pred_region
      // Predicated region
      $region61: #{forward.1} parent=59 // pred_check
        %p353 = pneg %p38
      $region62: #{forward.1} parent=59 // pred_check_branch
        %355 = sbr.rel (%p353) target = $region64
      $region63: #{forward.1} parent=59 // pred_region
        %s356 = smul.u32 14, %s18
        %p357 = scmp.lt.s32.totalorder %s356, 27
        %s358 = scalar_select %p357, %s356, 27
        %s359 = smul.addr %s358, 4
        %s360 = smul.addr %s359, 4
        %s361 = scalar_lea.vmem %s0, %s360
        %s362 = smul.u32 14, %s18
      $region64: #{forward.1} parent=59 // pred_fallthru
        _
    $region60: #{forward.1} parent=5 // pred_fallthru
      _
    %p363 = scmp.le.s32.totalorder 1, %s18
    %p364 = scmp.lt.s32.totalorder %s18, 3
    %p365 = pnand %p363, %p364
    %p366 = pneg %p365
    // Predicated region
    $region65: #{forward.1} parent=5 // pred_check
      _
    $region66: #{forward.1} parent=5 // pred_check_branch
      %368 = sbr.rel (%p365) target = $region68
    $region67: #{forward.1} parent=5 // pred_region
      %s369 = ssub.s32 %s18, 1
      %s370 = smul.u32 14, %s23
      %p371 = scmp.lt.s32.totalorder %s370, 27
      %s372 = scalar_select %p371, %s370, 27
      %s373 = smul.addr %s372, 4
      %s374 = smul.addr %s373, 4
      %s375 = scalar_lea.vmem %s0, %s374
      %p376 = pneg %p44
      %p377 = pneg %p41
      %p378 = pneg %p65
      %p379 = pneg %p62
      %p380 = pneg %p86
      %p381 = pneg %p83
      %p382 = pneg %p107
      %p383 = pneg %p104
      %p384 = pneg %p128
      %p385 = pneg %p125
      %p386 = pneg %p149
      %p387 = pneg %p146
      %p388 = pneg %p170
      %p389 = pneg %p167
      %p390 = pneg %p191
      %p391 = pneg %p188
      %p392 = pneg %p212
      %p393 = pneg %p209
      %p394 = pneg %p233
      %p395 = pneg %p230
      %p396 = pneg %p254
      %p397 = pneg %p251
      %p398 = pneg %p275
      %p399 = pneg %p272
      %p400 = pneg %p301
      %p401 = pneg %p298
      %s402 = smul.u32 2, %s23
      %p403 = scmp.lt.s32.totalorder %s402, 3
      %s404 = scalar_select %p403, %s402, 3
      %s405 = smul.addr %s404, 8
      %s406 = scalar_lea.vmem %s12, %s405
      %s407 = smul.u32 14, %s23
      %p408 = scmp.lt.s32.totalorder %s407, 27
      %s409 = scalar_select %p408, %s407, 27
      %s410 = smul.addr %s409, 4
      %s411 = smul.addr %s410, 4
      %s412 = scalar_lea.vmem %s0, %s411
      %s413 = smul.u32 14, %s23
      %s414 = smul.u32 2, %s23
      %p415 = scmp.lt.s32.totalorder %s414, 3
      %s416 = scalar_select %p415, %s414, 3
      %s417 = smul.addr %s416, 8
      %s418 = scalar_lea.vmem %s12, %s417
      %s419 = smul.u32 2, %s23
      %v421 = vld [vmem:[%s412] sm:$0xff]
      %v422 = vld [vmem:[%s412 + $0x8] sm:$0xff]
      %v423 = vld [vmem:[%s412 + $0x10] sm:$0xff]
      %v424 = vld [vmem:[%s412 + $0x18] sm:$0xff]
      %v425 = vld [vmem:[%s412 + $0x20] sm:$0xff]
      %v426 = vld [vmem:[%s412 + $0x28] sm:$0xff]
      %v427 = vld [vmem:[%s412 + $0x30] sm:$0xff]
      %v428 = vld [vmem:[%s412 + $0x38] sm:$0xff]
      %v429 = vld [vmem:[%s412 + $0x40] sm:$0xff]
      %v430 = vld [vmem:[%s412 + $0x48] sm:$0xff]
      %v431 = vld [vmem:[%s412 + $0x50] sm:$0xff]
      %v432 = vld [vmem:[%s412 + $0x58] sm:$0xff]
      %v433 = vld [vmem:[%s412 + $0x60] sm:$0xff]
      %v434 = vld [vmem:[%s412 + $0x68] sm:$0xff]
      %v435 = vld [vmem:[%s412 + $0x70] sm:$0xff]
      %v436 = vld [vmem:[%s412 + $0x78] sm:$0xff]
      %v437 = vld [vmem:[%s412 + $0x80] sm:$0xff]
      %v438 = vld [vmem:[%s412 + $0x88] sm:$0xff]
      %v439 = vld [vmem:[%s412 + $0x90] sm:$0xff]
      %v440 = vld [vmem:[%s412 + $0x98] sm:$0xff]
      %v441 = vld [vmem:[%s412 + $0xa0] sm:$0xff]
      %v442 = vld [vmem:[%s412 + $0xa8] sm:$0xff]
      %v443 = vld [vmem:[%s412 + $0xb0] sm:$0xff]
      %v444 = vld [vmem:[%s412 + $0xb8] sm:$0xff]
      %v445 = vld [vmem:[%s412 + $0xc0] sm:$0xff]
      %v446 = vld [vmem:[%s412 + $0xc8] sm:$0xff]
      %v447 = vld [vmem:[%s412 + $0xd0] sm:$0xff]
      %v448 = vld [vmem:[%s412 + $0xd8] sm:$0xff]
      %v449 = vld [vmem:[%s1] sm:$0xff]
      %v450 = vld [vmem:[%s1 + $0x8] sm:$0xff]
      %v451 = vld [vmem:[%s1 + $0x10] sm:$0xff]
      %v452 = vld [vmem:[%s1 + $0x18] sm:$0xff]
      %v453 = vld [vmem:[%s1 + $0x20] sm:$0xff]
      %v454 = vld [vmem:[%s1 + $0x28] sm:$0xff]
      %v455 = vld [vmem:[%s1 + $0x30] sm:$0xff]
      %v456 = vld [vmem:[%s1 + $0x38] sm:$0xff]
      %v457 = vld [vmem:[%s1 + $0x40] sm:$0xff]
      %v458 = vld [vmem:[%s1 + $0x48] sm:$0xff]
      %v459 = vld [vmem:[%s1 + $0x50] sm:$0xff]
      %v460 = vld [vmem:[%s1 + $0x58] sm:$0xff]
      %v461 = vld [vmem:[%s1 + $0x60] sm:$0xff]
      %v462 = vld [vmem:[%s1 + $0x68] sm:$0xff]
      %v463 = vld [vmem:[%s1 + $0x70] sm:$0xff]
      %v464 = vld [vmem:[%s1 + $0x78] sm:$0xff]
      %v465 = vld [vmem:[%s1 + $0x80] sm:$0xff]
      %v466 = vld [vmem:[%s1 + $0x88] sm:$0xff]
      %v467 = vld [vmem:[%s1 + $0x90] sm:$0xff]
      %v468 = vld [vmem:[%s1 + $0x98] sm:$0xff]
      %v469 = vld [vmem:[%s1 + $0xa0] sm:$0xff]
      %v470 = vld [vmem:[%s1 + $0xa8] sm:$0xff]
      %v471 = vld [vmem:[%s1 + $0xb0] sm:$0xff]
      %v472 = vld [vmem:[%s1 + $0xb8] sm:$0xff]
      %v473 = vld [vmem:[%s1 + $0xc0] sm:$0xff]
      %v474 = vld [vmem:[%s1 + $0xc8] sm:$0xff]
      %v475 = vld [vmem:[%s1 + $0xd0] sm:$0xff]
      %v476 = vld [vmem:[%s1 + $0xd8] sm:$0xff]
      %v477 = vld [vmem:[%s1 + $0xe0] sm:$0xff]
      %v478 = vld [vmem:[%s1 + $0xe8] sm:$0xff]
      %v479 = vld [vmem:[%s1 + $0xf0] sm:$0xff]
      %v480 = vld [vmem:[%s1 + $0xf8] sm:$0xff]
      %v481 = vld [vmem:[%s1 + $0x100] sm:$0xff]
      %v482 = vld [vmem:[%s1 + $0x108] sm:$0xff]
      %v483 = vld [vmem:[%s1 + $0x110] sm:$0xff]
      %v484 = vld [vmem:[%s1 + $0x118] sm:$0xff]
      %v485 = vld [vmem:[%s1 + $0x120] sm:$0xff]
      %v486 = vld [vmem:[%s1 + $0x128] sm:$0xff]
      %v487 = vld [vmem:[%s1 + $0x130] sm:$0xff]
      %v488 = vld [vmem:[%s1 + $0x138] sm:$0xff]
      %v489 = vld [vmem:[%s1 + $0x140] sm:$0xff]
      %v490 = vld [vmem:[%s1 + $0x148] sm:$0xff]
      %v491 = vld [vmem:[%s1 + $0x150] sm:$0xff]
      %v492 = vld [vmem:[%s1 + $0x158] sm:$0xff]
      %v493 = vld [vmem:[%s1 + $0x160] sm:$0xff]
      %v494 = vld [vmem:[%s1 + $0x168] sm:$0xff]
      %v495 = vld [vmem:[%s1 + $0x170] sm:$0xff]
      %v496 = vld [vmem:[%s1 + $0x178] sm:$0xff]
      %v497 = vld [vmem:[%s1 + $0x180] sm:$0xff]
      %v498 = vld [vmem:[%s1 + $0x188] sm:$0xff]
      %v499 = vld [vmem:[%s1 + $0x190] sm:$0xff]
      %v500 = vld [vmem:[%s1 + $0x198] sm:$0xff]
      %v501 = vld [vmem:[%s1 + $0x1a0] sm:$0xff]
      %v502 = vld [vmem:[%s1 + $0x1a8] sm:$0xff]
      %v503 = vld [vmem:[%s1 + $0x1b0] sm:$0xff]
      %v504 = vld [vmem:[%s1 + $0x1b8] sm:$0xff]
      %s505 = scalar_lea.vmem %s1, 448
      %v506 = vld [vmem:[%s505] sm:$0xff]
      %v507 = vld [vmem:[%s505 + $0x8] sm:$0xff]
      %v508 = vld [vmem:[%s505 + $0x10] sm:$0xff]
      %v509 = vld [vmem:[%s505 + $0x18] sm:$0xff]
      %v510 = vld [vmem:[%s505 + $0x20] sm:$0xff]
      %v511 = vld [vmem:[%s505 + $0x28] sm:$0xff]
      %v512 = vld [vmem:[%s505 + $0x30] sm:$0xff]
      %v513 = vld [vmem:[%s505 + $0x38] sm:$0xff]
      %v514 = vld [vmem:[%s505 + $0x40] sm:$0xff]
      %v515 = vld [vmem:[%s505 + $0x48] sm:$0xff]
      %v516 = vld [vmem:[%s505 + $0x50] sm:$0xff]
      %v517 = vld [vmem:[%s505 + $0x58] sm:$0xff]
      %v518 = vld [vmem:[%s505 + $0x60] sm:$0xff]
      %v519 = vld [vmem:[%s505 + $0x68] sm:$0xff]
      %v520 = vld [vmem:[%s505 + $0x70] sm:$0xff]
      %v521 = vld [vmem:[%s505 + $0x78] sm:$0xff]
      %v522 = vld [vmem:[%s505 + $0x80] sm:$0xff]
      %v523 = vld [vmem:[%s505 + $0x88] sm:$0xff]
      %v524 = vld [vmem:[%s505 + $0x90] sm:$0xff]
      %v525 = vld [vmem:[%s505 + $0x98] sm:$0xff]
      %v526 = vld [vmem:[%s505 + $0xa0] sm:$0xff]
      %v527 = vld [vmem:[%s505 + $0xa8] sm:$0xff]
      %v528 = vld [vmem:[%s505 + $0xb0] sm:$0xff]
      %v529 = vld [vmem:[%s505 + $0xb8] sm:$0xff]
      %v530 = vld [vmem:[%s505 + $0xc0] sm:$0xff]
      %v531 = vld [vmem:[%s505 + $0xc8] sm:$0xff]
      %v532 = vld [vmem:[%s505 + $0xd0] sm:$0xff]
      %v533 = vld [vmem:[%s505 + $0xd8] sm:$0xff]
      %v534 = vld [vmem:[%s505 + $0xe0] sm:$0xff]
      %v535 = vld [vmem:[%s505 + $0xe8] sm:$0xff]
      %v536 = vld [vmem:[%s505 + $0xf0] sm:$0xff]
      %v537 = vld [vmem:[%s505 + $0xf8] sm:$0xff]
      %v538 = vld [vmem:[%s505 + $0x100] sm:$0xff]
      %v539 = vld [vmem:[%s505 + $0x108] sm:$0xff]
      %v540 = vld [vmem:[%s505 + $0x110] sm:$0xff]
      %v541 = vld [vmem:[%s505 + $0x118] sm:$0xff]
      %v542 = vld [vmem:[%s505 + $0x120] sm:$0xff]
      %v543 = vld [vmem:[%s505 + $0x128] sm:$0xff]
      %v544 = vld [vmem:[%s505 + $0x130] sm:$0xff]
      %v545 = vld [vmem:[%s505 + $0x138] sm:$0xff]
      %v546 = vld [vmem:[%s505 + $0x140] sm:$0xff]
      %v547 = vld [vmem:[%s505 + $0x148] sm:$0xff]
      %v548 = vld [vmem:[%s505 + $0x150] sm:$0xff]
      %v549 = vld [vmem:[%s505 + $0x158] sm:$0xff]
      %v550 = vld [vmem:[%s505 + $0x160] sm:$0xff]
      %v551 = vld [vmem:[%s505 + $0x168] sm:$0xff]
      %v552 = vld [vmem:[%s505 + $0x170] sm:$0xff]
      %v553 = vld [vmem:[%s505 + $0x178] sm:$0xff]
      %v554 = vld [vmem:[%s505 + $0x180] sm:$0xff]
      %v555 = vld [vmem:[%s505 + $0x188] sm:$0xff]
      %v556 = vld [vmem:[%s505 + $0x190] sm:$0xff]
      %v557 = vld [vmem:[%s505 + $0x198] sm:$0xff]
      %v558 = vld [vmem:[%s505 + $0x1a0] sm:$0xff]
      %v559 = vld [vmem:[%s505 + $0x1a8] sm:$0xff]
      %v560 = vld [vmem:[%s505 + $0x1b0] sm:$0xff]
      %v561 = vld [vmem:[%s505 + $0x1b8] sm:$0xff]
      %v590 = vunpack.c.l.b16 %v421
      %v591 = vunpack.c.h.b16 %v421
      %v592 = vunpack.c.l.b16 %v422
      %v593 = vunpack.c.h.b16 %v422
      %v594 = vunpack.c.l.b16 %v423
      %v595 = vunpack.c.h.b16 %v423
      %v596 = vunpack.c.l.b16 %v424
      %v597 = vunpack.c.h.b16 %v424
      %v598 = vunpack.c.l.b16 %v425
      %v599 = vunpack.c.h.b16 %v425
      %v600 = vunpack.c.l.b16 %v426
      %v601 = vunpack.c.h.b16 %v426
      %v602 = vunpack.c.l.b16 %v427
      %v603 = vunpack.c.h.b16 %v427
      %v604 = vunpack.c.l.b16 %v428
      %v605 = vunpack.c.h.b16 %v428
      %v606 = vunpack.c.l.b16 %v429
      %v607 = vunpack.c.h.b16 %v429
      %v608 = vunpack.c.l.b16 %v430
      %v609 = vunpack.c.h.b16 %v430
      %v610 = vunpack.c.l.b16 %v431
      %v611 = vunpack.c.h.b16 %v431
      %v612 = vunpack.c.l.b16 %v432
      %v613 = vunpack.c.h.b16 %v432
      %v614 = vunpack.c.l.b16 %v433
      %v615 = vunpack.c.h.b16 %v433
      %v616 = vunpack.c.l.b16 %v434
      %v617 = vunpack.c.h.b16 %v434
      %v618 = vunpack.c.l.b16 %v435
      %v619 = vunpack.c.h.b16 %v435
      %v620 = vunpack.c.l.b16 %v436
      %v621 = vunpack.c.h.b16 %v436
      %v622 = vunpack.c.l.b16 %v437
      %v623 = vunpack.c.h.b16 %v437
      %v624 = vunpack.c.l.b16 %v438
      %v625 = vunpack.c.h.b16 %v438
      %v626 = vunpack.c.l.b16 %v439
      %v627 = vunpack.c.h.b16 %v439
      %v628 = vunpack.c.l.b16 %v440
      %v629 = vunpack.c.h.b16 %v440
      %v630 = vunpack.c.l.b16 %v441
      %v631 = vunpack.c.h.b16 %v441
      %v632 = vunpack.c.l.b16 %v442
      %v633 = vunpack.c.h.b16 %v442
      %v634 = vunpack.c.l.b16 %v443
      %v635 = vunpack.c.h.b16 %v443
      %v636 = vunpack.c.l.b16 %v444
      %v637 = vunpack.c.h.b16 %v444
      %v638 = vunpack.c.l.b16 %v445
      %v639 = vunpack.c.h.b16 %v445
      %v640 = vunpack.c.l.b16 %v446
      %v641 = vunpack.c.h.b16 %v446
      %v642 = vunpack.c.l.b16 %v447
      %v643 = vunpack.c.h.b16 %v447
      %v644 = vunpack.c.l.b16 %v448
      %v645 = vunpack.c.h.b16 %v448
      %v646 = vpack.c.b16 %v594, %v590
      %v647 = vpack.c.b16 %v595, %v591
      %v648 = vpack.c.b16 %v596, %v592
      %v649 = vpack.c.b16 %v597, %v593
      %v650 = vpack.c.b16 %v602, %v598
      %v651 = vpack.c.b16 %v603, %v599
      %v652 = vpack.c.b16 %v604, %v600
      %v653 = vpack.c.b16 %v605, %v601
      %v654 = vpack.c.b16 %v610, %v606
      %v655 = vpack.c.b16 %v611, %v607
      %v656 = vpack.c.b16 %v612, %v608
      %v657 = vpack.c.b16 %v613, %v609
      %v658 = vpack.c.b16 %v618, %v614
      %v659 = vpack.c.b16 %v619, %v615
      %v660 = vpack.c.b16 %v620, %v616
      %v661 = vpack.c.b16 %v621, %v617
      %v662 = vpack.c.b16 %v626, %v622
      %v663 = vpack.c.b16 %v627, %v623
      %v664 = vpack.c.b16 %v628, %v624
      %v665 = vpack.c.b16 %v629, %v625
      %v666 = vpack.c.b16 %v634, %v630
      %v667 = vpack.c.b16 %v635, %v631
      %v668 = vpack.c.b16 %v636, %v632
      %v669 = vpack.c.b16 %v637, %v633
      %v670 = vpack.c.b16 %v642, %v638
      %v671 = vpack.c.b16 %v643, %v639
      %v672 = vpack.c.b16 %v644, %v640
      %v673 = vpack.c.b16 %v645, %v641
      %vm674 = vsmask.f32 7424
      %v676 = vshrl.u32 %v646, 16
      %v678 = vshll.u32 %v646, 16
      %v680 = vrot.slane %v678, 1
      %v681 = vor.u32 %v676, %v680
      %v683 = vshll.u32 %v650, 16
      %v685 = vrot.slane %v683, 1
      %v686 = vsel %vm674, %v681, %v685
      %v688 = vshrl.u32 %v647, 16
      %v690 = vshll.u32 %v647, 16
      %v692 = vrot.slane %v690, 1
      %v693 = vor.u32 %v688, %v692
      %v695 = vshll.u32 %v651, 16
      %v697 = vrot.slane %v695, 1
      %v698 = vsel %vm674, %v693, %v697
      %v700 = vshrl.u32 %v648, 16
      %v702 = vshll.u32 %v648, 16
      %v704 = vrot.slane %v702, 1
      %v705 = vor.u32 %v700, %v704
      %v707 = vshll.u32 %v652, 16
      %v709 = vrot.slane %v707, 1
      %v710 = vsel %vm674, %v705, %v709
      %v712 = vshrl.u32 %v649, 16
      %v714 = vshll.u32 %v649, 16
      %v716 = vrot.slane %v714, 1
      %v717 = vor.u32 %v712, %v716
      %v719 = vshll.u32 %v653, 16
      %v721 = vrot.slane %v719, 1
      %v722 = vsel %vm674, %v717, %v721
      %v723 = vshrl.u32 %v650, 16
      %v725 = vor.u32 %v723, %v685
      %v727 = vshll.u32 %v654, 16
      %v729 = vrot.slane %v727, 1
      %v730 = vsel %vm674, %v725, %v729
      %v731 = vshrl.u32 %v651, 16
      %v733 = vor.u32 %v731, %v697
      %v735 = vshll.u32 %v655, 16
      %v737 = vrot.slane %v735, 1
      %v738 = vsel %vm674, %v733, %v737
      %v739 = vshrl.u32 %v652, 16
      %v741 = vor.u32 %v739, %v709
      %v743 = vshll.u32 %v656, 16
      %v745 = vrot.slane %v743, 1
      %v746 = vsel %vm674, %v741, %v745
      %v747 = vshrl.u32 %v653, 16
      %v749 = vor.u32 %v747, %v721
      %v751 = vshll.u32 %v657, 16
      %v753 = vrot.slane %v751, 1
      %v754 = vsel %vm674, %v749, %v753
      %v755 = vshrl.u32 %v654, 16
      %v757 = vor.u32 %v755, %v729
      %v759 = vshll.u32 %v658, 16
      %v761 = vrot.slane %v759, 1
      %v762 = vsel %vm674, %v757, %v761
      %v763 = vshrl.u32 %v655, 16
      %v765 = vor.u32 %v763, %v737
      %v767 = vshll.u32 %v659, 16
      %v769 = vrot.slane %v767, 1
      %v770 = vsel %vm674, %v765, %v769
      %v771 = vshrl.u32 %v656, 16
      %v773 = vor.u32 %v771, %v745
      %v775 = vshll.u32 %v660, 16
      %v777 = vrot.slane %v775, 1
      %v778 = vsel %vm674, %v773, %v777
      %v779 = vshrl.u32 %v657, 16
      %v781 = vor.u32 %v779, %v753
      %v783 = vshll.u32 %v661, 16
      %v785 = vrot.slane %v783, 1
      %v786 = vsel %vm674, %v781, %v785
      %v787 = vshrl.u32 %v658, 16
      %v789 = vor.u32 %v787, %v761
      %v791 = vshll.u32 %v662, 16
      %v793 = vrot.slane %v791, 1
      %v794 = vsel %vm674, %v789, %v793
      %v795 = vshrl.u32 %v659, 16
      %v797 = vor.u32 %v795, %v769
      %v799 = vshll.u32 %v663, 16
      %v801 = vrot.slane %v799, 1
      %v802 = vsel %vm674, %v797, %v801
      %v803 = vshrl.u32 %v660, 16
      %v805 = vor.u32 %v803, %v777
      %v807 = vshll.u32 %v664, 16
      %v809 = vrot.slane %v807, 1
      %v810 = vsel %vm674, %v805, %v809
      %v811 = vshrl.u32 %v661, 16
      %v813 = vor.u32 %v811, %v785
      %v815 = vshll.u32 %v665, 16
      %v817 = vrot.slane %v815, 1
      %v818 = vsel %vm674, %v813, %v817
      %v819 = vshrl.u32 %v662, 16
      %v821 = vor.u32 %v819, %v793
      %v823 = vshll.u32 %v666, 16
      %v825 = vrot.slane %v823, 1
      %v826 = vsel %vm674, %v821, %v825
      %v827 = vshrl.u32 %v663, 16
      %v829 = vor.u32 %v827, %v801
      %v831 = vshll.u32 %v667, 16
      %v833 = vrot.slane %v831, 1
      %v834 = vsel %vm674, %v829, %v833
      %v835 = vshrl.u32 %v664, 16
      %v837 = vor.u32 %v835, %v809
      %v839 = vshll.u32 %v668, 16
      %v841 = vrot.slane %v839, 1
      %v842 = vsel %vm674, %v837, %v841
      %v843 = vshrl.u32 %v665, 16
      %v845 = vor.u32 %v843, %v817
      %v847 = vshll.u32 %v669, 16
      %v849 = vrot.slane %v847, 1
      %v850 = vsel %vm674, %v845, %v849
      %v851 = vshrl.u32 %v666, 16
      %v853 = vor.u32 %v851, %v825
      %v855 = vshll.u32 %v670, 16
      %v857 = vrot.slane %v855, 1
      %v858 = vsel %vm674, %v853, %v857
      %v859 = vshrl.u32 %v667, 16
      %v861 = vor.u32 %v859, %v833
      %v863 = vshll.u32 %v671, 16
      %v865 = vrot.slane %v863, 1
      %v866 = vsel %vm674, %v861, %v865
      %v867 = vshrl.u32 %v668, 16
      %v869 = vor.u32 %v867, %v841
      %v871 = vshll.u32 %v672, 16
      %v873 = vrot.slane %v871, 1
      %v874 = vsel %vm674, %v869, %v873
      %v875 = vshrl.u32 %v669, 16
      %v877 = vor.u32 %v875, %v849
      %v879 = vshll.u32 %v673, 16
      %v881 = vrot.slane %v879, 1
      %v882 = vsel %vm674, %v877, %v881
      %v883 = vshrl.u32 %v670, 16
      %v885 = vor.u32 %v883, %v857
      %v886 = vshrl.u32 %v671, 16
      %v888 = vor.u32 %v886, %v865
      %v889 = vshrl.u32 %v672, 16
      %v891 = vor.u32 %v889, %v873
      %v892 = vshrl.u32 %v673, 16
      %v894 = vor.u32 %v892, %v881
      %v972 = vunpack.c.l.b16 %v506
      %v973 = vunpack.c.h.b16 %v506
      %v974 = vunpack.c.l.b16 %v507
      %v975 = vunpack.c.h.b16 %v507
      %v976 = vunpack.c.l.b16 %v508
      %v977 = vunpack.c.h.b16 %v508
      %v978 = vunpack.c.l.b16 %v509
      %v979 = vunpack.c.h.b16 %v509
      %v980 = vunpack.c.l.b16 %v510
      %v981 = vunpack.c.h.b16 %v510
      %v982 = vunpack.c.l.b16 %v511
      %v983 = vunpack.c.h.b16 %v511
      %v984 = vunpack.c.l.b16 %v512
      %v985 = vunpack.c.h.b16 %v512
      %v986 = vunpack.c.l.b16 %v513
      %v987 = vunpack.c.h.b16 %v513
      %v988 = vunpack.c.l.b16 %v514
      %v989 = vunpack.c.h.b16 %v514
      %v990 = vunpack.c.l.b16 %v515
      %v991 = vunpack.c.h.b16 %v515
      %v992 = vunpack.c.l.b16 %v516
      %v993 = vunpack.c.h.b16 %v516
      %v994 = vunpack.c.l.b16 %v517
      %v995 = vunpack.c.h.b16 %v517
      %v996 = vunpack.c.l.b16 %v518
      %v997 = vunpack.c.h.b16 %v518
      %v998 = vunpack.c.l.b16 %v519
      %v999 = vunpack.c.h.b16 %v519
      %v1000 = vunpack.c.l.b16 %v520
      %v1001 = vunpack.c.h.b16 %v520
      %v1002 = vunpack.c.l.b16 %v521
      %v1003 = vunpack.c.h.b16 %v521
      %v1004 = vunpack.c.l.b16 %v522
      %v1005 = vunpack.c.h.b16 %v522
      %v1006 = vunpack.c.l.b16 %v523
      %v1007 = vunpack.c.h.b16 %v523
      %v1008 = vunpack.c.l.b16 %v524
      %v1009 = vunpack.c.h.b16 %v524
      %v1010 = vunpack.c.l.b16 %v525
      %v1011 = vunpack.c.h.b16 %v525
      %v1012 = vunpack.c.l.b16 %v526
      %v1013 = vunpack.c.h.b16 %v526
      %v1014 = vunpack.c.l.b16 %v527
      %v1015 = vunpack.c.h.b16 %v527
      %v1016 = vunpack.c.l.b16 %v528
      %v1017 = vunpack.c.h.b16 %v528
      %v1018 = vunpack.c.l.b16 %v529
      %v1019 = vunpack.c.h.b16 %v529
      %v1020 = vunpack.c.l.b16 %v530
      %v1021 = vunpack.c.h.b16 %v530
      %v1022 = vunpack.c.l.b16 %v531
      %v1023 = vunpack.c.h.b16 %v531
      %v1024 = vunpack.c.l.b16 %v532
      %v1025 = vunpack.c.h.b16 %v532
      %v1026 = vunpack.c.l.b16 %v533
      %v1027 = vunpack.c.h.b16 %v533
      %v1028 = vunpack.c.l.b16 %v534
      %v1029 = vunpack.c.h.b16 %v534
      %v1030 = vunpack.c.l.b16 %v535
      %v1031 = vunpack.c.h.b16 %v535
      %v1032 = vunpack.c.l.b16 %v536
      %v1033 = vunpack.c.h.b16 %v536
      %v1034 = vunpack.c.l.b16 %v537
      %v1035 = vunpack.c.h.b16 %v537
      %v1036 = vunpack.c.l.b16 %v538
      %v1037 = vunpack.c.h.b16 %v538
      %v1038 = vunpack.c.l.b16 %v539
      %v1039 = vunpack.c.h.b16 %v539
      %v1040 = vunpack.c.l.b16 %v540
      %v1041 = vunpack.c.h.b16 %v540
      %v1042 = vunpack.c.l.b16 %v541
      %v1043 = vunpack.c.h.b16 %v541
      %v1044 = vunpack.c.l.b16 %v542
      %v1045 = vunpack.c.h.b16 %v542
      %v1046 = vunpack.c.l.b16 %v543
      %v1047 = vunpack.c.h.b16 %v543
      %v1048 = vunpack.c.l.b16 %v544
      %v1049 = vunpack.c.h.b16 %v544
      %v1050 = vunpack.c.l.b16 %v545
      %v1051 = vunpack.c.h.b16 %v545
      %v1052 = vunpack.c.l.b16 %v546
      %v1053 = vunpack.c.h.b16 %v546
      %v1054 = vunpack.c.l.b16 %v547
      %v1055 = vunpack.c.h.b16 %v547
      %v1056 = vunpack.c.l.b16 %v548
      %v1057 = vunpack.c.h.b16 %v548
      %v1058 = vunpack.c.l.b16 %v549
      %v1059 = vunpack.c.h.b16 %v549
      %v1060 = vunpack.c.l.b16 %v550
      %v1061 = vunpack.c.h.b16 %v550
      %v1062 = vunpack.c.l.b16 %v551
      %v1063 = vunpack.c.h.b16 %v551
      %v1064 = vunpack.c.l.b16 %v552
      %v1065 = vunpack.c.h.b16 %v552
      %v1066 = vunpack.c.l.b16 %v553
      %v1067 = vunpack.c.h.b16 %v553
      %v1068 = vunpack.c.l.b16 %v554
      %v1069 = vunpack.c.h.b16 %v554
      %v1070 = vunpack.c.l.b16 %v555
      %v1071 = vunpack.c.h.b16 %v555
      %v1072 = vunpack.c.l.b16 %v556
      %v1073 = vunpack.c.h.b16 %v556
      %v1074 = vunpack.c.l.b16 %v557
      %v1075 = vunpack.c.h.b16 %v557
      %v1076 = vunpack.c.l.b16 %v558
      %v1077 = vunpack.c.h.b16 %v558
      %v1078 = vunpack.c.l.b16 %v559
      %v1079 = vunpack.c.h.b16 %v559
      %v1080 = vunpack.c.l.b16 %v560
      %v1081 = vunpack.c.h.b16 %v560
      %v1082 = vunpack.c.l.b16 %v561
      %v1083 = vunpack.c.h.b16 %v561
      %v1084 = vpack.c.b16 %v974, %v972
      %v1085 = vpack.c.b16 %v975, %v973
      %v1086 = vpack.c.b16 %v978, %v976
      %v1087 = vpack.c.b16 %v979, %v977
      %v1088 = vpack.c.b16 %v982, %v980
      %v1089 = vpack.c.b16 %v983, %v981
      %v1090 = vpack.c.b16 %v986, %v984
      %v1091 = vpack.c.b16 %v987, %v985
      %v1092 = vpack.c.b16 %v990, %v988
      %v1093 = vpack.c.b16 %v991, %v989
      %v1094 = vpack.c.b16 %v994, %v992
      %v1095 = vpack.c.b16 %v995, %v993
      %v1096 = vpack.c.b16 %v998, %v996
      %v1097 = vpack.c.b16 %v999, %v997
      %v1098 = vpack.c.b16 %v1002, %v1000
      %v1099 = vpack.c.b16 %v1003, %v1001
      %v1100 = vpack.c.b16 %v1006, %v1004
      %v1101 = vpack.c.b16 %v1007, %v1005
      %v1102 = vpack.c.b16 %v1010, %v1008
      %v1103 = vpack.c.b16 %v1011, %v1009
      %v1104 = vpack.c.b16 %v1014, %v1012
      %v1105 = vpack.c.b16 %v1015, %v1013
      %v1106 = vpack.c.b16 %v1018, %v1016
      %v1107 = vpack.c.b16 %v1019, %v1017
      %v1108 = vpack.c.b16 %v1022, %v1020
      %v1109 = vpack.c.b16 %v1023, %v1021
      %v1110 = vpack.c.b16 %v1026, %v1024
      %v1111 = vpack.c.b16 %v1027, %v1025
      %v1112 = vpack.c.b16 %v1030, %v1028
      %v1113 = vpack.c.b16 %v1031, %v1029
      %v1114 = vpack.c.b16 %v1034, %v1032
      %v1115 = vpack.c.b16 %v1035, %v1033
      %v1116 = vpack.c.b16 %v1038, %v1036
      %v1117 = vpack.c.b16 %v1039, %v1037
      %v1118 = vpack.c.b16 %v1042, %v1040
      %v1119 = vpack.c.b16 %v1043, %v1041
      %v1120 = vpack.c.b16 %v1046, %v1044
      %v1121 = vpack.c.b16 %v1047, %v1045
      %v1122 = vpack.c.b16 %v1050, %v1048
      %v1123 = vpack.c.b16 %v1051, %v1049
      %v1124 = vpack.c.b16 %v1054, %v1052
      %v1125 = vpack.c.b16 %v1055, %v1053
      %v1126 = vpack.c.b16 %v1058, %v1056
      %v1127 = vpack.c.b16 %v1059, %v1057
      %v1128 = vpack.c.b16 %v1062, %v1060
      %v1129 = vpack.c.b16 %v1063, %v1061
      %v1130 = vpack.c.b16 %v1066, %v1064
      %v1131 = vpack.c.b16 %v1067, %v1065
      %v1132 = vpack.c.b16 %v1070, %v1068
      %v1133 = vpack.c.b16 %v1071, %v1069
      %v1134 = vpack.c.b16 %v1074, %v1072
      %v1135 = vpack.c.b16 %v1075, %v1073
      %v1136 = vpack.c.b16 %v1078, %v1076
      %v1137 = vpack.c.b16 %v1079, %v1077
      %v1138 = vpack.c.b16 %v1082, %v1080
      %v1139 = vpack.c.b16 %v1083, %v1081
      %vm1196 = vcmask 523264
      %v1198 = vsel %vm1196, %v722, 0
      %v1201 = vsel %vm1196, %v754, 0
      %v1204 = vsel %vm1196, %v786, 0
      %v1207 = vsel %vm1196, %v818, 0
      %v1210 = vsel %vm1196, %v850, 0
      %v1213 = vsel %vm1196, %v882, 0
      %v1216 = vsel %vm1196, %v894, 0
      %1218 = vmatprep.subr.bf16.mxu0 %v1099
      %1219 = vmatpush1.bf16.msra.mxu0 %v1098
      %1220 = vmatprep.subr.bf16.mxu0 %v1097
      %1221 = vmatpush1.bf16.msra.mxu0 %v1096
      %1222 = vmatprep.subr.bf16.mxu0 %v1095
      %1223 = vmatpush1.bf16.msra.mxu0 %v1094
      %1224 = vmatprep.subr.bf16.mxu0 %v1093
      %1225 = vmatpush1.bf16.msra.mxu0 %v1092
      %1226 = vmatprep.subr.bf16.mxu0 %v1091
      %1227 = vmatpush1.bf16.msra.mxu0 %v1090
      %1228 = vmatprep.subr.bf16.mxu0 %v1089
      %1229 = vmatpush1.bf16.msra.mxu0 %v1088
      %1230 = vmatprep.subr.bf16.mxu0 %v1087
      %1231 = vmatpush1.bf16.msra.mxu0 %v1086
      %1232 = vmatprep.subr.bf16.mxu0 %v1085
      %1233 = vmatpush1.bf16.msra.mxu0 %v1084
      %1234 = vmatprep.subr.bf16.mxu0 %v1115
      %1235 = vmatpush2.bf16.msra.mxu0 %v1114
      %1236 = vmatprep.subr.bf16.mxu0 %v1113
      %1237 = vmatpush2.bf16.msra.mxu0 %v1112
      %1238 = vmatprep.subr.bf16.mxu0 %v1111
      %1239 = vmatpush2.bf16.msra.mxu0 %v1110
      %1240 = vmatprep.subr.bf16.mxu0 %v1109
      %1241 = vmatpush2.bf16.msra.mxu0 %v1108
      %1242 = vmatprep.subr.bf16.mxu0 %v1107
      %1243 = vmatpush2.bf16.msra.mxu0 %v1106
      %1244 = vmatprep.subr.bf16.mxu0 %v1105
      %1245 = vmatpush2.bf16.msra.mxu0 %v1104
      %1246 = vmatprep.subr.bf16.mxu0 %v1103
      %1247 = vmatpush2.bf16.msra.mxu0 %v1102
      %1248 = vmatprep.subr.bf16.mxu0 %v1101
      %1249 = vmatpush2.bf16.msra.mxu0 %v1100
      %1250 = vmatprep.mubr.bf16.mxu0 %v698
      %1251 = vmatmul.mubr.bf16.gmra.mxu0 %v686
      %v1252 = vpop.f32.mrf.mxu0
      %v1253 = vadd.f32 0.0, %v1252
      %v1254 = vpop.f32.mrf.mxu0
      %v1255 = vadd.f32 0.0, %v1254
      %v1256 = vpop.f32.mrf.mxu0
      %v1257 = vadd.f32 0.0, %v1256
      %v1258 = vpop.f32.mrf.mxu0
      %v1259 = vadd.f32 0.0, %v1258
      %1260 = vmatprep.mubr.bf16.mxu0 %v738
      %1261 = vmatmul.mubr.bf16.gmra.mxu0 %v730
      %v1262 = vpop.f32.mrf.mxu0
      %v1263 = vadd.f32 0.0, %v1262
      %v1264 = vpop.f32.mrf.mxu0
      %v1265 = vadd.f32 0.0, %v1264
      %v1266 = vpop.f32.mrf.mxu0
      %v1267 = vadd.f32 0.0, %v1266
      %v1268 = vpop.f32.mrf.mxu0
      %v1269 = vadd.f32 0.0, %v1268
      %1270 = vmatprep.mubr.bf16.mxu0 %v770
      %1271 = vmatmul.mubr.bf16.gmra.mxu0 %v762
      %v1272 = vpop.f32.mrf.mxu0
      %v1273 = vadd.f32 0.0, %v1272
      %v1274 = vpop.f32.mrf.mxu0
      %v1275 = vadd.f32 0.0, %v1274
      %v1276 = vpop.f32.mrf.mxu0
      %v1277 = vadd.f32 0.0, %v1276
      %v1278 = vpop.f32.mrf.mxu0
      %v1279 = vadd.f32 0.0, %v1278
      %1280 = vmatprep.mubr.bf16.mxu0 %v802
      %1281 = vmatmul.mubr.bf16.gmra.mxu0 %v794
      %v1282 = vpop.f32.mrf.mxu0
      %v1283 = vadd.f32 0.0, %v1282
      %v1284 = vpop.f32.mrf.mxu0
      %v1285 = vadd.f32 0.0, %v1284
      %v1286 = vpop.f32.mrf.mxu0
      %v1287 = vadd.f32 0.0, %v1286
      %v1288 = vpop.f32.mrf.mxu0
      %v1289 = vadd.f32 0.0, %v1288
      %1290 = vmatprep.mubr.bf16.mxu0 %v834
      %1291 = vmatmul.mubr.bf16.gmra.mxu0 %v826
      %v1292 = vpop.f32.mrf.mxu0
      %v1293 = vadd.f32 0.0, %v1292
      %v1294 = vpop.f32.mrf.mxu0
      %v1295 = vadd.f32 0.0, %v1294
      %v1296 = vpop.f32.mrf.mxu0
      %v1297 = vadd.f32 0.0, %v1296
      %v1298 = vpop.f32.mrf.mxu0
      %v1299 = vadd.f32 0.0, %v1298
      %1300 = vmatprep.mubr.bf16.mxu0 %v866
      %1301 = vmatmul.mubr.bf16.gmra.mxu0 %v858
      %v1302 = vpop.f32.mrf.mxu0
      %v1303 = vadd.f32 0.0, %v1302
      %v1304 = vpop.f32.mrf.mxu0
      %v1305 = vadd.f32 0.0, %v1304
      %v1306 = vpop.f32.mrf.mxu0
      %v1307 = vadd.f32 0.0, %v1306
      %v1308 = vpop.f32.mrf.mxu0
      %v1309 = vadd.f32 0.0, %v1308
      %1310 = vmatprep.mubr.bf16.mxu0 %v888
      %1311 = vmatmul.mubr.bf16.gmra.mxu0 %v885
      %v1312 = vpop.f32.mrf.mxu0
      %v1313 = vadd.f32 0.0, %v1312
      %v1314 = vpop.f32.mrf.mxu0
      %v1315 = vadd.f32 0.0, %v1314
      %v1316 = vpop.f32.mrf.mxu0
      %v1317 = vadd.f32 0.0, %v1316
      %v1318 = vpop.f32.mrf.mxu0
      %v1319 = vadd.f32 0.0, %v1318
      %1320 = vdwg.mxu0
      %1321 = vmatprep.subr.bf16.mxu0 %v1131
      %1322 = vmatpush1.bf16.msra.mxu0 %v1130
      %1323 = vmatprep.subr.bf16.mxu0 %v1129
      %1324 = vmatpush1.bf16.msra.mxu0 %v1128
      %1325 = vmatprep.subr.bf16.mxu0 %v1127
      %1326 = vmatpush1.bf16.msra.mxu0 %v1126
      %1327 = vmatprep.subr.bf16.mxu0 %v1125
      %1328 = vmatpush1.bf16.msra.mxu0 %v1124
      %1329 = vmatprep.subr.bf16.mxu0 %v1123
      %1330 = vmatpush1.bf16.msra.mxu0 %v1122
      %1331 = vmatprep.subr.bf16.mxu0 %v1121
      %1332 = vmatpush1.bf16.msra.mxu0 %v1120
      %1333 = vmatprep.subr.bf16.mxu0 %v1119
      %1334 = vmatpush1.bf16.msra.mxu0 %v1118
      %1335 = vmatprep.subr.bf16.mxu0 %v1117
      %1336 = vmatpush1.bf16.msra.mxu0 %v1116
      %1337 = vmatprep.subr.bf16.mxu0 0
      %1338 = vmatpush2.bf16.msra.mxu0 0
      %1339 = vmatprep.subr.bf16.mxu0 0
      %1340 = vmatpush2.bf16.msra.mxu0 0
      %1341 = vmatprep.subr.bf16.mxu0 0
      %1342 = vmatpush2.bf16.msra.mxu0 0
      %1343 = vmatprep.subr.bf16.mxu0 0
      %1344 = vmatpush2.bf16.msra.mxu0 0
      %1345 = vmatprep.subr.bf16.mxu0 %v1139
      %1346 = vmatpush2.bf16.msra.mxu0 %v1138
      %1347 = vmatprep.subr.bf16.mxu0 %v1137
      %1348 = vmatpush2.bf16.msra.mxu0 %v1136
      %1349 = vmatprep.subr.bf16.mxu0 %v1135
      %1350 = vmatpush2.bf16.msra.mxu0 %v1134
      %1351 = vmatprep.subr.bf16.mxu0 %v1133
      %1352 = vmatpush2.bf16.msra.mxu0 %v1132
      %1353 = vmatprep.mubr.bf16.mxu0 %v1198
      %1354 = vmatmul.mubr.bf16.gmra.mxu0 %v710
      %v1355 = vpop.f32.mrf.mxu0
      %v1356 = vadd.f32 %v1253, %v1355
      %v1357 = vpop.f32.mrf.mxu0
      %v1358 = vadd.f32 %v1255, %v1357
      %v1359 = vpop.f32.mrf.mxu0
      %v1360 = vadd.f32 %v1257, %v1359
      %v1361 = vpop.f32.mrf.mxu0
      %v1362 = vadd.f32 %v1259, %v1361
      %1363 = vmatprep.mubr.bf16.mxu0 %v1201
      %1364 = vmatmul.mubr.bf16.gmra.mxu0 %v746
      %v1365 = vpop.f32.mrf.mxu0
      %v1366 = vadd.f32 %v1263, %v1365
      %v1367 = vpop.f32.mrf.mxu0
      %v1368 = vadd.f32 %v1265, %v1367
      %v1369 = vpop.f32.mrf.mxu0
      %v1370 = vadd.f32 %v1267, %v1369
      %v1371 = vpop.f32.mrf.mxu0
      %v1372 = vadd.f32 %v1269, %v1371
      %1373 = vmatprep.mubr.bf16.mxu0 %v1204
      %1374 = vmatmul.mubr.bf16.gmra.mxu0 %v778
      %v1375 = vpop.f32.mrf.mxu0
      %v1376 = vadd.f32 %v1273, %v1375
      %v1377 = vpop.f32.mrf.mxu0
      %v1378 = vadd.f32 %v1275, %v1377
      %v1379 = vpop.f32.mrf.mxu0
      %v1380 = vadd.f32 %v1277, %v1379
      %v1381 = vpop.f32.mrf.mxu0
      %v1382 = vadd.f32 %v1279, %v1381
      %1383 = vmatprep.mubr.bf16.mxu0 %v1207
      %1384 = vmatmul.mubr.bf16.gmra.mxu0 %v810
      %v1385 = vpop.f32.mrf.mxu0
      %v1386 = vadd.f32 %v1283, %v1385
      %v1387 = vpop.f32.mrf.mxu0
      %v1388 = vadd.f32 %v1285, %v1387
      %v1389 = vpop.f32.mrf.mxu0
      %v1390 = vadd.f32 %v1287, %v1389
      %v1391 = vpop.f32.mrf.mxu0
      %v1392 = vadd.f32 %v1289, %v1391
      %1393 = vmatprep.mubr.bf16.mxu0 %v1210
      %1394 = vmatmul.mubr.bf16.gmra.mxu0 %v842
      %v1395 = vpop.f32.mrf.mxu0
      %v1396 = vadd.f32 %v1293, %v1395
      %v1397 = vpop.f32.mrf.mxu0
      %v1398 = vadd.f32 %v1295, %v1397
      %v1399 = vpop.f32.mrf.mxu0
      %v1400 = vadd.f32 %v1297, %v1399
      %v1401 = vpop.f32.mrf.mxu0
      %v1402 = vadd.f32 %v1299, %v1401
      %1403 = vmatprep.mubr.bf16.mxu0 %v1213
      %1404 = vmatmul.mubr.bf16.gmra.mxu0 %v874
      %v1405 = vpop.f32.mrf.mxu0
      %v1406 = vadd.f32 %v1303, %v1405
      %v1407 = vpop.f32.mrf.mxu0
      %v1408 = vadd.f32 %v1305, %v1407
      %v1409 = vpop.f32.mrf.mxu0
      %v1410 = vadd.f32 %v1307, %v1409
      %v1411 = vpop.f32.mrf.mxu0
      %v1412 = vadd.f32 %v1309, %v1411
      %1413 = vmatprep.mubr.bf16.mxu0 %v1216
      %1414 = vmatmul.mubr.bf16.gmra.mxu0 %v891
      %v1415 = vpop.f32.mrf.mxu0
      %v1416 = vadd.f32 %v1313, %v1415
      %v1417 = vpop.f32.mrf.mxu0
      %v1418 = vadd.f32 %v1315, %v1417
      %v1419 = vpop.f32.mrf.mxu0
      %v1420 = vadd.f32 %v1317, %v1419
      %v1421 = vpop.f32.mrf.mxu0
      %v1422 = vadd.f32 %v1319, %v1421
      %1423 = vdwg.mxu0
      %v1501 = vunpack.c.l.b16 %v449
      %v1502 = vunpack.c.h.b16 %v449
      %v1503 = vunpack.c.l.b16 %v450
      %v1504 = vunpack.c.h.b16 %v450
      %v1505 = vunpack.c.l.b16 %v451
      %v1506 = vunpack.c.h.b16 %v451
      %v1507 = vunpack.c.l.b16 %v452
      %v1508 = vunpack.c.h.b16 %v452
      %v1509 = vunpack.c.l.b16 %v453
      %v1510 = vunpack.c.h.b16 %v453
      %v1511 = vunpack.c.l.b16 %v454
      %v1512 = vunpack.c.h.b16 %v454
      %v1513 = vunpack.c.l.b16 %v455
      %v1514 = vunpack.c.h.b16 %v455
      %v1515 = vunpack.c.l.b16 %v456
      %v1516 = vunpack.c.h.b16 %v456
      %v1517 = vunpack.c.l.b16 %v457
      %v1518 = vunpack.c.h.b16 %v457
      %v1519 = vunpack.c.l.b16 %v458
      %v1520 = vunpack.c.h.b16 %v458
      %v1521 = vunpack.c.l.b16 %v459
      %v1522 = vunpack.c.h.b16 %v459
      %v1523 = vunpack.c.l.b16 %v460
      %v1524 = vunpack.c.h.b16 %v460
      %v1525 = vunpack.c.l.b16 %v461
      %v1526 = vunpack.c.h.b16 %v461
      %v1527 = vunpack.c.l.b16 %v462
      %v1528 = vunpack.c.h.b16 %v462
      %v1529 = vunpack.c.l.b16 %v463
      %v1530 = vunpack.c.h.b16 %v463
      %v1531 = vunpack.c.l.b16 %v464
      %v1532 = vunpack.c.h.b16 %v464
      %v1533 = vunpack.c.l.b16 %v465
      %v1534 = vunpack.c.h.b16 %v465
      %v1535 = vunpack.c.l.b16 %v466
      %v1536 = vunpack.c.h.b16 %v466
      %v1537 = vunpack.c.l.b16 %v467
      %v1538 = vunpack.c.h.b16 %v467
      %v1539 = vunpack.c.l.b16 %v468
      %v1540 = vunpack.c.h.b16 %v468
      %v1541 = vunpack.c.l.b16 %v469
      %v1542 = vunpack.c.h.b16 %v469
      %v1543 = vunpack.c.l.b16 %v470
      %v1544 = vunpack.c.h.b16 %v470
      %v1545 = vunpack.c.l.b16 %v471
      %v1546 = vunpack.c.h.b16 %v471
      %v1547 = vunpack.c.l.b16 %v472
      %v1548 = vunpack.c.h.b16 %v472
      %v1549 = vunpack.c.l.b16 %v473
      %v1550 = vunpack.c.h.b16 %v473
      %v1551 = vunpack.c.l.b16 %v474
      %v1552 = vunpack.c.h.b16 %v474
      %v1553 = vunpack.c.l.b16 %v475
      %v1554 = vunpack.c.h.b16 %v475
      %v1555 = vunpack.c.l.b16 %v476
      %v1556 = vunpack.c.h.b16 %v476
      %v1557 = vunpack.c.l.b16 %v477
      %v1558 = vunpack.c.h.b16 %v477
      %v1559 = vunpack.c.l.b16 %v478
      %v1560 = vunpack.c.h.b16 %v478
      %v1561 = vunpack.c.l.b16 %v479
      %v1562 = vunpack.c.h.b16 %v479
      %v1563 = vunpack.c.l.b16 %v480
      %v1564 = vunpack.c.h.b16 %v480
      %v1565 = vunpack.c.l.b16 %v481
      %v1566 = vunpack.c.h.b16 %v481
      %v1567 = vunpack.c.l.b16 %v482
      %v1568 = vunpack.c.h.b16 %v482
      %v1569 = vunpack.c.l.b16 %v483
      %v1570 = vunpack.c.h.b16 %v483
      %v1571 = vunpack.c.l.b16 %v484
      %v1572 = vunpack.c.h.b16 %v484
      %v1573 = vunpack.c.l.b16 %v485
      %v1574 = vunpack.c.h.b16 %v485
      %v1575 = vunpack.c.l.b16 %v486
      %v1576 = vunpack.c.h.b16 %v486
      %v1577 = vunpack.c.l.b16 %v487
      %v1578 = vunpack.c.h.b16 %v487
      %v1579 = vunpack.c.l.b16 %v488
      %v1580 = vunpack.c.h.b16 %v488
      %v1581 = vunpack.c.l.b16 %v489
      %v1582 = vunpack.c.h.b16 %v489
      %v1583 = vunpack.c.l.b16 %v490
      %v1584 = vunpack.c.h.b16 %v490
      %v1585 = vunpack.c.l.b16 %v491
      %v1586 = vunpack.c.h.b16 %v491
      %v1587 = vunpack.c.l.b16 %v492
      %v1588 = vunpack.c.h.b16 %v492
      %v1589 = vunpack.c.l.b16 %v493
      %v1590 = vunpack.c.h.b16 %v493
      %v1591 = vunpack.c.l.b16 %v494
      %v1592 = vunpack.c.h.b16 %v494
      %v1593 = vunpack.c.l.b16 %v495
      %v1594 = vunpack.c.h.b16 %v495
      %v1595 = vunpack.c.l.b16 %v496
      %v1596 = vunpack.c.h.b16 %v496
      %v1597 = vunpack.c.l.b16 %v497
      %v1598 = vunpack.c.h.b16 %v497
      %v1599 = vunpack.c.l.b16 %v498
      %v1600 = vunpack.c.h.b16 %v498
      %v1601 = vunpack.c.l.b16 %v499
      %v1602 = vunpack.c.h.b16 %v499
      %v1603 = vunpack.c.l.b16 %v500
      %v1604 = vunpack.c.h.b16 %v500
      %v1605 = vunpack.c.l.b16 %v501
      %v1606 = vunpack.c.h.b16 %v501
      %v1607 = vunpack.c.l.b16 %v502
      %v1608 = vunpack.c.h.b16 %v502
      %v1609 = vunpack.c.l.b16 %v503
      %v1610 = vunpack.c.h.b16 %v503
      %v1611 = vunpack.c.l.b16 %v504
      %v1612 = vunpack.c.h.b16 %v504
      %v1613 = vpack.c.b16 %v1503, %v1501
      %v1614 = vpack.c.b16 %v1504, %v1502
      %v1615 = vpack.c.b16 %v1507, %v1505
      %v1616 = vpack.c.b16 %v1508, %v1506
      %v1617 = vpack.c.b16 %v1511, %v1509
      %v1618 = vpack.c.b16 %v1512, %v1510
      %v1619 = vpack.c.b16 %v1515, %v1513
      %v1620 = vpack.c.b16 %v1516, %v1514
      %v1621 = vpack.c.b16 %v1519, %v1517
      %v1622 = vpack.c.b16 %v1520, %v1518
      %v1623 = vpack.c.b16 %v1523, %v1521
      %v1624 = vpack.c.b16 %v1524, %v1522
      %v1625 = vpack.c.b16 %v1527, %v1525
      %v1626 = vpack.c.b16 %v1528, %v1526
      %v1627 = vpack.c.b16 %v1531, %v1529
      %v1628 = vpack.c.b16 %v1532, %v1530
      %v1629 = vpack.c.b16 %v1535, %v1533
      %v1630 = vpack.c.b16 %v1536, %v1534
      %v1631 = vpack.c.b16 %v1539, %v1537
      %v1632 = vpack.c.b16 %v1540, %v1538
      %v1633 = vpack.c.b16 %v1543, %v1541
      %v1634 = vpack.c.b16 %v1544, %v1542
      %v1635 = vpack.c.b16 %v1547, %v1545
      %v1636 = vpack.c.b16 %v1548, %v1546
      %v1637 = vpack.c.b16 %v1551, %v1549
      %v1638 = vpack.c.b16 %v1552, %v1550
      %v1639 = vpack.c.b16 %v1555, %v1553
      %v1640 = vpack.c.b16 %v1556, %v1554
      %v1641 = vpack.c.b16 %v1559, %v1557
      %v1642 = vpack.c.b16 %v1560, %v1558
      %v1643 = vpack.c.b16 %v1563, %v1561
      %v1644 = vpack.c.b16 %v1564, %v1562
      %v1645 = vpack.c.b16 %v1567, %v1565
      %v1646 = vpack.c.b16 %v1568, %v1566
      %v1647 = vpack.c.b16 %v1571, %v1569
      %v1648 = vpack.c.b16 %v1572, %v1570
      %v1649 = vpack.c.b16 %v1575, %v1573
      %v1650 = vpack.c.b16 %v1576, %v1574
      %v1651 = vpack.c.b16 %v1579, %v1577
      %v1652 = vpack.c.b16 %v1580, %v1578
      %v1653 = vpack.c.b16 %v1583, %v1581
      %v1654 = vpack.c.b16 %v1584, %v1582
      %v1655 = vpack.c.b16 %v1587, %v1585
      %v1656 = vpack.c.b16 %v1588, %v1586
      %v1657 = vpack.c.b16 %v1591, %v1589
      %v1658 = vpack.c.b16 %v1592, %v1590
      %v1659 = vpack.c.b16 %v1595, %v1593
      %v1660 = vpack.c.b16 %v1596, %v1594
      %v1661 = vpack.c.b16 %v1599, %v1597
      %v1662 = vpack.c.b16 %v1600, %v1598
      %v1663 = vpack.c.b16 %v1603, %v1601
      %v1664 = vpack.c.b16 %v1604, %v1602
      %v1665 = vpack.c.b16 %v1607, %v1605
      %v1666 = vpack.c.b16 %v1608, %v1606
      %v1667 = vpack.c.b16 %v1611, %v1609
      %v1668 = vpack.c.b16 %v1612, %v1610
      %v1725 = vsel %vm1196, %v649, 0
      %v1727 = vsel %vm1196, %v653, 0
      %v1729 = vsel %vm1196, %v657, 0
      %v1731 = vsel %vm1196, %v661, 0
      %v1733 = vsel %vm1196, %v665, 0
      %v1735 = vsel %vm1196, %v669, 0
      %v1737 = vsel %vm1196, %v673, 0
      %1739 = vmatprep.subr.bf16.mxu0 %v1628
      %1740 = vmatpush1.bf16.msra.mxu0 %v1627
      %1741 = vmatprep.subr.bf16.mxu0 %v1626
      %1742 = vmatpush1.bf16.msra.mxu0 %v1625
      %1743 = vmatprep.subr.bf16.mxu0 %v1624
      %1744 = vmatpush1.bf16.msra.mxu0 %v1623
      %1745 = vmatprep.subr.bf16.mxu0 %v1622
      %1746 = vmatpush1.bf16.msra.mxu0 %v1621
      %1747 = vmatprep.subr.bf16.mxu0 %v1620
      %1748 = vmatpush1.bf16.msra.mxu0 %v1619
      %1749 = vmatprep.subr.bf16.mxu0 %v1618
      %1750 = vmatpush1.bf16.msra.mxu0 %v1617
      %1751 = vmatprep.subr.bf16.mxu0 %v1616
      %1752 = vmatpush1.bf16.msra.mxu0 %v1615
      %1753 = vmatprep.subr.bf16.mxu0 %v1614
      %1754 = vmatpush1.bf16.msra.mxu0 %v1613
      %1755 = vmatprep.subr.bf16.mxu0 %v1644
      %1756 = vmatpush2.bf16.msra.mxu0 %v1643
      %1757 = vmatprep.subr.bf16.mxu0 %v1642
      %1758 = vmatpush2.bf16.msra.mxu0 %v1641
      %1759 = vmatprep.subr.bf16.mxu0 %v1640
      %1760 = vmatpush2.bf16.msra.mxu0 %v1639
      %1761 = vmatprep.subr.bf16.mxu0 %v1638
      %1762 = vmatpush2.bf16.msra.mxu0 %v1637
      %1763 = vmatprep.subr.bf16.mxu0 %v1636
      %1764 = vmatpush2.bf16.msra.mxu0 %v1635
      %1765 = vmatprep.subr.bf16.mxu0 %v1634
      %1766 = vmatpush2.bf16.msra.mxu0 %v1633
      %1767 = vmatprep.subr.bf16.mxu0 %v1632
      %1768 = vmatpush2.bf16.msra.mxu0 %v1631
      %1769 = vmatprep.subr.bf16.mxu0 %v1630
      %1770 = vmatpush2.bf16.msra.mxu0 %v1629
      %1771 = vmatprep.mubr.bf16.mxu0 %v647
      %1772 = vmatmul.mubr.bf16.gmra.mxu0 %v646
      %v1773 = vpop.f32.mrf.mxu0
      %v1774 = vadd.f32 %v1356, %v1773
      %v1775 = vpop.f32.mrf.mxu0
      %v1776 = vadd.f32 %v1358, %v1775
      %v1777 = vpop.f32.mrf.mxu0
      %v1778 = vadd.f32 %v1360, %v1777
      %v1779 = vpop.f32.mrf.mxu0
      %v1780 = vadd.f32 %v1362, %v1779
      %1781 = vmatprep.mubr.bf16.mxu0 %v651
      %1782 = vmatmul.mubr.bf16.gmra.mxu0 %v650
      %v1783 = vpop.f32.mrf.mxu0
      %v1784 = vadd.f32 %v1366, %v1783
      %v1785 = vpop.f32.mrf.mxu0
      %v1786 = vadd.f32 %v1368, %v1785
      %v1787 = vpop.f32.mrf.mxu0
      %v1788 = vadd.f32 %v1370, %v1787
      %v1789 = vpop.f32.mrf.mxu0
      %v1790 = vadd.f32 %v1372, %v1789
      %1791 = vmatprep.mubr.bf16.mxu0 %v655
      %1792 = vmatmul.mubr.bf16.gmra.mxu0 %v654
      %v1793 = vpop.f32.mrf.mxu0
      %v1794 = vadd.f32 %v1376, %v1793
      %v1795 = vpop.f32.mrf.mxu0
      %v1796 = vadd.f32 %v1378, %v1795
      %v1797 = vpop.f32.mrf.mxu0
      %v1798 = vadd.f32 %v1380, %v1797
      %v1799 = vpop.f32.mrf.mxu0
      %v1800 = vadd.f32 %v1382, %v1799
      %1801 = vmatprep.mubr.bf16.mxu0 %v659
      %1802 = vmatmul.mubr.bf16.gmra.mxu0 %v658
      %v1803 = vpop.f32.mrf.mxu0
      %v1804 = vadd.f32 %v1386, %v1803
      %v1805 = vpop.f32.mrf.mxu0
      %v1806 = vadd.f32 %v1388, %v1805
      %v1807 = vpop.f32.mrf.mxu0
      %v1808 = vadd.f32 %v1390, %v1807
      %v1809 = vpop.f32.mrf.mxu0
      %v1810 = vadd.f32 %v1392, %v1809
      %1811 = vmatprep.mubr.bf16.mxu0 %v663
      %1812 = vmatmul.mubr.bf16.gmra.mxu0 %v662
      %v1813 = vpop.f32.mrf.mxu0
      %v1814 = vadd.f32 %v1396, %v1813
      %v1815 = vpop.f32.mrf.mxu0
      %v1816 = vadd.f32 %v1398, %v1815
      %v1817 = vpop.f32.mrf.mxu0
      %v1818 = vadd.f32 %v1400, %v1817
      %v1819 = vpop.f32.mrf.mxu0
      %v1820 = vadd.f32 %v1402, %v1819
      %1821 = vmatprep.mubr.bf16.mxu0 %v667
      %1822 = vmatmul.mubr.bf16.gmra.mxu0 %v666
      %v1823 = vpop.f32.mrf.mxu0
      %v1824 = vadd.f32 %v1406, %v1823
      %v1825 = vpop.f32.mrf.mxu0
      %v1826 = vadd.f32 %v1408, %v1825
      %v1827 = vpop.f32.mrf.mxu0
      %v1828 = vadd.f32 %v1410, %v1827
      %v1829 = vpop.f32.mrf.mxu0
      %v1830 = vadd.f32 %v1412, %v1829
      %1831 = vmatprep.mubr.bf16.mxu0 %v671
      %1832 = vmatmul.mubr.bf16.gmra.mxu0 %v670
      %v1833 = vpop.f32.mrf.mxu0
      %v1834 = vadd.f32 %v1416, %v1833
      %v1835 = vpop.f32.mrf.mxu0
      %v1836 = vadd.f32 %v1418, %v1835
      %v1837 = vpop.f32.mrf.mxu0
      %v1838 = vadd.f32 %v1420, %v1837
      %v1839 = vpop.f32.mrf.mxu0
      %v1840 = vadd.f32 %v1422, %v1839
      %1841 = vdwg.mxu0
      %1842 = vmatprep.subr.bf16.mxu0 %v1660
      %1843 = vmatpush1.bf16.msra.mxu0 %v1659
      %1844 = vmatprep.subr.bf16.mxu0 %v1658
      %1845 = vmatpush1.bf16.msra.mxu0 %v1657
      %1846 = vmatprep.subr.bf16.mxu0 %v1656
      %1847 = vmatpush1.bf16.msra.mxu0 %v1655
      %1848 = vmatprep.subr.bf16.mxu0 %v1654
      %1849 = vmatpush1.bf16.msra.mxu0 %v1653
      %1850 = vmatprep.subr.bf16.mxu0 %v1652
      %1851 = vmatpush1.bf16.msra.mxu0 %v1651
      %1852 = vmatprep.subr.bf16.mxu0 %v1650
      %1853 = vmatpush1.bf16.msra.mxu0 %v1649
      %1854 = vmatprep.subr.bf16.mxu0 %v1648
      %1855 = vmatpush1.bf16.msra.mxu0 %v1647
      %1856 = vmatprep.subr.bf16.mxu0 %v1646
      %1857 = vmatpush1.bf16.msra.mxu0 %v1645
      %1858 = vmatprep.subr.bf16.mxu0 0
      %1859 = vmatpush2.bf16.msra.mxu0 0
      %1860 = vmatprep.subr.bf16.mxu0 0
      %1861 = vmatpush2.bf16.msra.mxu0 0
      %1862 = vmatprep.subr.bf16.mxu0 0
      %1863 = vmatpush2.bf16.msra.mxu0 0
      %1864 = vmatprep.subr.bf16.mxu0 0
      %1865 = vmatpush2.bf16.msra.mxu0 0
      %1866 = vmatprep.subr.bf16.mxu0 %v1668
      %1867 = vmatpush2.bf16.msra.mxu0 %v1667
      %1868 = vmatprep.subr.bf16.mxu0 %v1666
      %1869 = vmatpush2.bf16.msra.mxu0 %v1665
      %1870 = vmatprep.subr.bf16.mxu0 %v1664
      %1871 = vmatpush2.bf16.msra.mxu0 %v1663
      %1872 = vmatprep.subr.bf16.mxu0 %v1662
      %1873 = vmatpush2.bf16.msra.mxu0 %v1661
      %1874 = vmatprep.mubr.bf16.mxu0 %v1725
      %1875 = vmatmul.mubr.bf16.gmra.mxu0 %v648
      %v1876 = vpop.f32.mrf.mxu0
      %v1877 = vadd.f32 %v1774, %v1876
      %v1878 = vpop.f32.mrf.mxu0
      %v1879 = vadd.f32 %v1776, %v1878
      %v1880 = vpop.f32.mrf.mxu0
      %v1881 = vadd.f32 %v1778, %v1880
      %v1882 = vpop.f32.mrf.mxu0
      %v1883 = vadd.f32 %v1780, %v1882
      %1884 = vmatprep.mubr.bf16.mxu0 %v1727
      %1885 = vmatmul.mubr.bf16.gmra.mxu0 %v652
      %v1886 = vpop.f32.mrf.mxu0
      %v1887 = vadd.f32 %v1784, %v1886
      %v1888 = vpop.f32.mrf.mxu0
      %v1889 = vadd.f32 %v1786, %v1888
      %v1890 = vpop.f32.mrf.mxu0
      %v1891 = vadd.f32 %v1788, %v1890
      %v1892 = vpop.f32.mrf.mxu0
      %v1893 = vadd.f32 %v1790, %v1892
      %1894 = vmatprep.mubr.bf16.mxu0 %v1729
      %1895 = vmatmul.mubr.bf16.gmra.mxu0 %v656
      %v1896 = vpop.f32.mrf.mxu0
      %v1897 = vadd.f32 %v1794, %v1896
      %v1898 = vpop.f32.mrf.mxu0
      %v1899 = vadd.f32 %v1796, %v1898
      %v1900 = vpop.f32.mrf.mxu0
      %v1901 = vadd.f32 %v1798, %v1900
      %v1902 = vpop.f32.mrf.mxu0
      %v1903 = vadd.f32 %v1800, %v1902
      %1904 = vmatprep.mubr.bf16.mxu0 %v1731
      %1905 = vmatmul.mubr.bf16.gmra.mxu0 %v660
      %v1906 = vpop.f32.mrf.mxu0
      %v1907 = vadd.f32 %v1804, %v1906
      %v1908 = vpop.f32.mrf.mxu0
      %v1909 = vadd.f32 %v1806, %v1908
      %v1910 = vpop.f32.mrf.mxu0
      %v1911 = vadd.f32 %v1808, %v1910
      %v1912 = vpop.f32.mrf.mxu0
      %v1913 = vadd.f32 %v1810, %v1912
      %1914 = vmatprep.mubr.bf16.mxu0 %v1733
      %1915 = vmatmul.mubr.bf16.gmra.mxu0 %v664
      %v1916 = vpop.f32.mrf.mxu0
      %v1917 = vadd.f32 %v1814, %v1916
      %v1918 = vpop.f32.mrf.mxu0
      %v1919 = vadd.f32 %v1816, %v1918
      %v1920 = vpop.f32.mrf.mxu0
      %v1921 = vadd.f32 %v1818, %v1920
      %v1922 = vpop.f32.mrf.mxu0
      %v1923 = vadd.f32 %v1820, %v1922
      %1924 = vmatprep.mubr.bf16.mxu0 %v1735
      %1925 = vmatmul.mubr.bf16.gmra.mxu0 %v668
      %v1926 = vpop.f32.mrf.mxu0
      %v1927 = vadd.f32 %v1824, %v1926
      %v1928 = vpop.f32.mrf.mxu0
      %v1929 = vadd.f32 %v1826, %v1928
      %v1930 = vpop.f32.mrf.mxu0
      %v1931 = vadd.f32 %v1828, %v1930
      %v1932 = vpop.f32.mrf.mxu0
      %v1933 = vadd.f32 %v1830, %v1932
      %1934 = vmatprep.mubr.bf16.mxu0 %v1737
      %1935 = vmatmul.mubr.bf16.gmra.mxu0 %v672
      %v1936 = vpop.f32.mrf.mxu0
      %v1937 = vadd.f32 %v1834, %v1936
      %v1938 = vpop.f32.mrf.mxu0
      %v1939 = vadd.f32 %v1836, %v1938
      %v1940 = vpop.f32.mrf.mxu0
      %v1941 = vadd.f32 %v1838, %v1940
      %v1942 = vpop.f32.mrf.mxu0
      %v1943 = vadd.f32 %v1840, %v1942
      %1944 = vdwg.mxu0
      %s1945 = scalar_lea.vmem %s1, 896
      %v1946 = vld [vmem:[%s1945] sm:$0xff]
      %v1947 = vld [vmem:[%s1945 + $0x8] sm:$0xff]
      %v1948 = vld [vmem:[%s1945 + $0x10] sm:$0xff]
      %v1949 = vld [vmem:[%s1945 + $0x18] sm:$0xff]
      %v1950 = vld [vmem:[%s1945 + $0x20] sm:$0xff]
      %v1951 = vld [vmem:[%s1945 + $0x28] sm:$0xff]
      %v1952 = vld [vmem:[%s1945 + $0x30] sm:$0xff]
      %v1953 = vld [vmem:[%s1945 + $0x38] sm:$0xff]
      %v1954 = vld [vmem:[%s1945 + $0x40] sm:$0xff]
      %v1955 = vld [vmem:[%s1945 + $0x48] sm:$0xff]
      %v1956 = vld [vmem:[%s1945 + $0x50] sm:$0xff]
      %v1957 = vld [vmem:[%s1945 + $0x58] sm:$0xff]
      %v1958 = vld [vmem:[%s1945 + $0x60] sm:$0xff]
      %v1959 = vld [vmem:[%s1945 + $0x68] sm:$0xff]
      %v1960 = vld [vmem:[%s1945 + $0x70] sm:$0xff]
      %v1961 = vld [vmem:[%s1945 + $0x78] sm:$0xff]
      %v1962 = vld [vmem:[%s1945 + $0x80] sm:$0xff]
      %v1963 = vld [vmem:[%s1945 + $0x88] sm:$0xff]
      %v1964 = vld [vmem:[%s1945 + $0x90] sm:$0xff]
      %v1965 = vld [vmem:[%s1945 + $0x98] sm:$0xff]
      %v1966 = vld [vmem:[%s1945 + $0xa0] sm:$0xff]
      %v1967 = vld [vmem:[%s1945 + $0xa8] sm:$0xff]
      %v1968 = vld [vmem:[%s1945 + $0xb0] sm:$0xff]
      %v1969 = vld [vmem:[%s1945 + $0xb8] sm:$0xff]
      %v1970 = vld [vmem:[%s1945 + $0xc0] sm:$0xff]
      %v1971 = vld [vmem:[%s1945 + $0xc8] sm:$0xff]
      %v1972 = vld [vmem:[%s1945 + $0xd0] sm:$0xff]
      %v1973 = vld [vmem:[%s1945 + $0xd8] sm:$0xff]
      %v1974 = vld [vmem:[%s1945 + $0xe0] sm:$0xff]
      %v1975 = vld [vmem:[%s1945 + $0xe8] sm:$0xff]
      %v1976 = vld [vmem:[%s1945 + $0xf0] sm:$0xff]
      %v1977 = vld [vmem:[%s1945 + $0xf8] sm:$0xff]
      %v1978 = vld [vmem:[%s1945 + $0x100] sm:$0xff]
      %v1979 = vld [vmem:[%s1945 + $0x108] sm:$0xff]
      %v1980 = vld [vmem:[%s1945 + $0x110] sm:$0xff]
      %v1981 = vld [vmem:[%s1945 + $0x118] sm:$0xff]
      %v1982 = vld [vmem:[%s1945 + $0x120] sm:$0xff]
      %v1983 = vld [vmem:[%s1945 + $0x128] sm:$0xff]
      %v1984 = vld [vmem:[%s1945 + $0x130] sm:$0xff]
      %v1985 = vld [vmem:[%s1945 + $0x138] sm:$0xff]
      %v1986 = vld [vmem:[%s1945 + $0x140] sm:$0xff]
      %v1987 = vld [vmem:[%s1945 + $0x148] sm:$0xff]
      %v1988 = vld [vmem:[%s1945 + $0x150] sm:$0xff]
      %v1989 = vld [vmem:[%s1945 + $0x158] sm:$0xff]
      %v1990 = vld [vmem:[%s1945 + $0x160] sm:$0xff]
      %v1991 = vld [vmem:[%s1945 + $0x168] sm:$0xff]
      %v1992 = vld [vmem:[%s1945 + $0x170] sm:$0xff]
      %v1993 = vld [vmem:[%s1945 + $0x178] sm:$0xff]
      %v1994 = vld [vmem:[%s1945 + $0x180] sm:$0xff]
      %v1995 = vld [vmem:[%s1945 + $0x188] sm:$0xff]
      %v1996 = vld [vmem:[%s1945 + $0x190] sm:$0xff]
      %v1997 = vld [vmem:[%s1945 + $0x198] sm:$0xff]
      %v1998 = vld [vmem:[%s1945 + $0x1a0] sm:$0xff]
      %v1999 = vld [vmem:[%s1945 + $0x1a8] sm:$0xff]
      %v2000 = vld [vmem:[%s1945 + $0x1b0] sm:$0xff]
      %v2001 = vld [vmem:[%s1945 + $0x1b8] sm:$0xff]
      %s2002 = scalar_lea.vmem %s1, 1344
      %v2003 = vld [vmem:[%s2002] sm:$0xff]
      %v2004 = vld [vmem:[%s2002 + $0x8] sm:$0xff]
      %v2005 = vld [vmem:[%s2002 + $0x10] sm:$0xff]
      %v2006 = vld [vmem:[%s2002 + $0x18] sm:$0xff]
      %v2007 = vld [vmem:[%s2002 + $0x20] sm:$0xff]
      %v2008 = vld [vmem:[%s2002 + $0x28] sm:$0xff]
      %v2009 = vld [vmem:[%s2002 + $0x30] sm:$0xff]
      %v2010 = vld [vmem:[%s2002 + $0x38] sm:$0xff]
      %v2011 = vld [vmem:[%s2002 + $0x40] sm:$0xff]
      %v2012 = vld [vmem:[%s2002 + $0x48] sm:$0xff]
      %v2013 = vld [vmem:[%s2002 + $0x50] sm:$0xff]
      %v2014 = vld [vmem:[%s2002 + $0x58] sm:$0xff]
      %v2015 = vld [vmem:[%s2002 + $0x60] sm:$0xff]
      %v2016 = vld [vmem:[%s2002 + $0x68] sm:$0xff]
      %v2017 = vld [vmem:[%s2002 + $0x70] sm:$0xff]
      %v2018 = vld [vmem:[%s2002 + $0x78] sm:$0xff]
      %v2019 = vld [vmem:[%s2002 + $0x80] sm:$0xff]
      %v2020 = vld [vmem:[%s2002 + $0x88] sm:$0xff]
      %v2021 = vld [vmem:[%s2002 + $0x90] sm:$0xff]
      %v2022 = vld [vmem:[%s2002 + $0x98] sm:$0xff]
      %v2023 = vld [vmem:[%s2002 + $0xa0] sm:$0xff]
      %v2024 = vld [vmem:[%s2002 + $0xa8] sm:$0xff]
      %v2025 = vld [vmem:[%s2002 + $0xb0] sm:$0xff]
      %v2026 = vld [vmem:[%s2002 + $0xb8] sm:$0xff]
      %v2027 = vld [vmem:[%s2002 + $0xc0] sm:$0xff]
      %v2028 = vld [vmem:[%s2002 + $0xc8] sm:$0xff]
      %v2029 = vld [vmem:[%s2002 + $0xd0] sm:$0xff]
      %v2030 = vld [vmem:[%s2002 + $0xd8] sm:$0xff]
      %v2031 = vld [vmem:[%s2002 + $0xe0] sm:$0xff]
      %v2032 = vld [vmem:[%s2002 + $0xe8] sm:$0xff]
      %v2033 = vld [vmem:[%s2002 + $0xf0] sm:$0xff]
      %v2034 = vld [vmem:[%s2002 + $0xf8] sm:$0xff]
      %v2035 = vld [vmem:[%s2002 + $0x100] sm:$0xff]
      %v2036 = vld [vmem:[%s2002 + $0x108] sm:$0xff]
      %v2037 = vld [vmem:[%s2002 + $0x110] sm:$0xff]
      %v2038 = vld [vmem:[%s2002 + $0x118] sm:$0xff]
      %v2039 = vld [vmem:[%s2002 + $0x120] sm:$0xff]
      %v2040 = vld [vmem:[%s2002 + $0x128] sm:$0xff]
      %v2041 = vld [vmem:[%s2002 + $0x130] sm:$0xff]
      %v2042 = vld [vmem:[%s2002 + $0x138] sm:$0xff]
      %v2043 = vld [vmem:[%s2002 + $0x140] sm:$0xff]
      %v2044 = vld [vmem:[%s2002 + $0x148] sm:$0xff]
      %v2045 = vld [vmem:[%s2002 + $0x150] sm:$0xff]
      %v2046 = vld [vmem:[%s2002 + $0x158] sm:$0xff]
      %v2047 = vld [vmem:[%s2002 + $0x160] sm:$0xff]
      %v2048 = vld [vmem:[%s2002 + $0x168] sm:$0xff]
      %v2049 = vld [vmem:[%s2002 + $0x170] sm:$0xff]
      %v2050 = vld [vmem:[%s2002 + $0x178] sm:$0xff]
      %v2051 = vld [vmem:[%s2002 + $0x180] sm:$0xff]
      %v2052 = vld [vmem:[%s2002 + $0x188] sm:$0xff]
      %v2053 = vld [vmem:[%s2002 + $0x190] sm:$0xff]
      %v2054 = vld [vmem:[%s2002 + $0x198] sm:$0xff]
      %v2055 = vld [vmem:[%s2002 + $0x1a0] sm:$0xff]
      %v2056 = vld [vmem:[%s2002 + $0x1a8] sm:$0xff]
      %v2057 = vld [vmem:[%s2002 + $0x1b0] sm:$0xff]
      %v2058 = vld [vmem:[%s2002 + $0x1b8] sm:$0xff]
      %v2115 = vunpack.c.l.b16 %v2003
      %v2116 = vunpack.c.h.b16 %v2003
      %v2117 = vunpack.c.l.b16 %v2004
      %v2118 = vunpack.c.h.b16 %v2004
      %v2119 = vunpack.c.l.b16 %v2005
      %v2120 = vunpack.c.h.b16 %v2005
      %v2121 = vunpack.c.l.b16 %v2006
      %v2122 = vunpack.c.h.b16 %v2006
      %v2123 = vunpack.c.l.b16 %v2007
      %v2124 = vunpack.c.h.b16 %v2007
      %v2125 = vunpack.c.l.b16 %v2008
      %v2126 = vunpack.c.h.b16 %v2008
      %v2127 = vunpack.c.l.b16 %v2009
      %v2128 = vunpack.c.h.b16 %v2009
      %v2129 = vunpack.c.l.b16 %v2010
      %v2130 = vunpack.c.h.b16 %v2010
      %v2131 = vunpack.c.l.b16 %v2011
      %v2132 = vunpack.c.h.b16 %v2011
      %v2133 = vunpack.c.l.b16 %v2012
      %v2134 = vunpack.c.h.b16 %v2012
      %v2135 = vunpack.c.l.b16 %v2013
      %v2136 = vunpack.c.h.b16 %v2013
      %v2137 = vunpack.c.l.b16 %v2014
      %v2138 = vunpack.c.h.b16 %v2014
      %v2139 = vunpack.c.l.b16 %v2015
      %v2140 = vunpack.c.h.b16 %v2015
      %v2141 = vunpack.c.l.b16 %v2016
      %v2142 = vunpack.c.h.b16 %v2016
      %v2143 = vunpack.c.l.b16 %v2017
      %v2144 = vunpack.c.h.b16 %v2017
      %v2145 = vunpack.c.l.b16 %v2018
      %v2146 = vunpack.c.h.b16 %v2018
      %v2147 = vunpack.c.l.b16 %v2019
      %v2148 = vunpack.c.h.b16 %v2019
      %v2149 = vunpack.c.l.b16 %v2020
      %v2150 = vunpack.c.h.b16 %v2020
      %v2151 = vunpack.c.l.b16 %v2021
      %v2152 = vunpack.c.h.b16 %v2021
      %v2153 = vunpack.c.l.b16 %v2022
      %v2154 = vunpack.c.h.b16 %v2022
      %v2155 = vunpack.c.l.b16 %v2023
      %v2156 = vunpack.c.h.b16 %v2023
      %v2157 = vunpack.c.l.b16 %v2024
      %v2158 = vunpack.c.h.b16 %v2024
      %v2159 = vunpack.c.l.b16 %v2025
      %v2160 = vunpack.c.h.b16 %v2025
      %v2161 = vunpack.c.l.b16 %v2026
      %v2162 = vunpack.c.h.b16 %v2026
      %v2163 = vunpack.c.l.b16 %v2027
      %v2164 = vunpack.c.h.b16 %v2027
      %v2165 = vunpack.c.l.b16 %v2028
      %v2166 = vunpack.c.h.b16 %v2028
      %v2167 = vunpack.c.l.b16 %v2029
      %v2168 = vunpack.c.h.b16 %v2029
      %v2169 = vunpack.c.l.b16 %v2030
      %v2170 = vunpack.c.h.b16 %v2030
      %v2171 = vunpack.c.l.b16 %v2031
      %v2172 = vunpack.c.h.b16 %v2031
      %v2173 = vunpack.c.l.b16 %v2032
      %v2174 = vunpack.c.h.b16 %v2032
      %v2175 = vunpack.c.l.b16 %v2033
      %v2176 = vunpack.c.h.b16 %v2033
      %v2177 = vunpack.c.l.b16 %v2034
      %v2178 = vunpack.c.h.b16 %v2034
      %v2179 = vunpack.c.l.b16 %v2035
      %v2180 = vunpack.c.h.b16 %v2035
      %v2181 = vunpack.c.l.b16 %v2036
      %v2182 = vunpack.c.h.b16 %v2036
      %v2183 = vunpack.c.l.b16 %v2037
      %v2184 = vunpack.c.h.b16 %v2037
      %v2185 = vunpack.c.l.b16 %v2038
      %v2186 = vunpack.c.h.b16 %v2038
      %v2187 = vunpack.c.l.b16 %v2039
      %v2188 = vunpack.c.h.b16 %v2039
      %v2189 = vunpack.c.l.b16 %v2040
      %v2190 = vunpack.c.h.b16 %v2040
      %v2191 = vunpack.c.l.b16 %v2041
      %v2192 = vunpack.c.h.b16 %v2041
      %v2193 = vunpack.c.l.b16 %v2042
      %v2194 = vunpack.c.h.b16 %v2042
      %v2195 = vunpack.c.l.b16 %v2043
      %v2196 = vunpack.c.h.b16 %v2043
      %v2197 = vunpack.c.l.b16 %v2044
      %v2198 = vunpack.c.h.b16 %v2044
      %v2199 = vunpack.c.l.b16 %v2045
      %v2200 = vunpack.c.h.b16 %v2045
      %v2201 = vunpack.c.l.b16 %v2046
      %v2202 = vunpack.c.h.b16 %v2046
      %v2203 = vunpack.c.l.b16 %v2047
      %v2204 = vunpack.c.h.b16 %v2047
      %v2205 = vunpack.c.l.b16 %v2048
      %v2206 = vunpack.c.h.b16 %v2048
      %v2207 = vunpack.c.l.b16 %v2049
      %v2208 = vunpack.c.h.b16 %v2049
      %v2209 = vunpack.c.l.b16 %v2050
      %v2210 = vunpack.c.h.b16 %v2050
      %v2211 = vunpack.c.l.b16 %v2051
      %v2212 = vunpack.c.h.b16 %v2051
      %v2213 = vunpack.c.l.b16 %v2052
      %v2214 = vunpack.c.h.b16 %v2052
      %v2215 = vunpack.c.l.b16 %v2053
      %v2216 = vunpack.c.h.b16 %v2053
      %v2217 = vunpack.c.l.b16 %v2054
      %v2218 = vunpack.c.h.b16 %v2054
      %v2219 = vunpack.c.l.b16 %v2055
      %v2220 = vunpack.c.h.b16 %v2055
      %v2221 = vunpack.c.l.b16 %v2056
      %v2222 = vunpack.c.h.b16 %v2056
      %v2223 = vunpack.c.l.b16 %v2057
      %v2224 = vunpack.c.h.b16 %v2057
      %v2225 = vunpack.c.l.b16 %v2058
      %v2226 = vunpack.c.h.b16 %v2058
      %v2227 = vpack.c.b16 %v2117, %v2115
      %v2228 = vpack.c.b16 %v2118, %v2116
      %v2229 = vpack.c.b16 %v2121, %v2119
      %v2230 = vpack.c.b16 %v2122, %v2120
      %v2231 = vpack.c.b16 %v2125, %v2123
      %v2232 = vpack.c.b16 %v2126, %v2124
      %v2233 = vpack.c.b16 %v2129, %v2127
      %v2234 = vpack.c.b16 %v2130, %v2128
      %v2235 = vpack.c.b16 %v2133, %v2131
      %v2236 = vpack.c.b16 %v2134, %v2132
      %v2237 = vpack.c.b16 %v2137, %v2135
      %v2238 = vpack.c.b16 %v2138, %v2136
      %v2239 = vpack.c.b16 %v2141, %v2139
      %v2240 = vpack.c.b16 %v2142, %v2140
      %v2241 = vpack.c.b16 %v2145, %v2143
      %v2242 = vpack.c.b16 %v2146, %v2144
      %v2243 = vpack.c.b16 %v2149, %v2147
      %v2244 = vpack.c.b16 %v2150, %v2148
      %v2245 = vpack.c.b16 %v2153, %v2151
      %v2246 = vpack.c.b16 %v2154, %v2152
      %v2247 = vpack.c.b16 %v2157, %v2155
      %v2248 = vpack.c.b16 %v2158, %v2156
      %v2249 = vpack.c.b16 %v2161, %v2159
      %v2250 = vpack.c.b16 %v2162, %v2160
      %v2251 = vpack.c.b16 %v2165, %v2163
      %v2252 = vpack.c.b16 %v2166, %v2164
      %v2253 = vpack.c.b16 %v2169, %v2167
      %v2254 = vpack.c.b16 %v2170, %v2168
      %v2255 = vpack.c.b16 %v2173, %v2171
      %v2256 = vpack.c.b16 %v2174, %v2172
      %v2257 = vpack.c.b16 %v2177, %v2175
      %v2258 = vpack.c.b16 %v2178, %v2176
      %v2259 = vpack.c.b16 %v2181, %v2179
      %v2260 = vpack.c.b16 %v2182, %v2180
      %v2261 = vpack.c.b16 %v2185, %v2183
      %v2262 = vpack.c.b16 %v2186, %v2184
      %v2263 = vpack.c.b16 %v2189, %v2187
      %v2264 = vpack.c.b16 %v2190, %v2188
      %v2265 = vpack.c.b16 %v2193, %v2191
      %v2266 = vpack.c.b16 %v2194, %v2192
      %v2267 = vpack.c.b16 %v2197, %v2195
      %v2268 = vpack.c.b16 %v2198, %v2196
      %v2269 = vpack.c.b16 %v2201, %v2199
      %v2270 = vpack.c.b16 %v2202, %v2200
      %v2271 = vpack.c.b16 %v2205, %v2203
      %v2272 = vpack.c.b16 %v2206, %v2204
      %v2273 = vpack.c.b16 %v2209, %v2207
      %v2274 = vpack.c.b16 %v2210, %v2208
      %v2275 = vpack.c.b16 %v2213, %v2211
      %v2276 = vpack.c.b16 %v2214, %v2212
      %v2277 = vpack.c.b16 %v2217, %v2215
      %v2278 = vpack.c.b16 %v2218, %v2216
      %v2279 = vpack.c.b16 %v2221, %v2219
      %v2280 = vpack.c.b16 %v2222, %v2220
      %v2281 = vpack.c.b16 %v2225, %v2223
      %v2282 = vpack.c.b16 %v2226, %v2224
      %2339 = vmatprep.subr.bf16.mxu0 %v2242
      %2340 = vmatpush1.bf16.msra.mxu0 %v2241
      %2341 = vmatprep.subr.bf16.mxu0 %v2240
      %2342 = vmatpush1.bf16.msra.mxu0 %v2239
      %2343 = vmatprep.subr.bf16.mxu0 %v2238
      %2344 = vmatpush1.bf16.msra.mxu0 %v2237
      %2345 = vmatprep.subr.bf16.mxu0 %v2236
      %2346 = vmatpush1.bf16.msra.mxu0 %v2235
      %2347 = vmatprep.subr.bf16.mxu0 %v2234
      %2348 = vmatpush1.bf16.msra.mxu0 %v2233
      %2349 = vmatprep.subr.bf16.mxu0 %v2232
      %2350 = vmatpush1.bf16.msra.mxu0 %v2231
      %2351 = vmatprep.subr.bf16.mxu0 %v2230
      %2352 = vmatpush1.bf16.msra.mxu0 %v2229
      %2353 = vmatprep.subr.bf16.mxu0 %v2228
      %2354 = vmatpush1.bf16.msra.mxu0 %v2227
      %2355 = vmatprep.subr.bf16.mxu0 %v2258
      %2356 = vmatpush2.bf16.msra.mxu0 %v2257
      %2357 = vmatprep.subr.bf16.mxu0 %v2256
      %2358 = vmatpush2.bf16.msra.mxu0 %v2255
      %2359 = vmatprep.subr.bf16.mxu0 %v2254
      %2360 = vmatpush2.bf16.msra.mxu0 %v2253
      %2361 = vmatprep.subr.bf16.mxu0 %v2252
      %2362 = vmatpush2.bf16.msra.mxu0 %v2251
      %2363 = vmatprep.subr.bf16.mxu0 %v2250
      %2364 = vmatpush2.bf16.msra.mxu0 %v2249
      %2365 = vmatprep.subr.bf16.mxu0 %v2248
      %2366 = vmatpush2.bf16.msra.mxu0 %v2247
      %2367 = vmatprep.subr.bf16.mxu0 %v2246
      %2368 = vmatpush2.bf16.msra.mxu0 %v2245
      %2369 = vmatprep.subr.bf16.mxu0 %v2244
      %2370 = vmatpush2.bf16.msra.mxu0 %v2243
      %2371 = vmatprep.mubr.bf16.mxu0 %v698
      %2372 = vmatmul.mubr.bf16.gmra.mxu0 %v686
      %v2373 = vpop.f32.mrf.mxu0
      %v2374 = vadd.f32 0.0, %v2373
      %v2375 = vpop.f32.mrf.mxu0
      %v2376 = vadd.f32 0.0, %v2375
      %v2377 = vpop.f32.mrf.mxu0
      %v2378 = vadd.f32 0.0, %v2377
      %v2379 = vpop.f32.mrf.mxu0
      %v2380 = vadd.f32 0.0, %v2379
      %2381 = vmatprep.mubr.bf16.mxu0 %v738
      %2382 = vmatmul.mubr.bf16.gmra.mxu0 %v730
      %v2383 = vpop.f32.mrf.mxu0
      %v2384 = vadd.f32 0.0, %v2383
      %v2385 = vpop.f32.mrf.mxu0
      %v2386 = vadd.f32 0.0, %v2385
      %v2387 = vpop.f32.mrf.mxu0
      %v2388 = vadd.f32 0.0, %v2387
      %v2389 = vpop.f32.mrf.mxu0
      %v2390 = vadd.f32 0.0, %v2389
      %2391 = vmatprep.mubr.bf16.mxu0 %v770
      %2392 = vmatmul.mubr.bf16.gmra.mxu0 %v762
      %v2393 = vpop.f32.mrf.mxu0
      %v2394 = vadd.f32 0.0, %v2393
      %v2395 = vpop.f32.mrf.mxu0
      %v2396 = vadd.f32 0.0, %v2395
      %v2397 = vpop.f32.mrf.mxu0
      %v2398 = vadd.f32 0.0, %v2397
      %v2399 = vpop.f32.mrf.mxu0
      %v2400 = vadd.f32 0.0, %v2399
      %2401 = vmatprep.mubr.bf16.mxu0 %v802
      %2402 = vmatmul.mubr.bf16.gmra.mxu0 %v794
      %v2403 = vpop.f32.mrf.mxu0
      %v2404 = vadd.f32 0.0, %v2403
      %v2405 = vpop.f32.mrf.mxu0
      %v2406 = vadd.f32 0.0, %v2405
      %v2407 = vpop.f32.mrf.mxu0
      %v2408 = vadd.f32 0.0, %v2407
      %v2409 = vpop.f32.mrf.mxu0
      %v2410 = vadd.f32 0.0, %v2409
      %2411 = vmatprep.mubr.bf16.mxu0 %v834
      %2412 = vmatmul.mubr.bf16.gmra.mxu0 %v826
      %v2413 = vpop.f32.mrf.mxu0
      %v2414 = vadd.f32 0.0, %v2413
      %v2415 = vpop.f32.mrf.mxu0
      %v2416 = vadd.f32 0.0, %v2415
      %v2417 = vpop.f32.mrf.mxu0
      %v2418 = vadd.f32 0.0, %v2417
      %v2419 = vpop.f32.mrf.mxu0
      %v2420 = vadd.f32 0.0, %v2419
      %2421 = vmatprep.mubr.bf16.mxu0 %v866
      %2422 = vmatmul.mubr.bf16.gmra.mxu0 %v858
      %v2423 = vpop.f32.mrf.mxu0
      %v2424 = vadd.f32 0.0, %v2423
      %v2425 = vpop.f32.mrf.mxu0
      %v2426 = vadd.f32 0.0, %v2425
      %v2427 = vpop.f32.mrf.mxu0
      %v2428 = vadd.f32 0.0, %v2427
      %v2429 = vpop.f32.mrf.mxu0
      %v2430 = vadd.f32 0.0, %v2429
      %2431 = vmatprep.mubr.bf16.mxu0 %v888
      %2432 = vmatmul.mubr.bf16.gmra.mxu0 %v885
      %v2433 = vpop.f32.mrf.mxu0
      %v2434 = vadd.f32 0.0, %v2433
      %v2435 = vpop.f32.mrf.mxu0
      %v2436 = vadd.f32 0.0, %v2435
      %v2437 = vpop.f32.mrf.mxu0
      %v2438 = vadd.f32 0.0, %v2437
      %v2439 = vpop.f32.mrf.mxu0
      %v2440 = vadd.f32 0.0, %v2439
      %2441 = vdwg.mxu0
      %2442 = vmatprep.subr.bf16.mxu0 %v2274
      %2443 = vmatpush1.bf16.msra.mxu0 %v2273
      %2444 = vmatprep.subr.bf16.mxu0 %v2272
      %2445 = vmatpush1.bf16.msra.mxu0 %v2271
      %2446 = vmatprep.subr.bf16.mxu0 %v2270
      %2447 = vmatpush1.bf16.msra.mxu0 %v2269
      %2448 = vmatprep.subr.bf16.mxu0 %v2268
      %2449 = vmatpush1.bf16.msra.mxu0 %v2267
      %2450 = vmatprep.subr.bf16.mxu0 %v2266
      %2451 = vmatpush1.bf16.msra.mxu0 %v2265
      %2452 = vmatprep.subr.bf16.mxu0 %v2264
      %2453 = vmatpush1.bf16.msra.mxu0 %v2263
      %2454 = vmatprep.subr.bf16.mxu0 %v2262
      %2455 = vmatpush1.bf16.msra.mxu0 %v2261
      %2456 = vmatprep.subr.bf16.mxu0 %v2260
      %2457 = vmatpush1.bf16.msra.mxu0 %v2259
      %2458 = vmatprep.subr.bf16.mxu0 0
      %2459 = vmatpush2.bf16.msra.mxu0 0
      %2460 = vmatprep.subr.bf16.mxu0 0
      %2461 = vmatpush2.bf16.msra.mxu0 0
      %2462 = vmatprep.subr.bf16.mxu0 0
      %2463 = vmatpush2.bf16.msra.mxu0 0
      %2464 = vmatprep.subr.bf16.mxu0 0
      %2465 = vmatpush2.bf16.msra.mxu0 0
      %2466 = vmatprep.subr.bf16.mxu0 %v2282
      %2467 = vmatpush2.bf16.msra.mxu0 %v2281
      %2468 = vmatprep.subr.bf16.mxu0 %v2280
      %2469 = vmatpush2.bf16.msra.mxu0 %v2279
      %2470 = vmatprep.subr.bf16.mxu0 %v2278
      %2471 = vmatpush2.bf16.msra.mxu0 %v2277
      %2472 = vmatprep.subr.bf16.mxu0 %v2276
      %2473 = vmatpush2.bf16.msra.mxu0 %v2275
      %2474 = vmatprep.mubr.bf16.mxu0 %v1198
      %2475 = vmatmul.mubr.bf16.gmra.mxu0 %v710
      %v2476 = vpop.f32.mrf.mxu0
      %v2477 = vadd.f32 %v2374, %v2476
      %v2478 = vpop.f32.mrf.mxu0
      %v2479 = vadd.f32 %v2376, %v2478
      %v2480 = vpop.f32.mrf.mxu0
      %v2481 = vadd.f32 %v2378, %v2480
      %v2482 = vpop.f32.mrf.mxu0
      %v2483 = vadd.f32 %v2380, %v2482
      %2484 = vmatprep.mubr.bf16.mxu0 %v1201
      %2485 = vmatmul.mubr.bf16.gmra.mxu0 %v746
      %v2486 = vpop.f32.mrf.mxu0
      %v2487 = vadd.f32 %v2384, %v2486
      %v2488 = vpop.f32.mrf.mxu0
      %v2489 = vadd.f32 %v2386, %v2488
      %v2490 = vpop.f32.mrf.mxu0
      %v2491 = vadd.f32 %v2388, %v2490
      %v2492 = vpop.f32.mrf.mxu0
      %v2493 = vadd.f32 %v2390, %v2492
      %2494 = vmatprep.mubr.bf16.mxu0 %v1204
      %2495 = vmatmul.mubr.bf16.gmra.mxu0 %v778
      %v2496 = vpop.f32.mrf.mxu0
      %v2497 = vadd.f32 %v2394, %v2496
      %v2498 = vpop.f32.mrf.mxu0
      %v2499 = vadd.f32 %v2396, %v2498
      %v2500 = vpop.f32.mrf.mxu0
      %v2501 = vadd.f32 %v2398, %v2500
      %v2502 = vpop.f32.mrf.mxu0
      %v2503 = vadd.f32 %v2400, %v2502
      %2504 = vmatprep.mubr.bf16.mxu0 %v1207
      %2505 = vmatmul.mubr.bf16.gmra.mxu0 %v810
      %v2506 = vpop.f32.mrf.mxu0
      %v2507 = vadd.f32 %v2404, %v2506
      %v2508 = vpop.f32.mrf.mxu0
      %v2509 = vadd.f32 %v2406, %v2508
      %v2510 = vpop.f32.mrf.mxu0
      %v2511 = vadd.f32 %v2408, %v2510
      %v2512 = vpop.f32.mrf.mxu0
      %v2513 = vadd.f32 %v2410, %v2512
      %2514 = vmatprep.mubr.bf16.mxu0 %v1210
      %2515 = vmatmul.mubr.bf16.gmra.mxu0 %v842
      %v2516 = vpop.f32.mrf.mxu0
      %v2517 = vadd.f32 %v2414, %v2516
      %v2518 = vpop.f32.mrf.mxu0
      %v2519 = vadd.f32 %v2416, %v2518
      %v2520 = vpop.f32.mrf.mxu0
      %v2521 = vadd.f32 %v2418, %v2520
      %v2522 = vpop.f32.mrf.mxu0
      %v2523 = vadd.f32 %v2420, %v2522
      %2524 = vmatprep.mubr.bf16.mxu0 %v1213
      %2525 = vmatmul.mubr.bf16.gmra.mxu0 %v874
      %v2526 = vpop.f32.mrf.mxu0
      %v2527 = vadd.f32 %v2424, %v2526
      %v2528 = vpop.f32.mrf.mxu0
      %v2529 = vadd.f32 %v2426, %v2528
      %v2530 = vpop.f32.mrf.mxu0
      %v2531 = vadd.f32 %v2428, %v2530
      %v2532 = vpop.f32.mrf.mxu0
      %v2533 = vadd.f32 %v2430, %v2532
      %2534 = vmatprep.mubr.bf16.mxu0 %v1216
      %2535 = vmatmul.mubr.bf16.gmra.mxu0 %v891
      %v2536 = vpop.f32.mrf.mxu0
      %v2537 = vadd.f32 %v2434, %v2536
      %v2538 = vpop.f32.mrf.mxu0
      %v2539 = vadd.f32 %v2436, %v2538
      %v2540 = vpop.f32.mrf.mxu0
      %v2541 = vadd.f32 %v2438, %v2540
      %v2542 = vpop.f32.mrf.mxu0
      %v2543 = vadd.f32 %v2440, %v2542
      %2544 = vdwg.mxu0
      %v2601 = vunpack.c.l.b16 %v1946
      %v2602 = vunpack.c.h.b16 %v1946
      %v2603 = vunpack.c.l.b16 %v1947
      %v2604 = vunpack.c.h.b16 %v1947
      %v2605 = vunpack.c.l.b16 %v1948
      %v2606 = vunpack.c.h.b16 %v1948
      %v2607 = vunpack.c.l.b16 %v1949
      %v2608 = vunpack.c.h.b16 %v1949
      %v2609 = vunpack.c.l.b16 %v1950
      %v2610 = vunpack.c.h.b16 %v1950
      %v2611 = vunpack.c.l.b16 %v1951
      %v2612 = vunpack.c.h.b16 %v1951
      %v2613 = vunpack.c.l.b16 %v1952
      %v2614 = vunpack.c.h.b16 %v1952
      %v2615 = vunpack.c.l.b16 %v1953
      %v2616 = vunpack.c.h.b16 %v1953
      %v2617 = vunpack.c.l.b16 %v1954
      %v2618 = vunpack.c.h.b16 %v1954
      %v2619 = vunpack.c.l.b16 %v1955
      %v2620 = vunpack.c.h.b16 %v1955
      %v2621 = vunpack.c.l.b16 %v1956
      %v2622 = vunpack.c.h.b16 %v1956
      %v2623 = vunpack.c.l.b16 %v1957
      %v2624 = vunpack.c.h.b16 %v1957
      %v2625 = vunpack.c.l.b16 %v1958
      %v2626 = vunpack.c.h.b16 %v1958
      %v2627 = vunpack.c.l.b16 %v1959
      %v2628 = vunpack.c.h.b16 %v1959
      %v2629 = vunpack.c.l.b16 %v1960
      %v2630 = vunpack.c.h.b16 %v1960
      %v2631 = vunpack.c.l.b16 %v1961
      %v2632 = vunpack.c.h.b16 %v1961
      %v2633 = vunpack.c.l.b16 %v1962
      %v2634 = vunpack.c.h.b16 %v1962
      %v2635 = vunpack.c.l.b16 %v1963
      %v2636 = vunpack.c.h.b16 %v1963
      %v2637 = vunpack.c.l.b16 %v1964
      %v2638 = vunpack.c.h.b16 %v1964
      %v2639 = vunpack.c.l.b16 %v1965
      %v2640 = vunpack.c.h.b16 %v1965
      %v2641 = vunpack.c.l.b16 %v1966
      %v2642 = vunpack.c.h.b16 %v1966
      %v2643 = vunpack.c.l.b16 %v1967
      %v2644 = vunpack.c.h.b16 %v1967
      %v2645 = vunpack.c.l.b16 %v1968
      %v2646 = vunpack.c.h.b16 %v1968
      %v2647 = vunpack.c.l.b16 %v1969
      %v2648 = vunpack.c.h.b16 %v1969
      %v2649 = vunpack.c.l.b16 %v1970
      %v2650 = vunpack.c.h.b16 %v1970
      %v2651 = vunpack.c.l.b16 %v1971
      %v2652 = vunpack.c.h.b16 %v1971
      %v2653 = vunpack.c.l.b16 %v1972
      %v2654 = vunpack.c.h.b16 %v1972
      %v2655 = vunpack.c.l.b16 %v1973
      %v2656 = vunpack.c.h.b16 %v1973
      %v2657 = vunpack.c.l.b16 %v1974
      %v2658 = vunpack.c.h.b16 %v1974
      %v2659 = vunpack.c.l.b16 %v1975
      %v2660 = vunpack.c.h.b16 %v1975
      %v2661 = vunpack.c.l.b16 %v1976
      %v2662 = vunpack.c.h.b16 %v1976
      %v2663 = vunpack.c.l.b16 %v1977
      %v2664 = vunpack.c.h.b16 %v1977
      %v2665 = vunpack.c.l.b16 %v1978
      %v2666 = vunpack.c.h.b16 %v1978
      %v2667 = vunpack.c.l.b16 %v1979
      %v2668 = vunpack.c.h.b16 %v1979
      %v2669 = vunpack.c.l.b16 %v1980
      %v2670 = vunpack.c.h.b16 %v1980
      %v2671 = vunpack.c.l.b16 %v1981
      %v2672 = vunpack.c.h.b16 %v1981
      %v2673 = vunpack.c.l.b16 %v1982
      %v2674 = vunpack.c.h.b16 %v1982
      %v2675 = vunpack.c.l.b16 %v1983
      %v2676 = vunpack.c.h.b16 %v1983
      %v2677 = vunpack.c.l.b16 %v1984
      %v2678 = vunpack.c.h.b16 %v1984
      %v2679 = vunpack.c.l.b16 %v1985
      %v2680 = vunpack.c.h.b16 %v1985
      %v2681 = vunpack.c.l.b16 %v1986
      %v2682 = vunpack.c.h.b16 %v1986
      %v2683 = vunpack.c.l.b16 %v1987
      %v2684 = vunpack.c.h.b16 %v1987
      %v2685 = vunpack.c.l.b16 %v1988
      %v2686 = vunpack.c.h.b16 %v1988
      %v2687 = vunpack.c.l.b16 %v1989
      %v2688 = vunpack.c.h.b16 %v1989
      %v2689 = vunpack.c.l.b16 %v1990
      %v2690 = vunpack.c.h.b16 %v1990
      %v2691 = vunpack.c.l.b16 %v1991
      %v2692 = vunpack.c.h.b16 %v1991
      %v2693 = vunpack.c.l.b16 %v1992
      %v2694 = vunpack.c.h.b16 %v1992
      %v2695 = vunpack.c.l.b16 %v1993
      %v2696 = vunpack.c.h.b16 %v1993
      %v2697 = vunpack.c.l.b16 %v1994
      %v2698 = vunpack.c.h.b16 %v1994
      %v2699 = vunpack.c.l.b16 %v1995
      %v2700 = vunpack.c.h.b16 %v1995
      %v2701 = vunpack.c.l.b16 %v1996
      %v2702 = vunpack.c.h.b16 %v1996
      %v2703 = vunpack.c.l.b16 %v1997
      %v2704 = vunpack.c.h.b16 %v1997
      %v2705 = vunpack.c.l.b16 %v1998
      %v2706 = vunpack.c.h.b16 %v1998
      %v2707 = vunpack.c.l.b16 %v1999
      %v2708 = vunpack.c.h.b16 %v1999
      %v2709 = vunpack.c.l.b16 %v2000
      %v2710 = vunpack.c.h.b16 %v2000
      %v2711 = vunpack.c.l.b16 %v2001
      %v2712 = vunpack.c.h.b16 %v2001
      %v2713 = vpack.c.b16 %v2603, %v2601
      %v2714 = vpack.c.b16 %v2604, %v2602
      %v2715 = vpack.c.b16 %v2607, %v2605
      %v2716 = vpack.c.b16 %v2608, %v2606
      %v2717 = vpack.c.b16 %v2611, %v2609
      %v2718 = vpack.c.b16 %v2612, %v2610
      %v2719 = vpack.c.b16 %v2615, %v2613
      %v2720 = vpack.c.b16 %v2616, %v2614
      %v2721 = vpack.c.b16 %v2619, %v2617
      %v2722 = vpack.c.b16 %v2620, %v2618
      %v2723 = vpack.c.b16 %v2623, %v2621
      %v2724 = vpack.c.b16 %v2624, %v2622
      %v2725 = vpack.c.b16 %v2627, %v2625
      %v2726 = vpack.c.b16 %v2628, %v2626
      %v2727 = vpack.c.b16 %v2631, %v2629
      %v2728 = vpack.c.b16 %v2632, %v2630
      %v2729 = vpack.c.b16 %v2635, %v2633
      %v2730 = vpack.c.b16 %v2636, %v2634
      %v2731 = vpack.c.b16 %v2639, %v2637
      %v2732 = vpack.c.b16 %v2640, %v2638
      %v2733 = vpack.c.b16 %v2643, %v2641
      %v2734 = vpack.c.b16 %v2644, %v2642
      %v2735 = vpack.c.b16 %v2647, %v2645
      %v2736 = vpack.c.b16 %v2648, %v2646
      %v2737 = vpack.c.b16 %v2651, %v2649
      %v2738 = vpack.c.b16 %v2652, %v2650
      %v2739 = vpack.c.b16 %v2655, %v2653
      %v2740 = vpack.c.b16 %v2656, %v2654
      %v2741 = vpack.c.b16 %v2659, %v2657
      %v2742 = vpack.c.b16 %v2660, %v2658
      %v2743 = vpack.c.b16 %v2663, %v2661
      %v2744 = vpack.c.b16 %v2664, %v2662
      %v2745 = vpack.c.b16 %v2667, %v2665
      %v2746 = vpack.c.b16 %v2668, %v2666
      %v2747 = vpack.c.b16 %v2671, %v2669
      %v2748 = vpack.c.b16 %v2672, %v2670
      %v2749 = vpack.c.b16 %v2675, %v2673
      %v2750 = vpack.c.b16 %v2676, %v2674
      %v2751 = vpack.c.b16 %v2679, %v2677
      %v2752 = vpack.c.b16 %v2680, %v2678
      %v2753 = vpack.c.b16 %v2683, %v2681
      %v2754 = vpack.c.b16 %v2684, %v2682
      %v2755 = vpack.c.b16 %v2687, %v2685
      %v2756 = vpack.c.b16 %v2688, %v2686
      %v2757 = vpack.c.b16 %v2691, %v2689
      %v2758 = vpack.c.b16 %v2692, %v2690
      %v2759 = vpack.c.b16 %v2695, %v2693
      %v2760 = vpack.c.b16 %v2696, %v2694
      %v2761 = vpack.c.b16 %v2699, %v2697
      %v2762 = vpack.c.b16 %v2700, %v2698
      %v2763 = vpack.c.b16 %v2703, %v2701
      %v2764 = vpack.c.b16 %v2704, %v2702
      %v2765 = vpack.c.b16 %v2707, %v2705
      %v2766 = vpack.c.b16 %v2708, %v2706
      %v2767 = vpack.c.b16 %v2711, %v2709
      %v2768 = vpack.c.b16 %v2712, %v2710
      %2825 = vmatprep.subr.bf16.mxu0 %v2728
      %2826 = vmatpush1.bf16.msra.mxu0 %v2727
      %2827 = vmatprep.subr.bf16.mxu0 %v2726
      %2828 = vmatpush1.bf16.msra.mxu0 %v2725
      %2829 = vmatprep.subr.bf16.mxu0 %v2724
      %2830 = vmatpush1.bf16.msra.mxu0 %v2723
      %2831 = vmatprep.subr.bf16.mxu0 %v2722
      %2832 = vmatpush1.bf16.msra.mxu0 %v2721
      %2833 = vmatprep.subr.bf16.mxu0 %v2720
      %2834 = vmatpush1.bf16.msra.mxu0 %v2719
      %2835 = vmatprep.subr.bf16.mxu0 %v2718
      %2836 = vmatpush1.bf16.msra.mxu0 %v2717
      %2837 = vmatprep.subr.bf16.mxu0 %v2716
      %2838 = vmatpush1.bf16.msra.mxu0 %v2715
      %2839 = vmatprep.subr.bf16.mxu0 %v2714
      %2840 = vmatpush1.bf16.msra.mxu0 %v2713
      %2841 = vmatprep.subr.bf16.mxu0 %v2744
      %2842 = vmatpush2.bf16.msra.mxu0 %v2743
      %2843 = vmatprep.subr.bf16.mxu0 %v2742
      %2844 = vmatpush2.bf16.msra.mxu0 %v2741
      %2845 = vmatprep.subr.bf16.mxu0 %v2740
      %2846 = vmatpush2.bf16.msra.mxu0 %v2739
      %2847 = vmatprep.subr.bf16.mxu0 %v2738
      %2848 = vmatpush2.bf16.msra.mxu0 %v2737
      %2849 = vmatprep.subr.bf16.mxu0 %v2736
      %2850 = vmatpush2.bf16.msra.mxu0 %v2735
      %2851 = vmatprep.subr.bf16.mxu0 %v2734
      %2852 = vmatpush2.bf16.msra.mxu0 %v2733
      %2853 = vmatprep.subr.bf16.mxu0 %v2732
      %2854 = vmatpush2.bf16.msra.mxu0 %v2731
      %2855 = vmatprep.subr.bf16.mxu0 %v2730
      %2856 = vmatpush2.bf16.msra.mxu0 %v2729
      %2857 = vmatprep.mubr.bf16.mxu0 %v647
      %2858 = vmatmul.mubr.bf16.gmra.mxu0 %v646
      %v2859 = vpop.f32.mrf.mxu0
      %v2860 = vadd.f32 %v2477, %v2859
      %v2861 = vpop.f32.mrf.mxu0
      %v2862 = vadd.f32 %v2479, %v2861
      %v2863 = vpop.f32.mrf.mxu0
      %v2864 = vadd.f32 %v2481, %v2863
      %v2865 = vpop.f32.mrf.mxu0
      %v2866 = vadd.f32 %v2483, %v2865
      %2867 = vmatprep.mubr.bf16.mxu0 %v651
      %2868 = vmatmul.mubr.bf16.gmra.mxu0 %v650
      %v2869 = vpop.f32.mrf.mxu0
      %v2870 = vadd.f32 %v2487, %v2869
      %v2871 = vpop.f32.mrf.mxu0
      %v2872 = vadd.f32 %v2489, %v2871
      %v2873 = vpop.f32.mrf.mxu0
      %v2874 = vadd.f32 %v2491, %v2873
      %v2875 = vpop.f32.mrf.mxu0
      %v2876 = vadd.f32 %v2493, %v2875
      %2877 = vmatprep.mubr.bf16.mxu0 %v655
      %2878 = vmatmul.mubr.bf16.gmra.mxu0 %v654
      %v2879 = vpop.f32.mrf.mxu0
      %v2880 = vadd.f32 %v2497, %v2879
      %v2881 = vpop.f32.mrf.mxu0
      %v2882 = vadd.f32 %v2499, %v2881
      %v2883 = vpop.f32.mrf.mxu0
      %v2884 = vadd.f32 %v2501, %v2883
      %v2885 = vpop.f32.mrf.mxu0
      %v2886 = vadd.f32 %v2503, %v2885
      %2887 = vmatprep.mubr.bf16.mxu0 %v659
      %2888 = vmatmul.mubr.bf16.gmra.mxu0 %v658
      %v2889 = vpop.f32.mrf.mxu0
      %v2890 = vadd.f32 %v2507, %v2889
      %v2891 = vpop.f32.mrf.mxu0
      %v2892 = vadd.f32 %v2509, %v2891
      %v2893 = vpop.f32.mrf.mxu0
      %v2894 = vadd.f32 %v2511, %v2893
      %v2895 = vpop.f32.mrf.mxu0
      %v2896 = vadd.f32 %v2513, %v2895
      %2897 = vmatprep.mubr.bf16.mxu0 %v663
      %2898 = vmatmul.mubr.bf16.gmra.mxu0 %v662
      %v2899 = vpop.f32.mrf.mxu0
      %v2900 = vadd.f32 %v2517, %v2899
      %v2901 = vpop.f32.mrf.mxu0
      %v2902 = vadd.f32 %v2519, %v2901
      %v2903 = vpop.f32.mrf.mxu0
      %v2904 = vadd.f32 %v2521, %v2903
      %v2905 = vpop.f32.mrf.mxu0
      %v2906 = vadd.f32 %v2523, %v2905
      %2907 = vmatprep.mubr.bf16.mxu0 %v667
      %2908 = vmatmul.mubr.bf16.gmra.mxu0 %v666
      %v2909 = vpop.f32.mrf.mxu0
      %v2910 = vadd.f32 %v2527, %v2909
      %v2911 = vpop.f32.mrf.mxu0
      %v2912 = vadd.f32 %v2529, %v2911
      %v2913 = vpop.f32.mrf.mxu0
      %v2914 = vadd.f32 %v2531, %v2913
      %v2915 = vpop.f32.mrf.mxu0
      %v2916 = vadd.f32 %v2533, %v2915
      %2917 = vmatprep.mubr.bf16.mxu0 %v671
      %2918 = vmatmul.mubr.bf16.gmra.mxu0 %v670
      %v2919 = vpop.f32.mrf.mxu0
      %v2920 = vadd.f32 %v2537, %v2919
      %v2921 = vpop.f32.mrf.mxu0
      %v2922 = vadd.f32 %v2539, %v2921
      %v2923 = vpop.f32.mrf.mxu0
      %v2924 = vadd.f32 %v2541, %v2923
      %v2925 = vpop.f32.mrf.mxu0
      %v2926 = vadd.f32 %v2543, %v2925
      %2927 = vdwg.mxu0
      %2928 = vmatprep.subr.bf16.mxu0 %v2760
      %2929 = vmatpush1.bf16.msra.mxu0 %v2759
      %2930 = vmatprep.subr.bf16.mxu0 %v2758
      %2931 = vmatpush1.bf16.msra.mxu0 %v2757
      %2932 = vmatprep.subr.bf16.mxu0 %v2756
      %2933 = vmatpush1.bf16.msra.mxu0 %v2755
      %2934 = vmatprep.subr.bf16.mxu0 %v2754
      %2935 = vmatpush1.bf16.msra.mxu0 %v2753
      %2936 = vmatprep.subr.bf16.mxu0 %v2752
      %2937 = vmatpush1.bf16.msra.mxu0 %v2751
      %2938 = vmatprep.subr.bf16.mxu0 %v2750
      %2939 = vmatpush1.bf16.msra.mxu0 %v2749
      %2940 = vmatprep.subr.bf16.mxu0 %v2748
      %2941 = vmatpush1.bf16.msra.mxu0 %v2747
      %2942 = vmatprep.subr.bf16.mxu0 %v2746
      %2943 = vmatpush1.bf16.msra.mxu0 %v2745
      %2944 = vmatprep.subr.bf16.mxu0 0
      %2945 = vmatpush2.bf16.msra.mxu0 0
      %2946 = vmatprep.subr.bf16.mxu0 0
      %2947 = vmatpush2.bf16.msra.mxu0 0
      %2948 = vmatprep.subr.bf16.mxu0 0
      %2949 = vmatpush2.bf16.msra.mxu0 0
      %2950 = vmatprep.subr.bf16.mxu0 0
      %2951 = vmatpush2.bf16.msra.mxu0 0
      %2952 = vmatprep.subr.bf16.mxu0 %v2768
      %2953 = vmatpush2.bf16.msra.mxu0 %v2767
      %2954 = vmatprep.subr.bf16.mxu0 %v2766
      %2955 = vmatpush2.bf16.msra.mxu0 %v2765
      %2956 = vmatprep.subr.bf16.mxu0 %v2764
      %2957 = vmatpush2.bf16.msra.mxu0 %v2763
      %2958 = vmatprep.subr.bf16.mxu0 %v2762
      %2959 = vmatpush2.bf16.msra.mxu0 %v2761
      %2960 = vmatprep.mubr.bf16.mxu0 %v1725
      %2961 = vmatmul.mubr.bf16.gmra.mxu0 %v648
      %v2962 = vpop.f32.mrf.mxu0
      %v2963 = vadd.f32 %v2860, %v2962
      %v2964 = vpop.f32.mrf.mxu0
      %v2965 = vadd.f32 %v2862, %v2964
      %v2966 = vpop.f32.mrf.mxu0
      %v2967 = vadd.f32 %v2864, %v2966
      %v2968 = vpop.f32.mrf.mxu0
      %v2969 = vadd.f32 %v2866, %v2968
      %2970 = vmatprep.mubr.bf16.mxu0 %v1727
      %2971 = vmatmul.mubr.bf16.gmra.mxu0 %v652
      %v2972 = vpop.f32.mrf.mxu0
      %v2973 = vadd.f32 %v2870, %v2972
      %v2974 = vpop.f32.mrf.mxu0
      %v2975 = vadd.f32 %v2872, %v2974
      %v2976 = vpop.f32.mrf.mxu0
      %v2977 = vadd.f32 %v2874, %v2976
      %v2978 = vpop.f32.mrf.mxu0
      %v2979 = vadd.f32 %v2876, %v2978
      %2980 = vmatprep.mubr.bf16.mxu0 %v1729
      %2981 = vmatmul.mubr.bf16.gmra.mxu0 %v656
      %v2982 = vpop.f32.mrf.mxu0
      %v2983 = vadd.f32 %v2880, %v2982
      %v2984 = vpop.f32.mrf.mxu0
      %v2985 = vadd.f32 %v2882, %v2984
      %v2986 = vpop.f32.mrf.mxu0
      %v2987 = vadd.f32 %v2884, %v2986
      %v2988 = vpop.f32.mrf.mxu0
      %v2989 = vadd.f32 %v2886, %v2988
      %2990 = vmatprep.mubr.bf16.mxu0 %v1731
      %2991 = vmatmul.mubr.bf16.gmra.mxu0 %v660
      %v2992 = vpop.f32.mrf.mxu0
      %v2993 = vadd.f32 %v2890, %v2992
      %v2994 = vpop.f32.mrf.mxu0
      %v2995 = vadd.f32 %v2892, %v2994
      %v2996 = vpop.f32.mrf.mxu0
      %v2997 = vadd.f32 %v2894, %v2996
      %v2998 = vpop.f32.mrf.mxu0
      %v2999 = vadd.f32 %v2896, %v2998
      %3000 = vmatprep.mubr.bf16.mxu0 %v1733
      %3001 = vmatmul.mubr.bf16.gmra.mxu0 %v664
      %v3002 = vpop.f32.mrf.mxu0
      %v3003 = vadd.f32 %v2900, %v3002
      %v3004 = vpop.f32.mrf.mxu0
      %v3005 = vadd.f32 %v2902, %v3004
      %v3006 = vpop.f32.mrf.mxu0
      %v3007 = vadd.f32 %v2904, %v3006
      %v3008 = vpop.f32.mrf.mxu0
      %v3009 = vadd.f32 %v2906, %v3008
      %3010 = vmatprep.mubr.bf16.mxu0 %v1735
      %3011 = vmatmul.mubr.bf16.gmra.mxu0 %v668
      %v3012 = vpop.f32.mrf.mxu0
      %v3013 = vadd.f32 %v2910, %v3012
      %v3014 = vpop.f32.mrf.mxu0
      %v3015 = vadd.f32 %v2912, %v3014
      %v3016 = vpop.f32.mrf.mxu0
      %v3017 = vadd.f32 %v2914, %v3016
      %v3018 = vpop.f32.mrf.mxu0
      %v3019 = vadd.f32 %v2916, %v3018
      %3020 = vmatprep.mubr.bf16.mxu0 %v1737
      %3021 = vmatmul.mubr.bf16.gmra.mxu0 %v672
      %v3022 = vpop.f32.mrf.mxu0
      %v3023 = vadd.f32 %v2920, %v3022
      %v3024 = vpop.f32.mrf.mxu0
      %v3025 = vadd.f32 %v2922, %v3024
      %v3026 = vpop.f32.mrf.mxu0
      %v3027 = vadd.f32 %v2924, %v3026
      %v3028 = vpop.f32.mrf.mxu0
      %v3029 = vadd.f32 %v2926, %v3028
      %3030 = vdwg.mxu0
      %v3031 = vmax.f32 %v1877, %v2963
      %v3032 = vmax.f32 %v1879, %v2965
      %v3033 = vmax.f32 %v1881, %v2967
      %v3034 = vmax.f32 %v1883, %v2969
      %v3035 = vmax.f32 %v1887, %v2973
      %v3036 = vmax.f32 %v1889, %v2975
      %v3037 = vmax.f32 %v1891, %v2977
      %v3038 = vmax.f32 %v1893, %v2979
      %v3039 = vmax.f32 %v1897, %v2983
      %v3040 = vmax.f32 %v1899, %v2985
      %v3041 = vmax.f32 %v1901, %v2987
      %v3042 = vmax.f32 %v1903, %v2989
      %v3043 = vmax.f32 %v1907, %v2993
      %v3044 = vmax.f32 %v1909, %v2995
      %v3045 = vmax.f32 %v1911, %v2997
      %v3046 = vmax.f32 %v1913, %v2999
      %v3047 = vmax.f32 %v1917, %v3003
      %v3048 = vmax.f32 %v1919, %v3005
      %v3049 = vmax.f32 %v1921, %v3007
      %v3050 = vmax.f32 %v1923, %v3009
      %v3051 = vmax.f32 %v1927, %v3013
      %v3052 = vmax.f32 %v1929, %v3015
      %v3053 = vmax.f32 %v1931, %v3017
      %v3054 = vmax.f32 %v1933, %v3019
      %v3055 = vmax.f32 %v1937, %v3023
      %v3056 = vmax.f32 %v1939, %v3025
      %v3057 = vmax.f32 %v1941, %v3027
      %v3058 = vmax.f32 %v1943, %v3029
      %s3059 = scalar_lea.vmem %s1, 1792
      %v3060 = vld [vmem:[%s3059] sm:$0xff]
      %v3061 = vld [vmem:[%s3059 + $0x8] sm:$0xff]
      %v3062 = vld [vmem:[%s3059 + $0x10] sm:$0xff]
      %v3063 = vld [vmem:[%s3059 + $0x18] sm:$0xff]
      %v3064 = vld [vmem:[%s3059 + $0x20] sm:$0xff]
      %v3065 = vld [vmem:[%s3059 + $0x28] sm:$0xff]
      %v3066 = vld [vmem:[%s3059 + $0x30] sm:$0xff]
      %v3067 = vld [vmem:[%s3059 + $0x38] sm:$0xff]
      %v3068 = vld [vmem:[%s3059 + $0x40] sm:$0xff]
      %v3069 = vld [vmem:[%s3059 + $0x48] sm:$0xff]
      %v3070 = vld [vmem:[%s3059 + $0x50] sm:$0xff]
      %v3071 = vld [vmem:[%s3059 + $0x58] sm:$0xff]
      %v3072 = vld [vmem:[%s3059 + $0x60] sm:$0xff]
      %v3073 = vld [vmem:[%s3059 + $0x68] sm:$0xff]
      %v3074 = vld [vmem:[%s3059 + $0x70] sm:$0xff]
      %v3075 = vld [vmem:[%s3059 + $0x78] sm:$0xff]
      %v3076 = vld [vmem:[%s3059 + $0x80] sm:$0xff]
      %v3077 = vld [vmem:[%s3059 + $0x88] sm:$0xff]
      %v3078 = vld [vmem:[%s3059 + $0x90] sm:$0xff]
      %v3079 = vld [vmem:[%s3059 + $0x98] sm:$0xff]
      %v3080 = vld [vmem:[%s3059 + $0xa0] sm:$0xff]
      %v3081 = vld [vmem:[%s3059 + $0xa8] sm:$0xff]
      %v3082 = vld [vmem:[%s3059 + $0xb0] sm:$0xff]
      %v3083 = vld [vmem:[%s3059 + $0xb8] sm:$0xff]
      %v3084 = vld [vmem:[%s3059 + $0xc0] sm:$0xff]
      %v3085 = vld [vmem:[%s3059 + $0xc8] sm:$0xff]
      %v3086 = vld [vmem:[%s3059 + $0xd0] sm:$0xff]
      %v3087 = vld [vmem:[%s3059 + $0xd8] sm:$0xff]
      %v3088 = vld [vmem:[%s3059 + $0xe0] sm:$0xff]
      %v3089 = vld [vmem:[%s3059 + $0xe8] sm:$0xff]
      %v3090 = vld [vmem:[%s3059 + $0xf0] sm:$0xff]
      %v3091 = vld [vmem:[%s3059 + $0xf8] sm:$0xff]
      %v3092 = vld [vmem:[%s3059 + $0x100] sm:$0xff]
      %v3093 = vld [vmem:[%s3059 + $0x108] sm:$0xff]
      %v3094 = vld [vmem:[%s3059 + $0x110] sm:$0xff]
      %v3095 = vld [vmem:[%s3059 + $0x118] sm:$0xff]
      %v3096 = vld [vmem:[%s3059 + $0x120] sm:$0xff]
      %v3097 = vld [vmem:[%s3059 + $0x128] sm:$0xff]
      %v3098 = vld [vmem:[%s3059 + $0x130] sm:$0xff]
      %v3099 = vld [vmem:[%s3059 + $0x138] sm:$0xff]
      %v3100 = vld [vmem:[%s3059 + $0x140] sm:$0xff]
      %v3101 = vld [vmem:[%s3059 + $0x148] sm:$0xff]
      %v3102 = vld [vmem:[%s3059 + $0x150] sm:$0xff]
      %v3103 = vld [vmem:[%s3059 + $0x158] sm:$0xff]
      %v3104 = vld [vmem:[%s3059 + $0x160] sm:$0xff]
      %v3105 = vld [vmem:[%s3059 + $0x168] sm:$0xff]
      %v3106 = vld [vmem:[%s3059 + $0x170] sm:$0xff]
      %v3107 = vld [vmem:[%s3059 + $0x178] sm:$0xff]
      %v3108 = vld [vmem:[%s3059 + $0x180] sm:$0xff]
      %v3109 = vld [vmem:[%s3059 + $0x188] sm:$0xff]
      %v3110 = vld [vmem:[%s3059 + $0x190] sm:$0xff]
      %v3111 = vld [vmem:[%s3059 + $0x198] sm:$0xff]
      %v3112 = vld [vmem:[%s3059 + $0x1a0] sm:$0xff]
      %v3113 = vld [vmem:[%s3059 + $0x1a8] sm:$0xff]
      %v3114 = vld [vmem:[%s3059 + $0x1b0] sm:$0xff]
      %v3115 = vld [vmem:[%s3059 + $0x1b8] sm:$0xff]
      %s3116 = scalar_lea.vmem %s1, 2240
      %v3117 = vld [vmem:[%s3116] sm:$0xff]
      %v3118 = vld [vmem:[%s3116 + $0x8] sm:$0xff]
      %v3119 = vld [vmem:[%s3116 + $0x10] sm:$0xff]
      %v3120 = vld [vmem:[%s3116 + $0x18] sm:$0xff]
      %v3121 = vld [vmem:[%s3116 + $0x20] sm:$0xff]
      %v3122 = vld [vmem:[%s3116 + $0x28] sm:$0xff]
      %v3123 = vld [vmem:[%s3116 + $0x30] sm:$0xff]
      %v3124 = vld [vmem:[%s3116 + $0x38] sm:$0xff]
      %v3125 = vld [vmem:[%s3116 + $0x40] sm:$0xff]
      %v3126 = vld [vmem:[%s3116 + $0x48] sm:$0xff]
      %v3127 = vld [vmem:[%s3116 + $0x50] sm:$0xff]
      %v3128 = vld [vmem:[%s3116 + $0x58] sm:$0xff]
      %v3129 = vld [vmem:[%s3116 + $0x60] sm:$0xff]
      %v3130 = vld [vmem:[%s3116 + $0x68] sm:$0xff]
      %v3131 = vld [vmem:[%s3116 + $0x70] sm:$0xff]
      %v3132 = vld [vmem:[%s3116 + $0x78] sm:$0xff]
      %v3133 = vld [vmem:[%s3116 + $0x80] sm:$0xff]
      %v3134 = vld [vmem:[%s3116 + $0x88] sm:$0xff]
      %v3135 = vld [vmem:[%s3116 + $0x90] sm:$0xff]
      %v3136 = vld [vmem:[%s3116 + $0x98] sm:$0xff]
      %v3137 = vld [vmem:[%s3116 + $0xa0] sm:$0xff]
      %v3138 = vld [vmem:[%s3116 + $0xa8] sm:$0xff]
      %v3139 = vld [vmem:[%s3116 + $0xb0] sm:$0xff]
      %v3140 = vld [vmem:[%s3116 + $0xb8] sm:$0xff]
      %v3141 = vld [vmem:[%s3116 + $0xc0] sm:$0xff]
      %v3142 = vld [vmem:[%s3116 + $0xc8] sm:$0xff]
      %v3143 = vld [vmem:[%s3116 + $0xd0] sm:$0xff]
      %v3144 = vld [vmem:[%s3116 + $0xd8] sm:$0xff]
      %v3145 = vld [vmem:[%s3116 + $0xe0] sm:$0xff]
      %v3146 = vld [vmem:[%s3116 + $0xe8] sm:$0xff]
      %v3147 = vld [vmem:[%s3116 + $0xf0] sm:$0xff]
      %v3148 = vld [vmem:[%s3116 + $0xf8] sm:$0xff]
      %v3149 = vld [vmem:[%s3116 + $0x100] sm:$0xff]
      %v3150 = vld [vmem:[%s3116 + $0x108] sm:$0xff]
      %v3151 = vld [vmem:[%s3116 + $0x110] sm:$0xff]
      %v3152 = vld [vmem:[%s3116 + $0x118] sm:$0xff]
      %v3153 = vld [vmem:[%s3116 + $0x120] sm:$0xff]
      %v3154 = vld [vmem:[%s3116 + $0x128] sm:$0xff]
      %v3155 = vld [vmem:[%s3116 + $0x130] sm:$0xff]
      %v3156 = vld [vmem:[%s3116 + $0x138] sm:$0xff]
      %v3157 = vld [vmem:[%s3116 + $0x140] sm:$0xff]
      %v3158 = vld [vmem:[%s3116 + $0x148] sm:$0xff]
      %v3159 = vld [vmem:[%s3116 + $0x150] sm:$0xff]
      %v3160 = vld [vmem:[%s3116 + $0x158] sm:$0xff]
      %v3161 = vld [vmem:[%s3116 + $0x160] sm:$0xff]
      %v3162 = vld [vmem:[%s3116 + $0x168] sm:$0xff]
      %v3163 = vld [vmem:[%s3116 + $0x170] sm:$0xff]
      %v3164 = vld [vmem:[%s3116 + $0x178] sm:$0xff]
      %v3165 = vld [vmem:[%s3116 + $0x180] sm:$0xff]
      %v3166 = vld [vmem:[%s3116 + $0x188] sm:$0xff]
      %v3167 = vld [vmem:[%s3116 + $0x190] sm:$0xff]
      %v3168 = vld [vmem:[%s3116 + $0x198] sm:$0xff]
      %v3169 = vld [vmem:[%s3116 + $0x1a0] sm:$0xff]
      %v3170 = vld [vmem:[%s3116 + $0x1a8] sm:$0xff]
      %v3171 = vld [vmem:[%s3116 + $0x1b0] sm:$0xff]
      %v3172 = vld [vmem:[%s3116 + $0x1b8] sm:$0xff]
      %v3229 = vunpack.c.l.b16 %v3117
      %v3230 = vunpack.c.h.b16 %v3117
      %v3231 = vunpack.c.l.b16 %v3118
      %v3232 = vunpack.c.h.b16 %v3118
      %v3233 = vunpack.c.l.b16 %v3119
      %v3234 = vunpack.c.h.b16 %v3119
      %v3235 = vunpack.c.l.b16 %v3120
      %v3236 = vunpack.c.h.b16 %v3120
      %v3237 = vunpack.c.l.b16 %v3121
      %v3238 = vunpack.c.h.b16 %v3121
      %v3239 = vunpack.c.l.b16 %v3122
      %v3240 = vunpack.c.h.b16 %v3122
      %v3241 = vunpack.c.l.b16 %v3123
      %v3242 = vunpack.c.h.b16 %v3123
      %v3243 = vunpack.c.l.b16 %v3124
      %v3244 = vunpack.c.h.b16 %v3124
      %v3245 = vunpack.c.l.b16 %v3125
      %v3246 = vunpack.c.h.b16 %v3125
      %v3247 = vunpack.c.l.b16 %v3126
      %v3248 = vunpack.c.h.b16 %v3126
      %v3249 = vunpack.c.l.b16 %v3127
      %v3250 = vunpack.c.h.b16 %v3127
      %v3251 = vunpack.c.l.b16 %v3128
      %v3252 = vunpack.c.h.b16 %v3128
      %v3253 = vunpack.c.l.b16 %v3129
      %v3254 = vunpack.c.h.b16 %v3129
      %v3255 = vunpack.c.l.b16 %v3130
      %v3256 = vunpack.c.h.b16 %v3130
      %v3257 = vunpack.c.l.b16 %v3131
      %v3258 = vunpack.c.h.b16 %v3131
      %v3259 = vunpack.c.l.b16 %v3132
      %v3260 = vunpack.c.h.b16 %v3132
      %v3261 = vunpack.c.l.b16 %v3133
      %v3262 = vunpack.c.h.b16 %v3133
      %v3263 = vunpack.c.l.b16 %v3134
      %v3264 = vunpack.c.h.b16 %v3134
      %v3265 = vunpack.c.l.b16 %v3135
      %v3266 = vunpack.c.h.b16 %v3135
      %v3267 = vunpack.c.l.b16 %v3136
      %v3268 = vunpack.c.h.b16 %v3136
      %v3269 = vunpack.c.l.b16 %v3137
      %v3270 = vunpack.c.h.b16 %v3137
      %v3271 = vunpack.c.l.b16 %v3138
      %v3272 = vunpack.c.h.b16 %v3138
      %v3273 = vunpack.c.l.b16 %v3139
      %v3274 = vunpack.c.h.b16 %v3139
      %v3275 = vunpack.c.l.b16 %v3140
      %v3276 = vunpack.c.h.b16 %v3140
      %v3277 = vunpack.c.l.b16 %v3141
      %v3278 = vunpack.c.h.b16 %v3141
      %v3279 = vunpack.c.l.b16 %v3142
      %v3280 = vunpack.c.h.b16 %v3142
      %v3281 = vunpack.c.l.b16 %v3143
      %v3282 = vunpack.c.h.b16 %v3143
      %v3283 = vunpack.c.l.b16 %v3144
      %v3284 = vunpack.c.h.b16 %v3144
      %v3285 = vunpack.c.l.b16 %v3145
      %v3286 = vunpack.c.h.b16 %v3145
      %v3287 = vunpack.c.l.b16 %v3146
      %v3288 = vunpack.c.h.b16 %v3146
      %v3289 = vunpack.c.l.b16 %v3147
      %v3290 = vunpack.c.h.b16 %v3147
      %v3291 = vunpack.c.l.b16 %v3148
      %v3292 = vunpack.c.h.b16 %v3148
      %v3293 = vunpack.c.l.b16 %v3149
      %v3294 = vunpack.c.h.b16 %v3149
      %v3295 = vunpack.c.l.b16 %v3150
      %v3296 = vunpack.c.h.b16 %v3150
      %v3297 = vunpack.c.l.b16 %v3151
      %v3298 = vunpack.c.h.b16 %v3151
      %v3299 = vunpack.c.l.b16 %v3152
      %v3300 = vunpack.c.h.b16 %v3152
      %v3301 = vunpack.c.l.b16 %v3153
      %v3302 = vunpack.c.h.b16 %v3153
      %v3303 = vunpack.c.l.b16 %v3154
      %v3304 = vunpack.c.h.b16 %v3154
      %v3305 = vunpack.c.l.b16 %v3155
      %v3306 = vunpack.c.h.b16 %v3155
      %v3307 = vunpack.c.l.b16 %v3156
      %v3308 = vunpack.c.h.b16 %v3156
      %v3309 = vunpack.c.l.b16 %v3157
      %v3310 = vunpack.c.h.b16 %v3157
      %v3311 = vunpack.c.l.b16 %v3158
      %v3312 = vunpack.c.h.b16 %v3158
      %v3313 = vunpack.c.l.b16 %v3159
      %v3314 = vunpack.c.h.b16 %v3159
      %v3315 = vunpack.c.l.b16 %v3160
      %v3316 = vunpack.c.h.b16 %v3160
      %v3317 = vunpack.c.l.b16 %v3161
      %v3318 = vunpack.c.h.b16 %v3161
      %v3319 = vunpack.c.l.b16 %v3162
      %v3320 = vunpack.c.h.b16 %v3162
      %v3321 = vunpack.c.l.b16 %v3163
      %v3322 = vunpack.c.h.b16 %v3163
      %v3323 = vunpack.c.l.b16 %v3164
      %v3324 = vunpack.c.h.b16 %v3164
      %v3325 = vunpack.c.l.b16 %v3165
      %v3326 = vunpack.c.h.b16 %v3165
      %v3327 = vunpack.c.l.b16 %v3166
      %v3328 = vunpack.c.h.b16 %v3166
      %v3329 = vunpack.c.l.b16 %v3167
      %v3330 = vunpack.c.h.b16 %v3167
      %v3331 = vunpack.c.l.b16 %v3168
      %v3332 = vunpack.c.h.b16 %v3168
      %v3333 = vunpack.c.l.b16 %v3169
      %v3334 = vunpack.c.h.b16 %v3169
      %v3335 = vunpack.c.l.b16 %v3170
      %v3336 = vunpack.c.h.b16 %v3170
      %v3337 = vunpack.c.l.b16 %v3171
      %v3338 = vunpack.c.h.b16 %v3171
      %v3339 = vunpack.c.l.b16 %v3172
      %v3340 = vunpack.c.h.b16 %v3172
      %v3341 = vpack.c.b16 %v3231, %v3229
      %v3342 = vpack.c.b16 %v3232, %v3230
      %v3343 = vpack.c.b16 %v3235, %v3233
      %v3344 = vpack.c.b16 %v3236, %v3234
      %v3345 = vpack.c.b16 %v3239, %v3237
      %v3346 = vpack.c.b16 %v3240, %v3238
      %v3347 = vpack.c.b16 %v3243, %v3241
      %v3348 = vpack.c.b16 %v3244, %v3242
      %v3349 = vpack.c.b16 %v3247, %v3245
      %v3350 = vpack.c.b16 %v3248, %v3246
      %v3351 = vpack.c.b16 %v3251, %v3249
      %v3352 = vpack.c.b16 %v3252, %v3250
      %v3353 = vpack.c.b16 %v3255, %v3253
      %v3354 = vpack.c.b16 %v3256, %v3254
      %v3355 = vpack.c.b16 %v3259, %v3257
      %v3356 = vpack.c.b16 %v3260, %v3258
      %v3357 = vpack.c.b16 %v3263, %v3261
      %v3358 = vpack.c.b16 %v3264, %v3262
      %v3359 = vpack.c.b16 %v3267, %v3265
      %v3360 = vpack.c.b16 %v3268, %v3266
      %v3361 = vpack.c.b16 %v3271, %v3269
      %v3362 = vpack.c.b16 %v3272, %v3270
      %v3363 = vpack.c.b16 %v3275, %v3273
      %v3364 = vpack.c.b16 %v3276, %v3274
      %v3365 = vpack.c.b16 %v3279, %v3277
      %v3366 = vpack.c.b16 %v3280, %v3278
      %v3367 = vpack.c.b16 %v3283, %v3281
      %v3368 = vpack.c.b16 %v3284, %v3282
      %v3369 = vpack.c.b16 %v3287, %v3285
      %v3370 = vpack.c.b16 %v3288, %v3286
      %v3371 = vpack.c.b16 %v3291, %v3289
      %v3372 = vpack.c.b16 %v3292, %v3290
      %v3373 = vpack.c.b16 %v3295, %v3293
      %v3374 = vpack.c.b16 %v3296, %v3294
      %v3375 = vpack.c.b16 %v3299, %v3297
      %v3376 = vpack.c.b16 %v3300, %v3298
      %v3377 = vpack.c.b16 %v3303, %v3301
      %v3378 = vpack.c.b16 %v3304, %v3302
      %v3379 = vpack.c.b16 %v3307, %v3305
      %v3380 = vpack.c.b16 %v3308, %v3306
      %v3381 = vpack.c.b16 %v3311, %v3309
      %v3382 = vpack.c.b16 %v3312, %v3310
      %v3383 = vpack.c.b16 %v3315, %v3313
      %v3384 = vpack.c.b16 %v3316, %v3314
      %v3385 = vpack.c.b16 %v3319, %v3317
      %v3386 = vpack.c.b16 %v3320, %v3318
      %v3387 = vpack.c.b16 %v3323, %v3321
      %v3388 = vpack.c.b16 %v3324, %v3322
      %v3389 = vpack.c.b16 %v3327, %v3325
      %v3390 = vpack.c.b16 %v3328, %v3326
      %v3391 = vpack.c.b16 %v3331, %v3329
      %v3392 = vpack.c.b16 %v3332, %v3330
      %v3393 = vpack.c.b16 %v3335, %v3333
      %v3394 = vpack.c.b16 %v3336, %v3334
      %v3395 = vpack.c.b16 %v3339, %v3337
      %v3396 = vpack.c.b16 %v3340, %v3338
      %3453 = vmatprep.subr.bf16.mxu0 %v3356
      %3454 = vmatpush1.bf16.msra.mxu0 %v3355
      %3455 = vmatprep.subr.bf16.mxu0 %v3354
      %3456 = vmatpush1.bf16.msra.mxu0 %v3353
      %3457 = vmatprep.subr.bf16.mxu0 %v3352
      %3458 = vmatpush1.bf16.msra.mxu0 %v3351
      %3459 = vmatprep.subr.bf16.mxu0 %v3350
      %3460 = vmatpush1.bf16.msra.mxu0 %v3349
      %3461 = vmatprep.subr.bf16.mxu0 %v3348
      %3462 = vmatpush1.bf16.msra.mxu0 %v3347
      %3463 = vmatprep.subr.bf16.mxu0 %v3346
      %3464 = vmatpush1.bf16.msra.mxu0 %v3345
      %3465 = vmatprep.subr.bf16.mxu0 %v3344
      %3466 = vmatpush1.bf16.msra.mxu0 %v3343
      %3467 = vmatprep.subr.bf16.mxu0 %v3342
      %3468 = vmatpush1.bf16.msra.mxu0 %v3341
      %3469 = vmatprep.subr.bf16.mxu0 %v3372
      %3470 = vmatpush2.bf16.msra.mxu0 %v3371
      %3471 = vmatprep.subr.bf16.mxu0 %v3370
      %3472 = vmatpush2.bf16.msra.mxu0 %v3369
      %3473 = vmatprep.subr.bf16.mxu0 %v3368
      %3474 = vmatpush2.bf16.msra.mxu0 %v3367
      %3475 = vmatprep.subr.bf16.mxu0 %v3366
      %3476 = vmatpush2.bf16.msra.mxu0 %v3365
      %3477 = vmatprep.subr.bf16.mxu0 %v3364
      %3478 = vmatpush2.bf16.msra.mxu0 %v3363
      %3479 = vmatprep.subr.bf16.mxu0 %v3362
      %3480 = vmatpush2.bf16.msra.mxu0 %v3361
      %3481 = vmatprep.subr.bf16.mxu0 %v3360
      %3482 = vmatpush2.bf16.msra.mxu0 %v3359
      %3483 = vmatprep.subr.bf16.mxu0 %v3358
      %3484 = vmatpush2.bf16.msra.mxu0 %v3357
      %3485 = vmatprep.mubr.bf16.mxu0 %v698
      %3486 = vmatmul.mubr.bf16.gmra.mxu0 %v686
      %v3487 = vpop.f32.mrf.mxu0
      %v3488 = vadd.f32 0.0, %v3487
      %v3489 = vpop.f32.mrf.mxu0
      %v3490 = vadd.f32 0.0, %v3489
      %v3491 = vpop.f32.mrf.mxu0
      %v3492 = vadd.f32 0.0, %v3491
      %v3493 = vpop.f32.mrf.mxu0
      %v3494 = vadd.f32 0.0, %v3493
      %3495 = vmatprep.mubr.bf16.mxu0 %v738
      %3496 = vmatmul.mubr.bf16.gmra.mxu0 %v730
      %v3497 = vpop.f32.mrf.mxu0
      %v3498 = vadd.f32 0.0, %v3497
      %v3499 = vpop.f32.mrf.mxu0
      %v3500 = vadd.f32 0.0, %v3499
      %v3501 = vpop.f32.mrf.mxu0
      %v3502 = vadd.f32 0.0, %v3501
      %v3503 = vpop.f32.mrf.mxu0
      %v3504 = vadd.f32 0.0, %v3503
      %3505 = vmatprep.mubr.bf16.mxu0 %v770
      %3506 = vmatmul.mubr.bf16.gmra.mxu0 %v762
      %v3507 = vpop.f32.mrf.mxu0
      %v3508 = vadd.f32 0.0, %v3507
      %v3509 = vpop.f32.mrf.mxu0
      %v3510 = vadd.f32 0.0, %v3509
      %v3511 = vpop.f32.mrf.mxu0
      %v3512 = vadd.f32 0.0, %v3511
      %v3513 = vpop.f32.mrf.mxu0
      %v3514 = vadd.f32 0.0, %v3513
      %3515 = vmatprep.mubr.bf16.mxu0 %v802
      %3516 = vmatmul.mubr.bf16.gmra.mxu0 %v794
      %v3517 = vpop.f32.mrf.mxu0
      %v3518 = vadd.f32 0.0, %v3517
      %v3519 = vpop.f32.mrf.mxu0
      %v3520 = vadd.f32 0.0, %v3519
      %v3521 = vpop.f32.mrf.mxu0
      %v3522 = vadd.f32 0.0, %v3521
      %v3523 = vpop.f32.mrf.mxu0
      %v3524 = vadd.f32 0.0, %v3523
      %3525 = vmatprep.mubr.bf16.mxu0 %v834
      %3526 = vmatmul.mubr.bf16.gmra.mxu0 %v826
      %v3527 = vpop.f32.mrf.mxu0
      %v3528 = vadd.f32 0.0, %v3527
      %v3529 = vpop.f32.mrf.mxu0
      %v3530 = vadd.f32 0.0, %v3529
      %v3531 = vpop.f32.mrf.mxu0
      %v3532 = vadd.f32 0.0, %v3531
      %v3533 = vpop.f32.mrf.mxu0
      %v3534 = vadd.f32 0.0, %v3533
      %3535 = vmatprep.mubr.bf16.mxu0 %v866
      %3536 = vmatmul.mubr.bf16.gmra.mxu0 %v858
      %v3537 = vpop.f32.mrf.mxu0
      %v3538 = vadd.f32 0.0, %v3537
      %v3539 = vpop.f32.mrf.mxu0
      %v3540 = vadd.f32 0.0, %v3539
      %v3541 = vpop.f32.mrf.mxu0
      %v3542 = vadd.f32 0.0, %v3541
      %v3543 = vpop.f32.mrf.mxu0
      %v3544 = vadd.f32 0.0, %v3543
      %3545 = vmatprep.mubr.bf16.mxu0 %v888
      %3546 = vmatmul.mubr.bf16.gmra.mxu0 %v885
      %v3547 = vpop.f32.mrf.mxu0
      %v3548 = vadd.f32 0.0, %v3547
      %v3549 = vpop.f32.mrf.mxu0
      %v3550 = vadd.f32 0.0, %v3549
      %v3551 = vpop.f32.mrf.mxu0
      %v3552 = vadd.f32 0.0, %v3551
      %v3553 = vpop.f32.mrf.mxu0
      %v3554 = vadd.f32 0.0, %v3553
      %3555 = vdwg.mxu0
      %3556 = vmatprep.subr.bf16.mxu0 %v3388
      %3557 = vmatpush1.bf16.msra.mxu0 %v3387
      %3558 = vmatprep.subr.bf16.mxu0 %v3386
      %3559 = vmatpush1.bf16.msra.mxu0 %v3385
      %3560 = vmatprep.subr.bf16.mxu0 %v3384
      %3561 = vmatpush1.bf16.msra.mxu0 %v3383
      %3562 = vmatprep.subr.bf16.mxu0 %v3382
      %3563 = vmatpush1.bf16.msra.mxu0 %v3381
      %3564 = vmatprep.subr.bf16.mxu0 %v3380
      %3565 = vmatpush1.bf16.msra.mxu0 %v3379
      %3566 = vmatprep.subr.bf16.mxu0 %v3378
      %3567 = vmatpush1.bf16.msra.mxu0 %v3377
      %3568 = vmatprep.subr.bf16.mxu0 %v3376
      %3569 = vmatpush1.bf16.msra.mxu0 %v3375
      %3570 = vmatprep.subr.bf16.mxu0 %v3374
      %3571 = vmatpush1.bf16.msra.mxu0 %v3373
      %3572 = vmatprep.subr.bf16.mxu0 0
      %3573 = vmatpush2.bf16.msra.mxu0 0
      %3574 = vmatprep.subr.bf16.mxu0 0
      %3575 = vmatpush2.bf16.msra.mxu0 0
      %3576 = vmatprep.subr.bf16.mxu0 0
      %3577 = vmatpush2.bf16.msra.mxu0 0
      %3578 = vmatprep.subr.bf16.mxu0 0
      %3579 = vmatpush2.bf16.msra.mxu0 0
      %3580 = vmatprep.subr.bf16.mxu0 %v3396
      %3581 = vmatpush2.bf16.msra.mxu0 %v3395
      %3582 = vmatprep.subr.bf16.mxu0 %v3394
      %3583 = vmatpush2.bf16.msra.mxu0 %v3393
      %3584 = vmatprep.subr.bf16.mxu0 %v3392
      %3585 = vmatpush2.bf16.msra.mxu0 %v3391
      %3586 = vmatprep.subr.bf16.mxu0 %v3390
      %3587 = vmatpush2.bf16.msra.mxu0 %v3389
      %3588 = vmatprep.mubr.bf16.mxu0 %v1198
      %3589 = vmatmul.mubr.bf16.gmra.mxu0 %v710
      %v3590 = vpop.f32.mrf.mxu0
      %v3591 = vadd.f32 %v3488, %v3590
      %v3592 = vpop.f32.mrf.mxu0
      %v3593 = vadd.f32 %v3490, %v3592
      %v3594 = vpop.f32.mrf.mxu0
      %v3595 = vadd.f32 %v3492, %v3594
      %v3596 = vpop.f32.mrf.mxu0
      %v3597 = vadd.f32 %v3494, %v3596
      %3598 = vmatprep.mubr.bf16.mxu0 %v1201
      %3599 = vmatmul.mubr.bf16.gmra.mxu0 %v746
      %v3600 = vpop.f32.mrf.mxu0
      %v3601 = vadd.f32 %v3498, %v3600
      %v3602 = vpop.f32.mrf.mxu0
      %v3603 = vadd.f32 %v3500, %v3602
      %v3604 = vpop.f32.mrf.mxu0
      %v3605 = vadd.f32 %v3502, %v3604
      %v3606 = vpop.f32.mrf.mxu0
      %v3607 = vadd.f32 %v3504, %v3606
      %3608 = vmatprep.mubr.bf16.mxu0 %v1204
      %3609 = vmatmul.mubr.bf16.gmra.mxu0 %v778
      %v3610 = vpop.f32.mrf.mxu0
      %v3611 = vadd.f32 %v3508, %v3610
      %v3612 = vpop.f32.mrf.mxu0
      %v3613 = vadd.f32 %v3510, %v3612
      %v3614 = vpop.f32.mrf.mxu0
      %v3615 = vadd.f32 %v3512, %v3614
      %v3616 = vpop.f32.mrf.mxu0
      %v3617 = vadd.f32 %v3514, %v3616
      %3618 = vmatprep.mubr.bf16.mxu0 %v1207
      %3619 = vmatmul.mubr.bf16.gmra.mxu0 %v810
      %v3620 = vpop.f32.mrf.mxu0
      %v3621 = vadd.f32 %v3518, %v3620
      %v3622 = vpop.f32.mrf.mxu0
      %v3623 = vadd.f32 %v3520, %v3622
      %v3624 = vpop.f32.mrf.mxu0
      %v3625 = vadd.f32 %v3522, %v3624
      %v3626 = vpop.f32.mrf.mxu0
      %v3627 = vadd.f32 %v3524, %v3626
      %3628 = vmatprep.mubr.bf16.mxu0 %v1210
      %3629 = vmatmul.mubr.bf16.gmra.mxu0 %v842
      %v3630 = vpop.f32.mrf.mxu0
      %v3631 = vadd.f32 %v3528, %v3630
      %v3632 = vpop.f32.mrf.mxu0
      %v3633 = vadd.f32 %v3530, %v3632
      %v3634 = vpop.f32.mrf.mxu0
      %v3635 = vadd.f32 %v3532, %v3634
      %v3636 = vpop.f32.mrf.mxu0
      %v3637 = vadd.f32 %v3534, %v3636
      %3638 = vmatprep.mubr.bf16.mxu0 %v1213
      %3639 = vmatmul.mubr.bf16.gmra.mxu0 %v874
      %v3640 = vpop.f32.mrf.mxu0
      %v3641 = vadd.f32 %v3538, %v3640
      %v3642 = vpop.f32.mrf.mxu0
      %v3643 = vadd.f32 %v3540, %v3642
      %v3644 = vpop.f32.mrf.mxu0
      %v3645 = vadd.f32 %v3542, %v3644
      %v3646 = vpop.f32.mrf.mxu0
      %v3647 = vadd.f32 %v3544, %v3646
      %3648 = vmatprep.mubr.bf16.mxu0 %v1216
      %3649 = vmatmul.mubr.bf16.gmra.mxu0 %v891
      %v3650 = vpop.f32.mrf.mxu0
      %v3651 = vadd.f32 %v3548, %v3650
      %v3652 = vpop.f32.mrf.mxu0
      %v3653 = vadd.f32 %v3550, %v3652
      %v3654 = vpop.f32.mrf.mxu0
      %v3655 = vadd.f32 %v3552, %v3654
      %v3656 = vpop.f32.mrf.mxu0
      %v3657 = vadd.f32 %v3554, %v3656
      %3658 = vdwg.mxu0
      %v3715 = vunpack.c.l.b16 %v3060
      %v3716 = vunpack.c.h.b16 %v3060
      %v3717 = vunpack.c.l.b16 %v3061
      %v3718 = vunpack.c.h.b16 %v3061
      %v3719 = vunpack.c.l.b16 %v3062
      %v3720 = vunpack.c.h.b16 %v3062
      %v3721 = vunpack.c.l.b16 %v3063
      %v3722 = vunpack.c.h.b16 %v3063
      %v3723 = vunpack.c.l.b16 %v3064
      %v3724 = vunpack.c.h.b16 %v3064
      %v3725 = vunpack.c.l.b16 %v3065
      %v3726 = vunpack.c.h.b16 %v3065
      %v3727 = vunpack.c.l.b16 %v3066
      %v3728 = vunpack.c.h.b16 %v3066
      %v3729 = vunpack.c.l.b16 %v3067
      %v3730 = vunpack.c.h.b16 %v3067
      %v3731 = vunpack.c.l.b16 %v3068
      %v3732 = vunpack.c.h.b16 %v3068
      %v3733 = vunpack.c.l.b16 %v3069
      %v3734 = vunpack.c.h.b16 %v3069
      %v3735 = vunpack.c.l.b16 %v3070
      %v3736 = vunpack.c.h.b16 %v3070
      %v3737 = vunpack.c.l.b16 %v3071
      %v3738 = vunpack.c.h.b16 %v3071
      %v3739 = vunpack.c.l.b16 %v3072
      %v3740 = vunpack.c.h.b16 %v3072
      %v3741 = vunpack.c.l.b16 %v3073
      %v3742 = vunpack.c.h.b16 %v3073
      %v3743 = vunpack.c.l.b16 %v3074
      %v3744 = vunpack.c.h.b16 %v3074
      %v3745 = vunpack.c.l.b16 %v3075
      %v3746 = vunpack.c.h.b16 %v3075
      %v3747 = vunpack.c.l.b16 %v3076
      %v3748 = vunpack.c.h.b16 %v3076
      %v3749 = vunpack.c.l.b16 %v3077
      %v3750 = vunpack.c.h.b16 %v3077
      %v3751 = vunpack.c.l.b16 %v3078
      %v3752 = vunpack.c.h.b16 %v3078
      %v3753 = vunpack.c.l.b16 %v3079
      %v3754 = vunpack.c.h.b16 %v3079
      %v3755 = vunpack.c.l.b16 %v3080
      %v3756 = vunpack.c.h.b16 %v3080
      %v3757 = vunpack.c.l.b16 %v3081
      %v3758 = vunpack.c.h.b16 %v3081
      %v3759 = vunpack.c.l.b16 %v3082
      %v3760 = vunpack.c.h.b16 %v3082
      %v3761 = vunpack.c.l.b16 %v3083
      %v3762 = vunpack.c.h.b16 %v3083
      %v3763 = vunpack.c.l.b16 %v3084
      %v3764 = vunpack.c.h.b16 %v3084
      %v3765 = vunpack.c.l.b16 %v3085
      %v3766 = vunpack.c.h.b16 %v3085
      %v3767 = vunpack.c.l.b16 %v3086
      %v3768 = vunpack.c.h.b16 %v3086
      %v3769 = vunpack.c.l.b16 %v3087
      %v3770 = vunpack.c.h.b16 %v3087
      %v3771 = vunpack.c.l.b16 %v3088
      %v3772 = vunpack.c.h.b16 %v3088
      %v3773 = vunpack.c.l.b16 %v3089
      %v3774 = vunpack.c.h.b16 %v3089
      %v3775 = vunpack.c.l.b16 %v3090
      %v3776 = vunpack.c.h.b16 %v3090
      %v3777 = vunpack.c.l.b16 %v3091
      %v3778 = vunpack.c.h.b16 %v3091
      %v3779 = vunpack.c.l.b16 %v3092
      %v3780 = vunpack.c.h.b16 %v3092
      %v3781 = vunpack.c.l.b16 %v3093
      %v3782 = vunpack.c.h.b16 %v3093
      %v3783 = vunpack.c.l.b16 %v3094
      %v3784 = vunpack.c.h.b16 %v3094
      %v3785 = vunpack.c.l.b16 %v3095
      %v3786 = vunpack.c.h.b16 %v3095
      %v3787 = vunpack.c.l.b16 %v3096
      %v3788 = vunpack.c.h.b16 %v3096
      %v3789 = vunpack.c.l.b16 %v3097
      %v3790 = vunpack.c.h.b16 %v3097
      %v3791 = vunpack.c.l.b16 %v3098
      %v3792 = vunpack.c.h.b16 %v3098
      %v3793 = vunpack.c.l.b16 %v3099
      %v3794 = vunpack.c.h.b16 %v3099
      %v3795 = vunpack.c.l.b16 %v3100
      %v3796 = vunpack.c.h.b16 %v3100
      %v3797 = vunpack.c.l.b16 %v3101
      %v3798 = vunpack.c.h.b16 %v3101
      %v3799 = vunpack.c.l.b16 %v3102
      %v3800 = vunpack.c.h.b16 %v3102
      %v3801 = vunpack.c.l.b16 %v3103
      %v3802 = vunpack.c.h.b16 %v3103
      %v3803 = vunpack.c.l.b16 %v3104
      %v3804 = vunpack.c.h.b16 %v3104
      %v3805 = vunpack.c.l.b16 %v3105
      %v3806 = vunpack.c.h.b16 %v3105
      %v3807 = vunpack.c.l.b16 %v3106
      %v3808 = vunpack.c.h.b16 %v3106
      %v3809 = vunpack.c.l.b16 %v3107
      %v3810 = vunpack.c.h.b16 %v3107
      %v3811 = vunpack.c.l.b16 %v3108
      %v3812 = vunpack.c.h.b16 %v3108
      %v3813 = vunpack.c.l.b16 %v3109
      %v3814 = vunpack.c.h.b16 %v3109
      %v3815 = vunpack.c.l.b16 %v3110
      %v3816 = vunpack.c.h.b16 %v3110
      %v3817 = vunpack.c.l.b16 %v3111
      %v3818 = vunpack.c.h.b16 %v3111
      %v3819 = vunpack.c.l.b16 %v3112
      %v3820 = vunpack.c.h.b16 %v3112
      %v3821 = vunpack.c.l.b16 %v3113
      %v3822 = vunpack.c.h.b16 %v3113
      %v3823 = vunpack.c.l.b16 %v3114
      %v3824 = vunpack.c.h.b16 %v3114
      %v3825 = vunpack.c.l.b16 %v3115
      %v3826 = vunpack.c.h.b16 %v3115
      %v3827 = vpack.c.b16 %v3717, %v3715
      %v3828 = vpack.c.b16 %v3718, %v3716
      %v3829 = vpack.c.b16 %v3721, %v3719
      %v3830 = vpack.c.b16 %v3722, %v3720
      %v3831 = vpack.c.b16 %v3725, %v3723
      %v3832 = vpack.c.b16 %v3726, %v3724
      %v3833 = vpack.c.b16 %v3729, %v3727
      %v3834 = vpack.c.b16 %v3730, %v3728
      %v3835 = vpack.c.b16 %v3733, %v3731
      %v3836 = vpack.c.b16 %v3734, %v3732
      %v3837 = vpack.c.b16 %v3737, %v3735
      %v3838 = vpack.c.b16 %v3738, %v3736
      %v3839 = vpack.c.b16 %v3741, %v3739
      %v3840 = vpack.c.b16 %v3742, %v3740
      %v3841 = vpack.c.b16 %v3745, %v3743
      %v3842 = vpack.c.b16 %v3746, %v3744
      %v3843 = vpack.c.b16 %v3749, %v3747
      %v3844 = vpack.c.b16 %v3750, %v3748
      %v3845 = vpack.c.b16 %v3753, %v3751
      %v3846 = vpack.c.b16 %v3754, %v3752
      %v3847 = vpack.c.b16 %v3757, %v3755
      %v3848 = vpack.c.b16 %v3758, %v3756
      %v3849 = vpack.c.b16 %v3761, %v3759
      %v3850 = vpack.c.b16 %v3762, %v3760
      %v3851 = vpack.c.b16 %v3765, %v3763
      %v3852 = vpack.c.b16 %v3766, %v3764
      %v3853 = vpack.c.b16 %v3769, %v3767
      %v3854 = vpack.c.b16 %v3770, %v3768
      %v3855 = vpack.c.b16 %v3773, %v3771
      %v3856 = vpack.c.b16 %v3774, %v3772
      %v3857 = vpack.c.b16 %v3777, %v3775
      %v3858 = vpack.c.b16 %v3778, %v3776
      %v3859 = vpack.c.b16 %v3781, %v3779
      %v3860 = vpack.c.b16 %v3782, %v3780
      %v3861 = vpack.c.b16 %v3785, %v3783
      %v3862 = vpack.c.b16 %v3786, %v3784
      %v3863 = vpack.c.b16 %v3789, %v3787
      %v3864 = vpack.c.b16 %v3790, %v3788
      %v3865 = vpack.c.b16 %v3793, %v3791
      %v3866 = vpack.c.b16 %v3794, %v3792
      %v3867 = vpack.c.b16 %v3797, %v3795
      %v3868 = vpack.c.b16 %v3798, %v3796
      %v3869 = vpack.c.b16 %v3801, %v3799
      %v3870 = vpack.c.b16 %v3802, %v3800
      %v3871 = vpack.c.b16 %v3805, %v3803
      %v3872 = vpack.c.b16 %v3806, %v3804
      %v3873 = vpack.c.b16 %v3809, %v3807
      %v3874 = vpack.c.b16 %v3810, %v3808
      %v3875 = vpack.c.b16 %v3813, %v3811
      %v3876 = vpack.c.b16 %v3814, %v3812
      %v3877 = vpack.c.b16 %v3817, %v3815
      %v3878 = vpack.c.b16 %v3818, %v3816
      %v3879 = vpack.c.b16 %v3821, %v3819
      %v3880 = vpack.c.b16 %v3822, %v3820
      %v3881 = vpack.c.b16 %v3825, %v3823
      %v3882 = vpack.c.b16 %v3826, %v3824
      %3939 = vmatprep.subr.bf16.mxu0 %v3842
      %3940 = vmatpush1.bf16.msra.mxu0 %v3841
      %3941 = vmatprep.subr.bf16.mxu0 %v3840
      %3942 = vmatpush1.bf16.msra.mxu0 %v3839
      %3943 = vmatprep.subr.bf16.mxu0 %v3838
      %3944 = vmatpush1.bf16.msra.mxu0 %v3837
      %3945 = vmatprep.subr.bf16.mxu0 %v3836
      %3946 = vmatpush1.bf16.msra.mxu0 %v3835
      %3947 = vmatprep.subr.bf16.mxu0 %v3834
      %3948 = vmatpush1.bf16.msra.mxu0 %v3833
      %3949 = vmatprep.subr.bf16.mxu0 %v3832
      %3950 = vmatpush1.bf16.msra.mxu0 %v3831
      %3951 = vmatprep.subr.bf16.mxu0 %v3830
      %3952 = vmatpush1.bf16.msra.mxu0 %v3829
      %3953 = vmatprep.subr.bf16.mxu0 %v3828
      %3954 = vmatpush1.bf16.msra.mxu0 %v3827
      %3955 = vmatprep.subr.bf16.mxu0 %v3858
      %3956 = vmatpush2.bf16.msra.mxu0 %v3857
      %3957 = vmatprep.subr.bf16.mxu0 %v3856
      %3958 = vmatpush2.bf16.msra.mxu0 %v3855
      %3959 = vmatprep.subr.bf16.mxu0 %v3854
      %3960 = vmatpush2.bf16.msra.mxu0 %v3853
      %3961 = vmatprep.subr.bf16.mxu0 %v3852
      %3962 = vmatpush2.bf16.msra.mxu0 %v3851
      %3963 = vmatprep.subr.bf16.mxu0 %v3850
      %3964 = vmatpush2.bf16.msra.mxu0 %v3849
      %3965 = vmatprep.subr.bf16.mxu0 %v3848
      %3966 = vmatpush2.bf16.msra.mxu0 %v3847
      %3967 = vmatprep.subr.bf16.mxu0 %v3846
      %3968 = vmatpush2.bf16.msra.mxu0 %v3845
      %3969 = vmatprep.subr.bf16.mxu0 %v3844
      %3970 = vmatpush2.bf16.msra.mxu0 %v3843
      %3971 = vmatprep.mubr.bf16.mxu0 %v647
      %3972 = vmatmul.mubr.bf16.gmra.mxu0 %v646
      %v3973 = vpop.f32.mrf.mxu0
      %v3974 = vadd.f32 %v3591, %v3973
      %v3975 = vpop.f32.mrf.mxu0
      %v3976 = vadd.f32 %v3593, %v3975
      %v3977 = vpop.f32.mrf.mxu0
      %v3978 = vadd.f32 %v3595, %v3977
      %v3979 = vpop.f32.mrf.mxu0
      %v3980 = vadd.f32 %v3597, %v3979
      %3981 = vmatprep.mubr.bf16.mxu0 %v651
      %3982 = vmatmul.mubr.bf16.gmra.mxu0 %v650
      %v3983 = vpop.f32.mrf.mxu0
      %v3984 = vadd.f32 %v3601, %v3983
      %v3985 = vpop.f32.mrf.mxu0
      %v3986 = vadd.f32 %v3603, %v3985
      %v3987 = vpop.f32.mrf.mxu0
      %v3988 = vadd.f32 %v3605, %v3987
      %v3989 = vpop.f32.mrf.mxu0
      %v3990 = vadd.f32 %v3607, %v3989
      %3991 = vmatprep.mubr.bf16.mxu0 %v655
      %3992 = vmatmul.mubr.bf16.gmra.mxu0 %v654
      %v3993 = vpop.f32.mrf.mxu0
      %v3994 = vadd.f32 %v3611, %v3993
      %v3995 = vpop.f32.mrf.mxu0
      %v3996 = vadd.f32 %v3613, %v3995
      %v3997 = vpop.f32.mrf.mxu0
      %v3998 = vadd.f32 %v3615, %v3997
      %v3999 = vpop.f32.mrf.mxu0
      %v4000 = vadd.f32 %v3617, %v3999
      %4001 = vmatprep.mubr.bf16.mxu0 %v659
      %4002 = vmatmul.mubr.bf16.gmra.mxu0 %v658
      %v4003 = vpop.f32.mrf.mxu0
      %v4004 = vadd.f32 %v3621, %v4003
      %v4005 = vpop.f32.mrf.mxu0
      %v4006 = vadd.f32 %v3623, %v4005
      %v4007 = vpop.f32.mrf.mxu0
      %v4008 = vadd.f32 %v3625, %v4007
      %v4009 = vpop.f32.mrf.mxu0
      %v4010 = vadd.f32 %v3627, %v4009
      %4011 = vmatprep.mubr.bf16.mxu0 %v663
      %4012 = vmatmul.mubr.bf16.gmra.mxu0 %v662
      %v4013 = vpop.f32.mrf.mxu0
      %v4014 = vadd.f32 %v3631, %v4013
      %v4015 = vpop.f32.mrf.mxu0
      %v4016 = vadd.f32 %v3633, %v4015
      %v4017 = vpop.f32.mrf.mxu0
      %v4018 = vadd.f32 %v3635, %v4017
      %v4019 = vpop.f32.mrf.mxu0
      %v4020 = vadd.f32 %v3637, %v4019
      %4021 = vmatprep.mubr.bf16.mxu0 %v667
      %4022 = vmatmul.mubr.bf16.gmra.mxu0 %v666
      %v4023 = vpop.f32.mrf.mxu0
      %v4024 = vadd.f32 %v3641, %v4023
      %v4025 = vpop.f32.mrf.mxu0
      %v4026 = vadd.f32 %v3643, %v4025
      %v4027 = vpop.f32.mrf.mxu0
      %v4028 = vadd.f32 %v3645, %v4027
      %v4029 = vpop.f32.mrf.mxu0
      %v4030 = vadd.f32 %v3647, %v4029
      %4031 = vmatprep.mubr.bf16.mxu0 %v671
      %4032 = vmatmul.mubr.bf16.gmra.mxu0 %v670
      %v4033 = vpop.f32.mrf.mxu0
      %v4034 = vadd.f32 %v3651, %v4033
      %v4035 = vpop.f32.mrf.mxu0
      %v4036 = vadd.f32 %v3653, %v4035
      %v4037 = vpop.f32.mrf.mxu0
      %v4038 = vadd.f32 %v3655, %v4037
      %v4039 = vpop.f32.mrf.mxu0
      %v4040 = vadd.f32 %v3657, %v4039
      %4041 = vdwg.mxu0
      %4042 = vmatprep.subr.bf16.mxu0 %v3874
      %4043 = vmatpush1.bf16.msra.mxu0 %v3873
      %4044 = vmatprep.subr.bf16.mxu0 %v3872
      %4045 = vmatpush1.bf16.msra.mxu0 %v3871
      %4046 = vmatprep.subr.bf16.mxu0 %v3870
      %4047 = vmatpush1.bf16.msra.mxu0 %v3869
      %4048 = vmatprep.subr.bf16.mxu0 %v3868
      %4049 = vmatpush1.bf16.msra.mxu0 %v3867
      %4050 = vmatprep.subr.bf16.mxu0 %v3866
      %4051 = vmatpush1.bf16.msra.mxu0 %v3865
      %4052 = vmatprep.subr.bf16.mxu0 %v3864
      %4053 = vmatpush1.bf16.msra.mxu0 %v3863
      %4054 = vmatprep.subr.bf16.mxu0 %v3862
      %4055 = vmatpush1.bf16.msra.mxu0 %v3861
      %4056 = vmatprep.subr.bf16.mxu0 %v3860
      %4057 = vmatpush1.bf16.msra.mxu0 %v3859
      %4058 = vmatprep.subr.bf16.mxu0 0
      %4059 = vmatpush2.bf16.msra.mxu0 0
      %4060 = vmatprep.subr.bf16.mxu0 0
      %4061 = vmatpush2.bf16.msra.mxu0 0
      %4062 = vmatprep.subr.bf16.mxu0 0
      %4063 = vmatpush2.bf16.msra.mxu0 0
      %4064 = vmatprep.subr.bf16.mxu0 0
      %4065 = vmatpush2.bf16.msra.mxu0 0
      %4066 = vmatprep.subr.bf16.mxu0 %v3882
      %4067 = vmatpush2.bf16.msra.mxu0 %v3881
      %4068 = vmatprep.subr.bf16.mxu0 %v3880
      %4069 = vmatpush2.bf16.msra.mxu0 %v3879
      %4070 = vmatprep.subr.bf16.mxu0 %v3878
      %4071 = vmatpush2.bf16.msra.mxu0 %v3877
      %4072 = vmatprep.subr.bf16.mxu0 %v3876
      %4073 = vmatpush2.bf16.msra.mxu0 %v3875
      %4074 = vmatprep.mubr.bf16.mxu0 %v1725
      %4075 = vmatmul.mubr.bf16.gmra.mxu0 %v648
      %v4076 = vpop.f32.mrf.mxu0
      %v4077 = vadd.f32 %v3974, %v4076
      %v4078 = vpop.f32.mrf.mxu0
      %v4079 = vadd.f32 %v3976, %v4078
      %v4080 = vpop.f32.mrf.mxu0
      %v4081 = vadd.f32 %v3978, %v4080
      %v4082 = vpop.f32.mrf.mxu0
      %v4083 = vadd.f32 %v3980, %v4082
      %4084 = vmatprep.mubr.bf16.mxu0 %v1727
      %4085 = vmatmul.mubr.bf16.gmra.mxu0 %v652
      %v4086 = vpop.f32.mrf.mxu0
      %v4087 = vadd.f32 %v3984, %v4086
      %v4088 = vpop.f32.mrf.mxu0
      %v4089 = vadd.f32 %v3986, %v4088
      %v4090 = vpop.f32.mrf.mxu0
      %v4091 = vadd.f32 %v3988, %v4090
      %v4092 = vpop.f32.mrf.mxu0
      %v4093 = vadd.f32 %v3990, %v4092
      %4094 = vmatprep.mubr.bf16.mxu0 %v1729
      %4095 = vmatmul.mubr.bf16.gmra.mxu0 %v656
      %v4096 = vpop.f32.mrf.mxu0
      %v4097 = vadd.f32 %v3994, %v4096
      %v4098 = vpop.f32.mrf.mxu0
      %v4099 = vadd.f32 %v3996, %v4098
      %v4100 = vpop.f32.mrf.mxu0
      %v4101 = vadd.f32 %v3998, %v4100
      %v4102 = vpop.f32.mrf.mxu0
      %v4103 = vadd.f32 %v4000, %v4102
      %4104 = vmatprep.mubr.bf16.mxu0 %v1731
      %4105 = vmatmul.mubr.bf16.gmra.mxu0 %v660
      %v4106 = vpop.f32.mrf.mxu0
      %v4107 = vadd.f32 %v4004, %v4106
      %v4108 = vpop.f32.mrf.mxu0
      %v4109 = vadd.f32 %v4006, %v4108
      %v4110 = vpop.f32.mrf.mxu0
      %v4111 = vadd.f32 %v4008, %v4110
      %v4112 = vpop.f32.mrf.mxu0
      %v4113 = vadd.f32 %v4010, %v4112
      %4114 = vmatprep.mubr.bf16.mxu0 %v1733
      %4115 = vmatmul.mubr.bf16.gmra.mxu0 %v664
      %v4116 = vpop.f32.mrf.mxu0
      %v4117 = vadd.f32 %v4014, %v4116
      %v4118 = vpop.f32.mrf.mxu0
      %v4119 = vadd.f32 %v4016, %v4118
      %v4120 = vpop.f32.mrf.mxu0
      %v4121 = vadd.f32 %v4018, %v4120
      %v4122 = vpop.f32.mrf.mxu0
      %v4123 = vadd.f32 %v4020, %v4122
      %4124 = vmatprep.mubr.bf16.mxu0 %v1735
      %4125 = vmatmul.mubr.bf16.gmra.mxu0 %v668
      %v4126 = vpop.f32.mrf.mxu0
      %v4127 = vadd.f32 %v4024, %v4126
      %v4128 = vpop.f32.mrf.mxu0
      %v4129 = vadd.f32 %v4026, %v4128
      %v4130 = vpop.f32.mrf.mxu0
      %v4131 = vadd.f32 %v4028, %v4130
      %v4132 = vpop.f32.mrf.mxu0
      %v4133 = vadd.f32 %v4030, %v4132
      %4134 = vmatprep.mubr.bf16.mxu0 %v1737
      %4135 = vmatmul.mubr.bf16.gmra.mxu0 %v672
      %v4136 = vpop.f32.mrf.mxu0
      %v4137 = vadd.f32 %v4034, %v4136
      %v4138 = vpop.f32.mrf.mxu0
      %v4139 = vadd.f32 %v4036, %v4138
      %v4140 = vpop.f32.mrf.mxu0
      %v4141 = vadd.f32 %v4038, %v4140
      %v4142 = vpop.f32.mrf.mxu0
      %v4143 = vadd.f32 %v4040, %v4142
      %4144 = vdwg.mxu0
      %v4145 = vmax.f32 %v3031, %v4077
      %v4146 = vmax.f32 %v3032, %v4079
      %v4147 = vmax.f32 %v3033, %v4081
      %v4148 = vmax.f32 %v3034, %v4083
      %v4149 = vmax.f32 %v3035, %v4087
      %v4150 = vmax.f32 %v3036, %v4089
      %v4151 = vmax.f32 %v3037, %v4091
      %v4152 = vmax.f32 %v3038, %v4093
      %v4153 = vmax.f32 %v3039, %v4097
      %v4154 = vmax.f32 %v3040, %v4099
      %v4155 = vmax.f32 %v3041, %v4101
      %v4156 = vmax.f32 %v3042, %v4103
      %v4157 = vmax.f32 %v3043, %v4107
      %v4158 = vmax.f32 %v3044, %v4109
      %v4159 = vmax.f32 %v3045, %v4111
      %v4160 = vmax.f32 %v3046, %v4113
      %v4161 = vmax.f32 %v3047, %v4117
      %v4162 = vmax.f32 %v3048, %v4119
      %v4163 = vmax.f32 %v3049, %v4121
      %v4164 = vmax.f32 %v3050, %v4123
      %v4165 = vmax.f32 %v3051, %v4127
      %v4166 = vmax.f32 %v3052, %v4129
      %v4167 = vmax.f32 %v3053, %v4131
      %v4168 = vmax.f32 %v3054, %v4133
      %v4169 = vmax.f32 %v3055, %v4137
      %v4170 = vmax.f32 %v3056, %v4139
      %v4171 = vmax.f32 %v3057, %v4141
      %v4172 = vmax.f32 %v3058, %v4143
      %s4173 = scalar_lea.vmem %s1, 2688
      %v4174 = vld [vmem:[%s4173] sm:$0xff]
      %v4175 = vld [vmem:[%s4173 + $0x8] sm:$0xff]
      %v4176 = vld [vmem:[%s4173 + $0x10] sm:$0xff]
      %v4177 = vld [vmem:[%s4173 + $0x18] sm:$0xff]
      %v4178 = vld [vmem:[%s4173 + $0x20] sm:$0xff]
      %v4179 = vld [vmem:[%s4173 + $0x28] sm:$0xff]
      %v4180 = vld [vmem:[%s4173 + $0x30] sm:$0xff]
      %v4181 = vld [vmem:[%s4173 + $0x38] sm:$0xff]
      %v4182 = vld [vmem:[%s4173 + $0x40] sm:$0xff]
      %v4183 = vld [vmem:[%s4173 + $0x48] sm:$0xff]
      %v4184 = vld [vmem:[%s4173 + $0x50] sm:$0xff]
      %v4185 = vld [vmem:[%s4173 + $0x58] sm:$0xff]
      %v4186 = vld [vmem:[%s4173 + $0x60] sm:$0xff]
      %v4187 = vld [vmem:[%s4173 + $0x68] sm:$0xff]
      %v4188 = vld [vmem:[%s4173 + $0x70] sm:$0xff]
      %v4189 = vld [vmem:[%s4173 + $0x78] sm:$0xff]
      %v4190 = vld [vmem:[%s4173 + $0x80] sm:$0xff]
      %v4191 = vld [vmem:[%s4173 + $0x88] sm:$0xff]
      %v4192 = vld [vmem:[%s4173 + $0x90] sm:$0xff]
      %v4193 = vld [vmem:[%s4173 + $0x98] sm:$0xff]
      %v4194 = vld [vmem:[%s4173 + $0xa0] sm:$0xff]
      %v4195 = vld [vmem:[%s4173 + $0xa8] sm:$0xff]
      %v4196 = vld [vmem:[%s4173 + $0xb0] sm:$0xff]
      %v4197 = vld [vmem:[%s4173 + $0xb8] sm:$0xff]
      %v4198 = vld [vmem:[%s4173 + $0xc0] sm:$0xff]
      %v4199 = vld [vmem:[%s4173 + $0xc8] sm:$0xff]
      %v4200 = vld [vmem:[%s4173 + $0xd0] sm:$0xff]
      %v4201 = vld [vmem:[%s4173 + $0xd8] sm:$0xff]
      %v4202 = vld [vmem:[%s4173 + $0xe0] sm:$0xff]
      %v4203 = vld [vmem:[%s4173 + $0xe8] sm:$0xff]
      %v4204 = vld [vmem:[%s4173 + $0xf0] sm:$0xff]
      %v4205 = vld [vmem:[%s4173 + $0xf8] sm:$0xff]
      %v4206 = vld [vmem:[%s4173 + $0x100] sm:$0xff]
      %v4207 = vld [vmem:[%s4173 + $0x108] sm:$0xff]
      %v4208 = vld [vmem:[%s4173 + $0x110] sm:$0xff]
      %v4209 = vld [vmem:[%s4173 + $0x118] sm:$0xff]
      %v4210 = vld [vmem:[%s4173 + $0x120] sm:$0xff]
      %v4211 = vld [vmem:[%s4173 + $0x128] sm:$0xff]
      %v4212 = vld [vmem:[%s4173 + $0x130] sm:$0xff]
      %v4213 = vld [vmem:[%s4173 + $0x138] sm:$0xff]
      %v4214 = vld [vmem:[%s4173 + $0x140] sm:$0xff]
      %v4215 = vld [vmem:[%s4173 + $0x148] sm:$0xff]
      %v4216 = vld [vmem:[%s4173 + $0x150] sm:$0xff]
      %v4217 = vld [vmem:[%s4173 + $0x158] sm:$0xff]
      %v4218 = vld [vmem:[%s4173 + $0x160] sm:$0xff]
      %v4219 = vld [vmem:[%s4173 + $0x168] sm:$0xff]
      %v4220 = vld [vmem:[%s4173 + $0x170] sm:$0xff]
      %v4221 = vld [vmem:[%s4173 + $0x178] sm:$0xff]
      %v4222 = vld [vmem:[%s4173 + $0x180] sm:$0xff]
      %v4223 = vld [vmem:[%s4173 + $0x188] sm:$0xff]
      %v4224 = vld [vmem:[%s4173 + $0x190] sm:$0xff]
      %v4225 = vld [vmem:[%s4173 + $0x198] sm:$0xff]
      %v4226 = vld [vmem:[%s4173 + $0x1a0] sm:$0xff]
      %v4227 = vld [vmem:[%s4173 + $0x1a8] sm:$0xff]
      %v4228 = vld [vmem:[%s4173 + $0x1b0] sm:$0xff]
      %v4229 = vld [vmem:[%s4173 + $0x1b8] sm:$0xff]
      %s4230 = scalar_lea.vmem %s1, 3136
      %v4231 = vld [vmem:[%s4230] sm:$0xff]
      %v4232 = vld [vmem:[%s4230 + $0x8] sm:$0xff]
      %v4233 = vld [vmem:[%s4230 + $0x10] sm:$0xff]
      %v4234 = vld [vmem:[%s4230 + $0x18] sm:$0xff]
      %v4235 = vld [vmem:[%s4230 + $0x20] sm:$0xff]
      %v4236 = vld [vmem:[%s4230 + $0x28] sm:$0xff]
      %v4237 = vld [vmem:[%s4230 + $0x30] sm:$0xff]
      %v4238 = vld [vmem:[%s4230 + $0x38] sm:$0xff]
      %v4239 = vld [vmem:[%s4230 + $0x40] sm:$0xff]
      %v4240 = vld [vmem:[%s4230 + $0x48] sm:$0xff]
      %v4241 = vld [vmem:[%s4230 + $0x50] sm:$0xff]
      %v4242 = vld [vmem:[%s4230 + $0x58] sm:$0xff]
      %v4243 = vld [vmem:[%s4230 + $0x60] sm:$0xff]
      %v4244 = vld [vmem:[%s4230 + $0x68] sm:$0xff]
      %v4245 = vld [vmem:[%s4230 + $0x70] sm:$0xff]
      %v4246 = vld [vmem:[%s4230 + $0x78] sm:$0xff]
      %v4247 = vld [vmem:[%s4230 + $0x80] sm:$0xff]
      %v4248 = vld [vmem:[%s4230 + $0x88] sm:$0xff]
      %v4249 = vld [vmem:[%s4230 + $0x90] sm:$0xff]
      %v4250 = vld [vmem:[%s4230 + $0x98] sm:$0xff]
      %v4251 = vld [vmem:[%s4230 + $0xa0] sm:$0xff]
      %v4252 = vld [vmem:[%s4230 + $0xa8] sm:$0xff]
      %v4253 = vld [vmem:[%s4230 + $0xb0] sm:$0xff]
      %v4254 = vld [vmem:[%s4230 + $0xb8] sm:$0xff]
      %v4255 = vld [vmem:[%s4230 + $0xc0] sm:$0xff]
      %v4256 = vld [vmem:[%s4230 + $0xc8] sm:$0xff]
      %v4257 = vld [vmem:[%s4230 + $0xd0] sm:$0xff]
      %v4258 = vld [vmem:[%s4230 + $0xd8] sm:$0xff]
      %v4259 = vld [vmem:[%s4230 + $0xe0] sm:$0xff]
      %v4260 = vld [vmem:[%s4230 + $0xe8] sm:$0xff]
      %v4261 = vld [vmem:[%s4230 + $0xf0] sm:$0xff]
      %v4262 = vld [vmem:[%s4230 + $0xf8] sm:$0xff]
      %v4263 = vld [vmem:[%s4230 + $0x100] sm:$0xff]
      %v4264 = vld [vmem:[%s4230 + $0x108] sm:$0xff]
      %v4265 = vld [vmem:[%s4230 + $0x110] sm:$0xff]
      %v4266 = vld [vmem:[%s4230 + $0x118] sm:$0xff]
      %v4267 = vld [vmem:[%s4230 + $0x120] sm:$0xff]
      %v4268 = vld [vmem:[%s4230 + $0x128] sm:$0xff]
      %v4269 = vld [vmem:[%s4230 + $0x130] sm:$0xff]
      %v4270 = vld [vmem:[%s4230 + $0x138] sm:$0xff]
      %v4271 = vld [vmem:[%s4230 + $0x140] sm:$0xff]
      %v4272 = vld [vmem:[%s4230 + $0x148] sm:$0xff]
      %v4273 = vld [vmem:[%s4230 + $0x150] sm:$0xff]
      %v4274 = vld [vmem:[%s4230 + $0x158] sm:$0xff]
      %v4275 = vld [vmem:[%s4230 + $0x160] sm:$0xff]
      %v4276 = vld [vmem:[%s4230 + $0x168] sm:$0xff]
      %v4277 = vld [vmem:[%s4230 + $0x170] sm:$0xff]
      %v4278 = vld [vmem:[%s4230 + $0x178] sm:$0xff]
      %v4279 = vld [vmem:[%s4230 + $0x180] sm:$0xff]
      %v4280 = vld [vmem:[%s4230 + $0x188] sm:$0xff]
      %v4281 = vld [vmem:[%s4230 + $0x190] sm:$0xff]
      %v4282 = vld [vmem:[%s4230 + $0x198] sm:$0xff]
      %v4283 = vld [vmem:[%s4230 + $0x1a0] sm:$0xff]
      %v4284 = vld [vmem:[%s4230 + $0x1a8] sm:$0xff]
      %v4285 = vld [vmem:[%s4230 + $0x1b0] sm:$0xff]
      %v4286 = vld [vmem:[%s4230 + $0x1b8] sm:$0xff]
      %v4343 = vunpack.c.l.b16 %v4231
      %v4344 = vunpack.c.h.b16 %v4231
      %v4345 = vunpack.c.l.b16 %v4232
      %v4346 = vunpack.c.h.b16 %v4232
      %v4347 = vunpack.c.l.b16 %v4233
      %v4348 = vunpack.c.h.b16 %v4233
      %v4349 = vunpack.c.l.b16 %v4234
      %v4350 = vunpack.c.h.b16 %v4234
      %v4351 = vunpack.c.l.b16 %v4235
      %v4352 = vunpack.c.h.b16 %v4235
      %v4353 = vunpack.c.l.b16 %v4236
      %v4354 = vunpack.c.h.b16 %v4236
      %v4355 = vunpack.c.l.b16 %v4237
      %v4356 = vunpack.c.h.b16 %v4237
      %v4357 = vunpack.c.l.b16 %v4238
      %v4358 = vunpack.c.h.b16 %v4238
      %v4359 = vunpack.c.l.b16 %v4239
      %v4360 = vunpack.c.h.b16 %v4239
      %v4361 = vunpack.c.l.b16 %v4240
      %v4362 = vunpack.c.h.b16 %v4240
      %v4363 = vunpack.c.l.b16 %v4241
      %v4364 = vunpack.c.h.b16 %v4241
      %v4365 = vunpack.c.l.b16 %v4242
      %v4366 = vunpack.c.h.b16 %v4242
      %v4367 = vunpack.c.l.b16 %v4243
      %v4368 = vunpack.c.h.b16 %v4243
      %v4369 = vunpack.c.l.b16 %v4244
      %v4370 = vunpack.c.h.b16 %v4244
      %v4371 = vunpack.c.l.b16 %v4245
      %v4372 = vunpack.c.h.b16 %v4245
      %v4373 = vunpack.c.l.b16 %v4246
      %v4374 = vunpack.c.h.b16 %v4246
      %v4375 = vunpack.c.l.b16 %v4247
      %v4376 = vunpack.c.h.b16 %v4247
      %v4377 = vunpack.c.l.b16 %v4248
      %v4378 = vunpack.c.h.b16 %v4248
      %v4379 = vunpack.c.l.b16 %v4249
      %v4380 = vunpack.c.h.b16 %v4249
      %v4381 = vunpack.c.l.b16 %v4250
      %v4382 = vunpack.c.h.b16 %v4250
      %v4383 = vunpack.c.l.b16 %v4251
      %v4384 = vunpack.c.h.b16 %v4251
      %v4385 = vunpack.c.l.b16 %v4252
      %v4386 = vunpack.c.h.b16 %v4252
      %v4387 = vunpack.c.l.b16 %v4253
      %v4388 = vunpack.c.h.b16 %v4253
      %v4389 = vunpack.c.l.b16 %v4254
      %v4390 = vunpack.c.h.b16 %v4254
      %v4391 = vunpack.c.l.b16 %v4255
      %v4392 = vunpack.c.h.b16 %v4255
      %v4393 = vunpack.c.l.b16 %v4256
      %v4394 = vunpack.c.h.b16 %v4256
      %v4395 = vunpack.c.l.b16 %v4257
      %v4396 = vunpack.c.h.b16 %v4257
      %v4397 = vunpack.c.l.b16 %v4258
      %v4398 = vunpack.c.h.b16 %v4258
      %v4399 = vunpack.c.l.b16 %v4259
      %v4400 = vunpack.c.h.b16 %v4259
      %v4401 = vunpack.c.l.b16 %v4260
      %v4402 = vunpack.c.h.b16 %v4260
      %v4403 = vunpack.c.l.b16 %v4261
      %v4404 = vunpack.c.h.b16 %v4261
      %v4405 = vunpack.c.l.b16 %v4262
      %v4406 = vunpack.c.h.b16 %v4262
      %v4407 = vunpack.c.l.b16 %v4263
      %v4408 = vunpack.c.h.b16 %v4263
      %v4409 = vunpack.c.l.b16 %v4264
      %v4410 = vunpack.c.h.b16 %v4264
      %v4411 = vunpack.c.l.b16 %v4265
      %v4412 = vunpack.c.h.b16 %v4265
      %v4413 = vunpack.c.l.b16 %v4266
      %v4414 = vunpack.c.h.b16 %v4266
      %v4415 = vunpack.c.l.b16 %v4267
      %v4416 = vunpack.c.h.b16 %v4267
      %v4417 = vunpack.c.l.b16 %v4268
      %v4418 = vunpack.c.h.b16 %v4268
      %v4419 = vunpack.c.l.b16 %v4269
      %v4420 = vunpack.c.h.b16 %v4269
      %v4421 = vunpack.c.l.b16 %v4270
      %v4422 = vunpack.c.h.b16 %v4270
      %v4423 = vunpack.c.l.b16 %v4271
      %v4424 = vunpack.c.h.b16 %v4271
      %v4425 = vunpack.c.l.b16 %v4272
      %v4426 = vunpack.c.h.b16 %v4272
      %v4427 = vunpack.c.l.b16 %v4273
      %v4428 = vunpack.c.h.b16 %v4273
      %v4429 = vunpack.c.l.b16 %v4274
      %v4430 = vunpack.c.h.b16 %v4274
      %v4431 = vunpack.c.l.b16 %v4275
      %v4432 = vunpack.c.h.b16 %v4275
      %v4433 = vunpack.c.l.b16 %v4276
      %v4434 = vunpack.c.h.b16 %v4276
      %v4435 = vunpack.c.l.b16 %v4277
      %v4436 = vunpack.c.h.b16 %v4277
      %v4437 = vunpack.c.l.b16 %v4278
      %v4438 = vunpack.c.h.b16 %v4278
      %v4439 = vunpack.c.l.b16 %v4279
      %v4440 = vunpack.c.h.b16 %v4279
      %v4441 = vunpack.c.l.b16 %v4280
      %v4442 = vunpack.c.h.b16 %v4280
      %v4443 = vunpack.c.l.b16 %v4281
      %v4444 = vunpack.c.h.b16 %v4281
      %v4445 = vunpack.c.l.b16 %v4282
      %v4446 = vunpack.c.h.b16 %v4282
      %v4447 = vunpack.c.l.b16 %v4283
      %v4448 = vunpack.c.h.b16 %v4283
      %v4449 = vunpack.c.l.b16 %v4284
      %v4450 = vunpack.c.h.b16 %v4284
      %v4451 = vunpack.c.l.b16 %v4285
      %v4452 = vunpack.c.h.b16 %v4285
      %v4453 = vunpack.c.l.b16 %v4286
      %v4454 = vunpack.c.h.b16 %v4286
      %v4455 = vpack.c.b16 %v4345, %v4343
      %v4456 = vpack.c.b16 %v4346, %v4344
      %v4457 = vpack.c.b16 %v4349, %v4347
      %v4458 = vpack.c.b16 %v4350, %v4348
      %v4459 = vpack.c.b16 %v4353, %v4351
      %v4460 = vpack.c.b16 %v4354, %v4352
      %v4461 = vpack.c.b16 %v4357, %v4355
      %v4462 = vpack.c.b16 %v4358, %v4356
      %v4463 = vpack.c.b16 %v4361, %v4359
      %v4464 = vpack.c.b16 %v4362, %v4360
      %v4465 = vpack.c.b16 %v4365, %v4363
      %v4466 = vpack.c.b16 %v4366, %v4364
      %v4467 = vpack.c.b16 %v4369, %v4367
      %v4468 = vpack.c.b16 %v4370, %v4368
      %v4469 = vpack.c.b16 %v4373, %v4371
      %v4470 = vpack.c.b16 %v4374, %v4372
      %v4471 = vpack.c.b16 %v4377, %v4375
      %v4472 = vpack.c.b16 %v4378, %v4376
      %v4473 = vpack.c.b16 %v4381, %v4379
      %v4474 = vpack.c.b16 %v4382, %v4380
      %v4475 = vpack.c.b16 %v4385, %v4383
      %v4476 = vpack.c.b16 %v4386, %v4384
      %v4477 = vpack.c.b16 %v4389, %v4387
      %v4478 = vpack.c.b16 %v4390, %v4388
      %v4479 = vpack.c.b16 %v4393, %v4391
      %v4480 = vpack.c.b16 %v4394, %v4392
      %v4481 = vpack.c.b16 %v4397, %v4395
      %v4482 = vpack.c.b16 %v4398, %v4396
      %v4483 = vpack.c.b16 %v4401, %v4399
      %v4484 = vpack.c.b16 %v4402, %v4400
      %v4485 = vpack.c.b16 %v4405, %v4403
      %v4486 = vpack.c.b16 %v4406, %v4404
      %v4487 = vpack.c.b16 %v4409, %v4407
      %v4488 = vpack.c.b16 %v4410, %v4408
      %v4489 = vpack.c.b16 %v4413, %v4411
      %v4490 = vpack.c.b16 %v4414, %v4412
      %v4491 = vpack.c.b16 %v4417, %v4415
      %v4492 = vpack.c.b16 %v4418, %v4416
      %v4493 = vpack.c.b16 %v4421, %v4419
      %v4494 = vpack.c.b16 %v4422, %v4420
      %v4495 = vpack.c.b16 %v4425, %v4423
      %v4496 = vpack.c.b16 %v4426, %v4424
      %v4497 = vpack.c.b16 %v4429, %v4427
      %v4498 = vpack.c.b16 %v4430, %v4428
      %v4499 = vpack.c.b16 %v4433, %v4431
      %v4500 = vpack.c.b16 %v4434, %v4432
      %v4501 = vpack.c.b16 %v4437, %v4435
      %v4502 = vpack.c.b16 %v4438, %v4436
      %v4503 = vpack.c.b16 %v4441, %v4439
      %v4504 = vpack.c.b16 %v4442, %v4440
      %v4505 = vpack.c.b16 %v4445, %v4443
      %v4506 = vpack.c.b16 %v4446, %v4444
      %v4507 = vpack.c.b16 %v4449, %v4447
      %v4508 = vpack.c.b16 %v4450, %v4448
      %v4509 = vpack.c.b16 %v4453, %v4451
      %v4510 = vpack.c.b16 %v4454, %v4452
      %4567 = vmatprep.subr.bf16.mxu0 %v4470
      %4568 = vmatpush1.bf16.msra.mxu0 %v4469
      %4569 = vmatprep.subr.bf16.mxu0 %v4468
      %4570 = vmatpush1.bf16.msra.mxu0 %v4467
      %4571 = vmatprep.subr.bf16.mxu0 %v4466
      %4572 = vmatpush1.bf16.msra.mxu0 %v4465
      %4573 = vmatprep.subr.bf16.mxu0 %v4464
      %4574 = vmatpush1.bf16.msra.mxu0 %v4463
      %4575 = vmatprep.subr.bf16.mxu0 %v4462
      %4576 = vmatpush1.bf16.msra.mxu0 %v4461
      %4577 = vmatprep.subr.bf16.mxu0 %v4460
      %4578 = vmatpush1.bf16.msra.mxu0 %v4459
      %4579 = vmatprep.subr.bf16.mxu0 %v4458
      %4580 = vmatpush1.bf16.msra.mxu0 %v4457
      %4581 = vmatprep.subr.bf16.mxu0 %v4456
      %4582 = vmatpush1.bf16.msra.mxu0 %v4455
      %4583 = vmatprep.subr.bf16.mxu0 %v4486
      %4584 = vmatpush2.bf16.msra.mxu0 %v4485
      %4585 = vmatprep.subr.bf16.mxu0 %v4484
      %4586 = vmatpush2.bf16.msra.mxu0 %v4483
      %4587 = vmatprep.subr.bf16.mxu0 %v4482
      %4588 = vmatpush2.bf16.msra.mxu0 %v4481
      %4589 = vmatprep.subr.bf16.mxu0 %v4480
      %4590 = vmatpush2.bf16.msra.mxu0 %v4479
      %4591 = vmatprep.subr.bf16.mxu0 %v4478
      %4592 = vmatpush2.bf16.msra.mxu0 %v4477
      %4593 = vmatprep.subr.bf16.mxu0 %v4476
      %4594 = vmatpush2.bf16.msra.mxu0 %v4475
      %4595 = vmatprep.subr.bf16.mxu0 %v4474
      %4596 = vmatpush2.bf16.msra.mxu0 %v4473
      %4597 = vmatprep.subr.bf16.mxu0 %v4472
      %4598 = vmatpush2.bf16.msra.mxu0 %v4471
      %4599 = vmatprep.mubr.bf16.mxu0 %v698
      %4600 = vmatmul.mubr.bf16.gmra.mxu0 %v686
      %v4601 = vpop.f32.mrf.mxu0
      %v4602 = vadd.f32 0.0, %v4601
      %v4603 = vpop.f32.mrf.mxu0
      %v4604 = vadd.f32 0.0, %v4603
      %v4605 = vpop.f32.mrf.mxu0
      %v4606 = vadd.f32 0.0, %v4605
      %v4607 = vpop.f32.mrf.mxu0
      %v4608 = vadd.f32 0.0, %v4607
      %4609 = vmatprep.mubr.bf16.mxu0 %v738
      %4610 = vmatmul.mubr.bf16.gmra.mxu0 %v730
      %v4611 = vpop.f32.mrf.mxu0
      %v4612 = vadd.f32 0.0, %v4611
      %v4613 = vpop.f32.mrf.mxu0
      %v4614 = vadd.f32 0.0, %v4613
      %v4615 = vpop.f32.mrf.mxu0
      %v4616 = vadd.f32 0.0, %v4615
      %v4617 = vpop.f32.mrf.mxu0
      %v4618 = vadd.f32 0.0, %v4617
      %4619 = vmatprep.mubr.bf16.mxu0 %v770
      %4620 = vmatmul.mubr.bf16.gmra.mxu0 %v762
      %v4621 = vpop.f32.mrf.mxu0
      %v4622 = vadd.f32 0.0, %v4621
      %v4623 = vpop.f32.mrf.mxu0
      %v4624 = vadd.f32 0.0, %v4623
      %v4625 = vpop.f32.mrf.mxu0
      %v4626 = vadd.f32 0.0, %v4625
      %v4627 = vpop.f32.mrf.mxu0
      %v4628 = vadd.f32 0.0, %v4627
      %4629 = vmatprep.mubr.bf16.mxu0 %v802
      %4630 = vmatmul.mubr.bf16.gmra.mxu0 %v794
      %v4631 = vpop.f32.mrf.mxu0
      %v4632 = vadd.f32 0.0, %v4631
      %v4633 = vpop.f32.mrf.mxu0
      %v4634 = vadd.f32 0.0, %v4633
      %v4635 = vpop.f32.mrf.mxu0
      %v4636 = vadd.f32 0.0, %v4635
      %v4637 = vpop.f32.mrf.mxu0
      %v4638 = vadd.f32 0.0, %v4637
      %4639 = vmatprep.mubr.bf16.mxu0 %v834
      %4640 = vmatmul.mubr.bf16.gmra.mxu0 %v826
      %v4641 = vpop.f32.mrf.mxu0
      %v4642 = vadd.f32 0.0, %v4641
      %v4643 = vpop.f32.mrf.mxu0
      %v4644 = vadd.f32 0.0, %v4643
      %v4645 = vpop.f32.mrf.mxu0
      %v4646 = vadd.f32 0.0, %v4645
      %v4647 = vpop.f32.mrf.mxu0
      %v4648 = vadd.f32 0.0, %v4647
      %4649 = vmatprep.mubr.bf16.mxu0 %v866
      %4650 = vmatmul.mubr.bf16.gmra.mxu0 %v858
      %v4651 = vpop.f32.mrf.mxu0
      %v4652 = vadd.f32 0.0, %v4651
      %v4653 = vpop.f32.mrf.mxu0
      %v4654 = vadd.f32 0.0, %v4653
      %v4655 = vpop.f32.mrf.mxu0
      %v4656 = vadd.f32 0.0, %v4655
      %v4657 = vpop.f32.mrf.mxu0
      %v4658 = vadd.f32 0.0, %v4657
      %4659 = vmatprep.mubr.bf16.mxu0 %v888
      %4660 = vmatmul.mubr.bf16.gmra.mxu0 %v885
      %v4661 = vpop.f32.mrf.mxu0
      %v4662 = vadd.f32 0.0, %v4661
      %v4663 = vpop.f32.mrf.mxu0
      %v4664 = vadd.f32 0.0, %v4663
      %v4665 = vpop.f32.mrf.mxu0
      %v4666 = vadd.f32 0.0, %v4665
      %v4667 = vpop.f32.mrf.mxu0
      %v4668 = vadd.f32 0.0, %v4667
      %4669 = vdwg.mxu0
      %4670 = vmatprep.subr.bf16.mxu0 %v4502
      %4671 = vmatpush1.bf16.msra.mxu0 %v4501
      %4672 = vmatprep.subr.bf16.mxu0 %v4500
      %4673 = vmatpush1.bf16.msra.mxu0 %v4499
      %4674 = vmatprep.subr.bf16.mxu0 %v4498
      %4675 = vmatpush1.bf16.msra.mxu0 %v4497
      %4676 = vmatprep.subr.bf16.mxu0 %v4496
      %4677 = vmatpush1.bf16.msra.mxu0 %v4495
      %4678 = vmatprep.subr.bf16.mxu0 %v4494
      %4679 = vmatpush1.bf16.msra.mxu0 %v4493
      %4680 = vmatprep.subr.bf16.mxu0 %v4492
      %4681 = vmatpush1.bf16.msra.mxu0 %v4491
      %4682 = vmatprep.subr.bf16.mxu0 %v4490
      %4683 = vmatpush1.bf16.msra.mxu0 %v4489
      %4684 = vmatprep.subr.bf16.mxu0 %v4488
      %4685 = vmatpush1.bf16.msra.mxu0 %v4487
      %4686 = vmatprep.subr.bf16.mxu0 0
      %4687 = vmatpush2.bf16.msra.mxu0 0
      %4688 = vmatprep.subr.bf16.mxu0 0
      %4689 = vmatpush2.bf16.msra.mxu0 0
      %4690 = vmatprep.subr.bf16.mxu0 0
      %4691 = vmatpush2.bf16.msra.mxu0 0
      %4692 = vmatprep.subr.bf16.mxu0 0
      %4693 = vmatpush2.bf16.msra.mxu0 0
      %4694 = vmatprep.subr.bf16.mxu0 %v4510
      %4695 = vmatpush2.bf16.msra.mxu0 %v4509
      %4696 = vmatprep.subr.bf16.mxu0 %v4508
      %4697 = vmatpush2.bf16.msra.mxu0 %v4507
      %4698 = vmatprep.subr.bf16.mxu0 %v4506
      %4699 = vmatpush2.bf16.msra.mxu0 %v4505
      %4700 = vmatprep.subr.bf16.mxu0 %v4504
      %4701 = vmatpush2.bf16.msra.mxu0 %v4503
      %4702 = vmatprep.mubr.bf16.mxu0 %v1198
      %4703 = vmatmul.mubr.bf16.gmra.mxu0 %v710
      %v4704 = vpop.f32.mrf.mxu0
      %v4705 = vadd.f32 %v4602, %v4704
      %v4706 = vpop.f32.mrf.mxu0
      %v4707 = vadd.f32 %v4604, %v4706
      %v4708 = vpop.f32.mrf.mxu0
      %v4709 = vadd.f32 %v4606, %v4708
      %v4710 = vpop.f32.mrf.mxu0
      %v4711 = vadd.f32 %v4608, %v4710
      %4712 = vmatprep.mubr.bf16.mxu0 %v1201
      %4713 = vmatmul.mubr.bf16.gmra.mxu0 %v746
      %v4714 = vpop.f32.mrf.mxu0
      %v4715 = vadd.f32 %v4612, %v4714
      %v4716 = vpop.f32.mrf.mxu0
      %v4717 = vadd.f32 %v4614, %v4716
      %v4718 = vpop.f32.mrf.mxu0
      %v4719 = vadd.f32 %v4616, %v4718
      %v4720 = vpop.f32.mrf.mxu0
      %v4721 = vadd.f32 %v4618, %v4720
      %4722 = vmatprep.mubr.bf16.mxu0 %v1204
      %4723 = vmatmul.mubr.bf16.gmra.mxu0 %v778
      %v4724 = vpop.f32.mrf.mxu0
      %v4725 = vadd.f32 %v4622, %v4724
      %v4726 = vpop.f32.mrf.mxu0
      %v4727 = vadd.f32 %v4624, %v4726
      %v4728 = vpop.f32.mrf.mxu0
      %v4729 = vadd.f32 %v4626, %v4728
      %v4730 = vpop.f32.mrf.mxu0
      %v4731 = vadd.f32 %v4628, %v4730
      %4732 = vmatprep.mubr.bf16.mxu0 %v1207
      %4733 = vmatmul.mubr.bf16.gmra.mxu0 %v810
      %v4734 = vpop.f32.mrf.mxu0
      %v4735 = vadd.f32 %v4632, %v4734
      %v4736 = vpop.f32.mrf.mxu0
      %v4737 = vadd.f32 %v4634, %v4736
      %v4738 = vpop.f32.mrf.mxu0
      %v4739 = vadd.f32 %v4636, %v4738
      %v4740 = vpop.f32.mrf.mxu0
      %v4741 = vadd.f32 %v4638, %v4740
      %4742 = vmatprep.mubr.bf16.mxu0 %v1210
      %4743 = vmatmul.mubr.bf16.gmra.mxu0 %v842
      %v4744 = vpop.f32.mrf.mxu0
      %v4745 = vadd.f32 %v4642, %v4744
      %v4746 = vpop.f32.mrf.mxu0
      %v4747 = vadd.f32 %v4644, %v4746
      %v4748 = vpop.f32.mrf.mxu0
      %v4749 = vadd.f32 %v4646, %v4748
      %v4750 = vpop.f32.mrf.mxu0
      %v4751 = vadd.f32 %v4648, %v4750
      %4752 = vmatprep.mubr.bf16.mxu0 %v1213
      %4753 = vmatmul.mubr.bf16.gmra.mxu0 %v874
      %v4754 = vpop.f32.mrf.mxu0
      %v4755 = vadd.f32 %v4652, %v4754
      %v4756 = vpop.f32.mrf.mxu0
      %v4757 = vadd.f32 %v4654, %v4756
      %v4758 = vpop.f32.mrf.mxu0
      %v4759 = vadd.f32 %v4656, %v4758
      %v4760 = vpop.f32.mrf.mxu0
      %v4761 = vadd.f32 %v4658, %v4760
      %4762 = vmatprep.mubr.bf16.mxu0 %v1216
      %4763 = vmatmul.mubr.bf16.gmra.mxu0 %v891
      %v4764 = vpop.f32.mrf.mxu0
      %v4765 = vadd.f32 %v4662, %v4764
      %v4766 = vpop.f32.mrf.mxu0
      %v4767 = vadd.f32 %v4664, %v4766
      %v4768 = vpop.f32.mrf.mxu0
      %v4769 = vadd.f32 %v4666, %v4768
      %v4770 = vpop.f32.mrf.mxu0
      %v4771 = vadd.f32 %v4668, %v4770
      %4772 = vdwg.mxu0
      %v4829 = vunpack.c.l.b16 %v4174
      %v4830 = vunpack.c.h.b16 %v4174
      %v4831 = vunpack.c.l.b16 %v4175
      %v4832 = vunpack.c.h.b16 %v4175
      %v4833 = vunpack.c.l.b16 %v4176
      %v4834 = vunpack.c.h.b16 %v4176
      %v4835 = vunpack.c.l.b16 %v4177
      %v4836 = vunpack.c.h.b16 %v4177
      %v4837 = vunpack.c.l.b16 %v4178
      %v4838 = vunpack.c.h.b16 %v4178
      %v4839 = vunpack.c.l.b16 %v4179
      %v4840 = vunpack.c.h.b16 %v4179
      %v4841 = vunpack.c.l.b16 %v4180
      %v4842 = vunpack.c.h.b16 %v4180
      %v4843 = vunpack.c.l.b16 %v4181
      %v4844 = vunpack.c.h.b16 %v4181
      %v4845 = vunpack.c.l.b16 %v4182
      %v4846 = vunpack.c.h.b16 %v4182
      %v4847 = vunpack.c.l.b16 %v4183
      %v4848 = vunpack.c.h.b16 %v4183
      %v4849 = vunpack.c.l.b16 %v4184
      %v4850 = vunpack.c.h.b16 %v4184
      %v4851 = vunpack.c.l.b16 %v4185
      %v4852 = vunpack.c.h.b16 %v4185
      %v4853 = vunpack.c.l.b16 %v4186
      %v4854 = vunpack.c.h.b16 %v4186
      %v4855 = vunpack.c.l.b16 %v4187
      %v4856 = vunpack.c.h.b16 %v4187
      %v4857 = vunpack.c.l.b16 %v4188
      %v4858 = vunpack.c.h.b16 %v4188
      %v4859 = vunpack.c.l.b16 %v4189
      %v4860 = vunpack.c.h.b16 %v4189
      %v4861 = vunpack.c.l.b16 %v4190
      %v4862 = vunpack.c.h.b16 %v4190
      %v4863 = vunpack.c.l.b16 %v4191
      %v4864 = vunpack.c.h.b16 %v4191
      %v4865 = vunpack.c.l.b16 %v4192
      %v4866 = vunpack.c.h.b16 %v4192
      %v4867 = vunpack.c.l.b16 %v4193
      %v4868 = vunpack.c.h.b16 %v4193
      %v4869 = vunpack.c.l.b16 %v4194
      %v4870 = vunpack.c.h.b16 %v4194
      %v4871 = vunpack.c.l.b16 %v4195
      %v4872 = vunpack.c.h.b16 %v4195
      %v4873 = vunpack.c.l.b16 %v4196
      %v4874 = vunpack.c.h.b16 %v4196
      %v4875 = vunpack.c.l.b16 %v4197
      %v4876 = vunpack.c.h.b16 %v4197
      %v4877 = vunpack.c.l.b16 %v4198
      %v4878 = vunpack.c.h.b16 %v4198
      %v4879 = vunpack.c.l.b16 %v4199
      %v4880 = vunpack.c.h.b16 %v4199
      %v4881 = vunpack.c.l.b16 %v4200
      %v4882 = vunpack.c.h.b16 %v4200
      %v4883 = vunpack.c.l.b16 %v4201
      %v4884 = vunpack.c.h.b16 %v4201
      %v4885 = vunpack.c.l.b16 %v4202
      %v4886 = vunpack.c.h.b16 %v4202
      %v4887 = vunpack.c.l.b16 %v4203
      %v4888 = vunpack.c.h.b16 %v4203
      %v4889 = vunpack.c.l.b16 %v4204
      %v4890 = vunpack.c.h.b16 %v4204
      %v4891 = vunpack.c.l.b16 %v4205
      %v4892 = vunpack.c.h.b16 %v4205
      %v4893 = vunpack.c.l.b16 %v4206
      %v4894 = vunpack.c.h.b16 %v4206
      %v4895 = vunpack.c.l.b16 %v4207
      %v4896 = vunpack.c.h.b16 %v4207
      %v4897 = vunpack.c.l.b16 %v4208
      %v4898 = vunpack.c.h.b16 %v4208
      %v4899 = vunpack.c.l.b16 %v4209
      %v4900 = vunpack.c.h.b16 %v4209
      %v4901 = vunpack.c.l.b16 %v4210
      %v4902 = vunpack.c.h.b16 %v4210
      %v4903 = vunpack.c.l.b16 %v4211
      %v4904 = vunpack.c.h.b16 %v4211
      %v4905 = vunpack.c.l.b16 %v4212
      %v4906 = vunpack.c.h.b16 %v4212
      %v4907 = vunpack.c.l.b16 %v4213
      %v4908 = vunpack.c.h.b16 %v4213
      %v4909 = vunpack.c.l.b16 %v4214
      %v4910 = vunpack.c.h.b16 %v4214
      %v4911 = vunpack.c.l.b16 %v4215
      %v4912 = vunpack.c.h.b16 %v4215
      %v4913 = vunpack.c.l.b16 %v4216
      %v4914 = vunpack.c.h.b16 %v4216
      %v4915 = vunpack.c.l.b16 %v4217
      %v4916 = vunpack.c.h.b16 %v4217
      %v4917 = vunpack.c.l.b16 %v4218
      %v4918 = vunpack.c.h.b16 %v4218
      %v4919 = vunpack.c.l.b16 %v4219
      %v4920 = vunpack.c.h.b16 %v4219
      %v4921 = vunpack.c.l.b16 %v4220
      %v4922 = vunpack.c.h.b16 %v4220
      %v4923 = vunpack.c.l.b16 %v4221
      %v4924 = vunpack.c.h.b16 %v4221
      %v4925 = vunpack.c.l.b16 %v4222
      %v4926 = vunpack.c.h.b16 %v4222
      %v4927 = vunpack.c.l.b16 %v4223
      %v4928 = vunpack.c.h.b16 %v4223
      %v4929 = vunpack.c.l.b16 %v4224
      %v4930 = vunpack.c.h.b16 %v4224
      %v4931 = vunpack.c.l.b16 %v4225
      %v4932 = vunpack.c.h.b16 %v4225
      %v4933 = vunpack.c.l.b16 %v4226
      %v4934 = vunpack.c.h.b16 %v4226
      %v4935 = vunpack.c.l.b16 %v4227
      %v4936 = vunpack.c.h.b16 %v4227
      %v4937 = vunpack.c.l.b16 %v4228
      %v4938 = vunpack.c.h.b16 %v4228
      %v4939 = vunpack.c.l.b16 %v4229
      %v4940 = vunpack.c.h.b16 %v4229
      %v4941 = vpack.c.b16 %v4831, %v4829
      %v4942 = vpack.c.b16 %v4832, %v4830
      %v4943 = vpack.c.b16 %v4835, %v4833
      %v4944 = vpack.c.b16 %v4836, %v4834
      %v4945 = vpack.c.b16 %v4839, %v4837
      %v4946 = vpack.c.b16 %v4840, %v4838
      %v4947 = vpack.c.b16 %v4843, %v4841
      %v4948 = vpack.c.b16 %v4844, %v4842
      %v4949 = vpack.c.b16 %v4847, %v4845
      %v4950 = vpack.c.b16 %v4848, %v4846
      %v4951 = vpack.c.b16 %v4851, %v4849
      %v4952 = vpack.c.b16 %v4852, %v4850
      %v4953 = vpack.c.b16 %v4855, %v4853
      %v4954 = vpack.c.b16 %v4856, %v4854
      %v4955 = vpack.c.b16 %v4859, %v4857
      %v4956 = vpack.c.b16 %v4860, %v4858
      %v4957 = vpack.c.b16 %v4863, %v4861
      %v4958 = vpack.c.b16 %v4864, %v4862
      %v4959 = vpack.c.b16 %v4867, %v4865
      %v4960 = vpack.c.b16 %v4868, %v4866
      %v4961 = vpack.c.b16 %v4871, %v4869
      %v4962 = vpack.c.b16 %v4872, %v4870
      %v4963 = vpack.c.b16 %v4875, %v4873
      %v4964 = vpack.c.b16 %v4876, %v4874
      %v4965 = vpack.c.b16 %v4879, %v4877
      %v4966 = vpack.c.b16 %v4880, %v4878
      %v4967 = vpack.c.b16 %v4883, %v4881
      %v4968 = vpack.c.b16 %v4884, %v4882
      %v4969 = vpack.c.b16 %v4887, %v4885
      %v4970 = vpack.c.b16 %v4888, %v4886
      %v4971 = vpack.c.b16 %v4891, %v4889
      %v4972 = vpack.c.b16 %v4892, %v4890
      %v4973 = vpack.c.b16 %v4895, %v4893
      %v4974 = vpack.c.b16 %v4896, %v4894
      %v4975 = vpack.c.b16 %v4899, %v4897
      %v4976 = vpack.c.b16 %v4900, %v4898
      %v4977 = vpack.c.b16 %v4903, %v4901
      %v4978 = vpack.c.b16 %v4904, %v4902
      %v4979 = vpack.c.b16 %v4907, %v4905
      %v4980 = vpack.c.b16 %v4908, %v4906
      %v4981 = vpack.c.b16 %v4911, %v4909
      %v4982 = vpack.c.b16 %v4912, %v4910
      %v4983 = vpack.c.b16 %v4915, %v4913
      %v4984 = vpack.c.b16 %v4916, %v4914
      %v4985 = vpack.c.b16 %v4919, %v4917
      %v4986 = vpack.c.b16 %v4920, %v4918
      %v4987 = vpack.c.b16 %v4923, %v4921
      %v4988 = vpack.c.b16 %v4924, %v4922
      %v4989 = vpack.c.b16 %v4927, %v4925
      %v4990 = vpack.c.b16 %v4928, %v4926
      %v4991 = vpack.c.b16 %v4931, %v4929
      %v4992 = vpack.c.b16 %v4932, %v4930
      %v4993 = vpack.c.b16 %v4935, %v4933
      %v4994 = vpack.c.b16 %v4936, %v4934
      %v4995 = vpack.c.b16 %v4939, %v4937
      %v4996 = vpack.c.b16 %v4940, %v4938
      %5053 = vmatprep.subr.bf16.mxu0 %v4956
      %5054 = vmatpush1.bf16.msra.mxu0 %v4955
      %5055 = vmatprep.subr.bf16.mxu0 %v4954
      %5056 = vmatpush1.bf16.msra.mxu0 %v4953
      %5057 = vmatprep.subr.bf16.mxu0 %v4952
      %5058 = vmatpush1.bf16.msra.mxu0 %v4951
      %5059 = vmatprep.subr.bf16.mxu0 %v4950
      %5060 = vmatpush1.bf16.msra.mxu0 %v4949
      %5061 = vmatprep.subr.bf16.mxu0 %v4948
      %5062 = vmatpush1.bf16.msra.mxu0 %v4947
      %5063 = vmatprep.subr.bf16.mxu0 %v4946
      %5064 = vmatpush1.bf16.msra.mxu0 %v4945
      %5065 = vmatprep.subr.bf16.mxu0 %v4944
      %5066 = vmatpush1.bf16.msra.mxu0 %v4943
      %5067 = vmatprep.subr.bf16.mxu0 %v4942
      %5068 = vmatpush1.bf16.msra.mxu0 %v4941
      %5069 = vmatprep.subr.bf16.mxu0 %v4972
      %5070 = vmatpush2.bf16.msra.mxu0 %v4971
      %5071 = vmatprep.subr.bf16.mxu0 %v4970
      %5072 = vmatpush2.bf16.msra.mxu0 %v4969
      %5073 = vmatprep.subr.bf16.mxu0 %v4968
      %5074 = vmatpush2.bf16.msra.mxu0 %v4967
      %5075 = vmatprep.subr.bf16.mxu0 %v4966
      %5076 = vmatpush2.bf16.msra.mxu0 %v4965
      %5077 = vmatprep.subr.bf16.mxu0 %v4964
      %5078 = vmatpush2.bf16.msra.mxu0 %v4963
      %5079 = vmatprep.subr.bf16.mxu0 %v4962
      %5080 = vmatpush2.bf16.msra.mxu0 %v4961
      %5081 = vmatprep.subr.bf16.mxu0 %v4960
      %5082 = vmatpush2.bf16.msra.mxu0 %v4959
      %5083 = vmatprep.subr.bf16.mxu0 %v4958
      %5084 = vmatpush2.bf16.msra.mxu0 %v4957
      %5085 = vmatprep.mubr.bf16.mxu0 %v647
      %5086 = vmatmul.mubr.bf16.gmra.mxu0 %v646
      %v5087 = vpop.f32.mrf.mxu0
      %v5088 = vadd.f32 %v4705, %v5087
      %v5089 = vpop.f32.mrf.mxu0
      %v5090 = vadd.f32 %v4707, %v5089
      %v5091 = vpop.f32.mrf.mxu0
      %v5092 = vadd.f32 %v4709, %v5091
      %v5093 = vpop.f32.mrf.mxu0
      %v5094 = vadd.f32 %v4711, %v5093
      %5095 = vmatprep.mubr.bf16.mxu0 %v651
      %5096 = vmatmul.mubr.bf16.gmra.mxu0 %v650
      %v5097 = vpop.f32.mrf.mxu0
      %v5098 = vadd.f32 %v4715, %v5097
      %v5099 = vpop.f32.mrf.mxu0
      %v5100 = vadd.f32 %v4717, %v5099
      %v5101 = vpop.f32.mrf.mxu0
      %v5102 = vadd.f32 %v4719, %v5101
      %v5103 = vpop.f32.mrf.mxu0
      %v5104 = vadd.f32 %v4721, %v5103
      %5105 = vmatprep.mubr.bf16.mxu0 %v655
      %5106 = vmatmul.mubr.bf16.gmra.mxu0 %v654
      %v5107 = vpop.f32.mrf.mxu0
      %v5108 = vadd.f32 %v4725, %v5107
      %v5109 = vpop.f32.mrf.mxu0
      %v5110 = vadd.f32 %v4727, %v5109
      %v5111 = vpop.f32.mrf.mxu0
      %v5112 = vadd.f32 %v4729, %v5111
      %v5113 = vpop.f32.mrf.mxu0
      %v5114 = vadd.f32 %v4731, %v5113
      %5115 = vmatprep.mubr.bf16.mxu0 %v659
      %5116 = vmatmul.mubr.bf16.gmra.mxu0 %v658
      %v5117 = vpop.f32.mrf.mxu0
      %v5118 = vadd.f32 %v4735, %v5117
      %v5119 = vpop.f32.mrf.mxu0
      %v5120 = vadd.f32 %v4737, %v5119
      %v5121 = vpop.f32.mrf.mxu0
      %v5122 = vadd.f32 %v4739, %v5121
      %v5123 = vpop.f32.mrf.mxu0
      %v5124 = vadd.f32 %v4741, %v5123
      %5125 = vmatprep.mubr.bf16.mxu0 %v663
      %5126 = vmatmul.mubr.bf16.gmra.mxu0 %v662
      %v5127 = vpop.f32.mrf.mxu0
      %v5128 = vadd.f32 %v4745, %v5127
      %v5129 = vpop.f32.mrf.mxu0
      %v5130 = vadd.f32 %v4747, %v5129
      %v5131 = vpop.f32.mrf.mxu0
      %v5132 = vadd.f32 %v4749, %v5131
      %v5133 = vpop.f32.mrf.mxu0
      %v5134 = vadd.f32 %v4751, %v5133
      %5135 = vmatprep.mubr.bf16.mxu0 %v667
      %5136 = vmatmul.mubr.bf16.gmra.mxu0 %v666
      %v5137 = vpop.f32.mrf.mxu0
      %v5138 = vadd.f32 %v4755, %v5137
      %v5139 = vpop.f32.mrf.mxu0
      %v5140 = vadd.f32 %v4757, %v5139
      %v5141 = vpop.f32.mrf.mxu0
      %v5142 = vadd.f32 %v4759, %v5141
      %v5143 = vpop.f32.mrf.mxu0
      %v5144 = vadd.f32 %v4761, %v5143
      %5145 = vmatprep.mubr.bf16.mxu0 %v671
      %5146 = vmatmul.mubr.bf16.gmra.mxu0 %v670
      %v5147 = vpop.f32.mrf.mxu0
      %v5148 = vadd.f32 %v4765, %v5147
      %v5149 = vpop.f32.mrf.mxu0
      %v5150 = vadd.f32 %v4767, %v5149
      %v5151 = vpop.f32.mrf.mxu0
      %v5152 = vadd.f32 %v4769, %v5151
      %v5153 = vpop.f32.mrf.mxu0
      %v5154 = vadd.f32 %v4771, %v5153
      %5155 = vdwg.mxu0
      %5156 = vmatprep.subr.bf16.mxu0 %v4988
      %5157 = vmatpush1.bf16.msra.mxu0 %v4987
      %5158 = vmatprep.subr.bf16.mxu0 %v4986
      %5159 = vmatpush1.bf16.msra.mxu0 %v4985
      %5160 = vmatprep.subr.bf16.mxu0 %v4984
      %5161 = vmatpush1.bf16.msra.mxu0 %v4983
      %5162 = vmatprep.subr.bf16.mxu0 %v4982
      %5163 = vmatpush1.bf16.msra.mxu0 %v4981
      %5164 = vmatprep.subr.bf16.mxu0 %v4980
      %5165 = vmatpush1.bf16.msra.mxu0 %v4979
      %5166 = vmatprep.subr.bf16.mxu0 %v4978
      %5167 = vmatpush1.bf16.msra.mxu0 %v4977
      %5168 = vmatprep.subr.bf16.mxu0 %v4976
      %5169 = vmatpush1.bf16.msra.mxu0 %v4975
      %5170 = vmatprep.subr.bf16.mxu0 %v4974
      %5171 = vmatpush1.bf16.msra.mxu0 %v4973
      %5172 = vmatprep.subr.bf16.mxu0 0
      %5173 = vmatpush2.bf16.msra.mxu0 0
      %5174 = vmatprep.subr.bf16.mxu0 0
      %5175 = vmatpush2.bf16.msra.mxu0 0
      %5176 = vmatprep.subr.bf16.mxu0 0
      %5177 = vmatpush2.bf16.msra.mxu0 0
      %5178 = vmatprep.subr.bf16.mxu0 0
      %5179 = vmatpush2.bf16.msra.mxu0 0
      %5180 = vmatprep.subr.bf16.mxu0 %v4996
      %5181 = vmatpush2.bf16.msra.mxu0 %v4995
      %5182 = vmatprep.subr.bf16.mxu0 %v4994
      %5183 = vmatpush2.bf16.msra.mxu0 %v4993
      %5184 = vmatprep.subr.bf16.mxu0 %v4992
      %5185 = vmatpush2.bf16.msra.mxu0 %v4991
      %5186 = vmatprep.subr.bf16.mxu0 %v4990
      %5187 = vmatpush2.bf16.msra.mxu0 %v4989
      %5188 = vmatprep.mubr.bf16.mxu0 %v1725
      %5189 = vmatmul.mubr.bf16.gmra.mxu0 %v648
      %v5190 = vpop.f32.mrf.mxu0
      %v5191 = vadd.f32 %v5088, %v5190
      %v5192 = vpop.f32.mrf.mxu0
      %v5193 = vadd.f32 %v5090, %v5192
      %v5194 = vpop.f32.mrf.mxu0
      %v5195 = vadd.f32 %v5092, %v5194
      %v5196 = vpop.f32.mrf.mxu0
      %v5197 = vadd.f32 %v5094, %v5196
      %5198 = vmatprep.mubr.bf16.mxu0 %v1727
      %5199 = vmatmul.mubr.bf16.gmra.mxu0 %v652
      %v5200 = vpop.f32.mrf.mxu0
      %v5201 = vadd.f32 %v5098, %v5200
      %v5202 = vpop.f32.mrf.mxu0
      %v5203 = vadd.f32 %v5100, %v5202
      %v5204 = vpop.f32.mrf.mxu0
      %v5205 = vadd.f32 %v5102, %v5204
      %v5206 = vpop.f32.mrf.mxu0
      %v5207 = vadd.f32 %v5104, %v5206
      %5208 = vmatprep.mubr.bf16.mxu0 %v1729
      %5209 = vmatmul.mubr.bf16.gmra.mxu0 %v656
      %v5210 = vpop.f32.mrf.mxu0
      %v5211 = vadd.f32 %v5108, %v5210
      %v5212 = vpop.f32.mrf.mxu0
      %v5213 = vadd.f32 %v5110, %v5212
      %v5214 = vpop.f32.mrf.mxu0
      %v5215 = vadd.f32 %v5112, %v5214
      %v5216 = vpop.f32.mrf.mxu0
      %v5217 = vadd.f32 %v5114, %v5216
      %5218 = vmatprep.mubr.bf16.mxu0 %v1731
      %5219 = vmatmul.mubr.bf16.gmra.mxu0 %v660
      %v5220 = vpop.f32.mrf.mxu0
      %v5221 = vadd.f32 %v5118, %v5220
      %v5222 = vpop.f32.mrf.mxu0
      %v5223 = vadd.f32 %v5120, %v5222
      %v5224 = vpop.f32.mrf.mxu0
      %v5225 = vadd.f32 %v5122, %v5224
      %v5226 = vpop.f32.mrf.mxu0
      %v5227 = vadd.f32 %v5124, %v5226
      %5228 = vmatprep.mubr.bf16.mxu0 %v1733
      %5229 = vmatmul.mubr.bf16.gmra.mxu0 %v664
      %v5230 = vpop.f32.mrf.mxu0
      %v5231 = vadd.f32 %v5128, %v5230
      %v5232 = vpop.f32.mrf.mxu0
      %v5233 = vadd.f32 %v5130, %v5232
      %v5234 = vpop.f32.mrf.mxu0
      %v5235 = vadd.f32 %v5132, %v5234
      %v5236 = vpop.f32.mrf.mxu0
      %v5237 = vadd.f32 %v5134, %v5236
      %5238 = vmatprep.mubr.bf16.mxu0 %v1735
      %5239 = vmatmul.mubr.bf16.gmra.mxu0 %v668
      %v5240 = vpop.f32.mrf.mxu0
      %v5241 = vadd.f32 %v5138, %v5240
      %v5242 = vpop.f32.mrf.mxu0
      %v5243 = vadd.f32 %v5140, %v5242
      %v5244 = vpop.f32.mrf.mxu0
      %v5245 = vadd.f32 %v5142, %v5244
      %v5246 = vpop.f32.mrf.mxu0
      %v5247 = vadd.f32 %v5144, %v5246
      %5248 = vmatprep.mubr.bf16.mxu0 %v1737
      %5249 = vmatmul.mubr.bf16.gmra.mxu0 %v672
      %v5250 = vpop.f32.mrf.mxu0
      %v5251 = vadd.f32 %v5148, %v5250
      %v5252 = vpop.f32.mrf.mxu0
      %v5253 = vadd.f32 %v5150, %v5252
      %v5254 = vpop.f32.mrf.mxu0
      %v5255 = vadd.f32 %v5152, %v5254
      %v5256 = vpop.f32.mrf.mxu0
      %v5257 = vadd.f32 %v5154, %v5256
      %5258 = vdwg.mxu0
      %v5259 = vmax.f32 %v4145, %v5191
      %v5260 = vmax.f32 %v4146, %v5193
      %v5261 = vmax.f32 %v4147, %v5195
      %v5262 = vmax.f32 %v4148, %v5197
      %v5263 = vmax.f32 %v4149, %v5201
      %v5264 = vmax.f32 %v4150, %v5203
      %v5265 = vmax.f32 %v4151, %v5205
      %v5266 = vmax.f32 %v4152, %v5207
      %v5267 = vmax.f32 %v4153, %v5211
      %v5268 = vmax.f32 %v4154, %v5213
      %v5269 = vmax.f32 %v4155, %v5215
      %v5270 = vmax.f32 %v4156, %v5217
      %v5271 = vmax.f32 %v4157, %v5221
      %v5272 = vmax.f32 %v4158, %v5223
      %v5273 = vmax.f32 %v4159, %v5225
      %v5274 = vmax.f32 %v4160, %v5227
      %v5275 = vmax.f32 %v4161, %v5231
      %v5276 = vmax.f32 %v4162, %v5233
      %v5277 = vmax.f32 %v4163, %v5235
      %v5278 = vmax.f32 %v4164, %v5237
      %v5279 = vmax.f32 %v4165, %v5241
      %v5280 = vmax.f32 %v4166, %v5243
      %v5281 = vmax.f32 %v4167, %v5245
      %v5282 = vmax.f32 %v4168, %v5247
      %v5283 = vmax.f32 %v4169, %v5251
      %v5284 = vmax.f32 %v4170, %v5253
      %v5285 = vmax.f32 %v4171, %v5255
      %v5286 = vmax.f32 %v4172, %v5257
      %v5287 = vld [vmem:[%s2] sm:$0x3]
      %v5289 = vlaneseq
      %v5290 = vshrl.u32 %v5289, 7
      %v5291 = vsub.s32 0, %v5290
      %v5292 = vrot.slane %v5287, %v5291
      %v5293 = vlaneseq
      %v5294 = vshrl.u32 %v5293, 7
      %v5295 = vsub.s32 1, %v5294
      %v5296 = vrot.slane %v5287, %v5295
      %v5299 = vadd.f32 %v5259, %v5292
      %v5300 = vadd.f32 %v5260, %v5296
      %v5301 = vadd.f32 %v5261, %v5292
      %v5302 = vadd.f32 %v5262, %v5296
      %v5303 = vadd.f32 %v5263, %v5292
      %v5304 = vadd.f32 %v5264, %v5296
      %v5305 = vadd.f32 %v5265, %v5292
      %v5306 = vadd.f32 %v5266, %v5296
      %v5307 = vadd.f32 %v5267, %v5292
      %v5308 = vadd.f32 %v5268, %v5296
      %v5309 = vadd.f32 %v5269, %v5292
      %v5310 = vadd.f32 %v5270, %v5296
      %v5311 = vadd.f32 %v5271, %v5292
      %v5312 = vadd.f32 %v5272, %v5296
      %v5313 = vadd.f32 %v5273, %v5292
      %v5314 = vadd.f32 %v5274, %v5296
      %v5315 = vadd.f32 %v5275, %v5292
      %v5316 = vadd.f32 %v5276, %v5296
      %v5317 = vadd.f32 %v5277, %v5292
      %v5318 = vadd.f32 %v5278, %v5296
      %v5319 = vadd.f32 %v5279, %v5292
      %v5320 = vadd.f32 %v5280, %v5296
      %v5321 = vadd.f32 %v5281, %v5292
      %v5322 = vadd.f32 %v5282, %v5296
      %v5323 = vadd.f32 %v5283, %v5292
      %v5324 = vadd.f32 %v5284, %v5296
      %v5325 = vadd.f32 %v5285, %v5292
      %v5326 = vadd.f32 %v5286, %v5296
      %v5327 = vmax.f32 %v5299, 0.0
      %v5328 = vmax.f32 %v5300, 0.0
      %v5329 = vmax.f32 %v5301, 0.0
      %v5330 = vmax.f32 %v5302, 0.0
      %v5331 = vmax.f32 %v5303, 0.0
      %v5332 = vmax.f32 %v5304, 0.0
      %v5333 = vmax.f32 %v5305, 0.0
      %v5334 = vmax.f32 %v5306, 0.0
      %v5335 = vmax.f32 %v5307, 0.0
      %v5336 = vmax.f32 %v5308, 0.0
      %v5337 = vmax.f32 %v5309, 0.0
      %v5338 = vmax.f32 %v5310, 0.0
      %v5339 = vmax.f32 %v5311, 0.0
      %v5340 = vmax.f32 %v5312, 0.0
      %v5341 = vmax.f32 %v5313, 0.0
      %v5342 = vmax.f32 %v5314, 0.0
      %v5343 = vmax.f32 %v5315, 0.0
      %v5344 = vmax.f32 %v5316, 0.0
      %v5345 = vmax.f32 %v5317, 0.0
      %v5346 = vmax.f32 %v5318, 0.0
      %v5347 = vmax.f32 %v5319, 0.0
      %v5348 = vmax.f32 %v5320, 0.0
      %v5349 = vmax.f32 %v5321, 0.0
      %v5350 = vmax.f32 %v5322, 0.0
      %v5351 = vmax.f32 %v5323, 0.0
      %v5352 = vmax.f32 %v5324, 0.0
      %v5353 = vmax.f32 %v5325, 0.0
      %v5354 = vmax.f32 %v5326, 0.0
      %v5355 = vpack.c.bf16 %v5329, %v5327
      %v5356 = vpack.c.bf16 %v5330, %v5328
      %v5357 = vpack.c.bf16 %v5333, %v5331
      %v5358 = vpack.c.bf16 %v5334, %v5332
      %v5359 = vpack.c.bf16 %v5337, %v5335
      %v5360 = vpack.c.bf16 %v5338, %v5336
      %v5361 = vpack.c.bf16 %v5341, %v5339
      %v5362 = vpack.c.bf16 %v5342, %v5340
      %v5363 = vpack.c.bf16 %v5345, %v5343
      %v5364 = vpack.c.bf16 %v5346, %v5344
      %v5365 = vpack.c.bf16 %v5349, %v5347
      %v5366 = vpack.c.bf16 %v5350, %v5348
      %v5367 = vpack.c.bf16 %v5353, %v5351
      %v5368 = vpack.c.bf16 %v5354, %v5352
      %v5369 = vld [vmem:[%s3] sm:$0xf]
      %v5370 = vld [vmem:[%s3 + $0x4] sm:$0xf]
      %v5371 = vld [vmem:[%s3 + $0x8] sm:$0xf]
      %v5372 = vld [vmem:[%s3 + $0xc] sm:$0xf]
      %v5373 = vld [vmem:[%s3 + $0x10] sm:$0xf]
      %v5374 = vld [vmem:[%s3 + $0x14] sm:$0xf]
      %v5375 = vld [vmem:[%s3 + $0x18] sm:$0xf]
      %v5376 = vld [vmem:[%s3 + $0x1c] sm:$0xf]
      %v5377 = vld [vmem:[%s3 + $0x20] sm:$0xf]
      %v5378 = vld [vmem:[%s3 + $0x24] sm:$0xf]
      %v5379 = vld [vmem:[%s3 + $0x28] sm:$0xf]
      %v5380 = vld [vmem:[%s3 + $0x2c] sm:$0xf]
      %v5381 = vld [vmem:[%s3 + $0x30] sm:$0xf]
      %v5382 = vld [vmem:[%s3 + $0x34] sm:$0xf]
      %v5383 = vld [vmem:[%s3 + $0x38] sm:$0xf]
      %v5384 = vld [vmem:[%s3 + $0x3c] sm:$0xf]
      %v5385 = vld [vmem:[%s3 + $0x40] sm:$0xf]
      %v5386 = vld [vmem:[%s3 + $0x44] sm:$0xf]
      %s5387 = scalar_lea.vmem %s3, 72
      %v5388 = vld [vmem:[%s5387] sm:$0xf]
      %v5389 = vld [vmem:[%s5387 + $0x4] sm:$0xf]
      %v5390 = vld [vmem:[%s5387 + $0x8] sm:$0xf]
      %v5391 = vld [vmem:[%s5387 + $0xc] sm:$0xf]
      %v5392 = vld [vmem:[%s5387 + $0x10] sm:$0xf]
      %v5393 = vld [vmem:[%s5387 + $0x14] sm:$0xf]
      %v5394 = vld [vmem:[%s5387 + $0x18] sm:$0xf]
      %v5395 = vld [vmem:[%s5387 + $0x1c] sm:$0xf]
      %v5396 = vld [vmem:[%s5387 + $0x20] sm:$0xf]
      %v5397 = vld [vmem:[%s5387 + $0x24] sm:$0xf]
      %v5398 = vld [vmem:[%s5387 + $0x28] sm:$0xf]
      %v5399 = vld [vmem:[%s5387 + $0x2c] sm:$0xf]
      %v5400 = vld [vmem:[%s5387 + $0x30] sm:$0xf]
      %v5401 = vld [vmem:[%s5387 + $0x34] sm:$0xf]
      %v5402 = vld [vmem:[%s5387 + $0x38] sm:$0xf]
      %v5403 = vld [vmem:[%s5387 + $0x3c] sm:$0xf]
      %v5404 = vld [vmem:[%s5387 + $0x40] sm:$0xf]
      %v5405 = vld [vmem:[%s5387 + $0x44] sm:$0xf]
      %v5407 = vshrl.u32 %v5355, 16
      %v5409 = vshll.u32 %v5355, 16
      %v5411 = vrot.slane %v5409, 1
      %v5412 = vor.u32 %v5407, %v5411
      %v5414 = vshll.u32 %v5357, 16
      %v5416 = vrot.slane %v5414, 1
      %v5417 = vsel %vm674, %v5412, %v5416
      %v5419 = vshrl.u32 %v5356, 16
      %v5421 = vshll.u32 %v5356, 16
      %v5423 = vrot.slane %v5421, 1
      %v5424 = vor.u32 %v5419, %v5423
      %v5426 = vshll.u32 %v5358, 16
      %v5428 = vrot.slane %v5426, 1
      %v5429 = vsel %vm674, %v5424, %v5428
      %v5430 = vshrl.u32 %v5357, 16
      %v5432 = vor.u32 %v5430, %v5416
      %v5434 = vshll.u32 %v5359, 16
      %v5436 = vrot.slane %v5434, 1
      %v5437 = vsel %vm674, %v5432, %v5436
      %v5438 = vshrl.u32 %v5358, 16
      %v5440 = vor.u32 %v5438, %v5428
      %v5442 = vshll.u32 %v5360, 16
      %v5444 = vrot.slane %v5442, 1
      %v5445 = vsel %vm674, %v5440, %v5444
      %v5446 = vshrl.u32 %v5359, 16
      %v5448 = vor.u32 %v5446, %v5436
      %v5450 = vshll.u32 %v5361, 16
      %v5452 = vrot.slane %v5450, 1
      %v5453 = vsel %vm674, %v5448, %v5452
      %v5454 = vshrl.u32 %v5360, 16
      %v5456 = vor.u32 %v5454, %v5444
      %v5458 = vshll.u32 %v5362, 16
      %v5460 = vrot.slane %v5458, 1
      %v5461 = vsel %vm674, %v5456, %v5460
      %v5462 = vshrl.u32 %v5361, 16
      %v5464 = vor.u32 %v5462, %v5452
      %v5466 = vshll.u32 %v5363, 16
      %v5468 = vrot.slane %v5466, 1
      %v5469 = vsel %vm674, %v5464, %v5468
      %v5470 = vshrl.u32 %v5362, 16
      %v5472 = vor.u32 %v5470, %v5460
      %v5474 = vshll.u32 %v5364, 16
      %v5476 = vrot.slane %v5474, 1
      %v5477 = vsel %vm674, %v5472, %v5476
      %v5478 = vshrl.u32 %v5363, 16
      %v5480 = vor.u32 %v5478, %v5468
      %v5482 = vshll.u32 %v5365, 16
      %v5484 = vrot.slane %v5482, 1
      %v5485 = vsel %vm674, %v5480, %v5484
      %v5486 = vshrl.u32 %v5364, 16
      %v5488 = vor.u32 %v5486, %v5476
      %v5490 = vshll.u32 %v5366, 16
      %v5492 = vrot.slane %v5490, 1
      %v5493 = vsel %vm674, %v5488, %v5492
      %v5494 = vshrl.u32 %v5365, 16
      %v5496 = vor.u32 %v5494, %v5484
      %v5498 = vshll.u32 %v5367, 16
      %v5500 = vrot.slane %v5498, 1
      %v5501 = vsel %vm674, %v5496, %v5500
      %v5502 = vshrl.u32 %v5366, 16
      %v5504 = vor.u32 %v5502, %v5492
      %v5506 = vshll.u32 %v5368, 16
      %v5508 = vrot.slane %v5506, 1
      %v5509 = vsel %vm674, %v5504, %v5508
      %v5510 = vshrl.u32 %v5367, 16
      %v5512 = vor.u32 %v5510, %v5500
      %v5513 = vshrl.u32 %v5368, 16
      %v5515 = vor.u32 %v5513, %v5508
      %v5541 = vunpack.c.l.b16 %v5388
      %v5542 = vunpack.c.l.b16 %v5389
      %v5543 = vunpack.c.l.b16 %v5390
      %v5544 = vunpack.c.l.b16 %v5391
      %v5545 = vunpack.c.l.b16 %v5392
      %v5546 = vunpack.c.l.b16 %v5393
      %v5547 = vunpack.c.l.b16 %v5394
      %v5548 = vunpack.c.l.b16 %v5395
      %v5549 = vunpack.c.l.b16 %v5396
      %v5550 = vunpack.c.l.b16 %v5397
      %v5551 = vunpack.c.l.b16 %v5398
      %v5552 = vunpack.c.l.b16 %v5399
      %v5553 = vunpack.c.l.b16 %v5400
      %v5554 = vunpack.c.l.b16 %v5401
      %v5555 = vunpack.c.l.b16 %v5402
      %v5556 = vunpack.c.l.b16 %v5403
      %v5557 = vunpack.c.l.b16 %v5404
      %v5558 = vunpack.c.l.b16 %v5405
      %v5559 = vpack.c.b16 %v5542, %v5541
      %v5560 = vpack.c.b16 %v5544, %v5543
      %v5561 = vpack.c.b16 %v5546, %v5545
      %v5562 = vpack.c.b16 %v5548, %v5547
      %v5563 = vpack.c.b16 %v5550, %v5549
      %v5564 = vpack.c.b16 %v5552, %v5551
      %v5565 = vpack.c.b16 %v5554, %v5553
      %v5566 = vpack.c.b16 %v5556, %v5555
      %v5567 = vpack.c.b16 %v5558, %v5557
      %vm5577 = vcmask 130048
      %v5579 = vsel %vm5577, %v5429, 0
      %v5582 = vsel %vm5577, %v5445, 0
      %v5585 = vsel %vm5577, %v5461, 0
      %v5588 = vsel %vm5577, %v5477, 0
      %v5591 = vsel %vm5577, %v5493, 0
      %v5594 = vsel %vm5577, %v5509, 0
      %v5597 = vsel %vm5577, %v5515, 0
      %5599 = vmatprep.subr.bf16.mxu0 0
      %5600 = vmatpush1.bf16.msra.mxu0 %v5566
      %5601 = vmatprep.subr.bf16.mxu0 0
      %5602 = vmatpush1.bf16.msra.mxu0 %v5565
      %5603 = vmatprep.subr.bf16.mxu0 0
      %5604 = vmatpush1.bf16.msra.mxu0 %v5564
      %5605 = vmatprep.subr.bf16.mxu0 0
      %5606 = vmatpush1.bf16.msra.mxu0 %v5563
      %5607 = vmatprep.subr.bf16.mxu0 0
      %5608 = vmatpush1.bf16.msra.mxu0 %v5562
      %5609 = vmatprep.subr.bf16.mxu0 0
      %5610 = vmatpush1.bf16.msra.mxu0 %v5561
      %5611 = vmatprep.subr.bf16.mxu0 0
      %5612 = vmatpush1.bf16.msra.mxu0 %v5560
      %5613 = vmatprep.subr.bf16.mxu0 0
      %5614 = vmatpush1.bf16.msra.mxu0 %v5559
      %5615 = vmatprep.subr.bf16.mxu0 0
      %5616 = vmatpush2.bf16.msra.mxu0 0
      %5617 = vmatprep.subr.bf16.mxu0 0
      %5618 = vmatpush2.bf16.msra.mxu0 0
      %5619 = vmatprep.subr.bf16.mxu0 0
      %5620 = vmatpush2.bf16.msra.mxu0 0
      %5621 = vmatprep.subr.bf16.mxu0 0
      %5622 = vmatpush2.bf16.msra.mxu0 0
      %5623 = vmatprep.subr.bf16.mxu0 0
      %5624 = vmatpush2.bf16.msra.mxu0 0
      %5625 = vmatprep.subr.bf16.mxu0 0
      %5626 = vmatpush2.bf16.msra.mxu0 0
      %5627 = vmatprep.subr.bf16.mxu0 0
      %5628 = vmatpush2.bf16.msra.mxu0 0
      %5629 = vmatprep.subr.bf16.mxu0 0
      %5630 = vmatpush2.bf16.msra.mxu0 %v5567
      %5631 = vmatprep.mubr.bf16.mxu0 %v5579
      %5632 = vmatmul.mubr.bf16.gmra.mxu0 %v5417
      %v5633 = vpop.f32.mrf.mxu0
      %v5634 = vadd.f32 0.0, %v5633
      %v5635 = vpop.f32.mrf.mxu0
      %v5636 = vpop.f32.mrf.mxu0
      %v5637 = vadd.f32 0.0, %v5636
      %v5638 = vpop.f32.mrf.mxu0
      %5639 = vmatprep.mubr.bf16.mxu0 %v5582
      %5640 = vmatmul.mubr.bf16.gmra.mxu0 %v5437
      %v5641 = vpop.f32.mrf.mxu0
      %v5642 = vadd.f32 0.0, %v5641
      %v5643 = vpop.f32.mrf.mxu0
      %v5644 = vpop.f32.mrf.mxu0
      %v5645 = vadd.f32 0.0, %v5644
      %v5646 = vpop.f32.mrf.mxu0
      %5647 = vmatprep.mubr.bf16.mxu0 %v5585
      %5648 = vmatmul.mubr.bf16.gmra.mxu0 %v5453
      %v5649 = vpop.f32.mrf.mxu0
      %v5650 = vadd.f32 0.0, %v5649
      %v5651 = vpop.f32.mrf.mxu0
      %v5652 = vpop.f32.mrf.mxu0
      %v5653 = vadd.f32 0.0, %v5652
      %v5654 = vpop.f32.mrf.mxu0
      %5655 = vmatprep.mubr.bf16.mxu0 %v5588
      %5656 = vmatmul.mubr.bf16.gmra.mxu0 %v5469
      %v5657 = vpop.f32.mrf.mxu0
      %v5658 = vadd.f32 0.0, %v5657
      %v5659 = vpop.f32.mrf.mxu0
      %v5660 = vpop.f32.mrf.mxu0
      %v5661 = vadd.f32 0.0, %v5660
      %v5662 = vpop.f32.mrf.mxu0
      %5663 = vmatprep.mubr.bf16.mxu0 %v5591
      %5664 = vmatmul.mubr.bf16.gmra.mxu0 %v5485
      %v5665 = vpop.f32.mrf.mxu0
      %v5666 = vadd.f32 0.0, %v5665
      %v5667 = vpop.f32.mrf.mxu0
      %v5668 = vpop.f32.mrf.mxu0
      %v5669 = vadd.f32 0.0, %v5668
      %v5670 = vpop.f32.mrf.mxu0
      %5671 = vmatprep.mubr.bf16.mxu0 %v5594
      %5672 = vmatmul.mubr.bf16.gmra.mxu0 %v5501
      %v5673 = vpop.f32.mrf.mxu0
      %v5674 = vadd.f32 0.0, %v5673
      %v5675 = vpop.f32.mrf.mxu0
      %v5676 = vpop.f32.mrf.mxu0
      %v5677 = vadd.f32 0.0, %v5676
      %v5678 = vpop.f32.mrf.mxu0
      %5679 = vmatprep.mubr.bf16.mxu0 %v5597
      %5680 = vmatmul.mubr.bf16.gmra.mxu0 %v5512
      %v5681 = vpop.f32.mrf.mxu0
      %v5682 = vadd.f32 0.0, %v5681
      %v5683 = vpop.f32.mrf.mxu0
      %v5684 = vpop.f32.mrf.mxu0
      %v5685 = vadd.f32 0.0, %v5684
      %v5686 = vpop.f32.mrf.mxu0
      %5687 = vdwg.mxu0
      %v5706 = vunpack.c.l.b16 %v5369
      %v5707 = vunpack.c.l.b16 %v5370
      %v5708 = vunpack.c.l.b16 %v5371
      %v5709 = vunpack.c.l.b16 %v5372
      %v5710 = vunpack.c.l.b16 %v5373
      %v5711 = vunpack.c.l.b16 %v5374
      %v5712 = vunpack.c.l.b16 %v5375
      %v5713 = vunpack.c.l.b16 %v5376
      %v5714 = vunpack.c.l.b16 %v5377
      %v5715 = vunpack.c.l.b16 %v5378
      %v5716 = vunpack.c.l.b16 %v5379
      %v5717 = vunpack.c.l.b16 %v5380
      %v5718 = vunpack.c.l.b16 %v5381
      %v5719 = vunpack.c.l.b16 %v5382
      %v5720 = vunpack.c.l.b16 %v5383
      %v5721 = vunpack.c.l.b16 %v5384
      %v5722 = vunpack.c.l.b16 %v5385
      %v5723 = vunpack.c.l.b16 %v5386
      %v5724 = vpack.c.b16 %v5707, %v5706
      %v5725 = vpack.c.b16 %v5709, %v5708
      %v5726 = vpack.c.b16 %v5711, %v5710
      %v5727 = vpack.c.b16 %v5713, %v5712
      %v5728 = vpack.c.b16 %v5715, %v5714
      %v5729 = vpack.c.b16 %v5717, %v5716
      %v5730 = vpack.c.b16 %v5719, %v5718
      %v5731 = vpack.c.b16 %v5721, %v5720
      %v5732 = vpack.c.b16 %v5723, %v5722
      %v5742 = vsel %vm5577, %v5356, 0
      %v5744 = vsel %vm5577, %v5358, 0
      %v5746 = vsel %vm5577, %v5360, 0
      %v5748 = vsel %vm5577, %v5362, 0
      %v5750 = vsel %vm5577, %v5364, 0
      %v5752 = vsel %vm5577, %v5366, 0
      %v5754 = vsel %vm5577, %v5368, 0
      %5756 = vmatprep.subr.bf16.mxu0 0
      %5757 = vmatpush1.bf16.msra.mxu0 %v5731
      %5758 = vmatprep.subr.bf16.mxu0 0
      %5759 = vmatpush1.bf16.msra.mxu0 %v5730
      %5760 = vmatprep.subr.bf16.mxu0 0
      %5761 = vmatpush1.bf16.msra.mxu0 %v5729
      %5762 = vmatprep.subr.bf16.mxu0 0
      %5763 = vmatpush1.bf16.msra.mxu0 %v5728
      %5764 = vmatprep.subr.bf16.mxu0 0
      %5765 = vmatpush1.bf16.msra.mxu0 %v5727
      %5766 = vmatprep.subr.bf16.mxu0 0
      %5767 = vmatpush1.bf16.msra.mxu0 %v5726
      %5768 = vmatprep.subr.bf16.mxu0 0
      %5769 = vmatpush1.bf16.msra.mxu0 %v5725
      %5770 = vmatprep.subr.bf16.mxu0 0
      %5771 = vmatpush1.bf16.msra.mxu0 %v5724
      %5772 = vmatprep.subr.bf16.mxu0 0
      %5773 = vmatpush2.bf16.msra.mxu0 0
      %5774 = vmatprep.subr.bf16.mxu0 0
      %5775 = vmatpush2.bf16.msra.mxu0 0
      %5776 = vmatprep.subr.bf16.mxu0 0
      %5777 = vmatpush2.bf16.msra.mxu0 0
      %5778 = vmatprep.subr.bf16.mxu0 0
      %5779 = vmatpush2.bf16.msra.mxu0 0
      %5780 = vmatprep.subr.bf16.mxu0 0
      %5781 = vmatpush2.bf16.msra.mxu0 0
      %5782 = vmatprep.subr.bf16.mxu0 0
      %5783 = vmatpush2.bf16.msra.mxu0 0
      %5784 = vmatprep.subr.bf16.mxu0 0
      %5785 = vmatpush2.bf16.msra.mxu0 0
      %5786 = vmatprep.subr.bf16.mxu0 0
      %5787 = vmatpush2.bf16.msra.mxu0 %v5732
      %5788 = vmatprep.mubr.bf16.mxu0 %v5742
      %5789 = vmatmul.mubr.bf16.gmra.mxu0 %v5355
      %v5790 = vpop.f32.mrf.mxu0
      %v5791 = vadd.f32 %v5634, %v5790
      %v5792 = vpop.f32.mrf.mxu0
      %v5793 = vpop.f32.mrf.mxu0
      %v5794 = vadd.f32 %v5637, %v5793
      %v5795 = vpop.f32.mrf.mxu0
      %5796 = vmatprep.mubr.bf16.mxu0 %v5744
      %5797 = vmatmul.mubr.bf16.gmra.mxu0 %v5357
      %v5798 = vpop.f32.mrf.mxu0
      %v5799 = vadd.f32 %v5642, %v5798
      %v5800 = vpop.f32.mrf.mxu0
      %v5801 = vpop.f32.mrf.mxu0
      %v5802 = vadd.f32 %v5645, %v5801
      %v5803 = vpop.f32.mrf.mxu0
      %5804 = vmatprep.mubr.bf16.mxu0 %v5746
      %5805 = vmatmul.mubr.bf16.gmra.mxu0 %v5359
      %v5806 = vpop.f32.mrf.mxu0
      %v5807 = vadd.f32 %v5650, %v5806
      %v5808 = vpop.f32.mrf.mxu0
      %v5809 = vpop.f32.mrf.mxu0
      %v5810 = vadd.f32 %v5653, %v5809
      %v5811 = vpop.f32.mrf.mxu0
      %5812 = vmatprep.mubr.bf16.mxu0 %v5748
      %5813 = vmatmul.mubr.bf16.gmra.mxu0 %v5361
      %v5814 = vpop.f32.mrf.mxu0
      %v5815 = vadd.f32 %v5658, %v5814
      %v5816 = vpop.f32.mrf.mxu0
      %v5817 = vpop.f32.mrf.mxu0
      %v5818 = vadd.f32 %v5661, %v5817
      %v5819 = vpop.f32.mrf.mxu0
      %5820 = vmatprep.mubr.bf16.mxu0 %v5750
      %5821 = vmatmul.mubr.bf16.gmra.mxu0 %v5363
      %v5822 = vpop.f32.mrf.mxu0
      %v5823 = vadd.f32 %v5666, %v5822
      %v5824 = vpop.f32.mrf.mxu0
      %v5825 = vpop.f32.mrf.mxu0
      %v5826 = vadd.f32 %v5669, %v5825
      %v5827 = vpop.f32.mrf.mxu0
      %5828 = vmatprep.mubr.bf16.mxu0 %v5752
      %5829 = vmatmul.mubr.bf16.gmra.mxu0 %v5365
      %v5830 = vpop.f32.mrf.mxu0
      %v5831 = vadd.f32 %v5674, %v5830
      %v5832 = vpop.f32.mrf.mxu0
      %v5833 = vpop.f32.mrf.mxu0
      %v5834 = vadd.f32 %v5677, %v5833
      %v5835 = vpop.f32.mrf.mxu0
      %5836 = vmatprep.mubr.bf16.mxu0 %v5754
      %5837 = vmatmul.mubr.bf16.gmra.mxu0 %v5367
      %v5838 = vpop.f32.mrf.mxu0
      %v5839 = vadd.f32 %v5682, %v5838
      %v5840 = vpop.f32.mrf.mxu0
      %v5841 = vpop.f32.mrf.mxu0
      %v5842 = vadd.f32 %v5685, %v5841
      %v5843 = vpop.f32.mrf.mxu0
      %5844 = vdwg.mxu0
      %s5845 = scalar_lea.vmem %s3, 144
      %v5846 = vld [vmem:[%s5845] sm:$0xf]
      %v5847 = vld [vmem:[%s5845 + $0x4] sm:$0xf]
      %v5848 = vld [vmem:[%s5845 + $0x8] sm:$0xf]
      %v5849 = vld [vmem:[%s5845 + $0xc] sm:$0xf]
      %v5850 = vld [vmem:[%s5845 + $0x10] sm:$0xf]
      %v5851 = vld [vmem:[%s5845 + $0x14] sm:$0xf]
      %v5852 = vld [vmem:[%s5845 + $0x18] sm:$0xf]
      %v5853 = vld [vmem:[%s5845 + $0x1c] sm:$0xf]
      %v5854 = vld [vmem:[%s5845 + $0x20] sm:$0xf]
      %v5855 = vld [vmem:[%s5845 + $0x24] sm:$0xf]
      %v5856 = vld [vmem:[%s5845 + $0x28] sm:$0xf]
      %v5857 = vld [vmem:[%s5845 + $0x2c] sm:$0xf]
      %v5858 = vld [vmem:[%s5845 + $0x30] sm:$0xf]
      %v5859 = vld [vmem:[%s5845 + $0x34] sm:$0xf]
      %v5860 = vld [vmem:[%s5845 + $0x38] sm:$0xf]
      %v5861 = vld [vmem:[%s5845 + $0x3c] sm:$0xf]
      %v5862 = vld [vmem:[%s5845 + $0x40] sm:$0xf]
      %v5863 = vld [vmem:[%s5845 + $0x44] sm:$0xf]
      %vm5878 = vcmask 1046528
      %v5879 = vrot.slane %v5355, 1
      %v5880 = vrot.slane %v5357, 1
      %v5881 = vsel %vm5878, %v5879, %v5880
      %v5882 = vrot.slane %v5356, 1
      %v5883 = vrot.slane %v5358, 1
      %v5884 = vsel %vm5878, %v5882, %v5883
      %v5885 = vrot.slane %v5359, 1
      %v5886 = vsel %vm5878, %v5880, %v5885
      %v5887 = vrot.slane %v5360, 1
      %v5888 = vsel %vm5878, %v5883, %v5887
      %v5889 = vrot.slane %v5361, 1
      %v5890 = vsel %vm5878, %v5885, %v5889
      %v5891 = vrot.slane %v5362, 1
      %v5892 = vsel %vm5878, %v5887, %v5891
      %v5893 = vrot.slane %v5363, 1
      %v5894 = vsel %vm5878, %v5889, %v5893
      %v5895 = vrot.slane %v5364, 1
      %v5896 = vsel %vm5878, %v5891, %v5895
      %v5897 = vrot.slane %v5365, 1
      %v5898 = vsel %vm5878, %v5893, %v5897
      %v5899 = vrot.slane %v5366, 1
      %v5900 = vsel %vm5878, %v5895, %v5899
      %v5901 = vrot.slane %v5367, 1
      %v5902 = vsel %vm5878, %v5897, %v5901
      %v5903 = vrot.slane %v5368, 1
      %v5904 = vsel %vm5878, %v5899, %v5903
      %v5930 = vunpack.c.l.b16 %v5846
      %v5931 = vunpack.c.l.b16 %v5847
      %v5932 = vunpack.c.l.b16 %v5848
      %v5933 = vunpack.c.l.b16 %v5849
      %v5934 = vunpack.c.l.b16 %v5850
      %v5935 = vunpack.c.l.b16 %v5851
      %v5936 = vunpack.c.l.b16 %v5852
      %v5937 = vunpack.c.l.b16 %v5853
      %v5938 = vunpack.c.l.b16 %v5854
      %v5939 = vunpack.c.l.b16 %v5855
      %v5940 = vunpack.c.l.b16 %v5856
      %v5941 = vunpack.c.l.b16 %v5857
      %v5942 = vunpack.c.l.b16 %v5858
      %v5943 = vunpack.c.l.b16 %v5859
      %v5944 = vunpack.c.l.b16 %v5860
      %v5945 = vunpack.c.l.b16 %v5861
      %v5946 = vunpack.c.l.b16 %v5862
      %v5947 = vunpack.c.l.b16 %v5863
      %v5948 = vpack.c.b16 %v5931, %v5930
      %v5949 = vpack.c.b16 %v5933, %v5932
      %v5950 = vpack.c.b16 %v5935, %v5934
      %v5951 = vpack.c.b16 %v5937, %v5936
      %v5952 = vpack.c.b16 %v5939, %v5938
      %v5953 = vpack.c.b16 %v5941, %v5940
      %v5954 = vpack.c.b16 %v5943, %v5942
      %v5955 = vpack.c.b16 %v5945, %v5944
      %v5956 = vpack.c.b16 %v5947, %v5946
      %v5967 = vsel %vm5577, %v5884, 0
      %v5970 = vsel %vm5577, %v5888, 0
      %v5973 = vsel %vm5577, %v5892, 0
      %v5976 = vsel %vm5577, %v5896, 0
      %v5979 = vsel %vm5577, %v5900, 0
      %v5982 = vsel %vm5577, %v5904, 0
      %v5985 = vsel %vm5577, %v5903, 0
      %5987 = vmatprep.subr.bf16.mxu0 0
      %5988 = vmatpush1.bf16.msra.mxu0 %v5955
      %5989 = vmatprep.subr.bf16.mxu0 0
      %5990 = vmatpush1.bf16.msra.mxu0 %v5954
      %5991 = vmatprep.subr.bf16.mxu0 0
      %5992 = vmatpush1.bf16.msra.mxu0 %v5953
      %5993 = vmatprep.subr.bf16.mxu0 0
      %5994 = vmatpush1.bf16.msra.mxu0 %v5952
      %5995 = vmatprep.subr.bf16.mxu0 0
      %5996 = vmatpush1.bf16.msra.mxu0 %v5951
      %5997 = vmatprep.subr.bf16.mxu0 0
      %5998 = vmatpush1.bf16.msra.mxu0 %v5950
      %5999 = vmatprep.subr.bf16.mxu0 0
      %6000 = vmatpush1.bf16.msra.mxu0 %v5949
      %6001 = vmatprep.subr.bf16.mxu0 0
      %6002 = vmatpush1.bf16.msra.mxu0 %v5948
      %6003 = vmatprep.subr.bf16.mxu0 0
      %6004 = vmatpush2.bf16.msra.mxu0 0
      %6005 = vmatprep.subr.bf16.mxu0 0
      %6006 = vmatpush2.bf16.msra.mxu0 0
      %6007 = vmatprep.subr.bf16.mxu0 0
      %6008 = vmatpush2.bf16.msra.mxu0 0
      %6009 = vmatprep.subr.bf16.mxu0 0
      %6010 = vmatpush2.bf16.msra.mxu0 0
      %6011 = vmatprep.subr.bf16.mxu0 0
      %6012 = vmatpush2.bf16.msra.mxu0 0
      %6013 = vmatprep.subr.bf16.mxu0 0
      %6014 = vmatpush2.bf16.msra.mxu0 0
      %6015 = vmatprep.subr.bf16.mxu0 0
      %6016 = vmatpush2.bf16.msra.mxu0 0
      %6017 = vmatprep.subr.bf16.mxu0 0
      %6018 = vmatpush2.bf16.msra.mxu0 %v5956
      %6019 = vmatprep.mubr.bf16.mxu0 %v5967
      %6020 = vmatmul.mubr.bf16.gmra.mxu0 %v5881
      %v6021 = vpop.f32.mrf.mxu0
      %v6022 = vadd.f32 0.0, %v6021
      %v6023 = vpop.f32.mrf.mxu0
      %v6024 = vpop.f32.mrf.mxu0
      %v6025 = vadd.f32 0.0, %v6024
      %v6026 = vpop.f32.mrf.mxu0
      %6027 = vmatprep.mubr.bf16.mxu0 %v5970
      %6028 = vmatmul.mubr.bf16.gmra.mxu0 %v5886
      %v6029 = vpop.f32.mrf.mxu0
      %v6030 = vadd.f32 0.0, %v6029
      %v6031 = vpop.f32.mrf.mxu0
      %v6032 = vpop.f32.mrf.mxu0
      %v6033 = vadd.f32 0.0, %v6032
      %v6034 = vpop.f32.mrf.mxu0
      %6035 = vmatprep.mubr.bf16.mxu0 %v5973
      %6036 = vmatmul.mubr.bf16.gmra.mxu0 %v5890
      %v6037 = vpop.f32.mrf.mxu0
      %v6038 = vadd.f32 0.0, %v6037
      %v6039 = vpop.f32.mrf.mxu0
      %v6040 = vpop.f32.mrf.mxu0
      %v6041 = vadd.f32 0.0, %v6040
      %v6042 = vpop.f32.mrf.mxu0
      %6043 = vmatprep.mubr.bf16.mxu0 %v5976
      %6044 = vmatmul.mubr.bf16.gmra.mxu0 %v5894
      %v6045 = vpop.f32.mrf.mxu0
      %v6046 = vadd.f32 0.0, %v6045
      %v6047 = vpop.f32.mrf.mxu0
      %v6048 = vpop.f32.mrf.mxu0
      %v6049 = vadd.f32 0.0, %v6048
      %v6050 = vpop.f32.mrf.mxu0
      %6051 = vmatprep.mubr.bf16.mxu0 %v5979
      %6052 = vmatmul.mubr.bf16.gmra.mxu0 %v5898
      %v6053 = vpop.f32.mrf.mxu0
      %v6054 = vadd.f32 0.0, %v6053
      %v6055 = vpop.f32.mrf.mxu0
      %v6056 = vpop.f32.mrf.mxu0
      %v6057 = vadd.f32 0.0, %v6056
      %v6058 = vpop.f32.mrf.mxu0
      %6059 = vmatprep.mubr.bf16.mxu0 %v5982
      %6060 = vmatmul.mubr.bf16.gmra.mxu0 %v5902
      %v6061 = vpop.f32.mrf.mxu0
      %v6062 = vadd.f32 0.0, %v6061
      %v6063 = vpop.f32.mrf.mxu0
      %v6064 = vpop.f32.mrf.mxu0
      %v6065 = vadd.f32 0.0, %v6064
      %v6066 = vpop.f32.mrf.mxu0
      %6067 = vmatprep.mubr.bf16.mxu0 %v5985
      %6068 = vmatmul.mubr.bf16.gmra.mxu0 %v5901
      %v6069 = vpop.f32.mrf.mxu0
      %v6070 = vadd.f32 0.0, %v6069
      %v6071 = vpop.f32.mrf.mxu0
      %v6072 = vpop.f32.mrf.mxu0
      %v6073 = vadd.f32 0.0, %v6072
      %v6074 = vpop.f32.mrf.mxu0
      %6075 = vdwg.mxu0
      %v6076 = vadd.f32 %v5791, %v6022
      %v6077 = vadd.f32 %v5794, %v6025
      %v6078 = vadd.f32 %v5799, %v6030
      %v6079 = vadd.f32 %v5802, %v6033
      %v6080 = vadd.f32 %v5807, %v6038
      %v6081 = vadd.f32 %v5810, %v6041
      %v6082 = vadd.f32 %v5815, %v6046
      %v6083 = vadd.f32 %v5818, %v6049
      %v6084 = vadd.f32 %v5823, %v6054
      %v6085 = vadd.f32 %v5826, %v6057
      %v6086 = vadd.f32 %v5831, %v6062
      %v6087 = vadd.f32 %v5834, %v6065
      %v6088 = vadd.f32 %v5839, %v6070
      %v6089 = vadd.f32 %v5842, %v6073
      %s6090 = scalar_lea.vmem %s3, 216
      %v6091 = vld [vmem:[%s6090] sm:$0xf]
      %v6092 = vld [vmem:[%s6090 + $0x4] sm:$0xf]
      %v6093 = vld [vmem:[%s6090 + $0x8] sm:$0xf]
      %v6094 = vld [vmem:[%s6090 + $0xc] sm:$0xf]
      %v6095 = vld [vmem:[%s6090 + $0x10] sm:$0xf]
      %v6096 = vld [vmem:[%s6090 + $0x14] sm:$0xf]
      %v6097 = vld [vmem:[%s6090 + $0x18] sm:$0xf]
      %v6098 = vld [vmem:[%s6090 + $0x1c] sm:$0xf]
      %v6099 = vld [vmem:[%s6090 + $0x20] sm:$0xf]
      %v6100 = vld [vmem:[%s6090 + $0x24] sm:$0xf]
      %v6101 = vld [vmem:[%s6090 + $0x28] sm:$0xf]
      %v6102 = vld [vmem:[%s6090 + $0x2c] sm:$0xf]
      %v6103 = vld [vmem:[%s6090 + $0x30] sm:$0xf]
      %v6104 = vld [vmem:[%s6090 + $0x34] sm:$0xf]
      %v6105 = vld [vmem:[%s6090 + $0x38] sm:$0xf]
      %v6106 = vld [vmem:[%s6090 + $0x3c] sm:$0xf]
      %v6107 = vld [vmem:[%s6090 + $0x40] sm:$0xf]
      %v6108 = vld [vmem:[%s6090 + $0x44] sm:$0xf]
      %s6109 = scalar_lea.vmem %s3, 288
      %v6110 = vld [vmem:[%s6109] sm:$0xf]
      %v6111 = vld [vmem:[%s6109 + $0x4] sm:$0xf]
      %v6112 = vld [vmem:[%s6109 + $0x8] sm:$0xf]
      %v6113 = vld [vmem:[%s6109 + $0xc] sm:$0xf]
      %v6114 = vld [vmem:[%s6109 + $0x10] sm:$0xf]
      %v6115 = vld [vmem:[%s6109 + $0x14] sm:$0xf]
      %v6116 = vld [vmem:[%s6109 + $0x18] sm:$0xf]
      %v6117 = vld [vmem:[%s6109 + $0x1c] sm:$0xf]
      %v6118 = vld [vmem:[%s6109 + $0x20] sm:$0xf]
      %v6119 = vld [vmem:[%s6109 + $0x24] sm:$0xf]
      %v6120 = vld [vmem:[%s6109 + $0x28] sm:$0xf]
      %v6121 = vld [vmem:[%s6109 + $0x2c] sm:$0xf]
      %v6122 = vld [vmem:[%s6109 + $0x30] sm:$0xf]
      %v6123 = vld [vmem:[%s6109 + $0x34] sm:$0xf]
      %v6124 = vld [vmem:[%s6109 + $0x38] sm:$0xf]
      %v6125 = vld [vmem:[%s6109 + $0x3c] sm:$0xf]
      %v6126 = vld [vmem:[%s6109 + $0x40] sm:$0xf]
      %v6127 = vld [vmem:[%s6109 + $0x44] sm:$0xf]
      %v6146 = vunpack.c.l.b16 %v6110
      %v6147 = vunpack.c.l.b16 %v6111
      %v6148 = vunpack.c.l.b16 %v6112
      %v6149 = vunpack.c.l.b16 %v6113
      %v6150 = vunpack.c.l.b16 %v6114
      %v6151 = vunpack.c.l.b16 %v6115
      %v6152 = vunpack.c.l.b16 %v6116
      %v6153 = vunpack.c.l.b16 %v6117
      %v6154 = vunpack.c.l.b16 %v6118
      %v6155 = vunpack.c.l.b16 %v6119
      %v6156 = vunpack.c.l.b16 %v6120
      %v6157 = vunpack.c.l.b16 %v6121
      %v6158 = vunpack.c.l.b16 %v6122
      %v6159 = vunpack.c.l.b16 %v6123
      %v6160 = vunpack.c.l.b16 %v6124
      %v6161 = vunpack.c.l.b16 %v6125
      %v6162 = vunpack.c.l.b16 %v6126
      %v6163 = vunpack.c.l.b16 %v6127
      %v6164 = vpack.c.b16 %v6147, %v6146
      %v6165 = vpack.c.b16 %v6149, %v6148
      %v6166 = vpack.c.b16 %v6151, %v6150
      %v6167 = vpack.c.b16 %v6153, %v6152
      %v6168 = vpack.c.b16 %v6155, %v6154
      %v6169 = vpack.c.b16 %v6157, %v6156
      %v6170 = vpack.c.b16 %v6159, %v6158
      %v6171 = vpack.c.b16 %v6161, %v6160
      %v6172 = vpack.c.b16 %v6163, %v6162
      %6182 = vmatprep.subr.bf16.mxu0 0
      %6183 = vmatpush1.bf16.msra.mxu0 %v6171
      %6184 = vmatprep.subr.bf16.mxu0 0
      %6185 = vmatpush1.bf16.msra.mxu0 %v6170
      %6186 = vmatprep.subr.bf16.mxu0 0
      %6187 = vmatpush1.bf16.msra.mxu0 %v6169
      %6188 = vmatprep.subr.bf16.mxu0 0
      %6189 = vmatpush1.bf16.msra.mxu0 %v6168
      %6190 = vmatprep.subr.bf16.mxu0 0
      %6191 = vmatpush1.bf16.msra.mxu0 %v6167
      %6192 = vmatprep.subr.bf16.mxu0 0
      %6193 = vmatpush1.bf16.msra.mxu0 %v6166
      %6194 = vmatprep.subr.bf16.mxu0 0
      %6195 = vmatpush1.bf16.msra.mxu0 %v6165
      %6196 = vmatprep.subr.bf16.mxu0 0
      %6197 = vmatpush1.bf16.msra.mxu0 %v6164
      %6198 = vmatprep.subr.bf16.mxu0 0
      %6199 = vmatpush2.bf16.msra.mxu0 0
      %6200 = vmatprep.subr.bf16.mxu0 0
      %6201 = vmatpush2.bf16.msra.mxu0 0
      %6202 = vmatprep.subr.bf16.mxu0 0
      %6203 = vmatpush2.bf16.msra.mxu0 0
      %6204 = vmatprep.subr.bf16.mxu0 0
      %6205 = vmatpush2.bf16.msra.mxu0 0
      %6206 = vmatprep.subr.bf16.mxu0 0
      %6207 = vmatpush2.bf16.msra.mxu0 0
      %6208 = vmatprep.subr.bf16.mxu0 0
      %6209 = vmatpush2.bf16.msra.mxu0 0
      %6210 = vmatprep.subr.bf16.mxu0 0
      %6211 = vmatpush2.bf16.msra.mxu0 0
      %6212 = vmatprep.subr.bf16.mxu0 0
      %6213 = vmatpush2.bf16.msra.mxu0 %v6172
      %6214 = vmatprep.mubr.bf16.mxu0 %v5579
      %6215 = vmatmul.mubr.bf16.gmra.mxu0 %v5417
      %v6216 = vpop.f32.mrf.mxu0
      %v6217 = vadd.f32 0.0, %v6216
      %v6218 = vpop.f32.mrf.mxu0
      %v6219 = vpop.f32.mrf.mxu0
      %v6220 = vadd.f32 0.0, %v6219
      %v6221 = vpop.f32.mrf.mxu0
      %6222 = vmatprep.mubr.bf16.mxu0 %v5582
      %6223 = vmatmul.mubr.bf16.gmra.mxu0 %v5437
      %v6224 = vpop.f32.mrf.mxu0
      %v6225 = vadd.f32 0.0, %v6224
      %v6226 = vpop.f32.mrf.mxu0
      %v6227 = vpop.f32.mrf.mxu0
      %v6228 = vadd.f32 0.0, %v6227
      %v6229 = vpop.f32.mrf.mxu0
      %6230 = vmatprep.mubr.bf16.mxu0 %v5585
      %6231 = vmatmul.mubr.bf16.gmra.mxu0 %v5453
      %v6232 = vpop.f32.mrf.mxu0
      %v6233 = vadd.f32 0.0, %v6232
      %v6234 = vpop.f32.mrf.mxu0
      %v6235 = vpop.f32.mrf.mxu0
      %v6236 = vadd.f32 0.0, %v6235
      %v6237 = vpop.f32.mrf.mxu0
      %6238 = vmatprep.mubr.bf16.mxu0 %v5588
      %6239 = vmatmul.mubr.bf16.gmra.mxu0 %v5469
      %v6240 = vpop.f32.mrf.mxu0
      %v6241 = vadd.f32 0.0, %v6240
      %v6242 = vpop.f32.mrf.mxu0
      %v6243 = vpop.f32.mrf.mxu0
      %v6244 = vadd.f32 0.0, %v6243
      %v6245 = vpop.f32.mrf.mxu0
      %6246 = vmatprep.mubr.bf16.mxu0 %v5591
      %6247 = vmatmul.mubr.bf16.gmra.mxu0 %v5485
      %v6248 = vpop.f32.mrf.mxu0
      %v6249 = vadd.f32 0.0, %v6248
      %v6250 = vpop.f32.mrf.mxu0
      %v6251 = vpop.f32.mrf.mxu0
      %v6252 = vadd.f32 0.0, %v6251
      %v6253 = vpop.f32.mrf.mxu0
      %6254 = vmatprep.mubr.bf16.mxu0 %v5594
      %6255 = vmatmul.mubr.bf16.gmra.mxu0 %v5501
      %v6256 = vpop.f32.mrf.mxu0
      %v6257 = vadd.f32 0.0, %v6256
      %v6258 = vpop.f32.mrf.mxu0
      %v6259 = vpop.f32.mrf.mxu0
      %v6260 = vadd.f32 0.0, %v6259
      %v6261 = vpop.f32.mrf.mxu0
      %6262 = vmatprep.mubr.bf16.mxu0 %v5597
      %6263 = vmatmul.mubr.bf16.gmra.mxu0 %v5512
      %v6264 = vpop.f32.mrf.mxu0
      %v6265 = vadd.f32 0.0, %v6264
      %v6266 = vpop.f32.mrf.mxu0
      %v6267 = vpop.f32.mrf.mxu0
      %v6268 = vadd.f32 0.0, %v6267
      %v6269 = vpop.f32.mrf.mxu0
      %6270 = vdwg.mxu0
      %v6289 = vunpack.c.l.b16 %v6091
      %v6290 = vunpack.c.l.b16 %v6092
      %v6291 = vunpack.c.l.b16 %v6093
      %v6292 = vunpack.c.l.b16 %v6094
      %v6293 = vunpack.c.l.b16 %v6095
      %v6294 = vunpack.c.l.b16 %v6096
      %v6295 = vunpack.c.l.b16 %v6097
      %v6296 = vunpack.c.l.b16 %v6098
      %v6297 = vunpack.c.l.b16 %v6099
      %v6298 = vunpack.c.l.b16 %v6100
      %v6299 = vunpack.c.l.b16 %v6101
      %v6300 = vunpack.c.l.b16 %v6102
      %v6301 = vunpack.c.l.b16 %v6103
      %v6302 = vunpack.c.l.b16 %v6104
      %v6303 = vunpack.c.l.b16 %v6105
      %v6304 = vunpack.c.l.b16 %v6106
      %v6305 = vunpack.c.l.b16 %v6107
      %v6306 = vunpack.c.l.b16 %v6108
      %v6307 = vpack.c.b16 %v6290, %v6289
      %v6308 = vpack.c.b16 %v6292, %v6291
      %v6309 = vpack.c.b16 %v6294, %v6293
      %v6310 = vpack.c.b16 %v6296, %v6295
      %v6311 = vpack.c.b16 %v6298, %v6297
      %v6312 = vpack.c.b16 %v6300, %v6299
      %v6313 = vpack.c.b16 %v6302, %v6301
      %v6314 = vpack.c.b16 %v6304, %v6303
      %v6315 = vpack.c.b16 %v6306, %v6305
      %6325 = vmatprep.subr.bf16.mxu0 0
      %6326 = vmatpush1.bf16.msra.mxu0 %v6314
      %6327 = vmatprep.subr.bf16.mxu0 0
      %6328 = vmatpush1.bf16.msra.mxu0 %v6313
      %6329 = vmatprep.subr.bf16.mxu0 0
      %6330 = vmatpush1.bf16.msra.mxu0 %v6312
      %6331 = vmatprep.subr.bf16.mxu0 0
      %6332 = vmatpush1.bf16.msra.mxu0 %v6311
      %6333 = vmatprep.subr.bf16.mxu0 0
      %6334 = vmatpush1.bf16.msra.mxu0 %v6310
      %6335 = vmatprep.subr.bf16.mxu0 0
      %6336 = vmatpush1.bf16.msra.mxu0 %v6309
      %6337 = vmatprep.subr.bf16.mxu0 0
      %6338 = vmatpush1.bf16.msra.mxu0 %v6308
      %6339 = vmatprep.subr.bf16.mxu0 0
      %6340 = vmatpush1.bf16.msra.mxu0 %v6307
      %6341 = vmatprep.subr.bf16.mxu0 0
      %6342 = vmatpush2.bf16.msra.mxu0 0
      %6343 = vmatprep.subr.bf16.mxu0 0
      %6344 = vmatpush2.bf16.msra.mxu0 0
      %6345 = vmatprep.subr.bf16.mxu0 0
      %6346 = vmatpush2.bf16.msra.mxu0 0
      %6347 = vmatprep.subr.bf16.mxu0 0
      %6348 = vmatpush2.bf16.msra.mxu0 0
      %6349 = vmatprep.subr.bf16.mxu0 0
      %6350 = vmatpush2.bf16.msra.mxu0 0
      %6351 = vmatprep.subr.bf16.mxu0 0
      %6352 = vmatpush2.bf16.msra.mxu0 0
      %6353 = vmatprep.subr.bf16.mxu0 0
      %6354 = vmatpush2.bf16.msra.mxu0 0
      %6355 = vmatprep.subr.bf16.mxu0 0
      %6356 = vmatpush2.bf16.msra.mxu0 %v6315
      %6357 = vmatprep.mubr.bf16.mxu0 %v5742
      %6358 = vmatmul.mubr.bf16.gmra.mxu0 %v5355
      %v6359 = vpop.f32.mrf.mxu0
      %v6360 = vadd.f32 %v6217, %v6359
      %v6361 = vpop.f32.mrf.mxu0
      %v6362 = vpop.f32.mrf.mxu0
      %v6363 = vadd.f32 %v6220, %v6362
      %v6364 = vpop.f32.mrf.mxu0
      %6365 = vmatprep.mubr.bf16.mxu0 %v5744
      %6366 = vmatmul.mubr.bf16.gmra.mxu0 %v5357
      %v6367 = vpop.f32.mrf.mxu0
      %v6368 = vadd.f32 %v6225, %v6367
      %v6369 = vpop.f32.mrf.mxu0
      %v6370 = vpop.f32.mrf.mxu0
      %v6371 = vadd.f32 %v6228, %v6370
      %v6372 = vpop.f32.mrf.mxu0
      %6373 = vmatprep.mubr.bf16.mxu0 %v5746
      %6374 = vmatmul.mubr.bf16.gmra.mxu0 %v5359
      %v6375 = vpop.f32.mrf.mxu0
      %v6376 = vadd.f32 %v6233, %v6375
      %v6377 = vpop.f32.mrf.mxu0
      %v6378 = vpop.f32.mrf.mxu0
      %v6379 = vadd.f32 %v6236, %v6378
      %v6380 = vpop.f32.mrf.mxu0
      %6381 = vmatprep.mubr.bf16.mxu0 %v5748
      %6382 = vmatmul.mubr.bf16.gmra.mxu0 %v5361
      %v6383 = vpop.f32.mrf.mxu0
      %v6384 = vadd.f32 %v6241, %v6383
      %v6385 = vpop.f32.mrf.mxu0
      %v6386 = vpop.f32.mrf.mxu0
      %v6387 = vadd.f32 %v6244, %v6386
      %v6388 = vpop.f32.mrf.mxu0
      %6389 = vmatprep.mubr.bf16.mxu0 %v5750
      %6390 = vmatmul.mubr.bf16.gmra.mxu0 %v5363
      %v6391 = vpop.f32.mrf.mxu0
      %v6392 = vadd.f32 %v6249, %v6391
      %v6393 = vpop.f32.mrf.mxu0
      %v6394 = vpop.f32.mrf.mxu0
      %v6395 = vadd.f32 %v6252, %v6394
      %v6396 = vpop.f32.mrf.mxu0
      %6397 = vmatprep.mubr.bf16.mxu0 %v5752
      %6398 = vmatmul.mubr.bf16.gmra.mxu0 %v5365
      %v6399 = vpop.f32.mrf.mxu0
      %v6400 = vadd.f32 %v6257, %v6399
      %v6401 = vpop.f32.mrf.mxu0
      %v6402 = vpop.f32.mrf.mxu0
      %v6403 = vadd.f32 %v6260, %v6402
      %v6404 = vpop.f32.mrf.mxu0
      %6405 = vmatprep.mubr.bf16.mxu0 %v5754
      %6406 = vmatmul.mubr.bf16.gmra.mxu0 %v5367
      %v6407 = vpop.f32.mrf.mxu0
      %v6408 = vadd.f32 %v6265, %v6407
      %v6409 = vpop.f32.mrf.mxu0
      %v6410 = vpop.f32.mrf.mxu0
      %v6411 = vadd.f32 %v6268, %v6410
      %v6412 = vpop.f32.mrf.mxu0
      %6413 = vdwg.mxu0
      %s6414 = scalar_lea.vmem %s3, 360
      %v6415 = vld [vmem:[%s6414] sm:$0xf]
      %v6416 = vld [vmem:[%s6414 + $0x4] sm:$0xf]
      %v6417 = vld [vmem:[%s6414 + $0x8] sm:$0xf]
      %v6418 = vld [vmem:[%s6414 + $0xc] sm:$0xf]
      %v6419 = vld [vmem:[%s6414 + $0x10] sm:$0xf]
      %v6420 = vld [vmem:[%s6414 + $0x14] sm:$0xf]
      %v6421 = vld [vmem:[%s6414 + $0x18] sm:$0xf]
      %v6422 = vld [vmem:[%s6414 + $0x1c] sm:$0xf]
      %v6423 = vld [vmem:[%s6414 + $0x20] sm:$0xf]
      %v6424 = vld [vmem:[%s6414 + $0x24] sm:$0xf]
      %v6425 = vld [vmem:[%s6414 + $0x28] sm:$0xf]
      %v6426 = vld [vmem:[%s6414 + $0x2c] sm:$0xf]
      %v6427 = vld [vmem:[%s6414 + $0x30] sm:$0xf]
      %v6428 = vld [vmem:[%s6414 + $0x34] sm:$0xf]
      %v6429 = vld [vmem:[%s6414 + $0x38] sm:$0xf]
      %v6430 = vld [vmem:[%s6414 + $0x3c] sm:$0xf]
      %v6431 = vld [vmem:[%s6414 + $0x40] sm:$0xf]
      %v6432 = vld [vmem:[%s6414 + $0x44] sm:$0xf]
      %v6451 = vunpack.c.l.b16 %v6415
      %v6452 = vunpack.c.l.b16 %v6416
      %v6453 = vunpack.c.l.b16 %v6417
      %v6454 = vunpack.c.l.b16 %v6418
      %v6455 = vunpack.c.l.b16 %v6419
      %v6456 = vunpack.c.l.b16 %v6420
      %v6457 = vunpack.c.l.b16 %v6421
      %v6458 = vunpack.c.l.b16 %v6422
      %v6459 = vunpack.c.l.b16 %v6423
      %v6460 = vunpack.c.l.b16 %v6424
      %v6461 = vunpack.c.l.b16 %v6425
      %v6462 = vunpack.c.l.b16 %v6426
      %v6463 = vunpack.c.l.b16 %v6427
      %v6464 = vunpack.c.l.b16 %v6428
      %v6465 = vunpack.c.l.b16 %v6429
      %v6466 = vunpack.c.l.b16 %v6430
      %v6467 = vunpack.c.l.b16 %v6431
      %v6468 = vunpack.c.l.b16 %v6432
      %v6469 = vpack.c.b16 %v6452, %v6451
      %v6470 = vpack.c.b16 %v6454, %v6453
      %v6471 = vpack.c.b16 %v6456, %v6455
      %v6472 = vpack.c.b16 %v6458, %v6457
      %v6473 = vpack.c.b16 %v6460, %v6459
      %v6474 = vpack.c.b16 %v6462, %v6461
      %v6475 = vpack.c.b16 %v6464, %v6463
      %v6476 = vpack.c.b16 %v6466, %v6465
      %v6477 = vpack.c.b16 %v6468, %v6467
      %6487 = vmatprep.subr.bf16.mxu0 0
      %6488 = vmatpush1.bf16.msra.mxu0 %v6476
      %6489 = vmatprep.subr.bf16.mxu0 0
      %6490 = vmatpush1.bf16.msra.mxu0 %v6475
      %6491 = vmatprep.subr.bf16.mxu0 0
      %6492 = vmatpush1.bf16.msra.mxu0 %v6474
      %6493 = vmatprep.subr.bf16.mxu0 0
      %6494 = vmatpush1.bf16.msra.mxu0 %v6473
      %6495 = vmatprep.subr.bf16.mxu0 0
      %6496 = vmatpush1.bf16.msra.mxu0 %v6472
      %6497 = vmatprep.subr.bf16.mxu0 0
      %6498 = vmatpush1.bf16.msra.mxu0 %v6471
      %6499 = vmatprep.subr.bf16.mxu0 0
      %6500 = vmatpush1.bf16.msra.mxu0 %v6470
      %6501 = vmatprep.subr.bf16.mxu0 0
      %6502 = vmatpush1.bf16.msra.mxu0 %v6469
      %6503 = vmatprep.subr.bf16.mxu0 0
      %6504 = vmatpush2.bf16.msra.mxu0 0
      %6505 = vmatprep.subr.bf16.mxu0 0
      %6506 = vmatpush2.bf16.msra.mxu0 0
      %6507 = vmatprep.subr.bf16.mxu0 0
      %6508 = vmatpush2.bf16.msra.mxu0 0
      %6509 = vmatprep.subr.bf16.mxu0 0
      %6510 = vmatpush2.bf16.msra.mxu0 0
      %6511 = vmatprep.subr.bf16.mxu0 0
      %6512 = vmatpush2.bf16.msra.mxu0 0
      %6513 = vmatprep.subr.bf16.mxu0 0
      %6514 = vmatpush2.bf16.msra.mxu0 0
      %6515 = vmatprep.subr.bf16.mxu0 0
      %6516 = vmatpush2.bf16.msra.mxu0 0
      %6517 = vmatprep.subr.bf16.mxu0 0
      %6518 = vmatpush2.bf16.msra.mxu0 %v6477
      %6519 = vmatprep.mubr.bf16.mxu0 %v5967
      %6520 = vmatmul.mubr.bf16.gmra.mxu0 %v5881
      %v6521 = vpop.f32.mrf.mxu0
      %v6522 = vadd.f32 0.0, %v6521
      %v6523 = vpop.f32.mrf.mxu0
      %v6524 = vpop.f32.mrf.mxu0
      %v6525 = vadd.f32 0.0, %v6524
      %v6526 = vpop.f32.mrf.mxu0
      %6527 = vmatprep.mubr.bf16.mxu0 %v5970
      %6528 = vmatmul.mubr.bf16.gmra.mxu0 %v5886
      %v6529 = vpop.f32.mrf.mxu0
      %v6530 = vadd.f32 0.0, %v6529
      %v6531 = vpop.f32.mrf.mxu0
      %v6532 = vpop.f32.mrf.mxu0
      %v6533 = vadd.f32 0.0, %v6532
      %v6534 = vpop.f32.mrf.mxu0
      %6535 = vmatprep.mubr.bf16.mxu0 %v5973
      %6536 = vmatmul.mubr.bf16.gmra.mxu0 %v5890
      %v6537 = vpop.f32.mrf.mxu0
      %v6538 = vadd.f32 0.0, %v6537
      %v6539 = vpop.f32.mrf.mxu0
      %v6540 = vpop.f32.mrf.mxu0
      %v6541 = vadd.f32 0.0, %v6540
      %v6542 = vpop.f32.mrf.mxu0
      %6543 = vmatprep.mubr.bf16.mxu0 %v5976
      %6544 = vmatmul.mubr.bf16.gmra.mxu0 %v5894
      %v6545 = vpop.f32.mrf.mxu0
      %v6546 = vadd.f32 0.0, %v6545
      %v6547 = vpop.f32.mrf.mxu0
      %v6548 = vpop.f32.mrf.mxu0
      %v6549 = vadd.f32 0.0, %v6548
      %v6550 = vpop.f32.mrf.mxu0
      %6551 = vmatprep.mubr.bf16.mxu0 %v5979
      %6552 = vmatmul.mubr.bf16.gmra.mxu0 %v5898
      %v6553 = vpop.f32.mrf.mxu0
      %v6554 = vadd.f32 0.0, %v6553
      %v6555 = vpop.f32.mrf.mxu0
      %v6556 = vpop.f32.mrf.mxu0
      %v6557 = vadd.f32 0.0, %v6556
      %v6558 = vpop.f32.mrf.mxu0
      %6559 = vmatprep.mubr.bf16.mxu0 %v5982
      %6560 = vmatmul.mubr.bf16.gmra.mxu0 %v5902
      %v6561 = vpop.f32.mrf.mxu0
      %v6562 = vadd.f32 0.0, %v6561
      %v6563 = vpop.f32.mrf.mxu0
      %v6564 = vpop.f32.mrf.mxu0
      %v6565 = vadd.f32 0.0, %v6564
      %v6566 = vpop.f32.mrf.mxu0
      %6567 = vmatprep.mubr.bf16.mxu0 %v5985
      %6568 = vmatmul.mubr.bf16.gmra.mxu0 %v5901
      %v6569 = vpop.f32.mrf.mxu0
      %v6570 = vadd.f32 0.0, %v6569
      %v6571 = vpop.f32.mrf.mxu0
      %v6572 = vpop.f32.mrf.mxu0
      %v6573 = vadd.f32 0.0, %v6572
      %v6574 = vpop.f32.mrf.mxu0
      %6575 = vdwg.mxu0
      %v6576 = vadd.f32 %v6360, %v6522
      %v6577 = vadd.f32 %v6363, %v6525
      %v6578 = vadd.f32 %v6368, %v6530
      %v6579 = vadd.f32 %v6371, %v6533
      %v6580 = vadd.f32 %v6376, %v6538
      %v6581 = vadd.f32 %v6379, %v6541
      %v6582 = vadd.f32 %v6384, %v6546
      %v6583 = vadd.f32 %v6387, %v6549
      %v6584 = vadd.f32 %v6392, %v6554
      %v6585 = vadd.f32 %v6395, %v6557
      %v6586 = vadd.f32 %v6400, %v6562
      %v6587 = vadd.f32 %v6403, %v6565
      %v6588 = vadd.f32 %v6408, %v6570
      %v6589 = vadd.f32 %v6411, %v6573
      %v6590 = vmax.f32 %v6076, %v6576
      %v6591 = vmax.f32 %v6077, %v6577
      %v6592 = vmax.f32 %v6078, %v6578
      %v6593 = vmax.f32 %v6079, %v6579
      %v6594 = vmax.f32 %v6080, %v6580
      %v6595 = vmax.f32 %v6081, %v6581
      %v6596 = vmax.f32 %v6082, %v6582
      %v6597 = vmax.f32 %v6083, %v6583
      %v6598 = vmax.f32 %v6084, %v6584
      %v6599 = vmax.f32 %v6085, %v6585
      %v6600 = vmax.f32 %v6086, %v6586
      %v6601 = vmax.f32 %v6087, %v6587
      %v6602 = vmax.f32 %v6088, %v6588
      %v6603 = vmax.f32 %v6089, %v6589
      %s6604 = scalar_lea.vmem %s3, 432
      %v6605 = vld [vmem:[%s6604] sm:$0xf]
      %v6606 = vld [vmem:[%s6604 + $0x4] sm:$0xf]
      %v6607 = vld [vmem:[%s6604 + $0x8] sm:$0xf]
      %v6608 = vld [vmem:[%s6604 + $0xc] sm:$0xf]
      %v6609 = vld [vmem:[%s6604 + $0x10] sm:$0xf]
      %v6610 = vld [vmem:[%s6604 + $0x14] sm:$0xf]
      %v6611 = vld [vmem:[%s6604 + $0x18] sm:$0xf]
      %v6612 = vld [vmem:[%s6604 + $0x1c] sm:$0xf]
      %v6613 = vld [vmem:[%s6604 + $0x20] sm:$0xf]
      %v6614 = vld [vmem:[%s6604 + $0x24] sm:$0xf]
      %v6615 = vld [vmem:[%s6604 + $0x28] sm:$0xf]
      %v6616 = vld [vmem:[%s6604 + $0x2c] sm:$0xf]
      %v6617 = vld [vmem:[%s6604 + $0x30] sm:$0xf]
      %v6618 = vld [vmem:[%s6604 + $0x34] sm:$0xf]
      %v6619 = vld [vmem:[%s6604 + $0x38] sm:$0xf]
      %v6620 = vld [vmem:[%s6604 + $0x3c] sm:$0xf]
      %v6621 = vld [vmem:[%s6604 + $0x40] sm:$0xf]
      %v6622 = vld [vmem:[%s6604 + $0x44] sm:$0xf]
      %s6623 = scalar_lea.vmem %s3, 504
      %v6624 = vld [vmem:[%s6623] sm:$0xf]
      %v6625 = vld [vmem:[%s6623 + $0x4] sm:$0xf]
      %v6626 = vld [vmem:[%s6623 + $0x8] sm:$0xf]
      %v6627 = vld [vmem:[%s6623 + $0xc] sm:$0xf]
      %v6628 = vld [vmem:[%s6623 + $0x10] sm:$0xf]
      %v6629 = vld [vmem:[%s6623 + $0x14] sm:$0xf]
      %v6630 = vld [vmem:[%s6623 + $0x18] sm:$0xf]
      %v6631 = vld [vmem:[%s6623 + $0x1c] sm:$0xf]
      %v6632 = vld [vmem:[%s6623 + $0x20] sm:$0xf]
      %v6633 = vld [vmem:[%s6623 + $0x24] sm:$0xf]
      %v6634 = vld [vmem:[%s6623 + $0x28] sm:$0xf]
      %v6635 = vld [vmem:[%s6623 + $0x2c] sm:$0xf]
      %v6636 = vld [vmem:[%s6623 + $0x30] sm:$0xf]
      %v6637 = vld [vmem:[%s6623 + $0x34] sm:$0xf]
      %v6638 = vld [vmem:[%s6623 + $0x38] sm:$0xf]
      %v6639 = vld [vmem:[%s6623 + $0x3c] sm:$0xf]
      %v6640 = vld [vmem:[%s6623 + $0x40] sm:$0xf]
      %v6641 = vld [vmem:[%s6623 + $0x44] sm:$0xf]
      %v6660 = vunpack.c.l.b16 %v6624
      %v6661 = vunpack.c.l.b16 %v6625
      %v6662 = vunpack.c.l.b16 %v6626
      %v6663 = vunpack.c.l.b16 %v6627
      %v6664 = vunpack.c.l.b16 %v6628
      %v6665 = vunpack.c.l.b16 %v6629
      %v6666 = vunpack.c.l.b16 %v6630
      %v6667 = vunpack.c.l.b16 %v6631
      %v6668 = vunpack.c.l.b16 %v6632
      %v6669 = vunpack.c.l.b16 %v6633
      %v6670 = vunpack.c.l.b16 %v6634
      %v6671 = vunpack.c.l.b16 %v6635
      %v6672 = vunpack.c.l.b16 %v6636
      %v6673 = vunpack.c.l.b16 %v6637
      %v6674 = vunpack.c.l.b16 %v6638
      %v6675 = vunpack.c.l.b16 %v6639
      %v6676 = vunpack.c.l.b16 %v6640
      %v6677 = vunpack.c.l.b16 %v6641
      %v6678 = vpack.c.b16 %v6661, %v6660
      %v6679 = vpack.c.b16 %v6663, %v6662
      %v6680 = vpack.c.b16 %v6665, %v6664
      %v6681 = vpack.c.b16 %v6667, %v6666
      %v6682 = vpack.c.b16 %v6669, %v6668
      %v6683 = vpack.c.b16 %v6671, %v6670
      %v6684 = vpack.c.b16 %v6673, %v6672
      %v6685 = vpack.c.b16 %v6675, %v6674
      %v6686 = vpack.c.b16 %v6677, %v6676
      %6696 = vmatprep.subr.bf16.mxu0 0
      %6697 = vmatpush1.bf16.msra.mxu0 %v6685
      %6698 = vmatprep.subr.bf16.mxu0 0
      %6699 = vmatpush1.bf16.msra.mxu0 %v6684
      %6700 = vmatprep.subr.bf16.mxu0 0
      %6701 = vmatpush1.bf16.msra.mxu0 %v6683
      %6702 = vmatprep.subr.bf16.mxu0 0
      %6703 = vmatpush1.bf16.msra.mxu0 %v6682
      %6704 = vmatprep.subr.bf16.mxu0 0
      %6705 = vmatpush1.bf16.msra.mxu0 %v6681
      %6706 = vmatprep.subr.bf16.mxu0 0
      %6707 = vmatpush1.bf16.msra.mxu0 %v6680
      %6708 = vmatprep.subr.bf16.mxu0 0
      %6709 = vmatpush1.bf16.msra.mxu0 %v6679
      %6710 = vmatprep.subr.bf16.mxu0 0
      %6711 = vmatpush1.bf16.msra.mxu0 %v6678
      %6712 = vmatprep.subr.bf16.mxu0 0
      %6713 = vmatpush2.bf16.msra.mxu0 0
      %6714 = vmatprep.subr.bf16.mxu0 0
      %6715 = vmatpush2.bf16.msra.mxu0 0
      %6716 = vmatprep.subr.bf16.mxu0 0
      %6717 = vmatpush2.bf16.msra.mxu0 0
      %6718 = vmatprep.subr.bf16.mxu0 0
      %6719 = vmatpush2.bf16.msra.mxu0 0
      %6720 = vmatprep.subr.bf16.mxu0 0
      %6721 = vmatpush2.bf16.msra.mxu0 0
      %6722 = vmatprep.subr.bf16.mxu0 0
      %6723 = vmatpush2.bf16.msra.mxu0 0
      %6724 = vmatprep.subr.bf16.mxu0 0
      %6725 = vmatpush2.bf16.msra.mxu0 0
      %6726 = vmatprep.subr.bf16.mxu0 0
      %6727 = vmatpush2.bf16.msra.mxu0 %v6686
      %6728 = vmatprep.mubr.bf16.mxu0 %v5579
      %6729 = vmatmul.mubr.bf16.gmra.mxu0 %v5417
      %v6730 = vpop.f32.mrf.mxu0
      %v6731 = vadd.f32 0.0, %v6730
      %v6732 = vpop.f32.mrf.mxu0
      %v6733 = vpop.f32.mrf.mxu0
      %v6734 = vadd.f32 0.0, %v6733
      %v6735 = vpop.f32.mrf.mxu0
      %6736 = vmatprep.mubr.bf16.mxu0 %v5582
      %6737 = vmatmul.mubr.bf16.gmra.mxu0 %v5437
      %v6738 = vpop.f32.mrf.mxu0
      %v6739 = vadd.f32 0.0, %v6738
      %v6740 = vpop.f32.mrf.mxu0
      %v6741 = vpop.f32.mrf.mxu0
      %v6742 = vadd.f32 0.0, %v6741
      %v6743 = vpop.f32.mrf.mxu0
      %6744 = vmatprep.mubr.bf16.mxu0 %v5585
      %6745 = vmatmul.mubr.bf16.gmra.mxu0 %v5453
      %v6746 = vpop.f32.mrf.mxu0
      %v6747 = vadd.f32 0.0, %v6746
      %v6748 = vpop.f32.mrf.mxu0
      %v6749 = vpop.f32.mrf.mxu0
      %v6750 = vadd.f32 0.0, %v6749
      %v6751 = vpop.f32.mrf.mxu0
      %6752 = vmatprep.mubr.bf16.mxu0 %v5588
      %6753 = vmatmul.mubr.bf16.gmra.mxu0 %v5469
      %v6754 = vpop.f32.mrf.mxu0
      %v6755 = vadd.f32 0.0, %v6754
      %v6756 = vpop.f32.mrf.mxu0
      %v6757 = vpop.f32.mrf.mxu0
      %v6758 = vadd.f32 0.0, %v6757
      %v6759 = vpop.f32.mrf.mxu0
      %6760 = vmatprep.mubr.bf16.mxu0 %v5591
      %6761 = vmatmul.mubr.bf16.gmra.mxu0 %v5485
      %v6762 = vpop.f32.mrf.mxu0
      %v6763 = vadd.f32 0.0, %v6762
      %v6764 = vpop.f32.mrf.mxu0
      %v6765 = vpop.f32.mrf.mxu0
      %v6766 = vadd.f32 0.0, %v6765
      %v6767 = vpop.f32.mrf.mxu0
      %6768 = vmatprep.mubr.bf16.mxu0 %v5594
      %6769 = vmatmul.mubr.bf16.gmra.mxu0 %v5501
      %v6770 = vpop.f32.mrf.mxu0
      %v6771 = vadd.f32 0.0, %v6770
      %v6772 = vpop.f32.mrf.mxu0
      %v6773 = vpop.f32.mrf.mxu0
      %v6774 = vadd.f32 0.0, %v6773
      %v6775 = vpop.f32.mrf.mxu0
      %6776 = vmatprep.mubr.bf16.mxu0 %v5597
      %6777 = vmatmul.mubr.bf16.gmra.mxu0 %v5512
      %v6778 = vpop.f32.mrf.mxu0
      %v6779 = vadd.f32 0.0, %v6778
      %v6780 = vpop.f32.mrf.mxu0
      %v6781 = vpop.f32.mrf.mxu0
      %v6782 = vadd.f32 0.0, %v6781
      %v6783 = vpop.f32.mrf.mxu0
      %6784 = vdwg.mxu0
      %v6803 = vunpack.c.l.b16 %v6605
      %v6804 = vunpack.c.l.b16 %v6606
      %v6805 = vunpack.c.l.b16 %v6607
      %v6806 = vunpack.c.l.b16 %v6608
      %v6807 = vunpack.c.l.b16 %v6609
      %v6808 = vunpack.c.l.b16 %v6610
      %v6809 = vunpack.c.l.b16 %v6611
      %v6810 = vunpack.c.l.b16 %v6612
      %v6811 = vunpack.c.l.b16 %v6613
      %v6812 = vunpack.c.l.b16 %v6614
      %v6813 = vunpack.c.l.b16 %v6615
      %v6814 = vunpack.c.l.b16 %v6616
      %v6815 = vunpack.c.l.b16 %v6617
      %v6816 = vunpack.c.l.b16 %v6618
      %v6817 = vunpack.c.l.b16 %v6619
      %v6818 = vunpack.c.l.b16 %v6620
      %v6819 = vunpack.c.l.b16 %v6621
      %v6820 = vunpack.c.l.b16 %v6622
      %v6821 = vpack.c.b16 %v6804, %v6803
      %v6822 = vpack.c.b16 %v6806, %v6805
      %v6823 = vpack.c.b16 %v6808, %v6807
      %v6824 = vpack.c.b16 %v6810, %v6809
      %v6825 = vpack.c.b16 %v6812, %v6811
      %v6826 = vpack.c.b16 %v6814, %v6813
      %v6827 = vpack.c.b16 %v6816, %v6815
      %v6828 = vpack.c.b16 %v6818, %v6817
      %v6829 = vpack.c.b16 %v6820, %v6819
      %6839 = vmatprep.subr.bf16.mxu0 0
      %6840 = vmatpush1.bf16.msra.mxu0 %v6828
      %6841 = vmatprep.subr.bf16.mxu0 0
      %6842 = vmatpush1.bf16.msra.mxu0 %v6827
      %6843 = vmatprep.subr.bf16.mxu0 0
      %6844 = vmatpush1.bf16.msra.mxu0 %v6826
      %6845 = vmatprep.subr.bf16.mxu0 0
      %6846 = vmatpush1.bf16.msra.mxu0 %v6825
      %6847 = vmatprep.subr.bf16.mxu0 0
      %6848 = vmatpush1.bf16.msra.mxu0 %v6824
      %6849 = vmatprep.subr.bf16.mxu0 0
      %6850 = vmatpush1.bf16.msra.mxu0 %v6823
      %6851 = vmatprep.subr.bf16.mxu0 0
      %6852 = vmatpush1.bf16.msra.mxu0 %v6822
      %6853 = vmatprep.subr.bf16.mxu0 0
      %6854 = vmatpush1.bf16.msra.mxu0 %v6821
      %6855 = vmatprep.subr.bf16.mxu0 0
      %6856 = vmatpush2.bf16.msra.mxu0 0
      %6857 = vmatprep.subr.bf16.mxu0 0
      %6858 = vmatpush2.bf16.msra.mxu0 0
      %6859 = vmatprep.subr.bf16.mxu0 0
      %6860 = vmatpush2.bf16.msra.mxu0 0
      %6861 = vmatprep.subr.bf16.mxu0 0
      %6862 = vmatpush2.bf16.msra.mxu0 0
      %6863 = vmatprep.subr.bf16.mxu0 0
      %6864 = vmatpush2.bf16.msra.mxu0 0
      %6865 = vmatprep.subr.bf16.mxu0 0
      %6866 = vmatpush2.bf16.msra.mxu0 0
      %6867 = vmatprep.subr.bf16.mxu0 0
      %6868 = vmatpush2.bf16.msra.mxu0 0
      %6869 = vmatprep.subr.bf16.mxu0 0
      %6870 = vmatpush2.bf16.msra.mxu0 %v6829
      %6871 = vmatprep.mubr.bf16.mxu0 %v5742
      %6872 = vmatmul.mubr.bf16.gmra.mxu0 %v5355
      %v6873 = vpop.f32.mrf.mxu0
      %v6874 = vadd.f32 %v6731, %v6873
      %v6875 = vpop.f32.mrf.mxu0
      %v6876 = vpop.f32.mrf.mxu0
      %v6877 = vadd.f32 %v6734, %v6876
      %v6878 = vpop.f32.mrf.mxu0
      %6879 = vmatprep.mubr.bf16.mxu0 %v5744
      %6880 = vmatmul.mubr.bf16.gmra.mxu0 %v5357
      %v6881 = vpop.f32.mrf.mxu0
      %v6882 = vadd.f32 %v6739, %v6881
      %v6883 = vpop.f32.mrf.mxu0
      %v6884 = vpop.f32.mrf.mxu0
      %v6885 = vadd.f32 %v6742, %v6884
      %v6886 = vpop.f32.mrf.mxu0
      %6887 = vmatprep.mubr.bf16.mxu0 %v5746
      %6888 = vmatmul.mubr.bf16.gmra.mxu0 %v5359
      %v6889 = vpop.f32.mrf.mxu0
      %v6890 = vadd.f32 %v6747, %v6889
      %v6891 = vpop.f32.mrf.mxu0
      %v6892 = vpop.f32.mrf.mxu0
      %v6893 = vadd.f32 %v6750, %v6892
      %v6894 = vpop.f32.mrf.mxu0
      %6895 = vmatprep.mubr.bf16.mxu0 %v5748
      %6896 = vmatmul.mubr.bf16.gmra.mxu0 %v5361
      %v6897 = vpop.f32.mrf.mxu0
      %v6898 = vadd.f32 %v6755, %v6897
      %v6899 = vpop.f32.mrf.mxu0
      %v6900 = vpop.f32.mrf.mxu0
      %v6901 = vadd.f32 %v6758, %v6900
      %v6902 = vpop.f32.mrf.mxu0
      %6903 = vmatprep.mubr.bf16.mxu0 %v5750
      %6904 = vmatmul.mubr.bf16.gmra.mxu0 %v5363
      %v6905 = vpop.f32.mrf.mxu0
      %v6906 = vadd.f32 %v6763, %v6905
      %v6907 = vpop.f32.mrf.mxu0
      %v6908 = vpop.f32.mrf.mxu0
      %v6909 = vadd.f32 %v6766, %v6908
      %v6910 = vpop.f32.mrf.mxu0
      %6911 = vmatprep.mubr.bf16.mxu0 %v5752
      %6912 = vmatmul.mubr.bf16.gmra.mxu0 %v5365
      %v6913 = vpop.f32.mrf.mxu0
      %v6914 = vadd.f32 %v6771, %v6913
      %v6915 = vpop.f32.mrf.mxu0
      %v6916 = vpop.f32.mrf.mxu0
      %v6917 = vadd.f32 %v6774, %v6916
      %v6918 = vpop.f32.mrf.mxu0
      %6919 = vmatprep.mubr.bf16.mxu0 %v5754
      %6920 = vmatmul.mubr.bf16.gmra.mxu0 %v5367
      %v6921 = vpop.f32.mrf.mxu0
      %v6922 = vadd.f32 %v6779, %v6921
      %v6923 = vpop.f32.mrf.mxu0
      %v6924 = vpop.f32.mrf.mxu0
      %v6925 = vadd.f32 %v6782, %v6924
      %v6926 = vpop.f32.mrf.mxu0
      %6927 = vdwg.mxu0
      %s6928 = scalar_lea.vmem %s3, 576
      %v6929 = vld [vmem:[%s6928] sm:$0xf]
      %v6930 = vld [vmem:[%s6928 + $0x4] sm:$0xf]
      %v6931 = vld [vmem:[%s6928 + $0x8] sm:$0xf]
      %v6932 = vld [vmem:[%s6928 + $0xc] sm:$0xf]
      %v6933 = vld [vmem:[%s6928 + $0x10] sm:$0xf]
      %v6934 = vld [vmem:[%s6928 + $0x14] sm:$0xf]
      %v6935 = vld [vmem:[%s6928 + $0x18] sm:$0xf]
      %v6936 = vld [vmem:[%s6928 + $0x1c] sm:$0xf]
      %v6937 = vld [vmem:[%s6928 + $0x20] sm:$0xf]
      %v6938 = vld [vmem:[%s6928 + $0x24] sm:$0xf]
      %v6939 = vld [vmem:[%s6928 + $0x28] sm:$0xf]
      %v6940 = vld [vmem:[%s6928 + $0x2c] sm:$0xf]
      %v6941 = vld [vmem:[%s6928 + $0x30] sm:$0xf]
      %v6942 = vld [vmem:[%s6928 + $0x34] sm:$0xf]
      %v6943 = vld [vmem:[%s6928 + $0x38] sm:$0xf]
      %v6944 = vld [vmem:[%s6928 + $0x3c] sm:$0xf]
      %v6945 = vld [vmem:[%s6928 + $0x40] sm:$0xf]
      %v6946 = vld [vmem:[%s6928 + $0x44] sm:$0xf]
      %v6965 = vunpack.c.l.b16 %v6929
      %v6966 = vunpack.c.l.b16 %v6930
      %v6967 = vunpack.c.l.b16 %v6931
      %v6968 = vunpack.c.l.b16 %v6932
      %v6969 = vunpack.c.l.b16 %v6933
      %v6970 = vunpack.c.l.b16 %v6934
      %v6971 = vunpack.c.l.b16 %v6935
      %v6972 = vunpack.c.l.b16 %v6936
      %v6973 = vunpack.c.l.b16 %v6937
      %v6974 = vunpack.c.l.b16 %v6938
      %v6975 = vunpack.c.l.b16 %v6939
      %v6976 = vunpack.c.l.b16 %v6940
      %v6977 = vunpack.c.l.b16 %v6941
      %v6978 = vunpack.c.l.b16 %v6942
      %v6979 = vunpack.c.l.b16 %v6943
      %v6980 = vunpack.c.l.b16 %v6944
      %v6981 = vunpack.c.l.b16 %v6945
      %v6982 = vunpack.c.l.b16 %v6946
      %v6983 = vpack.c.b16 %v6966, %v6965
      %v6984 = vpack.c.b16 %v6968, %v6967
      %v6985 = vpack.c.b16 %v6970, %v6969
      %v6986 = vpack.c.b16 %v6972, %v6971
      %v6987 = vpack.c.b16 %v6974, %v6973
      %v6988 = vpack.c.b16 %v6976, %v6975
      %v6989 = vpack.c.b16 %v6978, %v6977
      %v6990 = vpack.c.b16 %v6980, %v6979
      %v6991 = vpack.c.b16 %v6982, %v6981
      %7001 = vmatprep.subr.bf16.mxu0 0
      %7002 = vmatpush1.bf16.msra.mxu0 %v6990
      %7003 = vmatprep.subr.bf16.mxu0 0
      %7004 = vmatpush1.bf16.msra.mxu0 %v6989
      %7005 = vmatprep.subr.bf16.mxu0 0
      %7006 = vmatpush1.bf16.msra.mxu0 %v6988
      %7007 = vmatprep.subr.bf16.mxu0 0
      %7008 = vmatpush1.bf16.msra.mxu0 %v6987
      %7009 = vmatprep.subr.bf16.mxu0 0
      %7010 = vmatpush1.bf16.msra.mxu0 %v6986
      %7011 = vmatprep.subr.bf16.mxu0 0
      %7012 = vmatpush1.bf16.msra.mxu0 %v6985
      %7013 = vmatprep.subr.bf16.mxu0 0
      %7014 = vmatpush1.bf16.msra.mxu0 %v6984
      %7015 = vmatprep.subr.bf16.mxu0 0
      %7016 = vmatpush1.bf16.msra.mxu0 %v6983
      %7017 = vmatprep.subr.bf16.mxu0 0
      %7018 = vmatpush2.bf16.msra.mxu0 0
      %7019 = vmatprep.subr.bf16.mxu0 0
      %7020 = vmatpush2.bf16.msra.mxu0 0
      %7021 = vmatprep.subr.bf16.mxu0 0
      %7022 = vmatpush2.bf16.msra.mxu0 0
      %7023 = vmatprep.subr.bf16.mxu0 0
      %7024 = vmatpush2.bf16.msra.mxu0 0
      %7025 = vmatprep.subr.bf16.mxu0 0
      %7026 = vmatpush2.bf16.msra.mxu0 0
      %7027 = vmatprep.subr.bf16.mxu0 0
      %7028 = vmatpush2.bf16.msra.mxu0 0
      %7029 = vmatprep.subr.bf16.mxu0 0
      %7030 = vmatpush2.bf16.msra.mxu0 0
      %7031 = vmatprep.subr.bf16.mxu0 0
      %7032 = vmatpush2.bf16.msra.mxu0 %v6991
      %7033 = vmatprep.mubr.bf16.mxu0 %v5967
      %7034 = vmatmul.mubr.bf16.gmra.mxu0 %v5881
      %v7035 = vpop.f32.mrf.mxu0
      %v7036 = vadd.f32 0.0, %v7035
      %v7037 = vpop.f32.mrf.mxu0
      %v7038 = vpop.f32.mrf.mxu0
      %v7039 = vadd.f32 0.0, %v7038
      %v7040 = vpop.f32.mrf.mxu0
      %7041 = vmatprep.mubr.bf16.mxu0 %v5970
      %7042 = vmatmul.mubr.bf16.gmra.mxu0 %v5886
      %v7043 = vpop.f32.mrf.mxu0
      %v7044 = vadd.f32 0.0, %v7043
      %v7045 = vpop.f32.mrf.mxu0
      %v7046 = vpop.f32.mrf.mxu0
      %v7047 = vadd.f32 0.0, %v7046
      %v7048 = vpop.f32.mrf.mxu0
      %7049 = vmatprep.mubr.bf16.mxu0 %v5973
      %7050 = vmatmul.mubr.bf16.gmra.mxu0 %v5890
      %v7051 = vpop.f32.mrf.mxu0
      %v7052 = vadd.f32 0.0, %v7051
      %v7053 = vpop.f32.mrf.mxu0
      %v7054 = vpop.f32.mrf.mxu0
      %v7055 = vadd.f32 0.0, %v7054
      %v7056 = vpop.f32.mrf.mxu0
      %7057 = vmatprep.mubr.bf16.mxu0 %v5976
      %7058 = vmatmul.mubr.bf16.gmra.mxu0 %v5894
      %v7059 = vpop.f32.mrf.mxu0
      %v7060 = vadd.f32 0.0, %v7059
      %v7061 = vpop.f32.mrf.mxu0
      %v7062 = vpop.f32.mrf.mxu0
      %v7063 = vadd.f32 0.0, %v7062
      %v7064 = vpop.f32.mrf.mxu0
      %7065 = vmatprep.mubr.bf16.mxu0 %v5979
      %7066 = vmatmul.mubr.bf16.gmra.mxu0 %v5898
      %v7067 = vpop.f32.mrf.mxu0
      %v7068 = vadd.f32 0.0, %v7067
      %v7069 = vpop.f32.mrf.mxu0
      %v7070 = vpop.f32.mrf.mxu0
      %v7071 = vadd.f32 0.0, %v7070
      %v7072 = vpop.f32.mrf.mxu0
      %7073 = vmatprep.mubr.bf16.mxu0 %v5982
      %7074 = vmatmul.mubr.bf16.gmra.mxu0 %v5902
      %v7075 = vpop.f32.mrf.mxu0
      %v7076 = vadd.f32 0.0, %v7075
      %v7077 = vpop.f32.mrf.mxu0
      %v7078 = vpop.f32.mrf.mxu0
      %v7079 = vadd.f32 0.0, %v7078
      %v7080 = vpop.f32.mrf.mxu0
      %7081 = vmatprep.mubr.bf16.mxu0 %v5985
      %7082 = vmatmul.mubr.bf16.gmra.mxu0 %v5901
      %v7083 = vpop.f32.mrf.mxu0
      %v7084 = vadd.f32 0.0, %v7083
      %v7085 = vpop.f32.mrf.mxu0
      %v7086 = vpop.f32.mrf.mxu0
      %v7087 = vadd.f32 0.0, %v7086
      %v7088 = vpop.f32.mrf.mxu0
      %7089 = vdwg.mxu0
      %v7090 = vadd.f32 %v6874, %v7036
      %v7091 = vadd.f32 %v6877, %v7039
      %v7092 = vadd.f32 %v6882, %v7044
      %v7093 = vadd.f32 %v6885, %v7047
      %v7094 = vadd.f32 %v6890, %v7052
      %v7095 = vadd.f32 %v6893, %v7055
      %v7096 = vadd.f32 %v6898, %v7060
      %v7097 = vadd.f32 %v6901, %v7063
      %v7098 = vadd.f32 %v6906, %v7068
      %v7099 = vadd.f32 %v6909, %v7071
      %v7100 = vadd.f32 %v6914, %v7076
      %v7101 = vadd.f32 %v6917, %v7079
      %v7102 = vadd.f32 %v6922, %v7084
      %v7103 = vadd.f32 %v6925, %v7087
      %v7104 = vmax.f32 %v6590, %v7090
      %v7105 = vmax.f32 %v6591, %v7091
      %v7106 = vmax.f32 %v6592, %v7092
      %v7107 = vmax.f32 %v6593, %v7093
      %v7108 = vmax.f32 %v6594, %v7094
      %v7109 = vmax.f32 %v6595, %v7095
      %v7110 = vmax.f32 %v6596, %v7096
      %v7111 = vmax.f32 %v6597, %v7097
      %v7112 = vmax.f32 %v6598, %v7098
      %v7113 = vmax.f32 %v6599, %v7099
      %v7114 = vmax.f32 %v6600, %v7100
      %v7115 = vmax.f32 %v6601, %v7101
      %v7116 = vmax.f32 %v6602, %v7102
      %v7117 = vmax.f32 %v6603, %v7103
      %s7118 = scalar_lea.vmem %s3, 648
      %v7119 = vld [vmem:[%s7118] sm:$0xf]
      %v7120 = vld [vmem:[%s7118 + $0x4] sm:$0xf]
      %v7121 = vld [vmem:[%s7118 + $0x8] sm:$0xf]
      %v7122 = vld [vmem:[%s7118 + $0xc] sm:$0xf]
      %v7123 = vld [vmem:[%s7118 + $0x10] sm:$0xf]
      %v7124 = vld [vmem:[%s7118 + $0x14] sm:$0xf]
      %v7125 = vld [vmem:[%s7118 + $0x18] sm:$0xf]
      %v7126 = vld [vmem:[%s7118 + $0x1c] sm:$0xf]
      %v7127 = vld [vmem:[%s7118 + $0x20] sm:$0xf]
      %v7128 = vld [vmem:[%s7118 + $0x24] sm:$0xf]
      %v7129 = vld [vmem:[%s7118 + $0x28] sm:$0xf]
      %v7130 = vld [vmem:[%s7118 + $0x2c] sm:$0xf]
      %v7131 = vld [vmem:[%s7118 + $0x30] sm:$0xf]
      %v7132 = vld [vmem:[%s7118 + $0x34] sm:$0xf]
      %v7133 = vld [vmem:[%s7118 + $0x38] sm:$0xf]
      %v7134 = vld [vmem:[%s7118 + $0x3c] sm:$0xf]
      %v7135 = vld [vmem:[%s7118 + $0x40] sm:$0xf]
      %v7136 = vld [vmem:[%s7118 + $0x44] sm:$0xf]
      %s7137 = scalar_lea.vmem %s3, 720
      %v7138 = vld [vmem:[%s7137] sm:$0xf]
      %v7139 = vld [vmem:[%s7137 + $0x4] sm:$0xf]
      %v7140 = vld [vmem:[%s7137 + $0x8] sm:$0xf]
      %v7141 = vld [vmem:[%s7137 + $0xc] sm:$0xf]
      %v7142 = vld [vmem:[%s7137 + $0x10] sm:$0xf]
      %v7143 = vld [vmem:[%s7137 + $0x14] sm:$0xf]
      %v7144 = vld [vmem:[%s7137 + $0x18] sm:$0xf]
      %v7145 = vld [vmem:[%s7137 + $0x1c] sm:$0xf]
      %v7146 = vld [vmem:[%s7137 + $0x20] sm:$0xf]
      %v7147 = vld [vmem:[%s7137 + $0x24] sm:$0xf]
      %v7148 = vld [vmem:[%s7137 + $0x28] sm:$0xf]
      %v7149 = vld [vmem:[%s7137 + $0x2c] sm:$0xf]
      %v7150 = vld [vmem:[%s7137 + $0x30] sm:$0xf]
      %v7151 = vld [vmem:[%s7137 + $0x34] sm:$0xf]
      %v7152 = vld [vmem:[%s7137 + $0x38] sm:$0xf]
      %v7153 = vld [vmem:[%s7137 + $0x3c] sm:$0xf]
      %v7154 = vld [vmem:[%s7137 + $0x40] sm:$0xf]
      %v7155 = vld [vmem:[%s7137 + $0x44] sm:$0xf]
      %v7174 = vunpack.c.l.b16 %v7138
      %v7175 = vunpack.c.l.b16 %v7139
      %v7176 = vunpack.c.l.b16 %v7140
      %v7177 = vunpack.c.l.b16 %v7141
      %v7178 = vunpack.c.l.b16 %v7142
      %v7179 = vunpack.c.l.b16 %v7143
      %v7180 = vunpack.c.l.b16 %v7144
      %v7181 = vunpack.c.l.b16 %v7145
      %v7182 = vunpack.c.l.b16 %v7146
      %v7183 = vunpack.c.l.b16 %v7147
      %v7184 = vunpack.c.l.b16 %v7148
      %v7185 = vunpack.c.l.b16 %v7149
      %v7186 = vunpack.c.l.b16 %v7150
      %v7187 = vunpack.c.l.b16 %v7151
      %v7188 = vunpack.c.l.b16 %v7152
      %v7189 = vunpack.c.l.b16 %v7153
      %v7190 = vunpack.c.l.b16 %v7154
      %v7191 = vunpack.c.l.b16 %v7155
      %v7192 = vpack.c.b16 %v7175, %v7174
      %v7193 = vpack.c.b16 %v7177, %v7176
      %v7194 = vpack.c.b16 %v7179, %v7178
      %v7195 = vpack.c.b16 %v7181, %v7180
      %v7196 = vpack.c.b16 %v7183, %v7182
      %v7197 = vpack.c.b16 %v7185, %v7184
      %v7198 = vpack.c.b16 %v7187, %v7186
      %v7199 = vpack.c.b16 %v7189, %v7188
      %v7200 = vpack.c.b16 %v7191, %v7190
      %7210 = vmatprep.subr.bf16.mxu0 0
      %7211 = vmatpush1.bf16.msra.mxu0 %v7199
      %7212 = vmatprep.subr.bf16.mxu0 0
      %7213 = vmatpush1.bf16.msra.mxu0 %v7198
      %7214 = vmatprep.subr.bf16.mxu0 0
      %7215 = vmatpush1.bf16.msra.mxu0 %v7197
      %7216 = vmatprep.subr.bf16.mxu0 0
      %7217 = vmatpush1.bf16.msra.mxu0 %v7196
      %7218 = vmatprep.subr.bf16.mxu0 0
      %7219 = vmatpush1.bf16.msra.mxu0 %v7195
      %7220 = vmatprep.subr.bf16.mxu0 0
      %7221 = vmatpush1.bf16.msra.mxu0 %v7194
      %7222 = vmatprep.subr.bf16.mxu0 0
      %7223 = vmatpush1.bf16.msra.mxu0 %v7193
      %7224 = vmatprep.subr.bf16.mxu0 0
      %7225 = vmatpush1.bf16.msra.mxu0 %v7192
      %7226 = vmatprep.subr.bf16.mxu0 0
      %7227 = vmatpush2.bf16.msra.mxu0 0
      %7228 = vmatprep.subr.bf16.mxu0 0
      %7229 = vmatpush2.bf16.msra.mxu0 0
      %7230 = vmatprep.subr.bf16.mxu0 0
      %7231 = vmatpush2.bf16.msra.mxu0 0
      %7232 = vmatprep.subr.bf16.mxu0 0
      %7233 = vmatpush2.bf16.msra.mxu0 0
      %7234 = vmatprep.subr.bf16.mxu0 0
      %7235 = vmatpush2.bf16.msra.mxu0 0
      %7236 = vmatprep.subr.bf16.mxu0 0
      %7237 = vmatpush2.bf16.msra.mxu0 0
      %7238 = vmatprep.subr.bf16.mxu0 0
      %7239 = vmatpush2.bf16.msra.mxu0 0
      %7240 = vmatprep.subr.bf16.mxu0 0
      %7241 = vmatpush2.bf16.msra.mxu0 %v7200
      %7242 = vmatprep.mubr.bf16.mxu0 %v5579
      %7243 = vmatmul.mubr.bf16.gmra.mxu0 %v5417
      %v7244 = vpop.f32.mrf.mxu0
      %v7245 = vadd.f32 0.0, %v7244
      %v7246 = vpop.f32.mrf.mxu0
      %v7247 = vpop.f32.mrf.mxu0
      %v7248 = vadd.f32 0.0, %v7247
      %v7249 = vpop.f32.mrf.mxu0
      %7250 = vmatprep.mubr.bf16.mxu0 %v5582
      %7251 = vmatmul.mubr.bf16.gmra.mxu0 %v5437
      %v7252 = vpop.f32.mrf.mxu0
      %v7253 = vadd.f32 0.0, %v7252
      %v7254 = vpop.f32.mrf.mxu0
      %v7255 = vpop.f32.mrf.mxu0
      %v7256 = vadd.f32 0.0, %v7255
      %v7257 = vpop.f32.mrf.mxu0
      %7258 = vmatprep.mubr.bf16.mxu0 %v5585
      %7259 = vmatmul.mubr.bf16.gmra.mxu0 %v5453
      %v7260 = vpop.f32.mrf.mxu0
      %v7261 = vadd.f32 0.0, %v7260
      %v7262 = vpop.f32.mrf.mxu0
      %v7263 = vpop.f32.mrf.mxu0
      %v7264 = vadd.f32 0.0, %v7263
      %v7265 = vpop.f32.mrf.mxu0
      %7266 = vmatprep.mubr.bf16.mxu0 %v5588
      %7267 = vmatmul.mubr.bf16.gmra.mxu0 %v5469
      %v7268 = vpop.f32.mrf.mxu0
      %v7269 = vadd.f32 0.0, %v7268
      %v7270 = vpop.f32.mrf.mxu0
      %v7271 = vpop.f32.mrf.mxu0
      %v7272 = vadd.f32 0.0, %v7271
      %v7273 = vpop.f32.mrf.mxu0
      %7274 = vmatprep.mubr.bf16.mxu0 %v5591
      %7275 = vmatmul.mubr.bf16.gmra.mxu0 %v5485
      %v7276 = vpop.f32.mrf.mxu0
      %v7277 = vadd.f32 0.0, %v7276
      %v7278 = vpop.f32.mrf.mxu0
      %v7279 = vpop.f32.mrf.mxu0
      %v7280 = vadd.f32 0.0, %v7279
      %v7281 = vpop.f32.mrf.mxu0
      %7282 = vmatprep.mubr.bf16.mxu0 %v5594
      %7283 = vmatmul.mubr.bf16.gmra.mxu0 %v5501
      %v7284 = vpop.f32.mrf.mxu0
      %v7285 = vadd.f32 0.0, %v7284
      %v7286 = vpop.f32.mrf.mxu0
      %v7287 = vpop.f32.mrf.mxu0
      %v7288 = vadd.f32 0.0, %v7287
      %v7289 = vpop.f32.mrf.mxu0
      %7290 = vmatprep.mubr.bf16.mxu0 %v5597
      %7291 = vmatmul.mubr.bf16.gmra.mxu0 %v5512
      %v7292 = vpop.f32.mrf.mxu0
      %v7293 = vadd.f32 0.0, %v7292
      %v7294 = vpop.f32.mrf.mxu0
      %v7295 = vpop.f32.mrf.mxu0
      %v7296 = vadd.f32 0.0, %v7295
      %v7297 = vpop.f32.mrf.mxu0
      %7298 = vdwg.mxu0
      %v7317 = vunpack.c.l.b16 %v7119
      %v7318 = vunpack.c.l.b16 %v7120
      %v7319 = vunpack.c.l.b16 %v7121
      %v7320 = vunpack.c.l.b16 %v7122
      %v7321 = vunpack.c.l.b16 %v7123
      %v7322 = vunpack.c.l.b16 %v7124
      %v7323 = vunpack.c.l.b16 %v7125
      %v7324 = vunpack.c.l.b16 %v7126
      %v7325 = vunpack.c.l.b16 %v7127
      %v7326 = vunpack.c.l.b16 %v7128
      %v7327 = vunpack.c.l.b16 %v7129
      %v7328 = vunpack.c.l.b16 %v7130
      %v7329 = vunpack.c.l.b16 %v7131
      %v7330 = vunpack.c.l.b16 %v7132
      %v7331 = vunpack.c.l.b16 %v7133
      %v7332 = vunpack.c.l.b16 %v7134
      %v7333 = vunpack.c.l.b16 %v7135
      %v7334 = vunpack.c.l.b16 %v7136
      %v7335 = vpack.c.b16 %v7318, %v7317
      %v7336 = vpack.c.b16 %v7320, %v7319
      %v7337 = vpack.c.b16 %v7322, %v7321
      %v7338 = vpack.c.b16 %v7324, %v7323
      %v7339 = vpack.c.b16 %v7326, %v7325
      %v7340 = vpack.c.b16 %v7328, %v7327
      %v7341 = vpack.c.b16 %v7330, %v7329
      %v7342 = vpack.c.b16 %v7332, %v7331
      %v7343 = vpack.c.b16 %v7334, %v7333
      %7353 = vmatprep.subr.bf16.mxu0 0
      %7354 = vmatpush1.bf16.msra.mxu0 %v7342
      %7355 = vmatprep.subr.bf16.mxu0 0
      %7356 = vmatpush1.bf16.msra.mxu0 %v7341
      %7357 = vmatprep.subr.bf16.mxu0 0
      %7358 = vmatpush1.bf16.msra.mxu0 %v7340
      %7359 = vmatprep.subr.bf16.mxu0 0
      %7360 = vmatpush1.bf16.msra.mxu0 %v7339
      %7361 = vmatprep.subr.bf16.mxu0 0
      %7362 = vmatpush1.bf16.msra.mxu0 %v7338
      %7363 = vmatprep.subr.bf16.mxu0 0
      %7364 = vmatpush1.bf16.msra.mxu0 %v7337
      %7365 = vmatprep.subr.bf16.mxu0 0
      %7366 = vmatpush1.bf16.msra.mxu0 %v7336
      %7367 = vmatprep.subr.bf16.mxu0 0
      %7368 = vmatpush1.bf16.msra.mxu0 %v7335
      %7369 = vmatprep.subr.bf16.mxu0 0
      %7370 = vmatpush2.bf16.msra.mxu0 0
      %7371 = vmatprep.subr.bf16.mxu0 0
      %7372 = vmatpush2.bf16.msra.mxu0 0
      %7373 = vmatprep.subr.bf16.mxu0 0
      %7374 = vmatpush2.bf16.msra.mxu0 0
      %7375 = vmatprep.subr.bf16.mxu0 0
      %7376 = vmatpush2.bf16.msra.mxu0 0
      %7377 = vmatprep.subr.bf16.mxu0 0
      %7378 = vmatpush2.bf16.msra.mxu0 0
      %7379 = vmatprep.subr.bf16.mxu0 0
      %7380 = vmatpush2.bf16.msra.mxu0 0
      %7381 = vmatprep.subr.bf16.mxu0 0
      %7382 = vmatpush2.bf16.msra.mxu0 0
      %7383 = vmatprep.subr.bf16.mxu0 0
      %7384 = vmatpush2.bf16.msra.mxu0 %v7343
      %7385 = vmatprep.mubr.bf16.mxu0 %v5742
      %7386 = vmatmul.mubr.bf16.gmra.mxu0 %v5355
      %v7387 = vpop.f32.mrf.mxu0
      %v7388 = vadd.f32 %v7245, %v7387
      %v7389 = vpop.f32.mrf.mxu0
      %v7390 = vpop.f32.mrf.mxu0
      %v7391 = vadd.f32 %v7248, %v7390
      %v7392 = vpop.f32.mrf.mxu0
      %7393 = vmatprep.mubr.bf16.mxu0 %v5744
      %7394 = vmatmul.mubr.bf16.gmra.mxu0 %v5357
      %v7395 = vpop.f32.mrf.mxu0
      %v7396 = vadd.f32 %v7253, %v7395
      %v7397 = vpop.f32.mrf.mxu0
      %v7398 = vpop.f32.mrf.mxu0
      %v7399 = vadd.f32 %v7256, %v7398
      %v7400 = vpop.f32.mrf.mxu0
      %7401 = vmatprep.mubr.bf16.mxu0 %v5746
      %7402 = vmatmul.mubr.bf16.gmra.mxu0 %v5359
      %v7403 = vpop.f32.mrf.mxu0
      %v7404 = vadd.f32 %v7261, %v7403
      %v7405 = vpop.f32.mrf.mxu0
      %v7406 = vpop.f32.mrf.mxu0
      %v7407 = vadd.f32 %v7264, %v7406
      %v7408 = vpop.f32.mrf.mxu0
      %7409 = vmatprep.mubr.bf16.mxu0 %v5748
      %7410 = vmatmul.mubr.bf16.gmra.mxu0 %v5361
      %v7411 = vpop.f32.mrf.mxu0
      %v7412 = vadd.f32 %v7269, %v7411
      %v7413 = vpop.f32.mrf.mxu0
      %v7414 = vpop.f32.mrf.mxu0
      %v7415 = vadd.f32 %v7272, %v7414
      %v7416 = vpop.f32.mrf.mxu0
      %7417 = vmatprep.mubr.bf16.mxu0 %v5750
      %7418 = vmatmul.mubr.bf16.gmra.mxu0 %v5363
      %v7419 = vpop.f32.mrf.mxu0
      %v7420 = vadd.f32 %v7277, %v7419
      %v7421 = vpop.f32.mrf.mxu0
      %v7422 = vpop.f32.mrf.mxu0
      %v7423 = vadd.f32 %v7280, %v7422
      %v7424 = vpop.f32.mrf.mxu0
      %7425 = vmatprep.mubr.bf16.mxu0 %v5752
      %7426 = vmatmul.mubr.bf16.gmra.mxu0 %v5365
      %v7427 = vpop.f32.mrf.mxu0
      %v7428 = vadd.f32 %v7285, %v7427
      %v7429 = vpop.f32.mrf.mxu0
      %v7430 = vpop.f32.mrf.mxu0
      %v7431 = vadd.f32 %v7288, %v7430
      %v7432 = vpop.f32.mrf.mxu0
      %7433 = vmatprep.mubr.bf16.mxu0 %v5754
      %7434 = vmatmul.mubr.bf16.gmra.mxu0 %v5367
      %v7435 = vpop.f32.mrf.mxu0
      %v7436 = vadd.f32 %v7293, %v7435
      %v7437 = vpop.f32.mrf.mxu0
      %v7438 = vpop.f32.mrf.mxu0
      %v7439 = vadd.f32 %v7296, %v7438
      %v7440 = vpop.f32.mrf.mxu0
      %7441 = vdwg.mxu0
      %s7442 = scalar_lea.vmem %s3, 792
      %v7443 = vld [vmem:[%s7442] sm:$0xf]
      %v7444 = vld [vmem:[%s7442 + $0x4] sm:$0xf]
      %v7445 = vld [vmem:[%s7442 + $0x8] sm:$0xf]
      %v7446 = vld [vmem:[%s7442 + $0xc] sm:$0xf]
      %v7447 = vld [vmem:[%s7442 + $0x10] sm:$0xf]
      %v7448 = vld [vmem:[%s7442 + $0x14] sm:$0xf]
      %v7449 = vld [vmem:[%s7442 + $0x18] sm:$0xf]
      %v7450 = vld [vmem:[%s7442 + $0x1c] sm:$0xf]
      %v7451 = vld [vmem:[%s7442 + $0x20] sm:$0xf]
      %v7452 = vld [vmem:[%s7442 + $0x24] sm:$0xf]
      %v7453 = vld [vmem:[%s7442 + $0x28] sm:$0xf]
      %v7454 = vld [vmem:[%s7442 + $0x2c] sm:$0xf]
      %v7455 = vld [vmem:[%s7442 + $0x30] sm:$0xf]
      %v7456 = vld [vmem:[%s7442 + $0x34] sm:$0xf]
      %v7457 = vld [vmem:[%s7442 + $0x38] sm:$0xf]
      %v7458 = vld [vmem:[%s7442 + $0x3c] sm:$0xf]
      %v7459 = vld [vmem:[%s7442 + $0x40] sm:$0xf]
      %v7460 = vld [vmem:[%s7442 + $0x44] sm:$0xf]
      %v7479 = vunpack.c.l.b16 %v7443
      %v7480 = vunpack.c.l.b16 %v7444
      %v7481 = vunpack.c.l.b16 %v7445
      %v7482 = vunpack.c.l.b16 %v7446
      %v7483 = vunpack.c.l.b16 %v7447
      %v7484 = vunpack.c.l.b16 %v7448
      %v7485 = vunpack.c.l.b16 %v7449
      %v7486 = vunpack.c.l.b16 %v7450
      %v7487 = vunpack.c.l.b16 %v7451
      %v7488 = vunpack.c.l.b16 %v7452
      %v7489 = vunpack.c.l.b16 %v7453
      %v7490 = vunpack.c.l.b16 %v7454
      %v7491 = vunpack.c.l.b16 %v7455
      %v7492 = vunpack.c.l.b16 %v7456
      %v7493 = vunpack.c.l.b16 %v7457
      %v7494 = vunpack.c.l.b16 %v7458
      %v7495 = vunpack.c.l.b16 %v7459
      %v7496 = vunpack.c.l.b16 %v7460
      %v7497 = vpack.c.b16 %v7480, %v7479
      %v7498 = vpack.c.b16 %v7482, %v7481
      %v7499 = vpack.c.b16 %v7484, %v7483
      %v7500 = vpack.c.b16 %v7486, %v7485
      %v7501 = vpack.c.b16 %v7488, %v7487
      %v7502 = vpack.c.b16 %v7490, %v7489
      %v7503 = vpack.c.b16 %v7492, %v7491
      %v7504 = vpack.c.b16 %v7494, %v7493
      %v7505 = vpack.c.b16 %v7496, %v7495
      %7515 = vmatprep.subr.bf16.mxu0 0
      %7516 = vmatpush1.bf16.msra.mxu0 %v7504
      %7517 = vmatprep.subr.bf16.mxu0 0
      %7518 = vmatpush1.bf16.msra.mxu0 %v7503
      %7519 = vmatprep.subr.bf16.mxu0 0
      %7520 = vmatpush1.bf16.msra.mxu0 %v7502
      %7521 = vmatprep.subr.bf16.mxu0 0
      %7522 = vmatpush1.bf16.msra.mxu0 %v7501
      %7523 = vmatprep.subr.bf16.mxu0 0
      %7524 = vmatpush1.bf16.msra.mxu0 %v7500
      %7525 = vmatprep.subr.bf16.mxu0 0
      %7526 = vmatpush1.bf16.msra.mxu0 %v7499
      %7527 = vmatprep.subr.bf16.mxu0 0
      %7528 = vmatpush1.bf16.msra.mxu0 %v7498
      %7529 = vmatprep.subr.bf16.mxu0 0
      %7530 = vmatpush1.bf16.msra.mxu0 %v7497
      %7531 = vmatprep.subr.bf16.mxu0 0
      %7532 = vmatpush2.bf16.msra.mxu0 0
      %7533 = vmatprep.subr.bf16.mxu0 0
      %7534 = vmatpush2.bf16.msra.mxu0 0
      %7535 = vmatprep.subr.bf16.mxu0 0
      %7536 = vmatpush2.bf16.msra.mxu0 0
      %7537 = vmatprep.subr.bf16.mxu0 0
      %7538 = vmatpush2.bf16.msra.mxu0 0
      %7539 = vmatprep.subr.bf16.mxu0 0
      %7540 = vmatpush2.bf16.msra.mxu0 0
      %7541 = vmatprep.subr.bf16.mxu0 0
      %7542 = vmatpush2.bf16.msra.mxu0 0
      %7543 = vmatprep.subr.bf16.mxu0 0
      %7544 = vmatpush2.bf16.msra.mxu0 0
      %7545 = vmatprep.subr.bf16.mxu0 0
      %7546 = vmatpush2.bf16.msra.mxu0 %v7505
      %7547 = vmatprep.mubr.bf16.mxu0 %v5967
      %7548 = vmatmul.mubr.bf16.gmra.mxu0 %v5881
      %v7549 = vpop.f32.mrf.mxu0
      %v7550 = vadd.f32 0.0, %v7549
      %v7551 = vpop.f32.mrf.mxu0
      %v7552 = vpop.f32.mrf.mxu0
      %v7553 = vadd.f32 0.0, %v7552
      %v7554 = vpop.f32.mrf.mxu0
      %7555 = vmatprep.mubr.bf16.mxu0 %v5970
      %7556 = vmatmul.mubr.bf16.gmra.mxu0 %v5886
      %v7557 = vpop.f32.mrf.mxu0
      %v7558 = vadd.f32 0.0, %v7557
      %v7559 = vpop.f32.mrf.mxu0
      %v7560 = vpop.f32.mrf.mxu0
      %v7561 = vadd.f32 0.0, %v7560
      %v7562 = vpop.f32.mrf.mxu0
      %7563 = vmatprep.mubr.bf16.mxu0 %v5973
      %7564 = vmatmul.mubr.bf16.gmra.mxu0 %v5890
      %v7565 = vpop.f32.mrf.mxu0
      %v7566 = vadd.f32 0.0, %v7565
      %v7567 = vpop.f32.mrf.mxu0
      %v7568 = vpop.f32.mrf.mxu0
      %v7569 = vadd.f32 0.0, %v7568
      %v7570 = vpop.f32.mrf.mxu0
      %7571 = vmatprep.mubr.bf16.mxu0 %v5976
      %7572 = vmatmul.mubr.bf16.gmra.mxu0 %v5894
      %v7573 = vpop.f32.mrf.mxu0
      %v7574 = vadd.f32 0.0, %v7573
      %v7575 = vpop.f32.mrf.mxu0
      %v7576 = vpop.f32.mrf.mxu0
      %v7577 = vadd.f32 0.0, %v7576
      %v7578 = vpop.f32.mrf.mxu0
      %7579 = vmatprep.mubr.bf16.mxu0 %v5979
      %7580 = vmatmul.mubr.bf16.gmra.mxu0 %v5898
      %v7581 = vpop.f32.mrf.mxu0
      %v7582 = vadd.f32 0.0, %v7581
      %v7583 = vpop.f32.mrf.mxu0
      %v7584 = vpop.f32.mrf.mxu0
      %v7585 = vadd.f32 0.0, %v7584
      %v7586 = vpop.f32.mrf.mxu0
      %7587 = vmatprep.mubr.bf16.mxu0 %v5982
      %7588 = vmatmul.mubr.bf16.gmra.mxu0 %v5902
      %v7589 = vpop.f32.mrf.mxu0
      %v7590 = vadd.f32 0.0, %v7589
      %v7591 = vpop.f32.mrf.mxu0
      %v7592 = vpop.f32.mrf.mxu0
      %v7593 = vadd.f32 0.0, %v7592
      %v7594 = vpop.f32.mrf.mxu0
      %7595 = vmatprep.mubr.bf16.mxu0 %v5985
      %7596 = vmatmul.mubr.bf16.gmra.mxu0 %v5901
      %v7597 = vpop.f32.mrf.mxu0
      %v7598 = vadd.f32 0.0, %v7597
      %v7599 = vpop.f32.mrf.mxu0
      %v7600 = vpop.f32.mrf.mxu0
      %v7601 = vadd.f32 0.0, %v7600
      %v7602 = vpop.f32.mrf.mxu0
      %7603 = vdwg.mxu0
      %v7604 = vadd.f32 %v7388, %v7550
      %v7605 = vadd.f32 %v7391, %v7553
      %v7606 = vadd.f32 %v7396, %v7558
      %v7607 = vadd.f32 %v7399, %v7561
      %v7608 = vadd.f32 %v7404, %v7566
      %v7609 = vadd.f32 %v7407, %v7569
      %v7610 = vadd.f32 %v7412, %v7574
      %v7611 = vadd.f32 %v7415, %v7577
      %v7612 = vadd.f32 %v7420, %v7582
      %v7613 = vadd.f32 %v7423, %v7585
      %v7614 = vadd.f32 %v7428, %v7590
      %v7615 = vadd.f32 %v7431, %v7593
      %v7616 = vadd.f32 %v7436, %v7598
      %v7617 = vadd.f32 %v7439, %v7601
      %v7618 = vmax.f32 %v7104, %v7604
      %v7619 = vmax.f32 %v7105, %v7605
      %v7620 = vmax.f32 %v7106, %v7606
      %v7621 = vmax.f32 %v7107, %v7607
      %v7622 = vmax.f32 %v7108, %v7608
      %v7623 = vmax.f32 %v7109, %v7609
      %v7624 = vmax.f32 %v7110, %v7610
      %v7625 = vmax.f32 %v7111, %v7611
      %v7626 = vmax.f32 %v7112, %v7612
      %v7627 = vmax.f32 %v7113, %v7613
      %v7628 = vmax.f32 %v7114, %v7614
      %v7629 = vmax.f32 %v7115, %v7615
      %v7630 = vmax.f32 %v7116, %v7616
      %v7631 = vmax.f32 %v7117, %v7617
      %v7632 = vld [vmem:[%s4] sm:$0x1]
      %v7634 = vlaneseq
      %v7635 = vshrl.u32 %v7634, 7
      %v7636 = vsub.s32 0, %v7635
      %v7637 = vrot.slane %v7632, %v7636
      %v7639 = vadd.f32 %v7618, %v7637
      %v7640 = vadd.f32 %v7619, %v7637
      %v7641 = vadd.f32 %v7620, %v7637
      %v7642 = vadd.f32 %v7621, %v7637
      %v7643 = vadd.f32 %v7622, %v7637
      %v7644 = vadd.f32 %v7623, %v7637
      %v7645 = vadd.f32 %v7624, %v7637
      %v7646 = vadd.f32 %v7625, %v7637
      %v7647 = vadd.f32 %v7626, %v7637
      %v7648 = vadd.f32 %v7627, %v7637
      %v7649 = vadd.f32 %v7628, %v7637
      %v7650 = vadd.f32 %v7629, %v7637
      %v7651 = vadd.f32 %v7630, %v7637
      %v7652 = vadd.f32 %v7631, %v7637
      %v7653 = vmax.f32 %v7639, 0.0
      %v7654 = vmax.f32 %v7640, 0.0
      %v7655 = vmax.f32 %v7641, 0.0
      %v7656 = vmax.f32 %v7642, 0.0
      %v7657 = vmax.f32 %v7643, 0.0
      %v7658 = vmax.f32 %v7644, 0.0
      %v7659 = vmax.f32 %v7645, 0.0
      %v7660 = vmax.f32 %v7646, 0.0
      %v7661 = vmax.f32 %v7647, 0.0
      %v7662 = vmax.f32 %v7648, 0.0
      %v7663 = vmax.f32 %v7649, 0.0
      %v7664 = vmax.f32 %v7650, 0.0
      %v7665 = vmax.f32 %v7651, 0.0
      %v7666 = vmax.f32 %v7652, 0.0
      %v7667 = vpack.c.bf16 %v7654, %v7653
      %v7668 = vpack.c.bf16 %v7656, %v7655
      %v7669 = vpack.c.bf16 %v7658, %v7657
      %v7670 = vpack.c.bf16 %v7660, %v7659
      %v7671 = vpack.c.bf16 %v7662, %v7661
      %v7672 = vpack.c.bf16 %v7664, %v7663
      %v7673 = vpack.c.bf16 %v7666, %v7665
      %v7674 = vld [vmem:[%s5] sm:$0xf]
      %v7675 = vld [vmem:[%s5 + $0x4] sm:$0xf]
      %v7676 = vld [vmem:[%s5 + $0x8] sm:$0xf]
      %v7677 = vld [vmem:[%s5 + $0xc] sm:$0xf]
      %v7678 = vld [vmem:[%s5 + $0x10] sm:$0xf]
      %v7679 = vld [vmem:[%s5 + $0x14] sm:$0xf]
      %v7680 = vld [vmem:[%s5 + $0x18] sm:$0xf]
      %v7681 = vld [vmem:[%s5 + $0x1c] sm:$0xf]
      %s7682 = scalar_lea.vmem %s5, 32
      %v7683 = vld [vmem:[%s7682] sm:$0xf]
      %v7684 = vld [vmem:[%s7682 + $0x4] sm:$0xf]
      %v7685 = vld [vmem:[%s7682 + $0x8] sm:$0xf]
      %v7686 = vld [vmem:[%s7682 + $0xc] sm:$0xf]
      %v7687 = vld [vmem:[%s7682 + $0x10] sm:$0xf]
      %v7688 = vld [vmem:[%s7682 + $0x14] sm:$0xf]
      %v7689 = vld [vmem:[%s7682 + $0x18] sm:$0xf]
      %v7690 = vld [vmem:[%s7682 + $0x1c] sm:$0xf]
      %v7692 = vshrl.u32 %v7667, 16
      %v7694 = vshll.u32 %v7667, 16
      %v7696 = vrot.slane %v7694, 1
      %v7697 = vor.u32 %v7692, %v7696
      %v7699 = vshll.u32 %v7668, 16
      %v7701 = vrot.slane %v7699, 1
      %v7702 = vsel %vm674, %v7697, %v7701
      %v7703 = vshrl.u32 %v7668, 16
      %v7705 = vor.u32 %v7703, %v7701
      %v7707 = vshll.u32 %v7669, 16
      %v7709 = vrot.slane %v7707, 1
      %v7710 = vsel %vm674, %v7705, %v7709
      %v7711 = vshrl.u32 %v7669, 16
      %v7713 = vor.u32 %v7711, %v7709
      %v7715 = vshll.u32 %v7670, 16
      %v7717 = vrot.slane %v7715, 1
      %v7718 = vsel %vm674, %v7713, %v7717
      %v7719 = vshrl.u32 %v7670, 16
      %v7721 = vor.u32 %v7719, %v7717
      %v7723 = vshll.u32 %v7671, 16
      %v7725 = vrot.slane %v7723, 1
      %v7726 = vsel %vm674, %v7721, %v7725
      %v7727 = vshrl.u32 %v7671, 16
      %v7729 = vor.u32 %v7727, %v7725
      %v7731 = vshll.u32 %v7672, 16
      %v7733 = vrot.slane %v7731, 1
      %v7734 = vsel %vm674, %v7729, %v7733
      %v7735 = vshrl.u32 %v7672, 16
      %v7737 = vor.u32 %v7735, %v7733
      %v7739 = vshll.u32 %v7673, 16
      %v7741 = vrot.slane %v7739, 1
      %v7742 = vsel %vm674, %v7737, %v7741
      %v7743 = vshrl.u32 %v7673, 16
      %v7745 = vor.u32 %v7743, %v7741
      %v7754 = vunpack.c.l.b16 %v7683
      %v7755 = vunpack.c.l.b16 %v7684
      %v7756 = vunpack.c.l.b16 %v7685
      %v7757 = vunpack.c.l.b16 %v7686
      %v7758 = vunpack.c.l.b16 %v7687
      %v7759 = vunpack.c.l.b16 %v7688
      %v7760 = vunpack.c.l.b16 %v7689
      %v7761 = vunpack.c.l.b16 %v7690
      %v7762 = vpack.c.b16 %v7755, %v7754
      %v7763 = vpack.c.b16 %v7757, %v7756
      %v7764 = vpack.c.b16 %v7759, %v7758
      %v7765 = vpack.c.b16 %v7761, %v7760
      %v7771 = vsel %vm1196, %v7702, 0
      %v7774 = vsel %vm1196, %v7710, 0
      %v7777 = vsel %vm1196, %v7718, 0
      %v7780 = vsel %vm1196, %v7726, 0
      %v7783 = vsel %vm1196, %v7734, 0
      %v7786 = vsel %vm1196, %v7742, 0
      %v7789 = vsel %vm1196, %v7745, 0
      %7791 = vmatprep.subr.bf16.mxu0 0
      %7792 = vmatpush1.bf16.msra.mxu0 0
      %7793 = vmatprep.subr.bf16.mxu0 0
      %7794 = vmatpush1.bf16.msra.mxu0 0
      %7795 = vmatprep.subr.bf16.mxu0 0
      %7796 = vmatpush1.bf16.msra.mxu0 0
      %7797 = vmatprep.subr.bf16.mxu0 0
      %7798 = vmatpush1.bf16.msra.mxu0 0
      %7799 = vmatprep.subr.bf16.mxu0 0
      %7800 = vmatpush1.bf16.msra.mxu0 %v7765
      %7801 = vmatprep.subr.bf16.mxu0 0
      %7802 = vmatpush1.bf16.msra.mxu0 %v7764
      %7803 = vmatprep.subr.bf16.mxu0 0
      %7804 = vmatpush1.bf16.msra.mxu0 %v7763
      %7805 = vmatprep.subr.bf16.mxu0 0
      %7806 = vmatpush1.bf16.msra.mxu0 %v7762
      %7807 = vmatprep.subr.bf16.mxu0 0
      %7808 = vmatpush2.bf16.msra.mxu0 0
      %7809 = vmatprep.subr.bf16.mxu0 0
      %7810 = vmatpush2.bf16.msra.mxu0 0
      %7811 = vmatprep.subr.bf16.mxu0 0
      %7812 = vmatpush2.bf16.msra.mxu0 0
      %7813 = vmatprep.subr.bf16.mxu0 0
      %7814 = vmatpush2.bf16.msra.mxu0 0
      %7815 = vmatprep.subr.bf16.mxu0 0
      %7816 = vmatpush2.bf16.msra.mxu0 0
      %7817 = vmatprep.subr.bf16.mxu0 0
      %7818 = vmatpush2.bf16.msra.mxu0 0
      %7819 = vmatprep.subr.bf16.mxu0 0
      %7820 = vmatpush2.bf16.msra.mxu0 0
      %7821 = vmatprep.subr.bf16.mxu0 0
      %7822 = vmatpush2.bf16.msra.mxu0 0
      %7823 = vmatprep.mubr.bf16.mxu0 0
      %7824 = vmatmul.mubr.bf16.gmra.mxu0 %v7771
      %v7825 = vpop.f32.mrf.mxu0
      %v7826 = vadd.f32 0.0, %v7825
      %v7827 = vpop.f32.mrf.mxu0
      %v7828 = vpop.f32.mrf.mxu0
      %v7829 = vadd.f32 0.0, %v7828
      %v7830 = vpop.f32.mrf.mxu0
      %7831 = vmatprep.mubr.bf16.mxu0 0
      %7832 = vmatmul.mubr.bf16.gmra.mxu0 %v7774
      %v7833 = vpop.f32.mrf.mxu0
      %v7834 = vadd.f32 0.0, %v7833
      %v7835 = vpop.f32.mrf.mxu0
      %v7836 = vpop.f32.mrf.mxu0
      %v7837 = vadd.f32 0.0, %v7836
      %v7838 = vpop.f32.mrf.mxu0
      %7839 = vmatprep.mubr.bf16.mxu0 0
      %7840 = vmatmul.mubr.bf16.gmra.mxu0 %v7777
      %v7841 = vpop.f32.mrf.mxu0
      %v7842 = vadd.f32 0.0, %v7841
      %v7843 = vpop.f32.mrf.mxu0
      %v7844 = vpop.f32.mrf.mxu0
      %v7845 = vadd.f32 0.0, %v7844
      %v7846 = vpop.f32.mrf.mxu0
      %7847 = vmatprep.mubr.bf16.mxu0 0
      %7848 = vmatmul.mubr.bf16.gmra.mxu0 %v7780
      %v7849 = vpop.f32.mrf.mxu0
      %v7850 = vadd.f32 0.0, %v7849
      %v7851 = vpop.f32.mrf.mxu0
      %v7852 = vpop.f32.mrf.mxu0
      %v7853 = vadd.f32 0.0, %v7852
      %v7854 = vpop.f32.mrf.mxu0
      %7855 = vmatprep.mubr.bf16.mxu0 0
      %7856 = vmatmul.mubr.bf16.gmra.mxu0 %v7783
      %v7857 = vpop.f32.mrf.mxu0
      %v7858 = vadd.f32 0.0, %v7857
      %v7859 = vpop.f32.mrf.mxu0
      %v7860 = vpop.f32.mrf.mxu0
      %v7861 = vadd.f32 0.0, %v7860
      %v7862 = vpop.f32.mrf.mxu0
      %7863 = vmatprep.mubr.bf16.mxu0 0
      %7864 = vmatmul.mubr.bf16.gmra.mxu0 %v7786
      %v7865 = vpop.f32.mrf.mxu0
      %v7866 = vadd.f32 0.0, %v7865
      %v7867 = vpop.f32.mrf.mxu0
      %v7868 = vpop.f32.mrf.mxu0
      %v7869 = vadd.f32 0.0, %v7868
      %v7870 = vpop.f32.mrf.mxu0
      %7871 = vmatprep.mubr.bf16.mxu0 0
      %7872 = vmatmul.mubr.bf16.gmra.mxu0 %v7789
      %v7873 = vpop.f32.mrf.mxu0
      %v7874 = vadd.f32 0.0, %v7873
      %v7875 = vpop.f32.mrf.mxu0
      %v7876 = vpop.f32.mrf.mxu0
      %v7877 = vadd.f32 0.0, %v7876
      %v7878 = vpop.f32.mrf.mxu0
      %7879 = vdwg.mxu0
      %v7888 = vunpack.c.l.b16 %v7674
      %v7889 = vunpack.c.l.b16 %v7675
      %v7890 = vunpack.c.l.b16 %v7676
      %v7891 = vunpack.c.l.b16 %v7677
      %v7892 = vunpack.c.l.b16 %v7678
      %v7893 = vunpack.c.l.b16 %v7679
      %v7894 = vunpack.c.l.b16 %v7680
      %v7895 = vunpack.c.l.b16 %v7681
      %v7896 = vpack.c.b16 %v7889, %v7888
      %v7897 = vpack.c.b16 %v7891, %v7890
      %v7898 = vpack.c.b16 %v7893, %v7892
      %v7899 = vpack.c.b16 %v7895, %v7894
      %v7904 = vsel %vm1196, %v7667, 0
      %v7906 = vsel %vm1196, %v7668, 0
      %v7908 = vsel %vm1196, %v7669, 0
      %v7910 = vsel %vm1196, %v7670, 0
      %v7912 = vsel %vm1196, %v7671, 0
      %v7914 = vsel %vm1196, %v7672, 0
      %v7916 = vsel %vm1196, %v7673, 0
      %7918 = vmatprep.subr.bf16.mxu0 0
      %7919 = vmatpush1.bf16.msra.mxu0 0
      %7920 = vmatprep.subr.bf16.mxu0 0
      %7921 = vmatpush1.bf16.msra.mxu0 0
      %7922 = vmatprep.subr.bf16.mxu0 0
      %7923 = vmatpush1.bf16.msra.mxu0 0
      %7924 = vmatprep.subr.bf16.mxu0 0
      %7925 = vmatpush1.bf16.msra.mxu0 0
      %7926 = vmatprep.subr.bf16.mxu0 0
      %7927 = vmatpush1.bf16.msra.mxu0 %v7899
      %7928 = vmatprep.subr.bf16.mxu0 0
      %7929 = vmatpush1.bf16.msra.mxu0 %v7898
      %7930 = vmatprep.subr.bf16.mxu0 0
      %7931 = vmatpush1.bf16.msra.mxu0 %v7897
      %7932 = vmatprep.subr.bf16.mxu0 0
      %7933 = vmatpush1.bf16.msra.mxu0 %v7896
      %7934 = vmatprep.subr.bf16.mxu0 0
      %7935 = vmatpush2.bf16.msra.mxu0 0
      %7936 = vmatprep.subr.bf16.mxu0 0
      %7937 = vmatpush2.bf16.msra.mxu0 0
      %7938 = vmatprep.subr.bf16.mxu0 0
      %7939 = vmatpush2.bf16.msra.mxu0 0
      %7940 = vmatprep.subr.bf16.mxu0 0
      %7941 = vmatpush2.bf16.msra.mxu0 0
      %7942 = vmatprep.subr.bf16.mxu0 0
      %7943 = vmatpush2.bf16.msra.mxu0 0
      %7944 = vmatprep.subr.bf16.mxu0 0
      %7945 = vmatpush2.bf16.msra.mxu0 0
      %7946 = vmatprep.subr.bf16.mxu0 0
      %7947 = vmatpush2.bf16.msra.mxu0 0
      %7948 = vmatprep.subr.bf16.mxu0 0
      %7949 = vmatpush2.bf16.msra.mxu0 0
      %7950 = vmatprep.mubr.bf16.mxu0 0
      %7951 = vmatmul.mubr.bf16.gmra.mxu0 %v7904
      %v7952 = vpop.f32.mrf.mxu0
      %v7953 = vadd.f32 %v7826, %v7952
      %v7954 = vpop.f32.mrf.mxu0
      %v7955 = vpop.f32.mrf.mxu0
      %v7956 = vadd.f32 %v7829, %v7955
      %v7957 = vpop.f32.mrf.mxu0
      %7958 = vmatprep.mubr.bf16.mxu0 0
      %7959 = vmatmul.mubr.bf16.gmra.mxu0 %v7906
      %v7960 = vpop.f32.mrf.mxu0
      %v7961 = vadd.f32 %v7834, %v7960
      %v7962 = vpop.f32.mrf.mxu0
      %v7963 = vpop.f32.mrf.mxu0
      %v7964 = vadd.f32 %v7837, %v7963
      %v7965 = vpop.f32.mrf.mxu0
      %7966 = vmatprep.mubr.bf16.mxu0 0
      %7967 = vmatmul.mubr.bf16.gmra.mxu0 %v7908
      %v7968 = vpop.f32.mrf.mxu0
      %v7969 = vadd.f32 %v7842, %v7968
      %v7970 = vpop.f32.mrf.mxu0
      %v7971 = vpop.f32.mrf.mxu0
      %v7972 = vadd.f32 %v7845, %v7971
      %v7973 = vpop.f32.mrf.mxu0
      %7974 = vmatprep.mubr.bf16.mxu0 0
      %7975 = vmatmul.mubr.bf16.gmra.mxu0 %v7910
      %v7976 = vpop.f32.mrf.mxu0
      %v7977 = vadd.f32 %v7850, %v7976
      %v7978 = vpop.f32.mrf.mxu0
      %v7979 = vpop.f32.mrf.mxu0
      %v7980 = vadd.f32 %v7853, %v7979
      %v7981 = vpop.f32.mrf.mxu0
      %7982 = vmatprep.mubr.bf16.mxu0 0
      %7983 = vmatmul.mubr.bf16.gmra.mxu0 %v7912
      %v7984 = vpop.f32.mrf.mxu0
      %v7985 = vadd.f32 %v7858, %v7984
      %v7986 = vpop.f32.mrf.mxu0
      %v7987 = vpop.f32.mrf.mxu0
      %v7988 = vadd.f32 %v7861, %v7987
      %v7989 = vpop.f32.mrf.mxu0
      %7990 = vmatprep.mubr.bf16.mxu0 0
      %7991 = vmatmul.mubr.bf16.gmra.mxu0 %v7914
      %v7992 = vpop.f32.mrf.mxu0
      %v7993 = vadd.f32 %v7866, %v7992
      %v7994 = vpop.f32.mrf.mxu0
      %v7995 = vpop.f32.mrf.mxu0
      %v7996 = vadd.f32 %v7869, %v7995
      %v7997 = vpop.f32.mrf.mxu0
      %7998 = vmatprep.mubr.bf16.mxu0 0
      %7999 = vmatmul.mubr.bf16.gmra.mxu0 %v7916
      %v8000 = vpop.f32.mrf.mxu0
      %v8001 = vadd.f32 %v7874, %v8000
      %v8002 = vpop.f32.mrf.mxu0
      %v8003 = vpop.f32.mrf.mxu0
      %v8004 = vadd.f32 %v7877, %v8003
      %v8005 = vpop.f32.mrf.mxu0
      %8006 = vdwg.mxu0
      %s8007 = scalar_lea.vmem %s5, 64
      %v8008 = vld [vmem:[%s8007] sm:$0xf]
      %v8009 = vld [vmem:[%s8007 + $0x4] sm:$0xf]
      %v8010 = vld [vmem:[%s8007 + $0x8] sm:$0xf]
      %v8011 = vld [vmem:[%s8007 + $0xc] sm:$0xf]
      %v8012 = vld [vmem:[%s8007 + $0x10] sm:$0xf]
      %v8013 = vld [vmem:[%s8007 + $0x14] sm:$0xf]
      %v8014 = vld [vmem:[%s8007 + $0x18] sm:$0xf]
      %v8015 = vld [vmem:[%s8007 + $0x1c] sm:$0xf]
      %v8023 = vrot.slane %v7667, 1
      %v8024 = vrot.slane %v7668, 1
      %v8025 = vsel %vm5878, %v8023, %v8024
      %v8026 = vrot.slane %v7669, 1
      %v8027 = vsel %vm5878, %v8024, %v8026
      %v8028 = vrot.slane %v7670, 1
      %v8029 = vsel %vm5878, %v8026, %v8028
      %v8030 = vrot.slane %v7671, 1
      %v8031 = vsel %vm5878, %v8028, %v8030
      %v8032 = vrot.slane %v7672, 1
      %v8033 = vsel %vm5878, %v8030, %v8032
      %v8034 = vrot.slane %v7673, 1
      %v8035 = vsel %vm5878, %v8032, %v8034
      %v8044 = vunpack.c.l.b16 %v8008
      %v8045 = vunpack.c.l.b16 %v8009
      %v8046 = vunpack.c.l.b16 %v8010
      %v8047 = vunpack.c.l.b16 %v8011
      %v8048 = vunpack.c.l.b16 %v8012
      %v8049 = vunpack.c.l.b16 %v8013
      %v8050 = vunpack.c.l.b16 %v8014
      %v8051 = vunpack.c.l.b16 %v8015
      %v8052 = vpack.c.b16 %v8045, %v8044
      %v8053 = vpack.c.b16 %v8047, %v8046
      %v8054 = vpack.c.b16 %v8049, %v8048
      %v8055 = vpack.c.b16 %v8051, %v8050
      %v8061 = vsel %vm1196, %v8025, 0
      %v8064 = vsel %vm1196, %v8027, 0
      %v8067 = vsel %vm1196, %v8029, 0
      %v8070 = vsel %vm1196, %v8031, 0
      %v8073 = vsel %vm1196, %v8033, 0
      %v8076 = vsel %vm1196, %v8035, 0
      %v8079 = vsel %vm1196, %v8034, 0
      %8081 = vmatprep.subr.bf16.mxu0 0
      %8082 = vmatpush1.bf16.msra.mxu0 0
      %8083 = vmatprep.subr.bf16.mxu0 0
      %8084 = vmatpush1.bf16.msra.mxu0 0
      %8085 = vmatprep.subr.bf16.mxu0 0
      %8086 = vmatpush1.bf16.msra.mxu0 0
      %8087 = vmatprep.subr.bf16.mxu0 0
      %8088 = vmatpush1.bf16.msra.mxu0 0
      %8089 = vmatprep.subr.bf16.mxu0 0
      %8090 = vmatpush1.bf16.msra.mxu0 %v8055
      %8091 = vmatprep.subr.bf16.mxu0 0
      %8092 = vmatpush1.bf16.msra.mxu0 %v8054
      %8093 = vmatprep.subr.bf16.mxu0 0
      %8094 = vmatpush1.bf16.msra.mxu0 %v8053
      %8095 = vmatprep.subr.bf16.mxu0 0
      %8096 = vmatpush1.bf16.msra.mxu0 %v8052
      %8097 = vmatprep.subr.bf16.mxu0 0
      %8098 = vmatpush2.bf16.msra.mxu0 0
      %8099 = vmatprep.subr.bf16.mxu0 0
      %8100 = vmatpush2.bf16.msra.mxu0 0
      %8101 = vmatprep.subr.bf16.mxu0 0
      %8102 = vmatpush2.bf16.msra.mxu0 0
      %8103 = vmatprep.subr.bf16.mxu0 0
      %8104 = vmatpush2.bf16.msra.mxu0 0
      %8105 = vmatprep.subr.bf16.mxu0 0
      %8106 = vmatpush2.bf16.msra.mxu0 0
      %8107 = vmatprep.subr.bf16.mxu0 0
      %8108 = vmatpush2.bf16.msra.mxu0 0
      %8109 = vmatprep.subr.bf16.mxu0 0
      %8110 = vmatpush2.bf16.msra.mxu0 0
      %8111 = vmatprep.subr.bf16.mxu0 0
      %8112 = vmatpush2.bf16.msra.mxu0 0
      %8113 = vmatprep.mubr.bf16.mxu0 0
      %8114 = vmatmul.mubr.bf16.gmra.mxu0 %v8061
      %v8115 = vpop.f32.mrf.mxu0
      %v8116 = vadd.f32 0.0, %v8115
      %v8117 = vpop.f32.mrf.mxu0
      %v8118 = vpop.f32.mrf.mxu0
      %v8119 = vadd.f32 0.0, %v8118
      %v8120 = vpop.f32.mrf.mxu0
      %8121 = vmatprep.mubr.bf16.mxu0 0
      %8122 = vmatmul.mubr.bf16.gmra.mxu0 %v8064
      %v8123 = vpop.f32.mrf.mxu0
      %v8124 = vadd.f32 0.0, %v8123
      %v8125 = vpop.f32.mrf.mxu0
      %v8126 = vpop.f32.mrf.mxu0
      %v8127 = vadd.f32 0.0, %v8126
      %v8128 = vpop.f32.mrf.mxu0
      %8129 = vmatprep.mubr.bf16.mxu0 0
      %8130 = vmatmul.mubr.bf16.gmra.mxu0 %v8067
      %v8131 = vpop.f32.mrf.mxu0
      %v8132 = vadd.f32 0.0, %v8131
      %v8133 = vpop.f32.mrf.mxu0
      %v8134 = vpop.f32.mrf.mxu0
      %v8135 = vadd.f32 0.0, %v8134
      %v8136 = vpop.f32.mrf.mxu0
      %8137 = vmatprep.mubr.bf16.mxu0 0
      %8138 = vmatmul.mubr.bf16.gmra.mxu0 %v8070
      %v8139 = vpop.f32.mrf.mxu0
      %v8140 = vadd.f32 0.0, %v8139
      %v8141 = vpop.f32.mrf.mxu0
      %v8142 = vpop.f32.mrf.mxu0
      %v8143 = vadd.f32 0.0, %v8142
      %v8144 = vpop.f32.mrf.mxu0
      %8145 = vmatprep.mubr.bf16.mxu0 0
      %8146 = vmatmul.mubr.bf16.gmra.mxu0 %v8073
      %v8147 = vpop.f32.mrf.mxu0
      %v8148 = vadd.f32 0.0, %v8147
      %v8149 = vpop.f32.mrf.mxu0
      %v8150 = vpop.f32.mrf.mxu0
      %v8151 = vadd.f32 0.0, %v8150
      %v8152 = vpop.f32.mrf.mxu0
      %8153 = vmatprep.mubr.bf16.mxu0 0
      %8154 = vmatmul.mubr.bf16.gmra.mxu0 %v8076
      %v8155 = vpop.f32.mrf.mxu0
      %v8156 = vadd.f32 0.0, %v8155
      %v8157 = vpop.f32.mrf.mxu0
      %v8158 = vpop.f32.mrf.mxu0
      %v8159 = vadd.f32 0.0, %v8158
      %v8160 = vpop.f32.mrf.mxu0
      %8161 = vmatprep.mubr.bf16.mxu0 0
      %8162 = vmatmul.mubr.bf16.gmra.mxu0 %v8079
      %v8163 = vpop.f32.mrf.mxu0
      %v8164 = vadd.f32 0.0, %v8163
      %v8165 = vpop.f32.mrf.mxu0
      %v8166 = vpop.f32.mrf.mxu0
      %v8167 = vadd.f32 0.0, %v8166
      %v8168 = vpop.f32.mrf.mxu0
      %8169 = vdwg.mxu0
      %v8170 = vadd.f32 %v7953, %v8116
      %v8171 = vadd.f32 %v7956, %v8119
      %v8172 = vadd.f32 %v7961, %v8124
      %v8173 = vadd.f32 %v7964, %v8127
      %v8174 = vadd.f32 %v7969, %v8132
      %v8175 = vadd.f32 %v7972, %v8135
      %v8176 = vadd.f32 %v7977, %v8140
      %v8177 = vadd.f32 %v7980, %v8143
      %v8178 = vadd.f32 %v7985, %v8148
      %v8179 = vadd.f32 %v7988, %v8151
      %v8180 = vadd.f32 %v7993, %v8156
      %v8181 = vadd.f32 %v7996, %v8159
      %v8182 = vadd.f32 %v8001, %v8164
      %v8183 = vadd.f32 %v8004, %v8167
      %s8184 = scalar_lea.vmem %s5, 96
      %v8185 = vld [vmem:[%s8184] sm:$0xf]
      %v8186 = vld [vmem:[%s8184 + $0x4] sm:$0xf]
      %v8187 = vld [vmem:[%s8184 + $0x8] sm:$0xf]
      %v8188 = vld [vmem:[%s8184 + $0xc] sm:$0xf]
      %v8189 = vld [vmem:[%s8184 + $0x10] sm:$0xf]
      %v8190 = vld [vmem:[%s8184 + $0x14] sm:$0xf]
      %v8191 = vld [vmem:[%s8184 + $0x18] sm:$0xf]
      %v8192 = vld [vmem:[%s8184 + $0x1c] sm:$0xf]
      %vm8193 = vsmask.f32 6400
      %v8194 = vrot.slane %v7692, 1
      %v8195 = vrot.slane %v7694, 2
      %v8196 = vor.u32 %v8194, %v8195
      %v8197 = vrot.slane %v7703, 1
      %v8198 = vrot.slane %v7699, 2
      %v8199 = vor.u32 %v8197, %v8198
      %v8200 = vsel %vm8193, %v8196, %v8199
      %v8201 = vrot.slane %v7711, 1
      %v8202 = vrot.slane %v7707, 2
      %v8203 = vor.u32 %v8201, %v8202
      %v8204 = vsel %vm8193, %v8199, %v8203
      %v8205 = vrot.slane %v7719, 1
      %v8206 = vrot.slane %v7715, 2
      %v8207 = vor.u32 %v8205, %v8206
      %v8208 = vsel %vm8193, %v8203, %v8207
      %v8209 = vrot.slane %v7727, 1
      %v8210 = vrot.slane %v7723, 2
      %v8211 = vor.u32 %v8209, %v8210
      %v8212 = vsel %vm8193, %v8207, %v8211
      %v8213 = vrot.slane %v7735, 1
      %v8214 = vrot.slane %v7731, 2
      %v8215 = vor.u32 %v8213, %v8214
      %v8216 = vsel %vm8193, %v8211, %v8215
      %v8217 = vrot.slane %v7743, 1
      %v8218 = vrot.slane %v7739, 2
      %v8219 = vor.u32 %v8217, %v8218
      %v8220 = vsel %vm8193, %v8215, %v8219
      %v8229 = vunpack.c.l.b16 %v8185
      %v8230 = vunpack.c.l.b16 %v8186
      %v8231 = vunpack.c.l.b16 %v8187
      %v8232 = vunpack.c.l.b16 %v8188
      %v8233 = vunpack.c.l.b16 %v8189
      %v8234 = vunpack.c.l.b16 %v8190
      %v8235 = vunpack.c.l.b16 %v8191
      %v8236 = vunpack.c.l.b16 %v8192
      %v8237 = vpack.c.b16 %v8230, %v8229
      %v8238 = vpack.c.b16 %v8232, %v8231
      %v8239 = vpack.c.b16 %v8234, %v8233
      %v8240 = vpack.c.b16 %v8236, %v8235
      %v8246 = vsel %vm1196, %v8200, 0
      %v8249 = vsel %vm1196, %v8204, 0
      %v8252 = vsel %vm1196, %v8208, 0
      %v8255 = vsel %vm1196, %v8212, 0
      %v8258 = vsel %vm1196, %v8216, 0
      %v8261 = vsel %vm1196, %v8220, 0
      %v8264 = vsel %vm1196, %v8219, 0
      %8266 = vmatprep.subr.bf16.mxu0 0
      %8267 = vmatpush1.bf16.msra.mxu0 0
      %8268 = vmatprep.subr.bf16.mxu0 0
      %8269 = vmatpush1.bf16.msra.mxu0 0
      %8270 = vmatprep.subr.bf16.mxu0 0
      %8271 = vmatpush1.bf16.msra.mxu0 0
      %8272 = vmatprep.subr.bf16.mxu0 0
      %8273 = vmatpush1.bf16.msra.mxu0 0
      %8274 = vmatprep.subr.bf16.mxu0 0
      %8275 = vmatpush1.bf16.msra.mxu0 %v8240
      %8276 = vmatprep.subr.bf16.mxu0 0
      %8277 = vmatpush1.bf16.msra.mxu0 %v8239
      %8278 = vmatprep.subr.bf16.mxu0 0
      %8279 = vmatpush1.bf16.msra.mxu0 %v8238
      %8280 = vmatprep.subr.bf16.mxu0 0
      %8281 = vmatpush1.bf16.msra.mxu0 %v8237
      %8282 = vmatprep.subr.bf16.mxu0 0
      %8283 = vmatpush2.bf16.msra.mxu0 0
      %8284 = vmatprep.subr.bf16.mxu0 0
      %8285 = vmatpush2.bf16.msra.mxu0 0
      %8286 = vmatprep.subr.bf16.mxu0 0
      %8287 = vmatpush2.bf16.msra.mxu0 0
      %8288 = vmatprep.subr.bf16.mxu0 0
      %8289 = vmatpush2.bf16.msra.mxu0 0
      %8290 = vmatprep.subr.bf16.mxu0 0
      %8291 = vmatpush2.bf16.msra.mxu0 0
      %8292 = vmatprep.subr.bf16.mxu0 0
      %8293 = vmatpush2.bf16.msra.mxu0 0
      %8294 = vmatprep.subr.bf16.mxu0 0
      %8295 = vmatpush2.bf16.msra.mxu0 0
      %8296 = vmatprep.subr.bf16.mxu0 0
      %8297 = vmatpush2.bf16.msra.mxu0 0
      %8298 = vmatprep.mubr.bf16.mxu0 0
      %8299 = vmatmul.mubr.bf16.gmra.mxu0 %v8246
      %v8300 = vpop.f32.mrf.mxu0
      %v8301 = vadd.f32 0.0, %v8300
      %v8302 = vpop.f32.mrf.mxu0
      %v8303 = vpop.f32.mrf.mxu0
      %v8304 = vadd.f32 0.0, %v8303
      %v8305 = vpop.f32.mrf.mxu0
      %8306 = vmatprep.mubr.bf16.mxu0 0
      %8307 = vmatmul.mubr.bf16.gmra.mxu0 %v8249
      %v8308 = vpop.f32.mrf.mxu0
      %v8309 = vadd.f32 0.0, %v8308
      %v8310 = vpop.f32.mrf.mxu0
      %v8311 = vpop.f32.mrf.mxu0
      %v8312 = vadd.f32 0.0, %v8311
      %v8313 = vpop.f32.mrf.mxu0
      %8314 = vmatprep.mubr.bf16.mxu0 0
      %8315 = vmatmul.mubr.bf16.gmra.mxu0 %v8252
      %v8316 = vpop.f32.mrf.mxu0
      %v8317 = vadd.f32 0.0, %v8316
      %v8318 = vpop.f32.mrf.mxu0
      %v8319 = vpop.f32.mrf.mxu0
      %v8320 = vadd.f32 0.0, %v8319
      %v8321 = vpop.f32.mrf.mxu0
      %8322 = vmatprep.mubr.bf16.mxu0 0
      %8323 = vmatmul.mubr.bf16.gmra.mxu0 %v8255
      %v8324 = vpop.f32.mrf.mxu0
      %v8325 = vadd.f32 0.0, %v8324
      %v8326 = vpop.f32.mrf.mxu0
      %v8327 = vpop.f32.mrf.mxu0
      %v8328 = vadd.f32 0.0, %v8327
      %v8329 = vpop.f32.mrf.mxu0
      %8330 = vmatprep.mubr.bf16.mxu0 0
      %8331 = vmatmul.mubr.bf16.gmra.mxu0 %v8258
      %v8332 = vpop.f32.mrf.mxu0
      %v8333 = vadd.f32 0.0, %v8332
      %v8334 = vpop.f32.mrf.mxu0
      %v8335 = vpop.f32.mrf.mxu0
      %v8336 = vadd.f32 0.0, %v8335
      %v8337 = vpop.f32.mrf.mxu0
      %8338 = vmatprep.mubr.bf16.mxu0 0
      %8339 = vmatmul.mubr.bf16.gmra.mxu0 %v8261
      %v8340 = vpop.f32.mrf.mxu0
      %v8341 = vadd.f32 0.0, %v8340
      %v8342 = vpop.f32.mrf.mxu0
      %v8343 = vpop.f32.mrf.mxu0
      %v8344 = vadd.f32 0.0, %v8343
      %v8345 = vpop.f32.mrf.mxu0
      %8346 = vmatprep.mubr.bf16.mxu0 0
      %8347 = vmatmul.mubr.bf16.gmra.mxu0 %v8264
      %v8348 = vpop.f32.mrf.mxu0
      %v8349 = vadd.f32 0.0, %v8348
      %v8350 = vpop.f32.mrf.mxu0
      %v8351 = vpop.f32.mrf.mxu0
      %v8352 = vadd.f32 0.0, %v8351
      %v8353 = vpop.f32.mrf.mxu0
      %8354 = vdwg.mxu0
      %v8355 = vadd.f32 %v8170, %v8301
      %v8356 = vadd.f32 %v8171, %v8304
      %v8357 = vadd.f32 %v8172, %v8309
      %v8358 = vadd.f32 %v8173, %v8312
      %v8359 = vadd.f32 %v8174, %v8317
      %v8360 = vadd.f32 %v8175, %v8320
      %v8361 = vadd.f32 %v8176, %v8325
      %v8362 = vadd.f32 %v8177, %v8328
      %v8363 = vadd.f32 %v8178, %v8333
      %v8364 = vadd.f32 %v8179, %v8336
      %v8365 = vadd.f32 %v8180, %v8341
      %v8366 = vadd.f32 %v8181, %v8344
      %v8367 = vadd.f32 %v8182, %v8349
      %v8368 = vadd.f32 %v8183, %v8352
      %v8369 = vld [vmem:[%s11] sm:$0xff]
      %v8370 = vld [vmem:[%s11 + $0x8] sm:$0xff]
      %v8371 = vld [vmem:[%s6] sm:$0x1]
      %v8373 = vlaneseq
      %v8374 = vshrl.u32 %v8373, 7
      %v8375 = vsub.s32 0, %v8374
      %v8376 = vrot.slane %v8371, %v8375
      %vm8378 = vcmask 867328
      %v8380 = vsel %vm8378, %v8369, 0
      %v8383 = vsel %vm8378, %v8370, 0
      %vm8385 = vcmask 1041408
      %v8387 = vsel %vm8385, %v8368, 0
      %8389 = vmatprep.subr.mxu0 0.0
      %8390 = vmatpush1.msra.mxu0 0.0
      %8391 = vmatprep.subr.mxu0 0.0
      %8392 = vmatpush1.msra.mxu0 0.0
      %8393 = vmatprep.subr.mxu0 0.0
      %8394 = vmatpush1.msra.mxu0 %v8387
      %8395 = vmatprep.subr.mxu0 0.0
      %8396 = vmatpush1.msra.mxu0 %v8367
      %8397 = vmatprep.subr.mxu0 0.0
      %8398 = vmatpush1.msra.mxu0 %v8366
      %8399 = vmatprep.subr.mxu0 0.0
      %8400 = vmatpush1.msra.mxu0 %v8365
      %8401 = vmatprep.subr.mxu0 0.0
      %8402 = vmatpush1.msra.mxu0 %v8364
      %8403 = vmatprep.subr.mxu0 0.0
      %8404 = vmatpush1.msra.mxu0 %v8363
      %8405 = vmatprep.subr.mxu0 0.0
      %8406 = vmatpush1.msra.mxu0 %v8362
      %8407 = vmatprep.subr.mxu0 0.0
      %8408 = vmatpush1.msra.mxu0 %v8361
      %8409 = vmatprep.subr.mxu0 0.0
      %8410 = vmatpush1.msra.mxu0 %v8360
      %8411 = vmatprep.subr.mxu0 0.0
      %8412 = vmatpush1.msra.mxu0 %v8359
      %8413 = vmatprep.subr.mxu0 0.0
      %8414 = vmatpush1.msra.mxu0 %v8358
      %8415 = vmatprep.subr.mxu0 0.0
      %8416 = vmatpush1.msra.mxu0 %v8357
      %8417 = vmatprep.subr.mxu0 0.0
      %8418 = vmatpush1.msra.mxu0 %v8356
      %8419 = vmatprep.subr.mxu0 0.0
      %8420 = vmatpush1.msra.mxu0 %v8355
      %8421 = vmatprep.subr.mxu0 0.0
      %8422 = vmatpush2.msra.mxu0 0.0
      %8423 = vmatprep.subr.mxu0 0.0
      %8424 = vmatpush2.msra.mxu0 0.0
      %8425 = vmatprep.subr.mxu0 0.0
      %8426 = vmatpush2.msra.mxu0 0.0
      %8427 = vmatprep.subr.mxu0 0.0
      %8428 = vmatpush2.msra.mxu0 0.0
      %8429 = vmatprep.subr.mxu0 0.0
      %8430 = vmatpush2.msra.mxu0 0.0
      %8431 = vmatprep.subr.mxu0 0.0
      %8432 = vmatpush2.msra.mxu0 0.0
      %8433 = vmatprep.subr.mxu0 0.0
      %8434 = vmatpush2.msra.mxu0 0.0
      %8435 = vmatprep.subr.mxu0 0.0
      %8436 = vmatpush2.msra.mxu0 0.0
      %8437 = vmatprep.subr.mxu0 0.0
      %8438 = vmatpush2.msra.mxu0 0.0
      %8439 = vmatprep.subr.mxu0 0.0
      %8440 = vmatpush2.msra.mxu0 0.0
      %8441 = vmatprep.subr.mxu0 0.0
      %8442 = vmatpush2.msra.mxu0 0.0
      %8443 = vmatprep.subr.mxu0 0.0
      %8444 = vmatpush2.msra.mxu0 0.0
      %8445 = vmatprep.subr.mxu0 0.0
      %8446 = vmatpush2.msra.mxu0 0.0
      %8447 = vmatprep.subr.mxu0 0.0
      %8448 = vmatpush2.msra.mxu0 0.0
      %8449 = vmatprep.subr.mxu0 0.0
      %8450 = vmatpush2.msra.mxu0 0.0
      %8451 = vmatprep.subr.mxu0 0.0
      %8452 = vmatpush2.msra.mxu0 0.0
      %8453 = vmatprep.mubr.f32.mxu0 0.0
      %8454 = vmatmul.mubr.f32.gmra.mxu0 %v8380
      %v8455 = vpop.f32.mrf.mxu0
      %v8456 = vadd.f32 %v8376, %v8455
      %v8457 = vpop.f32.mrf.mxu0
      %8458 = vmatprep.mubr.f32.mxu0 0.0
      %8459 = vmatmul.mubr.f32.gmra.mxu0 %v8383
      %v8460 = vpop.f32.mrf.mxu0
      %v8461 = vadd.f32 %v8376, %v8460
      %v8462 = vpop.f32.mrf.mxu0
      %8463 = vdwg.mxu0
      %v8464 = vmax.f32 %v8456, 0.0
      %v8465 = vmax.f32 %v8461, 0.0
      %v8466 = vpack.c.bf16 %v8465, %v8464
      %v8467 = vld [vmem:[%s7] sm:$0xf]
      %v8468 = vld [vmem:[%s7 + $0x4] sm:$0xf]
      %v8469 = vld [vmem:[%s7 + $0x8] sm:$0xf]
      %v8470 = vld [vmem:[%s7 + $0xc] sm:$0xf]
      %v8471 = vld [vmem:[%s7 + $0x10] sm:$0xf]
      %v8472 = vld [vmem:[%s7 + $0x14] sm:$0xf]
      %v8473 = vld [vmem:[%s7 + $0x18] sm:$0xf]
      %v8474 = vld [vmem:[%s7 + $0x1c] sm:$0xf]
      %v8475 = vld [vmem:[%s7 + $0x20] sm:$0xf]
      %v8476 = vld [vmem:[%s7 + $0x24] sm:$0xf]
      %v8477 = vld [vmem:[%s7 + $0x28] sm:$0xf]
      %v8478 = vld [vmem:[%s7 + $0x2c] sm:$0xf]
      %v8479 = vld [vmem:[%s7 + $0x30] sm:$0xf]
      %v8480 = vld [vmem:[%s7 + $0x34] sm:$0xf]
      %v8481 = vld [vmem:[%s7 + $0x38] sm:$0xf]
      %v8482 = vld [vmem:[%s8] sm:$0x1]
      %v8484 = vlaneseq
      %v8485 = vshrl.u32 %v8484, 7
      %v8486 = vsub.s32 0, %v8485
      %v8487 = vrot.slane %v8482, %v8486
      %v8504 = vunpack.c.l.b16 %v8467
      %v8505 = vunpack.c.l.b16 %v8468
      %v8506 = vunpack.c.l.b16 %v8469
      %v8507 = vunpack.c.l.b16 %v8470
      %v8508 = vunpack.c.l.b16 %v8471
      %v8509 = vunpack.c.l.b16 %v8472
      %v8510 = vunpack.c.l.b16 %v8473
      %v8511 = vunpack.c.l.b16 %v8474
      %v8512 = vunpack.c.l.b16 %v8475
      %v8513 = vunpack.c.l.b16 %v8476
      %v8514 = vunpack.c.l.b16 %v8477
      %v8515 = vunpack.c.l.b16 %v8478
      %v8516 = vunpack.c.l.b16 %v8479
      %v8517 = vunpack.c.l.b16 %v8480
      %v8518 = vunpack.c.l.b16 %v8481
      %v8519 = vpack.c.b16 %v8505, %v8504
      %v8520 = vpack.c.b16 %v8507, %v8506
      %v8521 = vpack.c.b16 %v8509, %v8508
      %v8522 = vpack.c.b16 %v8511, %v8510
      %v8523 = vpack.c.b16 %v8513, %v8512
      %v8524 = vpack.c.b16 %v8515, %v8514
      %v8525 = vpack.c.b16 %v8517, %v8516
      %v8526 = vpack.c.b16 %v8518, %v8518
      %vm8534 = vcmask 982016
      %v8536 = vsel %vm8534, %v8466, 0
      %vm8538 = vcmask 1043456
      %v8540 = vsel %vm8538, %v8526, 0
      %8542 = vmatprep.subr.bf16.mxu0 0
      %8543 = vmatpush1.bf16.msra.mxu0 %v8540
      %8544 = vmatprep.subr.bf16.mxu0 0
      %8545 = vmatpush1.bf16.msra.mxu0 %v8525
      %8546 = vmatprep.subr.bf16.mxu0 0
      %8547 = vmatpush1.bf16.msra.mxu0 %v8524
      %8548 = vmatprep.subr.bf16.mxu0 0
      %8549 = vmatpush1.bf16.msra.mxu0 %v8523
      %8550 = vmatprep.subr.bf16.mxu0 0
      %8551 = vmatpush1.bf16.msra.mxu0 %v8522
      %8552 = vmatprep.subr.bf16.mxu0 0
      %8553 = vmatpush1.bf16.msra.mxu0 %v8521
      %8554 = vmatprep.subr.bf16.mxu0 0
      %8555 = vmatpush1.bf16.msra.mxu0 %v8520
      %8556 = vmatprep.subr.bf16.mxu0 0
      %8557 = vmatpush1.bf16.msra.mxu0 %v8519
      %8558 = vmatprep.subr.bf16.mxu0 0
      %8559 = vmatpush2.bf16.msra.mxu0 0
      %8560 = vmatprep.subr.bf16.mxu0 0
      %8561 = vmatpush2.bf16.msra.mxu0 0
      %8562 = vmatprep.subr.bf16.mxu0 0
      %8563 = vmatpush2.bf16.msra.mxu0 0
      %8564 = vmatprep.subr.bf16.mxu0 0
      %8565 = vmatpush2.bf16.msra.mxu0 0
      %8566 = vmatprep.subr.bf16.mxu0 0
      %8567 = vmatpush2.bf16.msra.mxu0 0
      %8568 = vmatprep.subr.bf16.mxu0 0
      %8569 = vmatpush2.bf16.msra.mxu0 0
      %8570 = vmatprep.subr.bf16.mxu0 0
      %8571 = vmatpush2.bf16.msra.mxu0 0
      %8572 = vmatprep.subr.bf16.mxu0 0
      %8573 = vmatpush2.bf16.msra.mxu0 0
      %8574 = vmatprep.mubr.bf16.mxu0 0
      %8575 = vmatmul.mubr.bf16.gmra.mxu0 %v8536
      %v8576 = vpop.f32.mrf.mxu0
      %v8577 = vadd.f32 %v8487, %v8576
      %v8578 = vpop.f32.mrf.mxu0
      %v8579 = vpop.f32.mrf.mxu0
      %v8580 = vadd.f32 %v8487, %v8579
      %v8581 = vpop.f32.mrf.mxu0
      %8582 = vdwg.mxu0
      %v8583 = vmax.f32 %v8577, 0.0
      %v8584 = vmax.f32 %v8580, 0.0
      %v8585 = vpack.c.bf16 %v8584, %v8583
      %v8586 = vld [vmem:[%s9] sm:$0xf]
      %v8587 = vld [vmem:[%s9 + $0x4] sm:$0xf]
      %v8588 = vld [vmem:[%s9 + $0x8] sm:$0xf]
      %v8589 = vld [vmem:[%s9 + $0xc] sm:$0xf]
      %v8590 = vld [vmem:[%s9 + $0x10] sm:$0xf]
      %v8591 = vld [vmem:[%s9 + $0x14] sm:$0xf]
      %v8592 = vld [vmem:[%s9 + $0x18] sm:$0xf]
      %v8593 = vld [vmem:[%s9 + $0x1c] sm:$0xf]
      %v8594 = vld [vmem:[%s9 + $0x20] sm:$0xf]
      %v8595 = vld [vmem:[%s9 + $0x24] sm:$0xf]
      %v8596 = vld [vmem:[%s9 + $0x28] sm:$0x3]
      %v8597 = vld [vmem:[%s10] sm:$0x1]
      %v8599 = vlaneseq
      %v8600 = vshrl.u32 %v8599, 7
      %v8601 = vsub.s32 0, %v8600
      %v8602 = vrot.slane %v8597, %v8601
      %v8615 = vunpack.c.l.b16 %v8586
      %v8616 = vunpack.c.l.b16 %v8587
      %v8617 = vunpack.c.l.b16 %v8588
      %v8618 = vunpack.c.l.b16 %v8589
      %v8619 = vunpack.c.l.b16 %v8590
      %v8620 = vunpack.c.l.b16 %v8591
      %v8621 = vunpack.c.l.b16 %v8592
      %v8622 = vunpack.c.l.b16 %v8593
      %v8623 = vunpack.c.l.b16 %v8594
      %v8624 = vunpack.c.l.b16 %v8595
      %v8625 = vunpack.c.l.b16 %v8596
      %v8626 = vpack.c.b16 %v8616, %v8615
      %v8627 = vpack.c.b16 %v8618, %v8617
      %v8628 = vpack.c.b16 %v8620, %v8619
      %v8629 = vpack.c.b16 %v8622, %v8621
      %v8630 = vpack.c.b16 %v8624, %v8623
      %v8631 = vpack.c.b16 %v8625, %v8625
      %vm8637 = vcmask 687104
      %v8639 = vsel %vm8637, %v8585, 0
      %v8642 = vsel %vm8385, %v8631, 0
      %8644 = vmatprep.subr.bf16.mxu0 0
      %8645 = vmatpush1.bf16.msra.mxu0 0
      %8646 = vmatprep.subr.bf16.mxu0 0
      %8647 = vmatpush1.bf16.msra.mxu0 0
      %8648 = vmatprep.subr.bf16.mxu0 0
      %8649 = vmatpush1.bf16.msra.mxu0 %v8642
      %8650 = vmatprep.subr.bf16.mxu0 0
      %8651 = vmatpush1.bf16.msra.mxu0 %v8630
      %8652 = vmatprep.subr.bf16.mxu0 0
      %8653 = vmatpush1.bf16.msra.mxu0 %v8629
      %8654 = vmatprep.subr.bf16.mxu0 0
      %8655 = vmatpush1.bf16.msra.mxu0 %v8628
      %8656 = vmatprep.subr.bf16.mxu0 0
      %8657 = vmatpush1.bf16.msra.mxu0 %v8627
      %8658 = vmatprep.subr.bf16.mxu0 0
      %8659 = vmatpush1.bf16.msra.mxu0 %v8626
      %8660 = vmatprep.subr.bf16.mxu0 0
      %8661 = vmatpush2.bf16.msra.mxu0 0
      %8662 = vmatprep.subr.bf16.mxu0 0
      %8663 = vmatpush2.bf16.msra.mxu0 0
      %8664 = vmatprep.subr.bf16.mxu0 0
      %8665 = vmatpush2.bf16.msra.mxu0 0
      %8666 = vmatprep.subr.bf16.mxu0 0
      %8667 = vmatpush2.bf16.msra.mxu0 0
      %8668 = vmatprep.subr.bf16.mxu0 0
      %8669 = vmatpush2.bf16.msra.mxu0 0
      %8670 = vmatprep.subr.bf16.mxu0 0
      %8671 = vmatpush2.bf16.msra.mxu0 0
      %8672 = vmatprep.subr.bf16.mxu0 0
      %8673 = vmatpush2.bf16.msra.mxu0 0
      %8674 = vmatprep.subr.bf16.mxu0 0
      %8675 = vmatpush2.bf16.msra.mxu0 0
      %8676 = vmatprep.mubr.bf16.mxu0 0
      %8677 = vmatmul.mubr.bf16.gmra.mxu0 %v8639
      %v8678 = vpop.f32.mrf.mxu0
      %v8679 = vadd.f32 %v8602, %v8678
      %v8680 = vpop.f32.mrf.mxu0
      %v8681 = vpop.f32.mrf.mxu0
      %v8682 = vadd.f32 %v8602, %v8681
      %v8683 = vpop.f32.mrf.mxu0
      %8684 = vdwg.mxu0
      %vm8685 = vcmask 97280
      %8686 = vst.msk [vmem:[%s418] sm:$0xff] %vm8685, %v8679
      %8687 = vst.msk [vmem:[%s418 + $0x8] sm:$0xff] %vm8685, %v8682
      %s8688 = smul.u32 2, %s23
      %p8689 = scmp.lt.s32.totalorder %s8688, 3
      %s8690 = scalar_select %p8689, %s8688, 3
      %s8691 = smul.addr %s8690, 8
      %s8692 = scalar_lea.vmem %s12, %s8691
      // Predicated region
      $region69: #{forward.1} parent=67 // pred_check
        %p8693 = pneg %p298
      $region70: #{forward.1} parent=67 // pred_check_branch
        %8695 = sbr.rel (%p8693) target = $region72
      $region71: #{forward.1} parent=67 // pred_region
        %s8696 = smul.u32 2, %s23
      $region72: #{forward.1} parent=67 // pred_fallthru
        _
    $region68: #{forward.1} parent=5 // pred_fallthru
      _
    %p8697 = scmp.le.s32.totalorder 2, %s18
    // Predicated region
    $region73: #{forward.1} parent=5 // pred_check
      %p8698 = pneg %p8697
    $region74: #{forward.1} parent=5 // pred_check_branch
      %8700 = sbr.rel (%p8698) target = $region76
    $region75: #{forward.1} parent=5 // pred_region
      %s8701 = ssub.s32 %s18, 2
      // Predicated region
      $region77: #{forward.1} parent=75 // pred_check
        %p8702 = pneg %p304
      $region78: #{forward.1} parent=75 // pred_check_branch
        %8704 = sbr.rel (%p8702) target = $region80
      $region79: #{forward.1} parent=75 // pred_region
        %s8705 = smul.u32 2, %s24
        %p8706 = scmp.lt.s32.totalorder %s8705, 3
        %s8707 = scalar_select %p8706, %s8705, 3
        %s8708 = smul.addr %s8707, 8
        %s8709 = scalar_lea.vmem %s12, %s8708
      $region80: #{forward.1} parent=75 // pred_fallthru
        _
    $region76: #{forward.1} parent=5 // pred_fallthru
      _
  $region6: #{forward.1} parent=0 // loop_footer
    %s22 = sadd.s32 1, %s18
  $region7: #{forward.1} parent=0 // loop_footer_branch
    %17 = sbr.rel target = $region3
  $region8: #{forward.1} parent=0 // loop_exit
    _

</llo_original>
